<compile_context>
chip_gen: v6e
topology: v6e:2x2x1
jax: 0.10.0
libtpu: 0.0.40
codegen_flags: <defaults>
</compile_context>

<pallas_src>
import functools

import numpy as np
import jax
import jax.numpy as jnp
from jax import lax
from jax.experimental import pallas as pl
from jax.experimental.pallas import tpu as pltpu

_BN_EPS = 1e-5  # PyTorch BatchNorm2d default


def _round_up(v, m):
    return (v + m - 1) // m * m


# ------------------------------ fused kernel --------------------------------
def _basic_block_kernel(x_ref, w1_ref, s1_ref, b1_ref, w2_ref, s2_ref, b2_ref,
                        *rest, stride, has_proj):
    # x_ref : (H, W, Cin)         bf16  one image (batch dim squeezed by BlockSpec)
    # w1_ref: (3, 3*Cin, P)       bf16  conv1, rows = ky, cols = kx*Cin + c
    # w2_ref: (3, 3*P,  P)        bf16  conv2
    # s*/b* : (1, P)              f32   folded BatchNorm scale / bias
    # [wsc_ref: (Cin, P) bf16, ssc/bsc: (1, P) f32]  projection shortcut
    # o_ref : (Ho, Wo, P)         bf16
    # xs_ref: (H+2,  Wp, 3*Cin)   bf16  kx-stacked, zero-halo conv1 input
    # ys_ref: (Ho+2, Wp, 3*P)     bf16  kx-stacked, zero-halo conv2 input
    if has_proj:
        wsc_ref, ssc_ref, bsc_ref, o_ref, xs_ref, ys_ref = rest
    else:
        o_ref, xs_ref, ys_ref = rest

    H, W, Cin = x_ref.shape
    Ho, Wo, P = o_ref.shape
    Wp = xs_ref.shape[1]            # Wo rounded up to a multiple of 8
    dt = xs_ref.dtype

    # ---- build kx-stacked conv1 input (halo-only zeroing) -------------------
    # chunk kx (lanes [kx*Cin, (kx+1)*Cin)) at column ox holds padded column
    # ox*stride + kx of the zero-padded image.
    xs_ref[0:1, :, :] = jnp.zeros((1, Wp, 3 * Cin), dt)           # top halo row
    xs_ref[H + 1:H + 2, :, :] = jnp.zeros((1, Wp, 3 * Cin), dt)   # bottom halo row
    xs_ref[:, 0:1, :] = jnp.zeros((H + 2, 1, 3 * Cin), dt)        # left halo col
    xs_ref[:, Wo - 1:Wp, :] = jnp.zeros((H + 2, Wp - Wo + 1, 3 * Cin), dt)
    if stride == 1:
        xs_ref[1:H + 1, 1:Wo, 0:Cin] = x_ref[:, 0:W - 1, :]
        xs_ref[1:H + 1, 0:Wo, Cin:2 * Cin] = x_ref[...]
        xs_ref[1:H + 1, 0:Wo - 1, 2 * Cin:3 * Cin] = x_ref[:, 1:W, :]
    else:
        xs_ref[1:H + 1, 1:Wo, 0:Cin] = x_ref[:, pl.ds(1, Wo - 1, stride), :]
        xs_ref[1:H + 1, 0:Wo, Cin:2 * Cin] = x_ref[:, pl.ds(0, Wo, stride), :]
        xs_ref[1:H + 1, 0:Wo, 2 * Cin:3 * Cin] = x_ref[:, pl.ds(1, Wo, stride), :]

    def conv3x3(src_ref, w_ref, row_stride):
        # 3 MXU dots with contraction depth K = 3*C (kx folded into channels).
        k = src_ref.shape[-1]
        acc = None
        for ky in range(3):
            if row_stride == 1:
                patch = src_ref[pl.ds(ky, Ho), :, :]
            else:
                patch = src_ref[pl.ds(ky, Ho, row_stride), :, :]
            d = jnp.dot(patch.reshape(Ho * Wp, k), w_ref[ky],
                        preferred_element_type=jnp.float32)
            acc = d if acc is None else acc + d
        return acc                                    # (Ho*Wp, Cout) f32

    # conv1 -> bn1 -> relu  (kept in VMEM, bf16, for conv2)
    y1 = jnp.maximum(conv3x3(xs_ref, w1_ref, stride) * s1_ref[...] + b1_ref[...],
                     0.0)
    y1 = y1.reshape(Ho, Wp, P).astype(dt)

    # ---- stack y1 for conv2 (always stride 1) -------------------------------
    ys_ref[0:1, :, :] = jnp.zeros((1, Wp, 3 * P), dt)
    ys_ref[Ho + 1:Ho + 2, :, :] = jnp.zeros((1, Wp, 3 * P), dt)
    ys_ref[:, 0:1, :] = jnp.zeros((Ho + 2, 1, 3 * P), dt)
    ys_ref[:, Wo - 1:Wp, :] = jnp.zeros((Ho + 2, Wp - Wo + 1, 3 * P), dt)
    ys_ref[1:Ho + 1, 1:Wo, 0:P] = y1[:, 0:Wo - 1, :]
    ys_ref[1:Ho + 1, 0:Wo, P:2 * P] = y1[:, 0:Wo, :]
    ys_ref[1:Ho + 1, 0:Wo - 1, 2 * P:3 * P] = y1[:, 1:Wo, :]

    # conv2 -> bn2
    out = conv3x3(ys_ref, w2_ref, 1) * s2_ref[...] + b2_ref[...]

    # ---- shortcut ------------------------------------------------------------
    # The centre (kx=1) chunk of the stacked conv1 input IS x at the strided
    # output positions, so the shortcut needs no extra strided slice.
    if stride == 1:
        xc = xs_ref[1:Ho + 1, :, Cin:2 * Cin]
    else:
        xc = xs_ref[pl.ds(1, Ho, stride), :, Cin:2 * Cin]
    xc2 = xc.reshape(Ho * Wp, Cin)
    if has_proj:
        sc = jnp.dot(xc2, wsc_ref[...], preferred_element_type=jnp.float32)
        out = out + (sc * ssc_ref[...] + bsc_ref[...])
    else:
        out = out + xc2.astype(jnp.float32)

    res = jnp.maximum(out, 0.0).reshape(Ho, Wp, P)
    if Wp != Wo:
        res = res[:, 0:Wo, :]            # drop pad columns
    o_ref[...] = res.astype(o_ref.dtype)


# ------------------------------ param packing --------------------------------
def _fold_bn(bn):
    gamma, beta, mean, var = bn
    scale = gamma / jnp.sqrt(var + _BN_EPS)
    bias = beta - mean * scale
    return (scale.reshape(1, -1).astype(jnp.float32),
            bias.reshape(1, -1).astype(jnp.float32))


def pack_block_params(params, stride):
    """Pack torch-layout (OIHW) params into kernel layout ONCE per block."""
    w1, w2 = params['w1'], params['w2']
    P, Cin = w1.shape[0], w1.shape[1]
    # OIHW -> (ky, kx, Cin, Cout) -> (3, 3*Cin, Cout), row index = kx*Cin + c
    w1k = jnp.transpose(w1, (2, 3, 1, 0)).reshape(3, 3 * Cin, P).astype(jnp.bfloat16)
    w2k = jnp.transpose(w2, (2, 3, 1, 0)).reshape(3, 3 * P, P).astype(jnp.bfloat16)
    s1, b1 = _fold_bn(params['bn1'])
    s2, b2 = _fold_bn(params['bn2'])
    packed = dict(w1=w1k, s1=s1, b1=b1, w2=w2k, s2=s2, b2=b2,
                  cin=Cin, planes=P, stride=stride, has_proj=('wsc' in params))
    if packed['has_proj']:
        wsc = jnp.transpose(params['wsc'], (2, 3, 1, 0)).reshape(Cin, P).astype(jnp.bfloat16)
        ssc, bsc = _fold_bn(params['bnsc'])
        packed.update(wsc=wsc, ssc=ssc, bsc=bsc)
    return packed


# ------------------------------ host wrapper ----------------------------------
def basic_block_apply(x_nhwc, packed):
    """Fused BasicBlock. x_nhwc: (N, H, W, Cin) bf16 -> (N, Ho, Wo, P) bf16."""
    N, H, W, Cin = x_nhwc.shape
    stride, P, has_proj = packed['stride'], packed['planes'], packed['has_proj']
    assert Cin == packed['cin']
    assert stride in (1, 2)
    if stride == 2:
        assert H % 2 == 0 and W % 2 == 0, "stride-2 block expects even H, W"
    Ho = (H - 1) // stride + 1
    Wo = (W - 1) // stride + 1
    Wp = _round_up(Wo, 8)

    xb = x_nhwc.astype(jnp.bfloat16)
    inputs = [xb, packed['w1'], packed['s1'], packed['b1'],
              packed['w2'], packed['s2'], packed['b2']]
    if has_proj:
        inputs += [packed['wsc'], packed['ssc'], packed['bsc']]

    flops = 2 * N * Ho * Wo * P * (9 * Cin + 9 * P + (Cin if has_proj else 0))
    bytes_acc = sum(int(np.prod(a.shape)) * a.dtype.itemsize for a in inputs) \
        + N * Ho * Wo * P * 2
    cost = pl.CostEstimate(flops=flops, transcendentals=0, bytes_accessed=bytes_acc)

    kernel = functools.partial(_basic_block_kernel, stride=stride, has_proj=has_proj)

    def const_spec(arr, single_buffer):
        shape = arr.shape
        idx = lambda n: (0,) * len(shape)
        if single_buffer:
            # grid-invariant operand: single VMEM buffer instead of two
            return pl.BlockSpec(shape, idx, pipeline_mode=pl.Buffered(1))
        return pl.BlockSpec(shape, idx)

    def run(single_buffer_weights):
        in_specs = [pl.BlockSpec((None, H, W, Cin), lambda n: (n, 0, 0, 0))]
        in_specs += [const_spec(a, single_buffer_weights) for a in inputs[1:]]
        return pl.pallas_call(
            kernel,
            out_shape=jax.ShapeDtypeStruct((N, Ho, Wo, P), jnp.bfloat16),
            grid=(N,),
            in_specs=in_specs,
            out_specs=pl.BlockSpec((None, Ho, Wo, P), lambda n: (n, 0, 0, 0)),
            scratch_shapes=[
                pltpu.VMEM((H + 2, Wp, 3 * Cin), jnp.bfloat16),   # stacked conv1 input
                pltpu.VMEM((Ho + 2, Wp, 3 * P), jnp.bfloat16),    # stacked conv2 input
            ],
            compiler_params=pltpu.CompilerParams(
                dimension_semantics=("parallel",),
                vmem_limit_bytes=24 * 1024 * 1024,
            ),
            cost_estimate=cost,
        )(*inputs)

    try:
        out = run(True)
        jax.block_until_ready(out)
        return out
    except Exception:
        # pl.Buffered(1) not supported on this jax/Mosaic version -> default buffering.
        return run(False)


def basic_block_forward(x_nchw, params, *, stride):
    """Test convenience wrapper: NCHW f32 in -> NCHW bf16 out."""
    packed = pack_block_params(params, stride)
    x = jnp.transpose(x_nchw, (0, 2, 3, 1)).astype(jnp.bfloat16)   # NCHW -> NHWC
    out = basic_block_apply(x, packed)
    return jnp.transpose(out, (0, 3, 1, 2))                        # NHWC -> NCHW


# ------------------------- params / pure-JAX reference -----------------------
def make_block_params(key, in_planes, planes, stride):
    ks = jax.random.split(key, 6)

    def conv_w(k, cout, cin, ksz):
        fan = cin * ksz * ksz
        return (2.0 / fan) ** 0.5 * jax.random.normal(k, (cout, cin, ksz, ksz), jnp.float32)

    def bn_p(k, c):
        k1, k2, k3, k4 = jax.random.split(k, 4)
        gamma = 1.0 + 0.1 * jax.random.normal(k1, (c,), jnp.float32)
        beta = 0.1 * jax.random.normal(k2, (c,), jnp.float32)
        mean = 0.1 * jax.random.normal(k3, (c,), jnp.float32)
        var = jax.nn.softplus(jax.random.normal(k4, (c,), jnp.float32)) + 0.5
        return (gamma, beta, mean, var)

    p = {
        'w1': conv_w(ks[0], planes, in_planes, 3),
        'bn1': bn_p(ks[1], planes),
        'w2': conv_w(ks[2], planes, planes, 3),
        'bn2': bn_p(ks[3], planes),
    }
    if stride != 1 or in_planes != planes:
        p['wsc'] = conv_w(ks[4], planes, in_planes, 1)
        p['bnsc'] = bn_p(ks[5], planes)
    return p


def reference_forward(x_nchw, params, *, stride):
    # Mirrors kernel numerics: bf16-rounded operands / inter-conv activation,
    # f32 accumulation, running-stats BatchNorm. Output left in f32 here.
    def bf(v):
        return v.astype(jnp.bfloat16).astype(jnp.float32)

    def conv(a, w_oihw, s):
        w = jnp.transpose(w_oihw, (2, 3, 1, 0))               # OIHW -> HWIO
        pad = 1 if w.shape[0] == 3 else 0
        return lax.conv_general_dilated(
            a, bf(w), window_strides=(s, s), padding=((pad, pad), (pad, pad)),
            dimension_numbers=('NHWC', 'HWIO', 'NHWC'),
            precision=lax.Precision.HIGHEST)

    def bn(a, bnp):
        g, b, m, v = bnp
        return (a - m) * (g / jnp.sqrt(v + _BN_EPS)) + b

    x = jnp.transpose(x_nchw, (0, 2, 3, 1)).astype(jnp.float32)
    xq = bf(x)
    y1 = bf(jnp.maximum(bn(conv(xq, params['w1'], stride), params['bn1']), 0.0))
    out = bn(conv(y1, params['w2'], 1), params['bn2'])
    if 'wsc' in params:
        sc = bn(conv(xq, params['wsc'], stride), params['bnsc'])
    else:
        sc = xq
    out = jnp.maximum(out + sc, 0.0)
    return jnp.transpose(out, (0, 3, 1, 2))


if __name__ == "__main__":
    key = jax.random.PRNGKey(0)
    N, in_planes = 4, 32
    x16 = jax.random.normal(jax.random.fold_in(key, 1), (N, in_planes, 16, 16), jnp.float32)
    x14 = jax.random.normal(jax.random.fold_in(key, 2), (N, in_planes, 14, 14), jnp.float32)

    cases = [
        ("identity   s=1 32->32 16x16", x16, in_planes, 1),   # identity shortcut
        ("projection s=2 32->64 16x16", x16, 64, 2),          # 1x1-conv+bn shortcut
        ("projection s=2 32->64 14x14", x14, 64, 2),          # Wo=7 (non-8-aligned) path
    ]

    for i, (name, xin, planes, stride) in enumerate(cases):
        p = make_block_params(jax.random.fold_in(key, 10 + i), in_planes, planes, stride)
        out = jax.block_until_ready(basic_block_forward(xin, p, stride=stride))
        ref = reference_forward(xin, p, stride=stride)
        assert out.shape == ref.shape, (name, out.shape, ref.shape)
        o = np.asarray(out.astype(jnp.float32))
        r = np.asarray(ref.astype(jnp.bfloat16).astype(jnp.float32))  # kernel emits bf16
        if not np.allclose(o, r, rtol=2e-2, atol=2e-2):
            err = float(np.max(np.abs(o - r)))
            raise AssertionError(f"BasicBlock ({name}) mismatch, max abs err {err}")

    print("KERNEL_OK")
</pallas_src>

<mosaic_0001>
module attributes {stable_mosaic.version = 11 : i64} {
  func.func @_basic_block_kernel(%arg0: i32, %arg1: memref<1x16x16x32xbf16, #tpu.memory_space<vmem>>, %arg2: memref<3x96x32xbf16, #tpu.memory_space<vmem>>, %arg3: memref<1x32xf32, #tpu.memory_space<vmem>>, %arg4: memref<1x32xf32, #tpu.memory_space<vmem>>, %arg5: memref<3x96x32xbf16, #tpu.memory_space<vmem>>, %arg6: memref<1x32xf32, #tpu.memory_space<vmem>>, %arg7: memref<1x32xf32, #tpu.memory_space<vmem>>, %arg8: memref<1x16x16x32xbf16, #tpu.memory_space<vmem>>, %arg9: memref<18x16x96xbf16, #tpu.memory_space<vmem>>, %arg10: memref<18x16x96xbf16, #tpu.memory_space<vmem>>) attributes {dimension_semantics = [#tpu.dimension_semantics<parallel>], iteration_bounds = array<i64: 4>, scalar_prefetch = 0 : i64, scratch_operands = 2 : i64, tpu.core_type = #tpu.core_type<tc>, window_params = [{transform_indices = @transform_0, window_bounds = array<i64: 1, 16, 16, 32>}, {pipeline_mode = #tpu.pipeline_mode<synchronous>, transform_indices = @transform_1, window_bounds = array<i64: 3, 96, 32>}, {pipeline_mode = #tpu.pipeline_mode<synchronous>, transform_indices = @transform_2, window_bounds = array<i64: 1, 32>}, {pipeline_mode = #tpu.pipeline_mode<synchronous>, transform_indices = @transform_3, window_bounds = array<i64: 1, 32>}, {pipeline_mode = #tpu.pipeline_mode<synchronous>, transform_indices = @transform_4, window_bounds = array<i64: 3, 96, 32>}, {pipeline_mode = #tpu.pipeline_mode<synchronous>, transform_indices = @transform_5, window_bounds = array<i64: 1, 32>}, {pipeline_mode = #tpu.pipeline_mode<synchronous>, transform_indices = @transform_6, window_bounds = array<i64: 1, 32>}, {transform_indices = @transform_7, window_bounds = array<i64: 1, 16, 16, 32>}]} {
    %cst = arith.constant 0.000000e+00 : bf16
    %0 = vector.broadcast %cst : bf16 to vector<1x16x96xbf16>
    %c0 = arith.constant 0 : index
    %c0_0 = arith.constant 0 : index
    %c0_1 = arith.constant 0 : index
    %1 = vector.load %arg9[%c0, %c0_0, %c0_1] : memref<18x16x96xbf16, #tpu.memory_space<vmem>>, vector<1x16x96xbf16>
    tpu.vector_store %arg9[%c0, %c0_0, %c0_1], %0 {strides = array<i32>} : memref<18x16x96xbf16, #tpu.memory_space<vmem>>, vector<1x16x96xbf16>,
    %cst_2 = arith.constant 0.000000e+00 : bf16
    %2 = vector.broadcast %cst_2 : bf16 to vector<1x16x96xbf16>
    %c17 = arith.constant 17 : index
    %c0_3 = arith.constant 0 : index
    %c0_4 = arith.constant 0 : index
    %3 = vector.load %arg9[%c17, %c0_3, %c0_4] : memref<18x16x96xbf16, #tpu.memory_space<vmem>>, vector<1x16x96xbf16>
    tpu.vector_store %arg9[%c17, %c0_3, %c0_4], %2 {strides = array<i32>} : memref<18x16x96xbf16, #tpu.memory_space<vmem>>, vector<1x16x96xbf16>,
    %cst_5 = arith.constant 0.000000e+00 : bf16
    %4 = vector.broadcast %cst_5 : bf16 to vector<18x1x96xbf16>
    %c0_6 = arith.constant 0 : index
    %c0_7 = arith.constant 0 : index
    %c0_8 = arith.constant 0 : index
    %5 = vector.load %arg9[%c0_6, %c0_7, %c0_8] : memref<18x16x96xbf16, #tpu.memory_space<vmem>>, vector<18x1x96xbf16>
    tpu.vector_store %arg9[%c0_6, %c0_7, %c0_8], %4 {strides = array<i32>} : memref<18x16x96xbf16, #tpu.memory_space<vmem>>, vector<18x1x96xbf16>,
    %cst_9 = arith.constant 0.000000e+00 : bf16
    %6 = vector.broadcast %cst_9 : bf16 to vector<18x1x96xbf16>
    %c0_10 = arith.constant 0 : index
    %c15 = arith.constant 15 : index
    %c0_11 = arith.constant 0 : index
    %7 = vector.load %arg9[%c0_10, %c15, %c0_11] : memref<18x16x96xbf16, #tpu.memory_space<vmem>>, vector<18x1x96xbf16>
    tpu.vector_store %arg9[%c0_10, %c15, %c0_11], %6 {strides = array<i32>} : memref<18x16x96xbf16, #tpu.memory_space<vmem>>, vector<18x1x96xbf16>,
    %c0_12 = arith.constant 0 : index
    %c0_13 = arith.constant 0 : index
    %c0_14 = arith.constant 0 : index
    %c0_15 = arith.constant 0 : index
    %8 = vector.load %arg1[%c0_12, %c0_13, %c0_14, %c0_15] : memref<1x16x16x32xbf16, #tpu.memory_space<vmem>>, vector<1x16x15x32xbf16>
    %9 = vector.shape_cast %8 : vector<1x16x15x32xbf16> to vector<16x15x32xbf16>
    %c1 = arith.constant 1 : index
    %c1_16 = arith.constant 1 : index
    %c0_17 = arith.constant 0 : index
    %10 = vector.load %arg9[%c1, %c1_16, %c0_17] : memref<18x16x96xbf16, #tpu.memory_space<vmem>>, vector<16x15x32xbf16>
    tpu.vector_store %arg9[%c1, %c1_16, %c0_17], %9 {strides = array<i32>} : memref<18x16x96xbf16, #tpu.memory_space<vmem>>, vector<16x15x32xbf16>,
    %c0_18 = arith.constant 0 : index
    %c0_19 = arith.constant 0 : index
    %c0_20 = arith.constant 0 : index
    %c0_21 = arith.constant 0 : index
    %11 = vector.load %arg1[%c0_18, %c0_19, %c0_20, %c0_21] : memref<1x16x16x32xbf16, #tpu.memory_space<vmem>>, vector<1x16x16x32xbf16>
    %12 = vector.shape_cast %11 : vector<1x16x16x32xbf16> to vector<16x16x32xbf16>
    %c1_22 = arith.constant 1 : index
    %c0_23 = arith.constant 0 : index
    %c32 = arith.constant 32 : index
    %13 = vector.load %arg9[%c1_22, %c0_23, %c32] : memref<18x16x96xbf16, #tpu.memory_space<vmem>>, vector<16x16x32xbf16>
    tpu.vector_store %arg9[%c1_22, %c0_23, %c32], %12 {strides = array<i32>} : memref<18x16x96xbf16, #tpu.memory_space<vmem>>, vector<16x16x32xbf16>,
    %c0_24 = arith.constant 0 : index
    %c0_25 = arith.constant 0 : index
    %c1_26 = arith.constant 1 : index
    %c0_27 = arith.constant 0 : index
    %14 = vector.load %arg1[%c0_24, %c0_25, %c1_26, %c0_27] : memref<1x16x16x32xbf16, #tpu.memory_space<vmem>>, vector<1x16x15x32xbf16>
    %15 = vector.shape_cast %14 : vector<1x16x15x32xbf16> to vector<16x15x32xbf16>
    %c1_28 = arith.constant 1 : index
    %c0_29 = arith.constant 0 : index
    %c64 = arith.constant 64 : index
    %16 = vector.load %arg9[%c1_28, %c0_29, %c64] : memref<18x16x96xbf16, #tpu.memory_space<vmem>>, vector<16x15x32xbf16>
    tpu.vector_store %arg9[%c1_28, %c0_29, %c64], %15 {strides = array<i32>} : memref<18x16x96xbf16, #tpu.memory_space<vmem>>, vector<16x15x32xbf16>,
    %c0_30 = arith.constant 0 : index
    %c0_31 = arith.constant 0 : index
    %c0_32 = arith.constant 0 : index
    %17 = vector.load %arg9[%c0_30, %c0_31, %c0_32] : memref<18x16x96xbf16, #tpu.memory_space<vmem>>, vector<16x16x96xbf16>
    %18 = vector.shape_cast %17 : vector<16x16x96xbf16> to vector<256x96xbf16>
    %c0_33 = arith.constant 0 : index
    %c0_34 = arith.constant 0 : index
    %c0_35 = arith.constant 0 : index
    %19 = vector.load %arg2[%c0_33, %c0_34, %c0_35] : memref<3x96x32xbf16, #tpu.memory_space<vmem>>, vector<1x96x32xbf16>
    %20 = vector.shape_cast %19 : vector<1x96x32xbf16> to vector<96x32xbf16>
    %cst_36 = arith.constant dense<0.000000e+00> : vector<256x32xf32>
    %21 = tpu.matmul %18, %20, %cst_36 {dimension_numbers = #tpu.dot_dimension_numbers<[1], [0], [0], [1], [0, 0, 1, 1], [], []>} : vector<256x96xbf16>, vector<96x32xbf16>, vector<256x32xf32> -> vector<256x32xf32>
    %c1_37 = arith.constant 1 : index
    %c0_38 = arith.constant 0 : index
    %c0_39 = arith.constant 0 : index
    %22 = vector.load %arg9[%c1_37, %c0_38, %c0_39] : memref<18x16x96xbf16, #tpu.memory_space<vmem>>, vector<16x16x96xbf16>
    %23 = vector.shape_cast %22 : vector<16x16x96xbf16> to vector<256x96xbf16>
    %c1_40 = arith.constant 1 : index
    %c0_41 = arith.constant 0 : index
    %c0_42 = arith.constant 0 : index
    %24 = vector.load %arg2[%c1_40, %c0_41, %c0_42] : memref<3x96x32xbf16, #tpu.memory_space<vmem>>, vector<1x96x32xbf16>
    %25 = vector.shape_cast %24 : vector<1x96x32xbf16> to vector<96x32xbf16>
    %cst_43 = arith.constant dense<0.000000e+00> : vector<256x32xf32>
    %26 = tpu.matmul %23, %25, %cst_43 {dimension_numbers = #tpu.dot_dimension_numbers<[1], [0], [0], [1], [0, 0, 1, 1], [], []>} : vector<256x96xbf16>, vector<96x32xbf16>, vector<256x32xf32> -> vector<256x32xf32>
    %27 = arith.addf %21, %26 : vector<256x32xf32>
    %c2 = arith.constant 2 : index
    %c0_44 = arith.constant 0 : index
    %c0_45 = arith.constant 0 : index
    %28 = vector.load %arg9[%c2, %c0_44, %c0_45] : memref<18x16x96xbf16, #tpu.memory_space<vmem>>, vector<16x16x96xbf16>
    %29 = vector.shape_cast %28 : vector<16x16x96xbf16> to vector<256x96xbf16>
    %c2_46 = arith.constant 2 : index
    %c0_47 = arith.constant 0 : index
    %c0_48 = arith.constant 0 : index
    %30 = vector.load %arg2[%c2_46, %c0_47, %c0_48] : memref<3x96x32xbf16, #tpu.memory_space<vmem>>, vector<1x96x32xbf16>
    %31 = vector.shape_cast %30 : vector<1x96x32xbf16> to vector<96x32xbf16>
    %cst_49 = arith.constant dense<0.000000e+00> : vector<256x32xf32>
    %32 = tpu.matmul %29, %31, %cst_49 {dimension_numbers = #tpu.dot_dimension_numbers<[1], [0], [0], [1], [0, 0, 1, 1], [], []>} : vector<256x96xbf16>, vector<96x32xbf16>, vector<256x32xf32> -> vector<256x32xf32>
    %33 = arith.addf %27, %32 : vector<256x32xf32>
    %c0_50 = arith.constant 0 : index
    %c0_51 = arith.constant 0 : index
    %34 = vector.load %arg3[%c0_50, %c0_51] : memref<1x32xf32, #tpu.memory_space<vmem>>, vector<1x32xf32>
    %35 = vector.broadcast %34 : vector<1x32xf32> to vector<256x32xf32>
    %36 = arith.mulf %33, %35 : vector<256x32xf32>
    %c0_52 = arith.constant 0 : index
    %c0_53 = arith.constant 0 : index
    %37 = vector.load %arg4[%c0_52, %c0_53] : memref<1x32xf32, #tpu.memory_space<vmem>>, vector<1x32xf32>
    %38 = vector.broadcast %37 : vector<1x32xf32> to vector<256x32xf32>
    %39 = arith.addf %36, %38 : vector<256x32xf32>
    %cst_54 = arith.constant 0.000000e+00 : f32
    %40 = vector.broadcast %cst_54 : f32 to vector<256x32xf32>
    %41 = arith.maximumf %39, %40 : vector<256x32xf32>
    %42 = vector.shape_cast %41 : vector<256x32xf32> to vector<16x16x32xf32>
    %43 = arith.truncf %42 : vector<16x16x32xf32> to vector<16x16x32xbf16>
    %cst_55 = arith.constant 0.000000e+00 : bf16
    %44 = vector.broadcast %cst_55 : bf16 to vector<1x16x96xbf16>
    %c0_56 = arith.constant 0 : index
    %c0_57 = arith.constant 0 : index
    %c0_58 = arith.constant 0 : index
    %45 = vector.load %arg10[%c0_56, %c0_57, %c0_58] : memref<18x16x96xbf16, #tpu.memory_space<vmem>>, vector<1x16x96xbf16>
    tpu.vector_store %arg10[%c0_56, %c0_57, %c0_58], %44 {strides = array<i32>} : memref<18x16x96xbf16, #tpu.memory_space<vmem>>, vector<1x16x96xbf16>,
    %cst_59 = arith.constant 0.000000e+00 : bf16
    %46 = vector.broadcast %cst_59 : bf16 to vector<1x16x96xbf16>
    %c17_60 = arith.constant 17 : index
    %c0_61 = arith.constant 0 : index
    %c0_62 = arith.constant 0 : index
    %47 = vector.load %arg10[%c17_60, %c0_61, %c0_62] : memref<18x16x96xbf16, #tpu.memory_space<vmem>>, vector<1x16x96xbf16>
    tpu.vector_store %arg10[%c17_60, %c0_61, %c0_62], %46 {strides = array<i32>} : memref<18x16x96xbf16, #tpu.memory_space<vmem>>, vector<1x16x96xbf16>,
    %cst_63 = arith.constant 0.000000e+00 : bf16
    %48 = vector.broadcast %cst_63 : bf16 to vector<18x1x96xbf16>
    %c0_64 = arith.constant 0 : index
    %c0_65 = arith.constant 0 : index
    %c0_66 = arith.constant 0 : index
    %49 = vector.load %arg10[%c0_64, %c0_65, %c0_66] : memref<18x16x96xbf16, #tpu.memory_space<vmem>>, vector<18x1x96xbf16>
    tpu.vector_store %arg10[%c0_64, %c0_65, %c0_66], %48 {strides = array<i32>} : memref<18x16x96xbf16, #tpu.memory_space<vmem>>, vector<18x1x96xbf16>,
    %cst_67 = arith.constant 0.000000e+00 : bf16
    %50 = vector.broadcast %cst_67 : bf16 to vector<18x1x96xbf16>
    %c0_68 = arith.constant 0 : index
    %c15_69 = arith.constant 15 : index
    %c0_70 = arith.constant 0 : index
    %51 = vector.load %arg10[%c0_68, %c15_69, %c0_70] : memref<18x16x96xbf16, #tpu.memory_space<vmem>>, vector<18x1x96xbf16>
    tpu.vector_store %arg10[%c0_68, %c15_69, %c0_70], %50 {strides = array<i32>} : memref<18x16x96xbf16, #tpu.memory_space<vmem>>, vector<18x1x96xbf16>,
    %52 = vector.extract_strided_slice %43 {offsets = [0, 0, 0], sizes = [16, 15, 32], strides = [1, 1, 1]} : vector<16x16x32xbf16> to vector<16x15x32xbf16>
    %c1_71 = arith.constant 1 : index
    %c1_72 = arith.constant 1 : index
    %c0_73 = arith.constant 0 : index
    %53 = vector.load %arg10[%c1_71, %c1_72, %c0_73] : memref<18x16x96xbf16, #tpu.memory_space<vmem>>, vector<16x15x32xbf16>
    tpu.vector_store %arg10[%c1_71, %c1_72, %c0_73], %52 {strides = array<i32>} : memref<18x16x96xbf16, #tpu.memory_space<vmem>>, vector<16x15x32xbf16>,
    %c1_74 = arith.constant 1 : index
    %c0_75 = arith.constant 0 : index
    %c32_76 = arith.constant 32 : index
    %54 = vector.load %arg10[%c1_74, %c0_75, %c32_76] : memref<18x16x96xbf16, #tpu.memory_space<vmem>>, vector<16x16x32xbf16>
    tpu.vector_store %arg10[%c1_74, %c0_75, %c32_76], %43 {strides = array<i32>} : memref<18x16x96xbf16, #tpu.memory_space<vmem>>, vector<16x16x32xbf16>,
    %55 = vector.extract_strided_slice %43 {offsets = [0, 1, 0], sizes = [16, 15, 32], strides = [1, 1, 1]} : vector<16x16x32xbf16> to vector<16x15x32xbf16>
    %c1_77 = arith.constant 1 : index
    %c0_78 = arith.constant 0 : index
    %c64_79 = arith.constant 64 : index
    %56 = vector.load %arg10[%c1_77, %c0_78, %c64_79] : memref<18x16x96xbf16, #tpu.memory_space<vmem>>, vector<16x15x32xbf16>
    tpu.vector_store %arg10[%c1_77, %c0_78, %c64_79], %55 {strides = array<i32>} : memref<18x16x96xbf16, #tpu.memory_space<vmem>>, vector<16x15x32xbf16>,
    %c0_80 = arith.constant 0 : index
    %c0_81 = arith.constant 0 : index
    %c0_82 = arith.constant 0 : index
    %57 = vector.load %arg10[%c0_80, %c0_81, %c0_82] : memref<18x16x96xbf16, #tpu.memory_space<vmem>>, vector<16x16x96xbf16>
    %58 = vector.shape_cast %57 : vector<16x16x96xbf16> to vector<256x96xbf16>
    %c0_83 = arith.constant 0 : index
    %c0_84 = arith.constant 0 : index
    %c0_85 = arith.constant 0 : index
    %59 = vector.load %arg5[%c0_83, %c0_84, %c0_85] : memref<3x96x32xbf16, #tpu.memory_space<vmem>>, vector<1x96x32xbf16>
    %60 = vector.shape_cast %59 : vector<1x96x32xbf16> to vector<96x32xbf16>
    %cst_86 = arith.constant dense<0.000000e+00> : vector<256x32xf32>
    %61 = tpu.matmul %58, %60, %cst_86 {dimension_numbers = #tpu.dot_dimension_numbers<[1], [0], [0], [1], [0, 0, 1, 1], [], []>} : vector<256x96xbf16>, vector<96x32xbf16>, vector<256x32xf32> -> vector<256x32xf32>
    %c1_87 = arith.constant 1 : index
    %c0_88 = arith.constant 0 : index
    %c0_89 = arith.constant 0 : index
    %62 = vector.load %arg10[%c1_87, %c0_88, %c0_89] : memref<18x16x96xbf16, #tpu.memory_space<vmem>>, vector<16x16x96xbf16>
    %63 = vector.shape_cast %62 : vector<16x16x96xbf16> to vector<256x96xbf16>
    %c1_90 = arith.constant 1 : index
    %c0_91 = arith.constant 0 : index
    %c0_92 = arith.constant 0 : index
    %64 = vector.load %arg5[%c1_90, %c0_91, %c0_92] : memref<3x96x32xbf16, #tpu.memory_space<vmem>>, vector<1x96x32xbf16>
    %65 = vector.shape_cast %64 : vector<1x96x32xbf16> to vector<96x32xbf16>
    %cst_93 = arith.constant dense<0.000000e+00> : vector<256x32xf32>
    %66 = tpu.matmul %63, %65, %cst_93 {dimension_numbers = #tpu.dot_dimension_numbers<[1], [0], [0], [1], [0, 0, 1, 1], [], []>} : vector<256x96xbf16>, vector<96x32xbf16>, vector<256x32xf32> -> vector<256x32xf32>
    %67 = arith.addf %61, %66 : vector<256x32xf32>
    %c2_94 = arith.constant 2 : index
    %c0_95 = arith.constant 0 : index
    %c0_96 = arith.constant 0 : index
    %68 = vector.load %arg10[%c2_94, %c0_95, %c0_96] : memref<18x16x96xbf16, #tpu.memory_space<vmem>>, vector<16x16x96xbf16>
    %69 = vector.shape_cast %68 : vector<16x16x96xbf16> to vector<256x96xbf16>
    %c2_97 = arith.constant 2 : index
    %c0_98 = arith.constant 0 : index
    %c0_99 = arith.constant 0 : index
    %70 = vector.load %arg5[%c2_97, %c0_98, %c0_99] : memref<3x96x32xbf16, #tpu.memory_space<vmem>>, vector<1x96x32xbf16>
    %71 = vector.shape_cast %70 : vector<1x96x32xbf16> to vector<96x32xbf16>
    %cst_100 = arith.constant dense<0.000000e+00> : vector<256x32xf32>
    %72 = tpu.matmul %69, %71, %cst_100 {dimension_numbers = #tpu.dot_dimension_numbers<[1], [0], [0], [1], [0, 0, 1, 1], [], []>} : vector<256x96xbf16>, vector<96x32xbf16>, vector<256x32xf32> -> vector<256x32xf32>
    %73 = arith.addf %67, %72 : vector<256x32xf32>
    %c0_101 = arith.constant 0 : index
    %c0_102 = arith.constant 0 : index
    %74 = vector.load %arg6[%c0_101, %c0_102] : memref<1x32xf32, #tpu.memory_space<vmem>>, vector<1x32xf32>
    %75 = vector.broadcast %74 : vector<1x32xf32> to vector<256x32xf32>
    %76 = arith.mulf %73, %75 : vector<256x32xf32>
    %c0_103 = arith.constant 0 : index
    %c0_104 = arith.constant 0 : index
    %77 = vector.load %arg7[%c0_103, %c0_104] : memref<1x32xf32, #tpu.memory_space<vmem>>, vector<1x32xf32>
    %78 = vector.broadcast %77 : vector<1x32xf32> to vector<256x32xf32>
    %79 = arith.addf %76, %78 : vector<256x32xf32>
    %c1_105 = arith.constant 1 : index
    %c0_106 = arith.constant 0 : index
    %c32_107 = arith.constant 32 : index
    %80 = vector.load %arg9[%c1_105, %c0_106, %c32_107] : memref<18x16x96xbf16, #tpu.memory_space<vmem>>, vector<16x16x32xbf16>
    %81 = vector.shape_cast %80 : vector<16x16x32xbf16> to vector<256x32xbf16>
    %82 = arith.extf %81 : vector<256x32xbf16> to vector<256x32xf32>
    %83 = arith.addf %79, %82 : vector<256x32xf32>
    %cst_108 = arith.constant 0.000000e+00 : f32
    %84 = vector.broadcast %cst_108 : f32 to vector<256x32xf32>
    %85 = arith.maximumf %83, %84 : vector<256x32xf32>
    %86 = vector.shape_cast %85 : vector<256x32xf32> to vector<16x16x32xf32>
    %87 = arith.truncf %86 : vector<16x16x32xf32> to vector<16x16x32xbf16>
    %c0_109 = arith.constant 0 : index
    %c0_110 = arith.constant 0 : index
    %c0_111 = arith.constant 0 : index
    %c0_112 = arith.constant 0 : index
    %88 = vector.load %arg8[%c0_109, %c0_110, %c0_111, %c0_112] : memref<1x16x16x32xbf16, #tpu.memory_space<vmem>>, vector<1x16x16x32xbf16>
    %89 = vector.shape_cast %88 : vector<1x16x16x32xbf16> to vector<16x16x32xbf16>
    %90 = vector.shape_cast %87 : vector<16x16x32xbf16> to vector<1x16x16x32xbf16>
    tpu.vector_store %arg8[%c0_109, %c0_110, %c0_111, %c0_112], %90 {strides = array<i32>} : memref<1x16x16x32xbf16, #tpu.memory_space<vmem>>, vector<1x16x16x32xbf16>,
    return
  }
  func.func @transform_0(%arg0: i32) -> (i32, i32, i32, i32) {
    %c0_i32 = arith.constant 0 : i32
    %c0_i32_0 = arith.constant 0 : i32
    %c0_i32_1 = arith.constant 0 : i32
    %c0_i32_2 = arith.constant 0 : i32
    return %arg0, %c0_i32, %c0_i32_0, %c0_i32_1 : i32, i32, i32, i32
  }
  func.func @transform_1(%arg0: i32) -> (i32, i32, i32) {
    %c0_i32 = arith.constant 0 : i32
    %c0_i32_0 = arith.constant 0 : i32
    %c0_i32_1 = arith.constant 0 : i32
    %c0_i32_2 = arith.constant 0 : i32
    return %c0_i32, %c0_i32_0, %c0_i32_1 : i32, i32, i32
  }
  func.func @transform_2(%arg0: i32) -> (i32, i32) {
    %c0_i32 = arith.constant 0 : i32
    %c0_i32_0 = arith.constant 0 : i32
    %c0_i32_1 = arith.constant 0 : i32
    return %c0_i32, %c0_i32_0 : i32, i32
  }
  func.func @transform_3(%arg0: i32) -> (i32, i32) {
    %c0_i32 = arith.constant 0 : i32
    %c0_i32_0 = arith.constant 0 : i32
    %c0_i32_1 = arith.constant 0 : i32
    return %c0_i32, %c0_i32_0 : i32, i32
  }
  func.func @transform_4(%arg0: i32) -> (i32, i32, i32) {
    %c0_i32 = arith.constant 0 : i32
    %c0_i32_0 = arith.constant 0 : i32
    %c0_i32_1 = arith.constant 0 : i32
    %c0_i32_2 = arith.constant 0 : i32
    return %c0_i32, %c0_i32_0, %c0_i32_1 : i32, i32, i32
  }
  func.func @transform_5(%arg0: i32) -> (i32, i32) {
    %c0_i32 = arith.constant 0 : i32
    %c0_i32_0 = arith.constant 0 : i32
    %c0_i32_1 = arith.constant 0 : i32
    return %c0_i32, %c0_i32_0 : i32, i32
  }
  func.func @transform_6(%arg0: i32) -> (i32, i32) {
    %c0_i32 = arith.constant 0 : i32
    %c0_i32_0 = arith.constant 0 : i32
    %c0_i32_1 = arith.constant 0 : i32
    return %c0_i32, %c0_i32_0 : i32, i32
  }
  func.func @transform_7(%arg0: i32) -> (i32, i32, i32, i32) {
    %c0_i32 = arith.constant 0 : i32
    %c0_i32_0 = arith.constant 0 : i32
    %c0_i32_1 = arith.constant 0 : i32
    %c0_i32_2 = arith.constant 0 : i32
    return %arg0, %c0_i32, %c0_i32_0, %c0_i32_1 : i32, i32, i32, i32
  }
}

module attributes {stable_mosaic.version = 11 : i64} {
  func.func @_basic_block_kernel(%arg0: i32, %arg1: memref<1x16x16x32xbf16, #tpu.memory_space<vmem>>, %arg2: memref<3x96x32xbf16, #tpu.memory_space<vmem>>, %arg3: memref<1x32xf32, #tpu.memory_space<vmem>>, %arg4: memref<1x32xf32, #tpu.memory_space<vmem>>, %arg5: memref<3x96x32xbf16, #tpu.memory_space<vmem>>, %arg6: memref<1x32xf32, #tpu.memory_space<vmem>>, %arg7: memref<1x32xf32, #tpu.memory_space<vmem>>, %arg8: memref<1x16x16x32xbf16, #tpu.memory_space<vmem>>, %arg9: memref<18x16x96xbf16, #tpu.memory_space<vmem>>, %arg10: memref<18x16x96xbf16, #tpu.memory_space<vmem>>) attributes {dimension_semantics = [#tpu.dimension_semantics<parallel>], iteration_bounds = array<i64: 4>, scalar_prefetch = 0 : i64, scratch_operands = 2 : i64, tpu.core_type = #tpu.core_type<tc>, window_params = [{transform_indices = @transform_0, window_bounds = array<i64: 1, 16, 16, 32>}, {pipeline_mode = #tpu.pipeline_mode<synchronous>, transform_indices = @transform_1, window_bounds = array<i64: 3, 96, 32>}, {pipeline_mode = #tpu.pipeline_mode<synchronous>, transform_indices = @transform_2, window_bounds = array<i64: 1, 32>}, {pipeline_mode = #tpu.pipeline_mode<synchronous>, transform_indices = @transform_3, window_bounds = array<i64: 1, 32>}, {pipeline_mode = #tpu.pipeline_mode<synchronous>, transform_indices = @transform_4, window_bounds = array<i64: 3, 96, 32>}, {pipeline_mode = #tpu.pipeline_mode<synchronous>, transform_indices = @transform_5, window_bounds = array<i64: 1, 32>}, {pipeline_mode = #tpu.pipeline_mode<synchronous>, transform_indices = @transform_6, window_bounds = array<i64: 1, 32>}, {transform_indices = @transform_7, window_bounds = array<i64: 1, 16, 16, 32>}]} {
    %cst = arith.constant 0.000000e+00 : bf16
    %0 = vector.broadcast %cst : bf16 to vector<1x16x96xbf16>
    %c0 = arith.constant 0 : index
    %c0_0 = arith.constant 0 : index
    %c0_1 = arith.constant 0 : index
    %1 = vector.load %arg9[%c0, %c0_0, %c0_1] : memref<18x16x96xbf16, #tpu.memory_space<vmem>>, vector<1x16x96xbf16>
    tpu.vector_store %arg9[%c0, %c0_0, %c0_1], %0 {strides = array<i32>} : memref<18x16x96xbf16, #tpu.memory_space<vmem>>, vector<1x16x96xbf16>,
    %cst_2 = arith.constant 0.000000e+00 : bf16
    %2 = vector.broadcast %cst_2 : bf16 to vector<1x16x96xbf16>
    %c17 = arith.constant 17 : index
    %c0_3 = arith.constant 0 : index
    %c0_4 = arith.constant 0 : index
    %3 = vector.load %arg9[%c17, %c0_3, %c0_4] : memref<18x16x96xbf16, #tpu.memory_space<vmem>>, vector<1x16x96xbf16>
    tpu.vector_store %arg9[%c17, %c0_3, %c0_4], %2 {strides = array<i32>} : memref<18x16x96xbf16, #tpu.memory_space<vmem>>, vector<1x16x96xbf16>,
    %cst_5 = arith.constant 0.000000e+00 : bf16
    %4 = vector.broadcast %cst_5 : bf16 to vector<18x1x96xbf16>
    %c0_6 = arith.constant 0 : index
    %c0_7 = arith.constant 0 : index
    %c0_8 = arith.constant 0 : index
    %5 = vector.load %arg9[%c0_6, %c0_7, %c0_8] : memref<18x16x96xbf16, #tpu.memory_space<vmem>>, vector<18x1x96xbf16>
    tpu.vector_store %arg9[%c0_6, %c0_7, %c0_8], %4 {strides = array<i32>} : memref<18x16x96xbf16, #tpu.memory_space<vmem>>, vector<18x1x96xbf16>,
    %cst_9 = arith.constant 0.000000e+00 : bf16
    %6 = vector.broadcast %cst_9 : bf16 to vector<18x1x96xbf16>
    %c0_10 = arith.constant 0 : index
    %c15 = arith.constant 15 : index
    %c0_11 = arith.constant 0 : index
    %7 = vector.load %arg9[%c0_10, %c15, %c0_11] : memref<18x16x96xbf16, #tpu.memory_space<vmem>>, vector<18x1x96xbf16>
    tpu.vector_store %arg9[%c0_10, %c15, %c0_11], %6 {strides = array<i32>} : memref<18x16x96xbf16, #tpu.memory_space<vmem>>, vector<18x1x96xbf16>,
    %c0_12 = arith.constant 0 : index
    %c0_13 = arith.constant 0 : index
    %c0_14 = arith.constant 0 : index
    %c0_15 = arith.constant 0 : index
    %8 = vector.load %arg1[%c0_12, %c0_13, %c0_14, %c0_15] : memref<1x16x16x32xbf16, #tpu.memory_space<vmem>>, vector<1x16x15x32xbf16>
    %9 = vector.shape_cast %8 : vector<1x16x15x32xbf16> to vector<16x15x32xbf16>
    %c1 = arith.constant 1 : index
    %c1_16 = arith.constant 1 : index
    %c0_17 = arith.constant 0 : index
    %10 = vector.load %arg9[%c1, %c1_16, %c0_17] : memref<18x16x96xbf16, #tpu.memory_space<vmem>>, vector<16x15x32xbf16>
    tpu.vector_store %arg9[%c1, %c1_16, %c0_17], %9 {strides = array<i32>} : memref<18x16x96xbf16, #tpu.memory_space<vmem>>, vector<16x15x32xbf16>,
    %c0_18 = arith.constant 0 : index
    %c0_19 = arith.constant 0 : index
    %c0_20 = arith.constant 0 : index
    %c0_21 = arith.constant 0 : index
    %11 = vector.load %arg1[%c0_18, %c0_19, %c0_20, %c0_21] : memref<1x16x16x32xbf16, #tpu.memory_space<vmem>>, vector<1x16x16x32xbf16>
    %12 = vector.shape_cast %11 : vector<1x16x16x32xbf16> to vector<16x16x32xbf16>
    %c1_22 = arith.constant 1 : index
    %c0_23 = arith.constant 0 : index
    %c32 = arith.constant 32 : index
    %13 = vector.load %arg9[%c1_22, %c0_23, %c32] : memref<18x16x96xbf16, #tpu.memory_space<vmem>>, vector<16x16x32xbf16>
    tpu.vector_store %arg9[%c1_22, %c0_23, %c32], %12 {strides = array<i32>} : memref<18x16x96xbf16, #tpu.memory_space<vmem>>, vector<16x16x32xbf16>,
    %c0_24 = arith.constant 0 : index
    %c0_25 = arith.constant 0 : index
    %c1_26 = arith.constant 1 : index
    %c0_27 = arith.constant 0 : index
    %14 = vector.load %arg1[%c0_24, %c0_25, %c1_26, %c0_27] : memref<1x16x16x32xbf16, #tpu.memory_space<vmem>>, vector<1x16x15x32xbf16>
    %15 = vector.shape_cast %14 : vector<1x16x15x32xbf16> to vector<16x15x32xbf16>
    %c1_28 = arith.constant 1 : index
    %c0_29 = arith.constant 0 : index
    %c64 = arith.constant 64 : index
    %16 = vector.load %arg9[%c1_28, %c0_29, %c64] : memref<18x16x96xbf16, #tpu.memory_space<vmem>>, vector<16x15x32xbf16>
    tpu.vector_store %arg9[%c1_28, %c0_29, %c64], %15 {strides = array<i32>} : memref<18x16x96xbf16, #tpu.memory_space<vmem>>, vector<16x15x32xbf16>,
    %c0_30 = arith.constant 0 : index
    %c0_31 = arith.constant 0 : index
    %c0_32 = arith.constant 0 : index
    %17 = vector.load %arg9[%c0_30, %c0_31, %c0_32] : memref<18x16x96xbf16, #tpu.memory_space<vmem>>, vector<16x16x96xbf16>
    %18 = vector.shape_cast %17 : vector<16x16x96xbf16> to vector<256x96xbf16>
    %c0_33 = arith.constant 0 : index
    %c0_34 = arith.constant 0 : index
    %c0_35 = arith.constant 0 : index
    %19 = vector.load %arg2[%c0_33, %c0_34, %c0_35] : memref<3x96x32xbf16, #tpu.memory_space<vmem>>, vector<1x96x32xbf16>
    %20 = vector.shape_cast %19 : vector<1x96x32xbf16> to vector<96x32xbf16>
    %cst_36 = arith.constant dense<0.000000e+00> : vector<256x32xf32>
    %21 = tpu.matmul %18, %20, %cst_36 {dimension_numbers = #tpu.dot_dimension_numbers<[1], [0], [0], [1], [0, 0, 1, 1], [], []>} : vector<256x96xbf16>, vector<96x32xbf16>, vector<256x32xf32> -> vector<256x32xf32>
    %c1_37 = arith.constant 1 : index
    %c0_38 = arith.constant 0 : index
    %c0_39 = arith.constant 0 : index
    %22 = vector.load %arg9[%c1_37, %c0_38, %c0_39] : memref<18x16x96xbf16, #tpu.memory_space<vmem>>, vector<16x16x96xbf16>
    %23 = vector.shape_cast %22 : vector<16x16x96xbf16> to vector<256x96xbf16>
    %c1_40 = arith.constant 1 : index
    %c0_41 = arith.constant 0 : index
    %c0_42 = arith.constant 0 : index
    %24 = vector.load %arg2[%c1_40, %c0_41, %c0_42] : memref<3x96x32xbf16, #tpu.memory_space<vmem>>, vector<1x96x32xbf16>
    %25 = vector.shape_cast %24 : vector<1x96x32xbf16> to vector<96x32xbf16>
    %cst_43 = arith.constant dense<0.000000e+00> : vector<256x32xf32>
    %26 = tpu.matmul %23, %25, %cst_43 {dimension_numbers = #tpu.dot_dimension_numbers<[1], [0], [0], [1], [0, 0, 1, 1], [], []>} : vector<256x96xbf16>, vector<96x32xbf16>, vector<256x32xf32> -> vector<256x32xf32>
    %27 = arith.addf %21, %26 : vector<256x32xf32>
    %c2 = arith.constant 2 : index
    %c0_44 = arith.constant 0 : index
    %c0_45 = arith.constant 0 : index
    %28 = vector.load %arg9[%c2, %c0_44, %c0_45] : memref<18x16x96xbf16, #tpu.memory_space<vmem>>, vector<16x16x96xbf16>
    %29 = vector.shape_cast %28 : vector<16x16x96xbf16> to vector<256x96xbf16>
    %c2_46 = arith.constant 2 : index
    %c0_47 = arith.constant 0 : index
    %c0_48 = arith.constant 0 : index
    %30 = vector.load %arg2[%c2_46, %c0_47, %c0_48] : memref<3x96x32xbf16, #tpu.memory_space<vmem>>, vector<1x96x32xbf16>
    %31 = vector.shape_cast %30 : vector<1x96x32xbf16> to vector<96x32xbf16>
    %cst_49 = arith.constant dense<0.000000e+00> : vector<256x32xf32>
    %32 = tpu.matmul %29, %31, %cst_49 {dimension_numbers = #tpu.dot_dimension_numbers<[1], [0], [0], [1], [0, 0, 1, 1], [], []>} : vector<256x96xbf16>, vector<96x32xbf16>, vector<256x32xf32> -> vector<256x32xf32>
    %33 = arith.addf %27, %32 : vector<256x32xf32>
    %c0_50 = arith.constant 0 : index
    %c0_51 = arith.constant 0 : index
    %34 = vector.load %arg3[%c0_50, %c0_51] : memref<1x32xf32, #tpu.memory_space<vmem>>, vector<1x32xf32>
    %35 = vector.broadcast %34 : vector<1x32xf32> to vector<256x32xf32>
    %36 = arith.mulf %33, %35 : vector<256x32xf32>
    %c0_52 = arith.constant 0 : index
    %c0_53 = arith.constant 0 : index
    %37 = vector.load %arg4[%c0_52, %c0_53] : memref<1x32xf32, #tpu.memory_space<vmem>>, vector<1x32xf32>
    %38 = vector.broadcast %37 : vector<1x32xf32> to vector<256x32xf32>
    %39 = arith.addf %36, %38 : vector<256x32xf32>
    %cst_54 = arith.constant 0.000000e+00 : f32
    %40 = vector.broadcast %cst_54 : f32 to vector<256x32xf32>
    %41 = arith.maximumf %39, %40 : vector<256x32xf32>
    %42 = vector.shape_cast %41 : vector<256x32xf32> to vector<16x16x32xf32>
    %43 = arith.truncf %42 : vector<16x16x32xf32> to vector<16x16x32xbf16>
    %cst_55 = arith.constant 0.000000e+00 : bf16
    %44 = vector.broadcast %cst_55 : bf16 to vector<1x16x96xbf16>
    %c0_56 = arith.constant 0 : index
    %c0_57 = arith.constant 0 : index
    %c0_58 = arith.constant 0 : index
    %45 = vector.load %arg10[%c0_56, %c0_57, %c0_58] : memref<18x16x96xbf16, #tpu.memory_space<vmem>>, vector<1x16x96xbf16>
    tpu.vector_store %arg10[%c0_56, %c0_57, %c0_58], %44 {strides = array<i32>} : memref<18x16x96xbf16, #tpu.memory_space<vmem>>, vector<1x16x96xbf16>,
    %cst_59 = arith.constant 0.000000e+00 : bf16
    %46 = vector.broadcast %cst_59 : bf16 to vector<1x16x96xbf16>
    %c17_60 = arith.constant 17 : index
    %c0_61 = arith.constant 0 : index
    %c0_62 = arith.constant 0 : index
    %47 = vector.load %arg10[%c17_60, %c0_61, %c0_62] : memref<18x16x96xbf16, #tpu.memory_space<vmem>>, vector<1x16x96xbf16>
    tpu.vector_store %arg10[%c17_60, %c0_61, %c0_62], %46 {strides = array<i32>} : memref<18x16x96xbf16, #tpu.memory_space<vmem>>, vector<1x16x96xbf16>,
    %cst_63 = arith.constant 0.000000e+00 : bf16
    %48 = vector.broadcast %cst_63 : bf16 to vector<18x1x96xbf16>
    %c0_64 = arith.constant 0 : index
    %c0_65 = arith.constant 0 : index
    %c0_66 = arith.constant 0 : index
    %49 = vector.load %arg10[%c0_64, %c0_65, %c0_66] : memref<18x16x96xbf16, #tpu.memory_space<vmem>>, vector<18x1x96xbf16>
    tpu.vector_store %arg10[%c0_64, %c0_65, %c0_66], %48 {strides = array<i32>} : memref<18x16x96xbf16, #tpu.memory_space<vmem>>, vector<18x1x96xbf16>,
    %cst_67 = arith.constant 0.000000e+00 : bf16
    %50 = vector.broadcast %cst_67 : bf16 to vector<18x1x96xbf16>
    %c0_68 = arith.constant 0 : index
    %c15_69 = arith.constant 15 : index
    %c0_70 = arith.constant 0 : index
    %51 = vector.load %arg10[%c0_68, %c15_69, %c0_70] : memref<18x16x96xbf16, #tpu.memory_space<vmem>>, vector<18x1x96xbf16>
    tpu.vector_store %arg10[%c0_68, %c15_69, %c0_70], %50 {strides = array<i32>} : memref<18x16x96xbf16, #tpu.memory_space<vmem>>, vector<18x1x96xbf16>,
    %52 = vector.extract_strided_slice %43 {offsets = [0, 0, 0], sizes = [16, 15, 32], strides = [1, 1, 1]} : vector<16x16x32xbf16> to vector<16x15x32xbf16>
    %c1_71 = arith.constant 1 : index
    %c1_72 = arith.constant 1 : index
    %c0_73 = arith.constant 0 : index
    %53 = vector.load %arg10[%c1_71, %c1_72, %c0_73] : memref<18x16x96xbf16, #tpu.memory_space<vmem>>, vector<16x15x32xbf16>
    tpu.vector_store %arg10[%c1_71, %c1_72, %c0_73], %52 {strides = array<i32>} : memref<18x16x96xbf16, #tpu.memory_space<vmem>>, vector<16x15x32xbf16>,
    %c1_74 = arith.constant 1 : index
    %c0_75 = arith.constant 0 : index
    %c32_76 = arith.constant 32 : index
    %54 = vector.load %arg10[%c1_74, %c0_75, %c32_76] : memref<18x16x96xbf16, #tpu.memory_space<vmem>>, vector<16x16x32xbf16>
    tpu.vector_store %arg10[%c1_74, %c0_75, %c32_76], %43 {strides = array<i32>} : memref<18x16x96xbf16, #tpu.memory_space<vmem>>, vector<16x16x32xbf16>,
    %55 = vector.extract_strided_slice %43 {offsets = [0, 1, 0], sizes = [16, 15, 32], strides = [1, 1, 1]} : vector<16x16x32xbf16> to vector<16x15x32xbf16>
    %c1_77 = arith.constant 1 : index
    %c0_78 = arith.constant 0 : index
    %c64_79 = arith.constant 64 : index
    %56 = vector.load %arg10[%c1_77, %c0_78, %c64_79] : memref<18x16x96xbf16, #tpu.memory_space<vmem>>, vector<16x15x32xbf16>
    tpu.vector_store %arg10[%c1_77, %c0_78, %c64_79], %55 {strides = array<i32>} : memref<18x16x96xbf16, #tpu.memory_space<vmem>>, vector<16x15x32xbf16>,
    %c0_80 = arith.constant 0 : index
    %c0_81 = arith.constant 0 : index
    %c0_82 = arith.constant 0 : index
    %57 = vector.load %arg10[%c0_80, %c0_81, %c0_82] : memref<18x16x96xbf16, #tpu.memory_space<vmem>>, vector<16x16x96xbf16>
    %58 = vector.shape_cast %57 : vector<16x16x96xbf16> to vector<256x96xbf16>
    %c0_83 = arith.constant 0 : index
    %c0_84 = arith.constant 0 : index
    %c0_85 = arith.constant 0 : index
    %59 = vector.load %arg5[%c0_83, %c0_84, %c0_85] : memref<3x96x32xbf16, #tpu.memory_space<vmem>>, vector<1x96x32xbf16>
    %60 = vector.shape_cast %59 : vector<1x96x32xbf16> to vector<96x32xbf16>
    %cst_86 = arith.constant dense<0.000000e+00> : vector<256x32xf32>
    %61 = tpu.matmul %58, %60, %cst_86 {dimension_numbers = #tpu.dot_dimension_numbers<[1], [0], [0], [1], [0, 0, 1, 1], [], []>} : vector<256x96xbf16>, vector<96x32xbf16>, vector<256x32xf32> -> vector<256x32xf32>
    %c1_87 = arith.constant 1 : index
    %c0_88 = arith.constant 0 : index
    %c0_89 = arith.constant 0 : index
    %62 = vector.load %arg10[%c1_87, %c0_88, %c0_89] : memref<18x16x96xbf16, #tpu.memory_space<vmem>>, vector<16x16x96xbf16>
    %63 = vector.shape_cast %62 : vector<16x16x96xbf16> to vector<256x96xbf16>
    %c1_90 = arith.constant 1 : index
    %c0_91 = arith.constant 0 : index
    %c0_92 = arith.constant 0 : index
    %64 = vector.load %arg5[%c1_90, %c0_91, %c0_92] : memref<3x96x32xbf16, #tpu.memory_space<vmem>>, vector<1x96x32xbf16>
    %65 = vector.shape_cast %64 : vector<1x96x32xbf16> to vector<96x32xbf16>
    %cst_93 = arith.constant dense<0.000000e+00> : vector<256x32xf32>
    %66 = tpu.matmul %63, %65, %cst_93 {dimension_numbers = #tpu.dot_dimension_numbers<[1], [0], [0], [1], [0, 0, 1, 1], [], []>} : vector<256x96xbf16>, vector<96x32xbf16>, vector<256x32xf32> -> vector<256x32xf32>
    %67 = arith.addf %61, %66 : vector<256x32xf32>
    %c2_94 = arith.constant 2 : index
    %c0_95 = arith.constant 0 : index
    %c0_96 = arith.constant 0 : index
    %68 = vector.load %arg10[%c2_94, %c0_95, %c0_96] : memref<18x16x96xbf16, #tpu.memory_space<vmem>>, vector<16x16x96xbf16>
    %69 = vector.shape_cast %68 : vector<16x16x96xbf16> to vector<256x96xbf16>
    %c2_97 = arith.constant 2 : index
    %c0_98 = arith.constant 0 : index
    %c0_99 = arith.constant 0 : index
    %70 = vector.load %arg5[%c2_97, %c0_98, %c0_99] : memref<3x96x32xbf16, #tpu.memory_space<vmem>>, vector<1x96x32xbf16>
    %71 = vector.shape_cast %70 : vector<1x96x32xbf16> to vector<96x32xbf16>
    %cst_100 = arith.constant dense<0.000000e+00> : vector<256x32xf32>
    %72 = tpu.matmul %69, %71, %cst_100 {dimension_numbers = #tpu.dot_dimension_numbers<[1], [0], [0], [1], [0, 0, 1, 1], [], []>} : vector<256x96xbf16>, vector<96x32xbf16>, vector<256x32xf32> -> vector<256x32xf32>
    %73 = arith.addf %67, %72 : vector<256x32xf32>
    %c0_101 = arith.constant 0 : index
    %c0_102 = arith.constant 0 : index
    %74 = vector.load %arg6[%c0_101, %c0_102] : memref<1x32xf32, #tpu.memory_space<vmem>>, vector<1x32xf32>
    %75 = vector.broadcast %74 : vector<1x32xf32> to vector<256x32xf32>
    %76 = arith.mulf %73, %75 : vector<256x32xf32>
    %c0_103 = arith.constant 0 : index
    %c0_104 = arith.constant 0 : index
    %77 = vector.load %arg7[%c0_103, %c0_104] : memref<1x32xf32, #tpu.memory_space<vmem>>, vector<1x32xf32>
    %78 = vector.broadcast %77 : vector<1x32xf32> to vector<256x32xf32>
    %79 = arith.addf %76, %78 : vector<256x32xf32>
    %c1_105 = arith.constant 1 : index
    %c0_106 = arith.constant 0 : index
    %c32_107 = arith.constant 32 : index
    %80 = vector.load %arg9[%c1_105, %c0_106, %c32_107] : memref<18x16x96xbf16, #tpu.memory_space<vmem>>, vector<16x16x32xbf16>
    %81 = vector.shape_cast %80 : vector<16x16x32xbf16> to vector<256x32xbf16>
    %82 = arith.extf %81 : vector<256x32xbf16> to vector<256x32xf32>
    %83 = arith.addf %79, %82 : vector<256x32xf32>
    %cst_108 = arith.constant 0.000000e+00 : f32
    %84 = vector.broadcast %cst_108 : f32 to vector<256x32xf32>
    %85 = arith.maximumf %83, %84 : vector<256x32xf32>
    %86 = vector.shape_cast %85 : vector<256x32xf32> to vector<16x16x32xf32>
    %87 = arith.truncf %86 : vector<16x16x32xf32> to vector<16x16x32xbf16>
    %c0_109 = arith.constant 0 : index
    %c0_110 = arith.constant 0 : index
    %c0_111 = arith.constant 0 : index
    %c0_112 = arith.constant 0 : index
    %88 = vector.load %arg8[%c0_109, %c0_110, %c0_111, %c0_112] : memref<1x16x16x32xbf16, #tpu.memory_space<vmem>>, vector<1x16x16x32xbf16>
    %89 = vector.shape_cast %88 : vector<1x16x16x32xbf16> to vector<16x16x32xbf16>
    %90 = vector.shape_cast %87 : vector<16x16x32xbf16> to vector<1x16x16x32xbf16>
    tpu.vector_store %arg8[%c0_109, %c0_110, %c0_111, %c0_112], %90 {strides = array<i32>} : memref<1x16x16x32xbf16, #tpu.memory_space<vmem>>, vector<1x16x16x32xbf16>,
    return
  }
  func.func @transform_0(%arg0: i32) -> (i32, i32, i32, i32) {
    %c0_i32 = arith.constant 0 : i32
    %c0_i32_0 = arith.constant 0 : i32
    %c0_i32_1 = arith.constant 0 : i32
    %c0_i32_2 = arith.constant 0 : i32
    return %arg0, %c0_i32, %c0_i32_0, %c0_i32_1 : i32, i32, i32, i32
  }
  func.func @transform_1(%arg0: i32) -> (i32, i32, i32) {
    %c0_i32 = arith.constant 0 : i32
    %c0_i32_0 = arith.constant 0 : i32
    %c0_i32_1 = arith.constant 0 : i32
    %c0_i32_2 = arith.constant 0 : i32
    return %c0_i32, %c0_i32_0, %c0_i32_1 : i32, i32, i32
  }
  func.func @transform_2(%arg0: i32) -> (i32, i32) {
    %c0_i32 = arith.constant 0 : i32
    %c0_i32_0 = arith.constant 0 : i32
    %c0_i32_1 = arith.constant 0 : i32
    return %c0_i32, %c0_i32_0 : i32, i32
  }
  func.func @transform_3(%arg0: i32) -> (i32, i32) {
    %c0_i32 = arith.constant 0 : i32
    %c0_i32_0 = arith.constant 0 : i32
    %c0_i32_1 = arith.constant 0 : i32
    return %c0_i32, %c0_i32_0 : i32, i32
  }
  func.func @transform_4(%arg0: i32) -> (i32, i32, i32) {
    %c0_i32 = arith.constant 0 : i32
    %c0_i32_0 = arith.constant 0 : i32
    %c0_i32_1 = arith.constant 0 : i32
    %c0_i32_2 = arith.constant 0 : i32
    return %c0_i32, %c0_i32_0, %c0_i32_1 : i32, i32, i32
  }
  func.func @transform_5(%arg0: i32) -> (i32, i32) {
    %c0_i32 = arith.constant 0 : i32
    %c0_i32_0 = arith.constant 0 : i32
    %c0_i32_1 = arith.constant 0 : i32
    return %c0_i32, %c0_i32_0 : i32, i32
  }
  func.func @transform_6(%arg0: i32) -> (i32, i32) {
    %c0_i32 = arith.constant 0 : i32
    %c0_i32_0 = arith.constant 0 : i32
    %c0_i32_1 = arith.constant 0 : i32
    return %c0_i32, %c0_i32_0 : i32, i32
  }
  func.func @transform_7(%arg0: i32) -> (i32, i32, i32, i32) {
    %c0_i32 = arith.constant 0 : i32
    %c0_i32_0 = arith.constant 0 : i32
    %c0_i32_1 = arith.constant 0 : i32
    %c0_i32_2 = arith.constant 0 : i32
    return %arg0, %c0_i32, %c0_i32_0, %c0_i32_1 : i32, i32, i32, i32
  }
}

</mosaic_0001>

<llo_original>
// kernel: tpu_custom_call.1
$region0: #{tpu_custom_call.1}
  #allocation0 [shape = 'u32[]', space=smem, size = 0x4, offset = 0x4, fixed_abs, tag = 'smem constant byte address 0x4 - core index']
  #allocation1 [shape = 'u32[144,128]{1,0:T(1,128)}', space=vmem, size = 0x12000, scoped, tag = 'internal scratch']
  #allocation2 [shape = 'bf16[18,16,96]{2,1,0:T(8,128)(2,1)}', space=vmem, size = 0x12000, scoped, tag = 'scratch operand']
  #allocation3 [shape = 'bf16[18,16,96]{2,1,0:T(8,128)(2,1)}', space=vmem, size = 0x12000, scoped, tag = 'scratch operand']
  %s0 = inlined_call_operand.hbm [shape: bf16[4,16,16,32], index: 0, kind: input, shape index: {}]
  %s1 = inlined_call_operand.vmem [shape: bf16[3,96,32], index: 1, kind: input, shape index: {}]
  %s2 = inlined_call_operand.vmem [shape: f32[1,32], index: 2, kind: input, shape index: {}]
  %s3 = inlined_call_operand.vmem [shape: f32[1,32], index: 3, kind: input, shape index: {}]
  %s4 = inlined_call_operand.vmem [shape: bf16[3,96,32], index: 4, kind: input, shape index: {}]
  %s5 = inlined_call_operand.vmem [shape: f32[1,32], index: 5, kind: input, shape index: {}]
  %s6 = inlined_call_operand.vmem [shape: f32[1,32], index: 6, kind: input, shape index: {}]
  %s7 = inlined_call_operand.hbm [shape: bf16[4,16,16,32], index: 7, kind: output, shape index: {}]
  %s8 = sld [smem:[#allocation0]]
  $region65: #{tpu_custom_call.1} parent=0
    _
  %s10 = ssub.s32 1, %s8
  %s11 = scalar_select 0, %s10, %s8
  $region1: #{tpu_custom_call.1} parent=0
    #allocation4 [shape = 'u8[131072]{0}', space=vmem, size = 0x20000, scoped, tag = 'input window, operand 0']
    #allocation5 [shape = 's32[2]{0}', space=sflag, size = 0x8, scoped, tag = 'scoped memory for tpu_custom_call.1']
    #allocation6 [shape = 's32[2]{0}', space=sflag, size = 0x8, scoped, tag = 'scoped memory for tpu_custom_call.1']
    #allocation7 [shape = 'u8[131072]{0}', space=vmem, size = 0x20000, scoped, tag = 'output window, operand 0']
    %12 = vsyncpa [#allocation5], 0
    %s13 = scalar_lea.sflag [#allocation5], 1
    %14 = vsyncpa %s13, 0
    %15 = vsyncpa [#allocation6], 0
    %s16 = scalar_lea.sflag [#allocation6], 1
    %17 = vsyncpa %s16, 0
    loop: start=0, step=1, limit=6
    $region2: #{tpu_custom_call.1} parent=1 // loop_pre_header
      _
    $region3: #{tpu_custom_call.1} parent=1 // loop_header
      %s19 = sphi 0, %s23
      %p20 = scmp.ge.s32.totalorder %s19, 6
      %s29 = sphi 0, %s31
      %s32 = sphi 0, %s29
      %s33 = sphi 0, %s32
      %s49 = sphi 0, %s33
      %s53 = sphi 0, %s53
      %s55 = sphi 0, %s53
      %s56 = sphi 0, %s55
      %s70 = sphi 0, %s56
      %s74 = sphi 0, %s74
      %s76 = sphi 0, %s74
      %s77 = sphi 0, %s76
      %s91 = sphi 0, %s77
      %s95 = sphi 0, %s95
      %s97 = sphi 0, %s95
      %s98 = sphi 0, %s97
      %s112 = sphi 0, %s98
      %s116 = sphi 0, %s116
      %s118 = sphi 0, %s116
      %s119 = sphi 0, %s118
      %s133 = sphi 0, %s119
      %s137 = sphi 0, %s137
      %s139 = sphi 0, %s137
      %s140 = sphi 0, %s139
      %s154 = sphi 0, %s140
      %s158 = sphi 0, %s158
      %s160 = sphi 0, %s158
      %s161 = sphi 0, %s160
      %s175 = sphi 0, %s161
      %s181 = sphi 0, %s183
      %s184 = sphi 0, %s181
      %s185 = sphi 0, %s184
      %s201 = sphi 0, %s185
    $region4: #{tpu_custom_call.1} parent=1 // loop_header_branch
      %22 = sbr.rel (%p20) target = $region8
    $region5: #{tpu_custom_call.1} parent=1 // loop_body
      %s24 = ssub.s32 %s19, 1
      %s25 = ssub.s32 %s19, 2
      %s26 = sadd.s32 %s19, 1
      %s27 = ssub.s32 %s19, %s26
      %p28 = scmp.eq.s32.totalorder %s27, 0
      %s30 = sadd.s32 %s29, 1
      %s31 = scalar_select %p28, %s29, %s30
      %p34 = pneg %p28
      %p35 = scmp.eq.s32.totalorder %s19, 3
      %p36 = por %p34, %p35
      %p37 = scmp.ne.s32.totalorder %s29, %s32
      %p38 = scmp.eq.s32.totalorder %s19, 0
      %p39 = por %p37, %p38
      %p40 = scmp.ne.s32.totalorder %s29, %s32
      %p41 = scmp.eq.s32.totalorder %s24, 3
      %p42 = por %p40, %p41
      %p43 = scmp.ne.s32.totalorder %s32, %s33
      %p44 = scmp.eq.s32.totalorder %s24, 0
      %p45 = por %p43, %p44
      %p46 = scmp.ne.s32.totalorder %s32, %s33
      %p47 = scmp.eq.s32.totalorder %s25, 3
      %p48 = por %p46, %p47
      %p50 = scmp.ne.s32.totalorder %s33, %s49
      %p51 = scmp.eq.s32.totalorder %s25, 0
      %p52 = por %p50, %p51
      %s54 = sadd.s32 %s53, 1
      %p57 = scmp.eq.s32.totalorder %s19, 3
      %p58 = scmp.ne.s32.totalorder %s53, %s55
      %p59 = scmp.eq.s32.totalorder %s19, 0
      %p60 = por %p58, %p59
      %p61 = scmp.ne.s32.totalorder %s53, %s55
      %p62 = scmp.eq.s32.totalorder %s24, 3
      %p63 = por %p61, %p62
      %p64 = scmp.ne.s32.totalorder %s55, %s56
      %p65 = scmp.eq.s32.totalorder %s24, 0
      %p66 = por %p64, %p65
      %p67 = scmp.ne.s32.totalorder %s55, %s56
      %p68 = scmp.eq.s32.totalorder %s25, 3
      %p69 = por %p67, %p68
      %p71 = scmp.ne.s32.totalorder %s56, %s70
      %p72 = scmp.eq.s32.totalorder %s25, 0
      %p73 = por %p71, %p72
      %s75 = sadd.s32 %s74, 1
      %p78 = scmp.eq.s32.totalorder %s19, 3
      %p79 = scmp.ne.s32.totalorder %s74, %s76
      %p80 = scmp.eq.s32.totalorder %s19, 0
      %p81 = por %p79, %p80
      %p82 = scmp.ne.s32.totalorder %s74, %s76
      %p83 = scmp.eq.s32.totalorder %s24, 3
      %p84 = por %p82, %p83
      %p85 = scmp.ne.s32.totalorder %s76, %s77
      %p86 = scmp.eq.s32.totalorder %s24, 0
      %p87 = por %p85, %p86
      %p88 = scmp.ne.s32.totalorder %s76, %s77
      %p89 = scmp.eq.s32.totalorder %s25, 3
      %p90 = por %p88, %p89
      %p92 = scmp.ne.s32.totalorder %s77, %s91
      %p93 = scmp.eq.s32.totalorder %s25, 0
      %p94 = por %p92, %p93
      %s96 = sadd.s32 %s95, 1
      %p99 = scmp.eq.s32.totalorder %s19, 3
      %p100 = scmp.ne.s32.totalorder %s95, %s97
      %p101 = scmp.eq.s32.totalorder %s19, 0
      %p102 = por %p100, %p101
      %p103 = scmp.ne.s32.totalorder %s95, %s97
      %p104 = scmp.eq.s32.totalorder %s24, 3
      %p105 = por %p103, %p104
      %p106 = scmp.ne.s32.totalorder %s97, %s98
      %p107 = scmp.eq.s32.totalorder %s24, 0
      %p108 = por %p106, %p107
      %p109 = scmp.ne.s32.totalorder %s97, %s98
      %p110 = scmp.eq.s32.totalorder %s25, 3
      %p111 = por %p109, %p110
      %p113 = scmp.ne.s32.totalorder %s98, %s112
      %p114 = scmp.eq.s32.totalorder %s25, 0
      %p115 = por %p113, %p114
      %s117 = sadd.s32 %s116, 1
      %p120 = scmp.eq.s32.totalorder %s19, 3
      %p121 = scmp.ne.s32.totalorder %s116, %s118
      %p122 = scmp.eq.s32.totalorder %s19, 0
      %p123 = por %p121, %p122
      %p124 = scmp.ne.s32.totalorder %s116, %s118
      %p125 = scmp.eq.s32.totalorder %s24, 3
      %p126 = por %p124, %p125
      %p127 = scmp.ne.s32.totalorder %s118, %s119
      %p128 = scmp.eq.s32.totalorder %s24, 0
      %p129 = por %p127, %p128
      %p130 = scmp.ne.s32.totalorder %s118, %s119
      %p131 = scmp.eq.s32.totalorder %s25, 3
      %p132 = por %p130, %p131
      %p134 = scmp.ne.s32.totalorder %s119, %s133
      %p135 = scmp.eq.s32.totalorder %s25, 0
      %p136 = por %p134, %p135
      %s138 = sadd.s32 %s137, 1
      %p141 = scmp.eq.s32.totalorder %s19, 3
      %p142 = scmp.ne.s32.totalorder %s137, %s139
      %p143 = scmp.eq.s32.totalorder %s19, 0
      %p144 = por %p142, %p143
      %p145 = scmp.ne.s32.totalorder %s137, %s139
      %p146 = scmp.eq.s32.totalorder %s24, 3
      %p147 = por %p145, %p146
      %p148 = scmp.ne.s32.totalorder %s139, %s140
      %p149 = scmp.eq.s32.totalorder %s24, 0
      %p150 = por %p148, %p149
      %p151 = scmp.ne.s32.totalorder %s139, %s140
      %p152 = scmp.eq.s32.totalorder %s25, 3
      %p153 = por %p151, %p152
      %p155 = scmp.ne.s32.totalorder %s140, %s154
      %p156 = scmp.eq.s32.totalorder %s25, 0
      %p157 = por %p155, %p156
      %s159 = sadd.s32 %s158, 1
      %p162 = scmp.eq.s32.totalorder %s19, 3
      %p163 = scmp.ne.s32.totalorder %s158, %s160
      %p164 = scmp.eq.s32.totalorder %s19, 0
      %p165 = por %p163, %p164
      %p166 = scmp.ne.s32.totalorder %s158, %s160
      %p167 = scmp.eq.s32.totalorder %s24, 3
      %p168 = por %p166, %p167
      %p169 = scmp.ne.s32.totalorder %s160, %s161
      %p170 = scmp.eq.s32.totalorder %s24, 0
      %p171 = por %p169, %p170
      %p172 = scmp.ne.s32.totalorder %s160, %s161
      %p173 = scmp.eq.s32.totalorder %s25, 3
      %p174 = por %p172, %p173
      %p176 = scmp.ne.s32.totalorder %s161, %s175
      %p177 = scmp.eq.s32.totalorder %s25, 0
      %p178 = por %p176, %p177
      %s179 = ssub.s32 %s19, %s26
      %p180 = scmp.eq.s32.totalorder %s179, 0
      %s182 = sadd.s32 %s181, 1
      %s183 = scalar_select %p180, %s181, %s182
      %p186 = pneg %p180
      %p187 = scmp.eq.s32.totalorder %s19, 3
      %p188 = por %p186, %p187
      %p189 = scmp.ne.s32.totalorder %s181, %s184
      %p190 = scmp.eq.s32.totalorder %s19, 0
      %p191 = por %p189, %p190
      %p192 = scmp.ne.s32.totalorder %s181, %s184
      %p193 = scmp.eq.s32.totalorder %s24, 3
      %p194 = por %p192, %p193
      %p195 = scmp.ne.s32.totalorder %s184, %s185
      %p196 = scmp.eq.s32.totalorder %s24, 0
      %p197 = por %p195, %p196
      %p198 = scmp.ne.s32.totalorder %s184, %s185
      %p199 = scmp.eq.s32.totalorder %s25, 3
      %p200 = por %p198, %p199
      %p202 = scmp.ne.s32.totalorder %s185, %s201
      %p203 = scmp.eq.s32.totalorder %s25, 0
      %p204 = por %p202, %p203
      %p205 = scmp.le.s32.totalorder 1, %s19
      %p206 = scmp.lt.s32.totalorder %s19, 5
      %p207 = pnand %p205, %p206
      %p208 = pneg %p207
      // Predicated region
      $region9: #{tpu_custom_call.1} parent=5 // pred_check
        _
      $region10: #{tpu_custom_call.1} parent=5 // pred_check_branch
        %210 = sbr.rel (%p207) target = $region12
      $region11: #{tpu_custom_call.1} parent=5 // pred_region
        %s211 = ssub.s32 %s19, 1
        // Predicated region
        $region13: #{tpu_custom_call.1} parent=11 // pred_check
          %p212 = pneg %p66
        $region14: #{tpu_custom_call.1} parent=11 // pred_check_branch
          %214 = sbr.rel (%p212) target = $region16
        $region15: #{tpu_custom_call.1} parent=11 // pred_region
          _
        $region16: #{tpu_custom_call.1} parent=11 // pred_fallthru
          _
        // Predicated region
        $region17: #{tpu_custom_call.1} parent=11 // pred_check
          %p215 = pneg %p87
        $region18: #{tpu_custom_call.1} parent=11 // pred_check_branch
          %217 = sbr.rel (%p215) target = $region20
        $region19: #{tpu_custom_call.1} parent=11 // pred_region
          _
        $region20: #{tpu_custom_call.1} parent=11 // pred_fallthru
          _
        // Predicated region
        $region21: #{tpu_custom_call.1} parent=11 // pred_check
          %p218 = pneg %p108
        $region22: #{tpu_custom_call.1} parent=11 // pred_check_branch
          %220 = sbr.rel (%p218) target = $region24
        $region23: #{tpu_custom_call.1} parent=11 // pred_region
          _
        $region24: #{tpu_custom_call.1} parent=11 // pred_fallthru
          _
        // Predicated region
        $region25: #{tpu_custom_call.1} parent=11 // pred_check
          %p221 = pneg %p129
        $region26: #{tpu_custom_call.1} parent=11 // pred_check_branch
          %223 = sbr.rel (%p221) target = $region28
        $region27: #{tpu_custom_call.1} parent=11 // pred_region
          _
        $region28: #{tpu_custom_call.1} parent=11 // pred_fallthru
          _
        // Predicated region
        $region29: #{tpu_custom_call.1} parent=11 // pred_check
          %p224 = pneg %p150
        $region30: #{tpu_custom_call.1} parent=11 // pred_check_branch
          %226 = sbr.rel (%p224) target = $region32
        $region31: #{tpu_custom_call.1} parent=11 // pred_region
          _
        $region32: #{tpu_custom_call.1} parent=11 // pred_fallthru
          _
        // Predicated region
        $region33: #{tpu_custom_call.1} parent=11 // pred_check
          %p227 = pneg %p171
        $region34: #{tpu_custom_call.1} parent=11 // pred_check_branch
          %229 = sbr.rel (%p227) target = $region36
        $region35: #{tpu_custom_call.1} parent=11 // pred_region
          _
        $region36: #{tpu_custom_call.1} parent=11 // pred_fallthru
          _
      $region12: #{tpu_custom_call.1} parent=5 // pred_fallthru
        _
      %p230 = scmp.lt.s32.totalorder %s19, 4
      // Predicated region
      $region37: #{tpu_custom_call.1} parent=5 // pred_check
        %p231 = pneg %p230
      $region38: #{tpu_custom_call.1} parent=5 // pred_check_branch
        %233 = sbr.rel (%p231) target = $region40
      $region39: #{tpu_custom_call.1} parent=5 // pred_region
        // Predicated region
        $region41: #{tpu_custom_call.1} parent=39 // pred_check
          %p234 = pneg %p39
        $region42: #{tpu_custom_call.1} parent=39 // pred_check_branch
          %236 = sbr.rel (%p234) target = $region44
        $region43: #{tpu_custom_call.1} parent=39 // pred_region
          %s237 = sand.u32 %s29, 1
          %s238 = scalar_lea.sflag [#allocation5], %s237
          %s239 = sand.u32 %s29, 1
          %s240 = smul.addr %s239, 128
          %s241 = scalar_lea.vmem [#allocation4], %s240
          %s243 = ssub.s32 2048, 2048
          %244 = vsyncadd %s238, %s243
          %s245 = smul.addr %s19, 32
          %s246 = smul.addr %s245, 64
          %s247 = scalar_lea.hbm %s0, %s246
          %s248 = sshll.u32 %s241, 4
          %s249 = int_to_ptr.vmem [resolvable:$true] %s248
          %254 = dma.hbm_to_vmem [thread:$0]  %s247, 2048, %s249, %s238, 64, 64, 4
        $region44: #{tpu_custom_call.1} parent=39 // pred_fallthru
          _
      $region40: #{tpu_custom_call.1} parent=5 // pred_fallthru
        _
      %p255 = scmp.le.s32.totalorder 1, %s19
      %p256 = scmp.lt.s32.totalorder %s19, 5
      %p257 = pnand %p255, %p256
      %p258 = pneg %p257
      // Predicated region
      $region45: #{tpu_custom_call.1} parent=5 // pred_check
        _
      $region46: #{tpu_custom_call.1} parent=5 // pred_check_branch
        %260 = sbr.rel (%p257) target = $region48
      $region47: #{tpu_custom_call.1} parent=5 // pred_region
        %s261 = ssub.s32 %s19, 1
        %s262 = sand.u32 %s32, 1
        %s263 = scalar_lea.sflag [#allocation5], %s262
        %s264 = sand.u32 %s32, 1
        %s265 = smul.addr %s264, 128
        %s266 = scalar_lea.vmem [#allocation4], %s265
        // Predicated region
        $region49: #{tpu_custom_call.1} parent=47 // pred_check
          %p267 = pneg %p45
        $region50: #{tpu_custom_call.1} parent=47 // pred_check_branch
          %269 = sbr.rel (%p267) target = $region52
        $region51: #{tpu_custom_call.1} parent=47 // pred_region
          %270 = dma.done %s263, 2048
        $region52: #{tpu_custom_call.1} parent=47 // pred_fallthru
          _
        %s271 = sand.u32 %s32, 1
        %s272 = scalar_lea.sflag [#allocation5], %s271
        %s273 = sand.u32 %s32, 1
        %s274 = smul.addr %s273, 128
        %s275 = scalar_lea.vmem [#allocation4], %s274
        %p276 = pneg %p45
        %p277 = pneg %p42
        %p278 = pneg %p66
        %p279 = pneg %p63
        %p280 = pneg %p87
        %p281 = pneg %p84
        %p282 = pneg %p108
        %p283 = pneg %p105
        %p284 = pneg %p129
        %p285 = pneg %p126
        %p286 = pneg %p150
        %p287 = pneg %p147
        %p288 = pneg %p171
        %p289 = pneg %p168
        %p290 = pneg %p197
        %p291 = pneg %p194
        %s292 = sand.u32 %s184, 1
        %s293 = scalar_lea.sflag [#allocation6], %s292
        %s294 = sand.u32 %s184, 1
        %s295 = smul.addr %s294, 128
        %s296 = scalar_lea.vmem [#allocation7], %s295
        %vm298 = vcmask 781312
        %299 = vst.msk [vmem:[#allocation2] sm:$0xf] %vm298, 0
        %300 = vst.msk [vmem:[#allocation2 + $0x4] sm:$0xf] %vm298, 0
        %s301 = scalar_lea.vmem [#allocation2], 136
        %302 = vst.msk [vmem:[%s301] sm:$0xf] %vm298, 0
        %303 = vst.msk [vmem:[%s301 + $0x4] sm:$0xf] %vm298, 0
        %vm304 = vcmask 778240
        %vm305 = vsmask.f32 256
        %vm306 = vmand %vm304, %vm305
        %v307 = vld [vmem:[#allocation2] sm:$0x1]
        %v308 = vsel %vm306, 0, %v307
        %309 = vst [vmem:[#allocation2] sm:$0x1] %v308
        %v310 = vld [vmem:[#allocation2 + $0x8] sm:$0x1]
        %v311 = vsel %vm306, 0, %v310
        %312 = vst [vmem:[#allocation2 + $0x8] sm:$0x1] %v311
        %v313 = vld [vmem:[#allocation2 + $0x10] sm:$0x1]
        %v314 = vsel %vm306, 0, %v313
        %315 = vst [vmem:[#allocation2 + $0x10] sm:$0x1] %v314
        %v316 = vld [vmem:[#allocation2 + $0x18] sm:$0x1]
        %v317 = vsel %vm306, 0, %v316
        %318 = vst [vmem:[#allocation2 + $0x18] sm:$0x1] %v317
        %v319 = vld [vmem:[#allocation2 + $0x20] sm:$0x1]
        %v320 = vsel %vm306, 0, %v319
        %321 = vst [vmem:[#allocation2 + $0x20] sm:$0x1] %v320
        %v322 = vld [vmem:[#allocation2 + $0x28] sm:$0x1]
        %v323 = vsel %vm306, 0, %v322
        %324 = vst [vmem:[#allocation2 + $0x28] sm:$0x1] %v323
        %v325 = vld [vmem:[#allocation2 + $0x30] sm:$0x1]
        %v326 = vsel %vm306, 0, %v325
        %327 = vst [vmem:[#allocation2 + $0x30] sm:$0x1] %v326
        %v328 = vld [vmem:[#allocation2 + $0x38] sm:$0x1]
        %v329 = vsel %vm306, 0, %v328
        %330 = vst [vmem:[#allocation2 + $0x38] sm:$0x1] %v329
        %v331 = vld [vmem:[#allocation2 + $0x40] sm:$0x1]
        %v332 = vsel %vm306, 0, %v331
        %333 = vst [vmem:[#allocation2 + $0x40] sm:$0x1] %v332
        %v334 = vld [vmem:[#allocation2 + $0x48] sm:$0x1]
        %v335 = vsel %vm306, 0, %v334
        %336 = vst [vmem:[#allocation2 + $0x48] sm:$0x1] %v335
        %v337 = vld [vmem:[#allocation2 + $0x50] sm:$0x1]
        %v338 = vsel %vm306, 0, %v337
        %339 = vst [vmem:[#allocation2 + $0x50] sm:$0x1] %v338
        %v340 = vld [vmem:[#allocation2 + $0x58] sm:$0x1]
        %v341 = vsel %vm306, 0, %v340
        %342 = vst [vmem:[#allocation2 + $0x58] sm:$0x1] %v341
        %v343 = vld [vmem:[#allocation2 + $0x60] sm:$0x1]
        %v344 = vsel %vm306, 0, %v343
        %345 = vst [vmem:[#allocation2 + $0x60] sm:$0x1] %v344
        %v346 = vld [vmem:[#allocation2 + $0x68] sm:$0x1]
        %v347 = vsel %vm306, 0, %v346
        %348 = vst [vmem:[#allocation2 + $0x68] sm:$0x1] %v347
        %v349 = vld [vmem:[#allocation2 + $0x70] sm:$0x1]
        %v350 = vsel %vm306, 0, %v349
        %351 = vst [vmem:[#allocation2 + $0x70] sm:$0x1] %v350
        %v352 = vld [vmem:[#allocation2 + $0x78] sm:$0x1]
        %v353 = vsel %vm306, 0, %v352
        %354 = vst [vmem:[#allocation2 + $0x78] sm:$0x1] %v353
        %v355 = vld [vmem:[#allocation2 + $0x80] sm:$0x1]
        %v356 = vsel %vm306, 0, %v355
        %357 = vst [vmem:[#allocation2 + $0x80] sm:$0x1] %v356
        %v358 = vld [vmem:[#allocation2 + $0x88] sm:$0x1]
        %v359 = vsel %vm306, 0, %v358
        %360 = vst [vmem:[#allocation2 + $0x88] sm:$0x1] %v359
        %vm361 = vcmask 781315
        %vm362 = vsmask.f32 7950
        %vm363 = vmand %vm361, %vm362
        %v364 = vld [vmem:[#allocation2 + $0x4] sm:$0x8]
        %v365 = vsel %vm363, 0, %v364
        %366 = vst [vmem:[#allocation2 + $0x4] sm:$0x8] %v365
        %v367 = vld [vmem:[#allocation2 + $0xc] sm:$0x8]
        %v368 = vsel %vm363, 0, %v367
        %369 = vst [vmem:[#allocation2 + $0xc] sm:$0x8] %v368
        %v370 = vld [vmem:[#allocation2 + $0x14] sm:$0x8]
        %v371 = vsel %vm363, 0, %v370
        %372 = vst [vmem:[#allocation2 + $0x14] sm:$0x8] %v371
        %v373 = vld [vmem:[#allocation2 + $0x1c] sm:$0x8]
        %v374 = vsel %vm363, 0, %v373
        %375 = vst [vmem:[#allocation2 + $0x1c] sm:$0x8] %v374
        %v376 = vld [vmem:[#allocation2 + $0x24] sm:$0x8]
        %v377 = vsel %vm363, 0, %v376
        %378 = vst [vmem:[#allocation2 + $0x24] sm:$0x8] %v377
        %v379 = vld [vmem:[#allocation2 + $0x2c] sm:$0x8]
        %v380 = vsel %vm363, 0, %v379
        %381 = vst [vmem:[#allocation2 + $0x2c] sm:$0x8] %v380
        %v382 = vld [vmem:[#allocation2 + $0x34] sm:$0x8]
        %v383 = vsel %vm363, 0, %v382
        %384 = vst [vmem:[#allocation2 + $0x34] sm:$0x8] %v383
        %v385 = vld [vmem:[#allocation2 + $0x3c] sm:$0x8]
        %v386 = vsel %vm363, 0, %v385
        %387 = vst [vmem:[#allocation2 + $0x3c] sm:$0x8] %v386
        %v388 = vld [vmem:[#allocation2 + $0x44] sm:$0x8]
        %v389 = vsel %vm363, 0, %v388
        %390 = vst [vmem:[#allocation2 + $0x44] sm:$0x8] %v389
        %v391 = vld [vmem:[#allocation2 + $0x4c] sm:$0x8]
        %v392 = vsel %vm363, 0, %v391
        %393 = vst [vmem:[#allocation2 + $0x4c] sm:$0x8] %v392
        %v394 = vld [vmem:[#allocation2 + $0x54] sm:$0x8]
        %v395 = vsel %vm363, 0, %v394
        %396 = vst [vmem:[#allocation2 + $0x54] sm:$0x8] %v395
        %v397 = vld [vmem:[#allocation2 + $0x5c] sm:$0x8]
        %v398 = vsel %vm363, 0, %v397
        %399 = vst [vmem:[#allocation2 + $0x5c] sm:$0x8] %v398
        %v400 = vld [vmem:[#allocation2 + $0x64] sm:$0x8]
        %v401 = vsel %vm363, 0, %v400
        %402 = vst [vmem:[#allocation2 + $0x64] sm:$0x8] %v401
        %v403 = vld [vmem:[#allocation2 + $0x6c] sm:$0x8]
        %v404 = vsel %vm363, 0, %v403
        %405 = vst [vmem:[#allocation2 + $0x6c] sm:$0x8] %v404
        %v406 = vld [vmem:[#allocation2 + $0x74] sm:$0x8]
        %v407 = vsel %vm363, 0, %v406
        %408 = vst [vmem:[#allocation2 + $0x74] sm:$0x8] %v407
        %v409 = vld [vmem:[#allocation2 + $0x7c] sm:$0x8]
        %v410 = vsel %vm363, 0, %v409
        %411 = vst [vmem:[#allocation2 + $0x7c] sm:$0x8] %v410
        %v412 = vld [vmem:[#allocation2 + $0x84] sm:$0x8]
        %v413 = vsel %vm363, 0, %v412
        %414 = vst [vmem:[#allocation2 + $0x84] sm:$0x8] %v413
        %v415 = vld [vmem:[#allocation2 + $0x8c] sm:$0x8]
        %v416 = vsel %vm363, 0, %v415
        %417 = vst [vmem:[#allocation2 + $0x8c] sm:$0x8] %v416
        %v418 = vld [vmem:[%s266] sm:$0xf]
        %v419 = vld [vmem:[%s266 + $0x4] sm:$0xf]
        %v420 = vld [vmem:[%s266 + $0x8] sm:$0xf]
        %v421 = vld [vmem:[%s266 + $0xc] sm:$0xf]
        %v422 = vld [vmem:[%s266 + $0x10] sm:$0xf]
        %v423 = vld [vmem:[%s266 + $0x14] sm:$0xf]
        %v424 = vld [vmem:[%s266 + $0x18] sm:$0xf]
        %v425 = vld [vmem:[%s266 + $0x1c] sm:$0xf]
        %v426 = vld [vmem:[%s266 + $0x20] sm:$0xf]
        %v427 = vld [vmem:[%s266 + $0x24] sm:$0xf]
        %v428 = vld [vmem:[%s266 + $0x28] sm:$0xf]
        %v429 = vld [vmem:[%s266 + $0x2c] sm:$0xf]
        %v430 = vld [vmem:[%s266 + $0x30] sm:$0xf]
        %v431 = vld [vmem:[%s266 + $0x34] sm:$0xf]
        %v432 = vld [vmem:[%s266 + $0x38] sm:$0xf]
        %v433 = vld [vmem:[%s266 + $0x3c] sm:$0xf]
        %v434 = vld [vmem:[%s266 + $0x40] sm:$0xf]
        %v435 = vld [vmem:[%s266 + $0x44] sm:$0xf]
        %v436 = vld [vmem:[%s266 + $0x48] sm:$0xf]
        %v437 = vld [vmem:[%s266 + $0x4c] sm:$0xf]
        %v438 = vld [vmem:[%s266 + $0x50] sm:$0xf]
        %v439 = vld [vmem:[%s266 + $0x54] sm:$0xf]
        %v440 = vld [vmem:[%s266 + $0x58] sm:$0xf]
        %v441 = vld [vmem:[%s266 + $0x5c] sm:$0xf]
        %v442 = vld [vmem:[%s266 + $0x60] sm:$0xf]
        %v443 = vld [vmem:[%s266 + $0x64] sm:$0xf]
        %v444 = vld [vmem:[%s266 + $0x68] sm:$0xf]
        %v445 = vld [vmem:[%s266 + $0x6c] sm:$0xf]
        %v446 = vld [vmem:[%s266 + $0x70] sm:$0xf]
        %v447 = vld [vmem:[%s266 + $0x74] sm:$0xf]
        %v448 = vld [vmem:[%s266 + $0x78] sm:$0xf]
        %v449 = vld [vmem:[%s266 + $0x7c] sm:$0xf]
        %vm450 = vsmask.f32 4368
        %vm451 = vmor %vm305, %vm450
        %v453 = vshrl.u32 %v418, 16
        %v455 = vrot.slane %v453, 7
        %v456 = vshll.u32 %v418, 16
        %v458 = vor.u32 %v455, %v456
        %v459 = vrot.slane %v455, 4
        %v461 = vshrl.u32 %v419, 16
        %v463 = vrot.slane %v461, 7
        %v464 = vshll.u32 %v419, 16
        %v466 = vor.u32 %v463, %v464
        %v467 = vsel %vm451, %v459, %v466
        %v469 = vshrl.u32 %v420, 16
        %v471 = vrot.slane %v469, 7
        %v472 = vshll.u32 %v420, 16
        %v474 = vor.u32 %v471, %v472
        %v475 = vrot.slane %v471, 4
        %v477 = vshrl.u32 %v421, 16
        %v479 = vrot.slane %v477, 7
        %v480 = vshll.u32 %v421, 16
        %v482 = vor.u32 %v479, %v480
        %v483 = vsel %vm451, %v475, %v482
        %v485 = vshrl.u32 %v422, 16
        %v487 = vrot.slane %v485, 7
        %v488 = vshll.u32 %v422, 16
        %v490 = vor.u32 %v487, %v488
        %v491 = vrot.slane %v487, 4
        %v493 = vshrl.u32 %v423, 16
        %v495 = vrot.slane %v493, 7
        %v496 = vshll.u32 %v423, 16
        %v498 = vor.u32 %v495, %v496
        %v499 = vsel %vm451, %v491, %v498
        %v501 = vshrl.u32 %v424, 16
        %v503 = vrot.slane %v501, 7
        %v504 = vshll.u32 %v424, 16
        %v506 = vor.u32 %v503, %v504
        %v507 = vrot.slane %v503, 4
        %v509 = vshrl.u32 %v425, 16
        %v511 = vrot.slane %v509, 7
        %v512 = vshll.u32 %v425, 16
        %v514 = vor.u32 %v511, %v512
        %v515 = vsel %vm451, %v507, %v514
        %v517 = vshrl.u32 %v426, 16
        %v519 = vrot.slane %v517, 7
        %v520 = vshll.u32 %v426, 16
        %v522 = vor.u32 %v519, %v520
        %v523 = vrot.slane %v519, 4
        %v525 = vshrl.u32 %v427, 16
        %v527 = vrot.slane %v525, 7
        %v528 = vshll.u32 %v427, 16
        %v530 = vor.u32 %v527, %v528
        %v531 = vsel %vm451, %v523, %v530
        %v533 = vshrl.u32 %v428, 16
        %v535 = vrot.slane %v533, 7
        %v536 = vshll.u32 %v428, 16
        %v538 = vor.u32 %v535, %v536
        %v539 = vrot.slane %v535, 4
        %v541 = vshrl.u32 %v429, 16
        %v543 = vrot.slane %v541, 7
        %v544 = vshll.u32 %v429, 16
        %v546 = vor.u32 %v543, %v544
        %v547 = vsel %vm451, %v539, %v546
        %v549 = vshrl.u32 %v430, 16
        %v551 = vrot.slane %v549, 7
        %v552 = vshll.u32 %v430, 16
        %v554 = vor.u32 %v551, %v552
        %v555 = vrot.slane %v551, 4
        %v557 = vshrl.u32 %v431, 16
        %v559 = vrot.slane %v557, 7
        %v560 = vshll.u32 %v431, 16
        %v562 = vor.u32 %v559, %v560
        %v563 = vsel %vm451, %v555, %v562
        %v565 = vshrl.u32 %v432, 16
        %v567 = vrot.slane %v565, 7
        %v568 = vshll.u32 %v432, 16
        %v570 = vor.u32 %v567, %v568
        %v571 = vrot.slane %v567, 4
        %v573 = vshrl.u32 %v433, 16
        %v575 = vrot.slane %v573, 7
        %v576 = vshll.u32 %v433, 16
        %v578 = vor.u32 %v575, %v576
        %v579 = vsel %vm451, %v571, %v578
        %v581 = vshrl.u32 %v434, 16
        %v583 = vrot.slane %v581, 7
        %v584 = vshll.u32 %v434, 16
        %v586 = vor.u32 %v583, %v584
        %v587 = vrot.slane %v583, 4
        %v589 = vshrl.u32 %v435, 16
        %v591 = vrot.slane %v589, 7
        %v592 = vshll.u32 %v435, 16
        %v594 = vor.u32 %v591, %v592
        %v595 = vsel %vm451, %v587, %v594
        %v597 = vshrl.u32 %v436, 16
        %v599 = vrot.slane %v597, 7
        %v600 = vshll.u32 %v436, 16
        %v602 = vor.u32 %v599, %v600
        %v603 = vrot.slane %v599, 4
        %v605 = vshrl.u32 %v437, 16
        %v607 = vrot.slane %v605, 7
        %v608 = vshll.u32 %v437, 16
        %v610 = vor.u32 %v607, %v608
        %v611 = vsel %vm451, %v603, %v610
        %v613 = vshrl.u32 %v438, 16
        %v615 = vrot.slane %v613, 7
        %v616 = vshll.u32 %v438, 16
        %v618 = vor.u32 %v615, %v616
        %v619 = vrot.slane %v615, 4
        %v621 = vshrl.u32 %v439, 16
        %v623 = vrot.slane %v621, 7
        %v624 = vshll.u32 %v439, 16
        %v626 = vor.u32 %v623, %v624
        %v627 = vsel %vm451, %v619, %v626
        %v629 = vshrl.u32 %v440, 16
        %v631 = vrot.slane %v629, 7
        %v632 = vshll.u32 %v440, 16
        %v634 = vor.u32 %v631, %v632
        %v635 = vrot.slane %v631, 4
        %v637 = vshrl.u32 %v441, 16
        %v639 = vrot.slane %v637, 7
        %v640 = vshll.u32 %v441, 16
        %v642 = vor.u32 %v639, %v640
        %v643 = vsel %vm451, %v635, %v642
        %v645 = vshrl.u32 %v442, 16
        %v647 = vrot.slane %v645, 7
        %v648 = vshll.u32 %v442, 16
        %v650 = vor.u32 %v647, %v648
        %v651 = vrot.slane %v647, 4
        %v653 = vshrl.u32 %v443, 16
        %v655 = vrot.slane %v653, 7
        %v656 = vshll.u32 %v443, 16
        %v658 = vor.u32 %v655, %v656
        %v659 = vsel %vm451, %v651, %v658
        %v661 = vshrl.u32 %v444, 16
        %v663 = vrot.slane %v661, 7
        %v664 = vshll.u32 %v444, 16
        %v666 = vor.u32 %v663, %v664
        %v667 = vrot.slane %v663, 4
        %v669 = vshrl.u32 %v445, 16
        %v671 = vrot.slane %v669, 7
        %v672 = vshll.u32 %v445, 16
        %v674 = vor.u32 %v671, %v672
        %v675 = vsel %vm451, %v667, %v674
        %v677 = vshrl.u32 %v446, 16
        %v679 = vrot.slane %v677, 7
        %v680 = vshll.u32 %v446, 16
        %v682 = vor.u32 %v679, %v680
        %v683 = vrot.slane %v679, 4
        %v685 = vshrl.u32 %v447, 16
        %v687 = vrot.slane %v685, 7
        %v688 = vshll.u32 %v447, 16
        %v690 = vor.u32 %v687, %v688
        %v691 = vsel %vm451, %v683, %v690
        %v693 = vshrl.u32 %v448, 16
        %v695 = vrot.slane %v693, 7
        %v696 = vshll.u32 %v448, 16
        %v698 = vor.u32 %v695, %v696
        %v699 = vrot.slane %v695, 4
        %v701 = vshrl.u32 %v449, 16
        %v703 = vrot.slane %v701, 7
        %v704 = vshll.u32 %v449, 16
        %v706 = vor.u32 %v703, %v704
        %v707 = vsel %vm451, %v699, %v706
        %s740 = scalar_lea.vmem [#allocation2], 8
        %vm741 = vcmask 257024
        %vm742 = vsmask.f32 7938
        %vm743 = vmand %vm741, %vm742
        %v744 = vld [vmem:[%s740] sm:$0xf]
        %v745 = vsel %vm743, %v458, %v744
        %746 = vst [vmem:[%s740] sm:$0xf] %v745
        %vm747 = vcmask 257024
        %748 = vst.msk [vmem:[%s740 + $0x4] sm:$0xf] %vm747, %v467
        %v749 = vld [vmem:[%s740 + $0x8] sm:$0xf]
        %v750 = vsel %vm743, %v474, %v749
        %751 = vst [vmem:[%s740 + $0x8] sm:$0xf] %v750
        %752 = vst.msk [vmem:[%s740 + $0xc] sm:$0xf] %vm747, %v483
        %v753 = vld [vmem:[%s740 + $0x10] sm:$0xf]
        %v754 = vsel %vm743, %v490, %v753
        %755 = vst [vmem:[%s740 + $0x10] sm:$0xf] %v754
        %756 = vst.msk [vmem:[%s740 + $0x14] sm:$0xf] %vm747, %v499
        %v757 = vld [vmem:[%s740 + $0x18] sm:$0xf]
        %v758 = vsel %vm743, %v506, %v757
        %759 = vst [vmem:[%s740 + $0x18] sm:$0xf] %v758
        %760 = vst.msk [vmem:[%s740 + $0x1c] sm:$0xf] %vm747, %v515
        %v761 = vld [vmem:[%s740 + $0x20] sm:$0xf]
        %v762 = vsel %vm743, %v522, %v761
        %763 = vst [vmem:[%s740 + $0x20] sm:$0xf] %v762
        %764 = vst.msk [vmem:[%s740 + $0x24] sm:$0xf] %vm747, %v531
        %v765 = vld [vmem:[%s740 + $0x28] sm:$0xf]
        %v766 = vsel %vm743, %v538, %v765
        %767 = vst [vmem:[%s740 + $0x28] sm:$0xf] %v766
        %768 = vst.msk [vmem:[%s740 + $0x2c] sm:$0xf] %vm747, %v547
        %v769 = vld [vmem:[%s740 + $0x30] sm:$0xf]
        %v770 = vsel %vm743, %v554, %v769
        %771 = vst [vmem:[%s740 + $0x30] sm:$0xf] %v770
        %772 = vst.msk [vmem:[%s740 + $0x34] sm:$0xf] %vm747, %v563
        %v773 = vld [vmem:[%s740 + $0x38] sm:$0xf]
        %v774 = vsel %vm743, %v570, %v773
        %775 = vst [vmem:[%s740 + $0x38] sm:$0xf] %v774
        %776 = vst.msk [vmem:[%s740 + $0x3c] sm:$0xf] %vm747, %v579
        %v777 = vld [vmem:[%s740 + $0x40] sm:$0xf]
        %v778 = vsel %vm743, %v586, %v777
        %779 = vst [vmem:[%s740 + $0x40] sm:$0xf] %v778
        %780 = vst.msk [vmem:[%s740 + $0x44] sm:$0xf] %vm747, %v595
        %v781 = vld [vmem:[%s740 + $0x48] sm:$0xf]
        %v782 = vsel %vm743, %v602, %v781
        %783 = vst [vmem:[%s740 + $0x48] sm:$0xf] %v782
        %784 = vst.msk [vmem:[%s740 + $0x4c] sm:$0xf] %vm747, %v611
        %v785 = vld [vmem:[%s740 + $0x50] sm:$0xf]
        %v786 = vsel %vm743, %v618, %v785
        %787 = vst [vmem:[%s740 + $0x50] sm:$0xf] %v786
        %788 = vst.msk [vmem:[%s740 + $0x54] sm:$0xf] %vm747, %v627
        %v789 = vld [vmem:[%s740 + $0x58] sm:$0xf]
        %v790 = vsel %vm743, %v634, %v789
        %791 = vst [vmem:[%s740 + $0x58] sm:$0xf] %v790
        %792 = vst.msk [vmem:[%s740 + $0x5c] sm:$0xf] %vm747, %v643
        %v793 = vld [vmem:[%s740 + $0x60] sm:$0xf]
        %v794 = vsel %vm743, %v650, %v793
        %795 = vst [vmem:[%s740 + $0x60] sm:$0xf] %v794
        %796 = vst.msk [vmem:[%s740 + $0x64] sm:$0xf] %vm747, %v659
        %v797 = vld [vmem:[%s740 + $0x68] sm:$0xf]
        %v798 = vsel %vm743, %v666, %v797
        %799 = vst [vmem:[%s740 + $0x68] sm:$0xf] %v798
        %800 = vst.msk [vmem:[%s740 + $0x6c] sm:$0xf] %vm747, %v675
        %v801 = vld [vmem:[%s740 + $0x70] sm:$0xf]
        %v802 = vsel %vm743, %v682, %v801
        %803 = vst [vmem:[%s740 + $0x70] sm:$0xf] %v802
        %804 = vst.msk [vmem:[%s740 + $0x74] sm:$0xf] %vm747, %v691
        %v805 = vld [vmem:[%s740 + $0x78] sm:$0xf]
        %v806 = vsel %vm743, %v698, %v805
        %807 = vst [vmem:[%s740 + $0x78] sm:$0xf] %v806
        %808 = vst.msk [vmem:[%s740 + $0x7c] sm:$0xf] %vm747, %v707
        %v809 = vld [vmem:[%s266] sm:$0xf]
        %v810 = vld [vmem:[%s266 + $0x4] sm:$0xf]
        %v811 = vld [vmem:[%s266 + $0x8] sm:$0xf]
        %v812 = vld [vmem:[%s266 + $0xc] sm:$0xf]
        %v813 = vld [vmem:[%s266 + $0x10] sm:$0xf]
        %v814 = vld [vmem:[%s266 + $0x14] sm:$0xf]
        %v815 = vld [vmem:[%s266 + $0x18] sm:$0xf]
        %v816 = vld [vmem:[%s266 + $0x1c] sm:$0xf]
        %v817 = vld [vmem:[%s266 + $0x20] sm:$0xf]
        %v818 = vld [vmem:[%s266 + $0x24] sm:$0xf]
        %v819 = vld [vmem:[%s266 + $0x28] sm:$0xf]
        %v820 = vld [vmem:[%s266 + $0x2c] sm:$0xf]
        %v821 = vld [vmem:[%s266 + $0x30] sm:$0xf]
        %v822 = vld [vmem:[%s266 + $0x34] sm:$0xf]
        %v823 = vld [vmem:[%s266 + $0x38] sm:$0xf]
        %v824 = vld [vmem:[%s266 + $0x3c] sm:$0xf]
        %v825 = vld [vmem:[%s266 + $0x40] sm:$0xf]
        %v826 = vld [vmem:[%s266 + $0x44] sm:$0xf]
        %v827 = vld [vmem:[%s266 + $0x48] sm:$0xf]
        %v828 = vld [vmem:[%s266 + $0x4c] sm:$0xf]
        %v829 = vld [vmem:[%s266 + $0x50] sm:$0xf]
        %v830 = vld [vmem:[%s266 + $0x54] sm:$0xf]
        %v831 = vld [vmem:[%s266 + $0x58] sm:$0xf]
        %v832 = vld [vmem:[%s266 + $0x5c] sm:$0xf]
        %v833 = vld [vmem:[%s266 + $0x60] sm:$0xf]
        %v834 = vld [vmem:[%s266 + $0x64] sm:$0xf]
        %v835 = vld [vmem:[%s266 + $0x68] sm:$0xf]
        %v836 = vld [vmem:[%s266 + $0x6c] sm:$0xf]
        %v837 = vld [vmem:[%s266 + $0x70] sm:$0xf]
        %v838 = vld [vmem:[%s266 + $0x74] sm:$0xf]
        %v839 = vld [vmem:[%s266 + $0x78] sm:$0xf]
        %v840 = vld [vmem:[%s266 + $0x7c] sm:$0xf]
        %873 = vrot.lane.b32.xlu0 %v809, 32
        %v874 = vpop.permute.xlu0 %873
        %875 = vrot.lane.b32.xlu0 %v810, 32
        %v876 = vpop.permute.xlu0 %875
        %877 = vrot.lane.b32.xlu0 %v811, 32
        %v878 = vpop.permute.xlu0 %877
        %879 = vrot.lane.b32.xlu0 %v812, 32
        %v880 = vpop.permute.xlu0 %879
        %881 = vrot.lane.b32.xlu0 %v813, 32
        %v882 = vpop.permute.xlu0 %881
        %883 = vrot.lane.b32.xlu0 %v814, 32
        %v884 = vpop.permute.xlu0 %883
        %885 = vrot.lane.b32.xlu0 %v815, 32
        %v886 = vpop.permute.xlu0 %885
        %887 = vrot.lane.b32.xlu0 %v816, 32
        %v888 = vpop.permute.xlu0 %887
        %889 = vrot.lane.b32.xlu0 %v817, 32
        %v890 = vpop.permute.xlu0 %889
        %891 = vrot.lane.b32.xlu0 %v818, 32
        %v892 = vpop.permute.xlu0 %891
        %893 = vrot.lane.b32.xlu0 %v819, 32
        %v894 = vpop.permute.xlu0 %893
        %895 = vrot.lane.b32.xlu0 %v820, 32
        %v896 = vpop.permute.xlu0 %895
        %897 = vrot.lane.b32.xlu0 %v821, 32
        %v898 = vpop.permute.xlu0 %897
        %899 = vrot.lane.b32.xlu0 %v822, 32
        %v900 = vpop.permute.xlu0 %899
        %901 = vrot.lane.b32.xlu0 %v823, 32
        %v902 = vpop.permute.xlu0 %901
        %903 = vrot.lane.b32.xlu0 %v824, 32
        %v904 = vpop.permute.xlu0 %903
        %905 = vrot.lane.b32.xlu0 %v825, 32
        %v906 = vpop.permute.xlu0 %905
        %907 = vrot.lane.b32.xlu0 %v826, 32
        %v908 = vpop.permute.xlu0 %907
        %909 = vrot.lane.b32.xlu0 %v827, 32
        %v910 = vpop.permute.xlu0 %909
        %911 = vrot.lane.b32.xlu0 %v828, 32
        %v912 = vpop.permute.xlu0 %911
        %913 = vrot.lane.b32.xlu0 %v829, 32
        %v914 = vpop.permute.xlu0 %913
        %915 = vrot.lane.b32.xlu0 %v830, 32
        %v916 = vpop.permute.xlu0 %915
        %917 = vrot.lane.b32.xlu0 %v831, 32
        %v918 = vpop.permute.xlu0 %917
        %919 = vrot.lane.b32.xlu0 %v832, 32
        %v920 = vpop.permute.xlu0 %919
        %921 = vrot.lane.b32.xlu0 %v833, 32
        %v922 = vpop.permute.xlu0 %921
        %923 = vrot.lane.b32.xlu0 %v834, 32
        %v924 = vpop.permute.xlu0 %923
        %925 = vrot.lane.b32.xlu0 %v835, 32
        %v926 = vpop.permute.xlu0 %925
        %927 = vrot.lane.b32.xlu0 %v836, 32
        %v928 = vpop.permute.xlu0 %927
        %929 = vrot.lane.b32.xlu0 %v837, 32
        %v930 = vpop.permute.xlu0 %929
        %931 = vrot.lane.b32.xlu0 %v838, 32
        %v932 = vpop.permute.xlu0 %931
        %933 = vrot.lane.b32.xlu0 %v839, 32
        %v934 = vpop.permute.xlu0 %933
        %935 = vrot.lane.b32.xlu0 %v840, 32
        %v936 = vpop.permute.xlu0 %935
        %vm969 = vcmask 519424
        %970 = vst.msk [vmem:[%s740] sm:$0xf] %vm969, %v874
        %971 = vst.msk [vmem:[%s740 + $0x4] sm:$0xf] %vm969, %v876
        %972 = vst.msk [vmem:[%s740 + $0x8] sm:$0xf] %vm969, %v878
        %973 = vst.msk [vmem:[%s740 + $0xc] sm:$0xf] %vm969, %v880
        %974 = vst.msk [vmem:[%s740 + $0x10] sm:$0xf] %vm969, %v882
        %975 = vst.msk [vmem:[%s740 + $0x14] sm:$0xf] %vm969, %v884
        %976 = vst.msk [vmem:[%s740 + $0x18] sm:$0xf] %vm969, %v886
        %977 = vst.msk [vmem:[%s740 + $0x1c] sm:$0xf] %vm969, %v888
        %978 = vst.msk [vmem:[%s740 + $0x20] sm:$0xf] %vm969, %v890
        %979 = vst.msk [vmem:[%s740 + $0x24] sm:$0xf] %vm969, %v892
        %980 = vst.msk [vmem:[%s740 + $0x28] sm:$0xf] %vm969, %v894
        %981 = vst.msk [vmem:[%s740 + $0x2c] sm:$0xf] %vm969, %v896
        %982 = vst.msk [vmem:[%s740 + $0x30] sm:$0xf] %vm969, %v898
        %983 = vst.msk [vmem:[%s740 + $0x34] sm:$0xf] %vm969, %v900
        %984 = vst.msk [vmem:[%s740 + $0x38] sm:$0xf] %vm969, %v902
        %985 = vst.msk [vmem:[%s740 + $0x3c] sm:$0xf] %vm969, %v904
        %986 = vst.msk [vmem:[%s740 + $0x40] sm:$0xf] %vm969, %v906
        %987 = vst.msk [vmem:[%s740 + $0x44] sm:$0xf] %vm969, %v908
        %988 = vst.msk [vmem:[%s740 + $0x48] sm:$0xf] %vm969, %v910
        %989 = vst.msk [vmem:[%s740 + $0x4c] sm:$0xf] %vm969, %v912
        %990 = vst.msk [vmem:[%s740 + $0x50] sm:$0xf] %vm969, %v914
        %991 = vst.msk [vmem:[%s740 + $0x54] sm:$0xf] %vm969, %v916
        %992 = vst.msk [vmem:[%s740 + $0x58] sm:$0xf] %vm969, %v918
        %993 = vst.msk [vmem:[%s740 + $0x5c] sm:$0xf] %vm969, %v920
        %994 = vst.msk [vmem:[%s740 + $0x60] sm:$0xf] %vm969, %v922
        %995 = vst.msk [vmem:[%s740 + $0x64] sm:$0xf] %vm969, %v924
        %996 = vst.msk [vmem:[%s740 + $0x68] sm:$0xf] %vm969, %v926
        %997 = vst.msk [vmem:[%s740 + $0x6c] sm:$0xf] %vm969, %v928
        %998 = vst.msk [vmem:[%s740 + $0x70] sm:$0xf] %vm969, %v930
        %999 = vst.msk [vmem:[%s740 + $0x74] sm:$0xf] %vm969, %v932
        %1000 = vst.msk [vmem:[%s740 + $0x78] sm:$0xf] %vm969, %v934
        %1001 = vst.msk [vmem:[%s740 + $0x7c] sm:$0xf] %vm969, %v936
        %v1002 = vld [vmem:[%s266] sm:$0xf]
        %v1003 = vld [vmem:[%s266 + $0x4] sm:$0xf]
        %v1004 = vld [vmem:[%s266 + $0x8] sm:$0xf]
        %v1005 = vld [vmem:[%s266 + $0xc] sm:$0xf]
        %v1006 = vld [vmem:[%s266 + $0x10] sm:$0xf]
        %v1007 = vld [vmem:[%s266 + $0x14] sm:$0xf]
        %v1008 = vld [vmem:[%s266 + $0x18] sm:$0xf]
        %v1009 = vld [vmem:[%s266 + $0x1c] sm:$0xf]
        %v1010 = vld [vmem:[%s266 + $0x20] sm:$0xf]
        %v1011 = vld [vmem:[%s266 + $0x24] sm:$0xf]
        %v1012 = vld [vmem:[%s266 + $0x28] sm:$0xf]
        %v1013 = vld [vmem:[%s266 + $0x2c] sm:$0xf]
        %v1014 = vld [vmem:[%s266 + $0x30] sm:$0xf]
        %v1015 = vld [vmem:[%s266 + $0x34] sm:$0xf]
        %v1016 = vld [vmem:[%s266 + $0x38] sm:$0xf]
        %v1017 = vld [vmem:[%s266 + $0x3c] sm:$0xf]
        %v1018 = vld [vmem:[%s266 + $0x40] sm:$0xf]
        %v1019 = vld [vmem:[%s266 + $0x44] sm:$0xf]
        %v1020 = vld [vmem:[%s266 + $0x48] sm:$0xf]
        %v1021 = vld [vmem:[%s266 + $0x4c] sm:$0xf]
        %v1022 = vld [vmem:[%s266 + $0x50] sm:$0xf]
        %v1023 = vld [vmem:[%s266 + $0x54] sm:$0xf]
        %v1024 = vld [vmem:[%s266 + $0x58] sm:$0xf]
        %v1025 = vld [vmem:[%s266 + $0x5c] sm:$0xf]
        %v1026 = vld [vmem:[%s266 + $0x60] sm:$0xf]
        %v1027 = vld [vmem:[%s266 + $0x64] sm:$0xf]
        %v1028 = vld [vmem:[%s266 + $0x68] sm:$0xf]
        %v1029 = vld [vmem:[%s266 + $0x6c] sm:$0xf]
        %v1030 = vld [vmem:[%s266 + $0x70] sm:$0xf]
        %v1031 = vld [vmem:[%s266 + $0x74] sm:$0xf]
        %v1032 = vld [vmem:[%s266 + $0x78] sm:$0xf]
        %v1033 = vld [vmem:[%s266 + $0x7c] sm:$0xf]
        %vm1034 = vsmask.f32 3328
        %vm1035 = vsmask.f32 7440
        %vm1036 = vmor %vm1034, %vm1035
        %v1038 = vshrl.u32 %v1002, 16
        %v1040 = vrot.slane %v1038, 4
        %v1041 = vshll.u32 %v1002, 16
        %v1043 = vrot.slane %v1041, 5
        %v1044 = vor.u32 %v1040, %v1043
        %v1045 = vrot.slane %v1044, 4
        %v1047 = vshll.u32 %v1003, 16
        %v1049 = vrot.slane %v1047, 5
        %v1050 = vsel %vm1036, %v1045, %v1049
        %v1051 = vshrl.u32 %v1003, 16
        %v1053 = vrot.slane %v1051, 4
        %v1054 = vor.u32 %v1053, %v1049
        %v1055 = vrot.slane %v1054, 4
        %v1057 = vshrl.u32 %v1004, 16
        %v1059 = vrot.slane %v1057, 4
        %v1060 = vshll.u32 %v1004, 16
        %v1062 = vrot.slane %v1060, 5
        %v1063 = vor.u32 %v1059, %v1062
        %v1064 = vrot.slane %v1063, 4
        %v1066 = vshll.u32 %v1005, 16
        %v1068 = vrot.slane %v1066, 5
        %v1069 = vsel %vm1036, %v1064, %v1068
        %v1070 = vshrl.u32 %v1005, 16
        %v1072 = vrot.slane %v1070, 4
        %v1073 = vor.u32 %v1072, %v1068
        %v1074 = vrot.slane %v1073, 4
        %v1076 = vshrl.u32 %v1006, 16
        %v1078 = vrot.slane %v1076, 4
        %v1079 = vshll.u32 %v1006, 16
        %v1081 = vrot.slane %v1079, 5
        %v1082 = vor.u32 %v1078, %v1081
        %v1083 = vrot.slane %v1082, 4
        %v1085 = vshll.u32 %v1007, 16
        %v1087 = vrot.slane %v1085, 5
        %v1088 = vsel %vm1036, %v1083, %v1087
        %v1089 = vshrl.u32 %v1007, 16
        %v1091 = vrot.slane %v1089, 4
        %v1092 = vor.u32 %v1091, %v1087
        %v1093 = vrot.slane %v1092, 4
        %v1095 = vshrl.u32 %v1008, 16
        %v1097 = vrot.slane %v1095, 4
        %v1098 = vshll.u32 %v1008, 16
        %v1100 = vrot.slane %v1098, 5
        %v1101 = vor.u32 %v1097, %v1100
        %v1102 = vrot.slane %v1101, 4
        %v1104 = vshll.u32 %v1009, 16
        %v1106 = vrot.slane %v1104, 5
        %v1107 = vsel %vm1036, %v1102, %v1106
        %v1108 = vshrl.u32 %v1009, 16
        %v1110 = vrot.slane %v1108, 4
        %v1111 = vor.u32 %v1110, %v1106
        %v1112 = vrot.slane %v1111, 4
        %v1114 = vshrl.u32 %v1010, 16
        %v1116 = vrot.slane %v1114, 4
        %v1117 = vshll.u32 %v1010, 16
        %v1119 = vrot.slane %v1117, 5
        %v1120 = vor.u32 %v1116, %v1119
        %v1121 = vrot.slane %v1120, 4
        %v1123 = vshll.u32 %v1011, 16
        %v1125 = vrot.slane %v1123, 5
        %v1126 = vsel %vm1036, %v1121, %v1125
        %v1127 = vshrl.u32 %v1011, 16
        %v1129 = vrot.slane %v1127, 4
        %v1130 = vor.u32 %v1129, %v1125
        %v1131 = vrot.slane %v1130, 4
        %v1133 = vshrl.u32 %v1012, 16
        %v1135 = vrot.slane %v1133, 4
        %v1136 = vshll.u32 %v1012, 16
        %v1138 = vrot.slane %v1136, 5
        %v1139 = vor.u32 %v1135, %v1138
        %v1140 = vrot.slane %v1139, 4
        %v1142 = vshll.u32 %v1013, 16
        %v1144 = vrot.slane %v1142, 5
        %v1145 = vsel %vm1036, %v1140, %v1144
        %v1146 = vshrl.u32 %v1013, 16
        %v1148 = vrot.slane %v1146, 4
        %v1149 = vor.u32 %v1148, %v1144
        %v1150 = vrot.slane %v1149, 4
        %v1152 = vshrl.u32 %v1014, 16
        %v1154 = vrot.slane %v1152, 4
        %v1155 = vshll.u32 %v1014, 16
        %v1157 = vrot.slane %v1155, 5
        %v1158 = vor.u32 %v1154, %v1157
        %v1159 = vrot.slane %v1158, 4
        %v1161 = vshll.u32 %v1015, 16
        %v1163 = vrot.slane %v1161, 5
        %v1164 = vsel %vm1036, %v1159, %v1163
        %v1165 = vshrl.u32 %v1015, 16
        %v1167 = vrot.slane %v1165, 4
        %v1168 = vor.u32 %v1167, %v1163
        %v1169 = vrot.slane %v1168, 4
        %v1171 = vshrl.u32 %v1016, 16
        %v1173 = vrot.slane %v1171, 4
        %v1174 = vshll.u32 %v1016, 16
        %v1176 = vrot.slane %v1174, 5
        %v1177 = vor.u32 %v1173, %v1176
        %v1178 = vrot.slane %v1177, 4
        %v1180 = vshll.u32 %v1017, 16
        %v1182 = vrot.slane %v1180, 5
        %v1183 = vsel %vm1036, %v1178, %v1182
        %v1184 = vshrl.u32 %v1017, 16
        %v1186 = vrot.slane %v1184, 4
        %v1187 = vor.u32 %v1186, %v1182
        %v1188 = vrot.slane %v1187, 4
        %v1190 = vshrl.u32 %v1018, 16
        %v1192 = vrot.slane %v1190, 4
        %v1193 = vshll.u32 %v1018, 16
        %v1195 = vrot.slane %v1193, 5
        %v1196 = vor.u32 %v1192, %v1195
        %v1197 = vrot.slane %v1196, 4
        %v1199 = vshll.u32 %v1019, 16
        %v1201 = vrot.slane %v1199, 5
        %v1202 = vsel %vm1036, %v1197, %v1201
        %v1203 = vshrl.u32 %v1019, 16
        %v1205 = vrot.slane %v1203, 4
        %v1206 = vor.u32 %v1205, %v1201
        %v1207 = vrot.slane %v1206, 4
        %v1209 = vshrl.u32 %v1020, 16
        %v1211 = vrot.slane %v1209, 4
        %v1212 = vshll.u32 %v1020, 16
        %v1214 = vrot.slane %v1212, 5
        %v1215 = vor.u32 %v1211, %v1214
        %v1216 = vrot.slane %v1215, 4
        %v1218 = vshll.u32 %v1021, 16
        %v1220 = vrot.slane %v1218, 5
        %v1221 = vsel %vm1036, %v1216, %v1220
        %v1222 = vshrl.u32 %v1021, 16
        %v1224 = vrot.slane %v1222, 4
        %v1225 = vor.u32 %v1224, %v1220
        %v1226 = vrot.slane %v1225, 4
        %v1228 = vshrl.u32 %v1022, 16
        %v1230 = vrot.slane %v1228, 4
        %v1231 = vshll.u32 %v1022, 16
        %v1233 = vrot.slane %v1231, 5
        %v1234 = vor.u32 %v1230, %v1233
        %v1235 = vrot.slane %v1234, 4
        %v1237 = vshll.u32 %v1023, 16
        %v1239 = vrot.slane %v1237, 5
        %v1240 = vsel %vm1036, %v1235, %v1239
        %v1241 = vshrl.u32 %v1023, 16
        %v1243 = vrot.slane %v1241, 4
        %v1244 = vor.u32 %v1243, %v1239
        %v1245 = vrot.slane %v1244, 4
        %v1247 = vshrl.u32 %v1024, 16
        %v1249 = vrot.slane %v1247, 4
        %v1250 = vshll.u32 %v1024, 16
        %v1252 = vrot.slane %v1250, 5
        %v1253 = vor.u32 %v1249, %v1252
        %v1254 = vrot.slane %v1253, 4
        %v1256 = vshll.u32 %v1025, 16
        %v1258 = vrot.slane %v1256, 5
        %v1259 = vsel %vm1036, %v1254, %v1258
        %v1260 = vshrl.u32 %v1025, 16
        %v1262 = vrot.slane %v1260, 4
        %v1263 = vor.u32 %v1262, %v1258
        %v1264 = vrot.slane %v1263, 4
        %v1266 = vshrl.u32 %v1026, 16
        %v1268 = vrot.slane %v1266, 4
        %v1269 = vshll.u32 %v1026, 16
        %v1271 = vrot.slane %v1269, 5
        %v1272 = vor.u32 %v1268, %v1271
        %v1273 = vrot.slane %v1272, 4
        %v1275 = vshll.u32 %v1027, 16
        %v1277 = vrot.slane %v1275, 5
        %v1278 = vsel %vm1036, %v1273, %v1277
        %v1279 = vshrl.u32 %v1027, 16
        %v1281 = vrot.slane %v1279, 4
        %v1282 = vor.u32 %v1281, %v1277
        %v1283 = vrot.slane %v1282, 4
        %v1285 = vshrl.u32 %v1028, 16
        %v1287 = vrot.slane %v1285, 4
        %v1288 = vshll.u32 %v1028, 16
        %v1290 = vrot.slane %v1288, 5
        %v1291 = vor.u32 %v1287, %v1290
        %v1292 = vrot.slane %v1291, 4
        %v1294 = vshll.u32 %v1029, 16
        %v1296 = vrot.slane %v1294, 5
        %v1297 = vsel %vm1036, %v1292, %v1296
        %v1298 = vshrl.u32 %v1029, 16
        %v1300 = vrot.slane %v1298, 4
        %v1301 = vor.u32 %v1300, %v1296
        %v1302 = vrot.slane %v1301, 4
        %v1304 = vshrl.u32 %v1030, 16
        %v1306 = vrot.slane %v1304, 4
        %v1307 = vshll.u32 %v1030, 16
        %v1309 = vrot.slane %v1307, 5
        %v1310 = vor.u32 %v1306, %v1309
        %v1311 = vrot.slane %v1310, 4
        %v1313 = vshll.u32 %v1031, 16
        %v1315 = vrot.slane %v1313, 5
        %v1316 = vsel %vm1036, %v1311, %v1315
        %v1317 = vshrl.u32 %v1031, 16
        %v1319 = vrot.slane %v1317, 4
        %v1320 = vor.u32 %v1319, %v1315
        %v1321 = vrot.slane %v1320, 4
        %v1323 = vshrl.u32 %v1032, 16
        %v1325 = vrot.slane %v1323, 4
        %v1326 = vshll.u32 %v1032, 16
        %v1328 = vrot.slane %v1326, 5
        %v1329 = vor.u32 %v1325, %v1328
        %v1330 = vrot.slane %v1329, 4
        %v1332 = vshll.u32 %v1033, 16
        %v1334 = vrot.slane %v1332, 5
        %v1335 = vsel %vm1036, %v1330, %v1334
        %v1336 = vshrl.u32 %v1033, 16
        %v1338 = vrot.slane %v1336, 4
        %v1339 = vor.u32 %v1338, %v1334
        %v1340 = vrot.slane %v1339, 4
        %1341 = vrot.lane.b32.xlu0 %v1050, 64
        %v1342 = vpop.permute.xlu0 %1341
        %1343 = vrot.lane.b32.xlu0 %v1055, 64
        %v1344 = vpop.permute.xlu0 %1343
        %1345 = vrot.lane.b32.xlu0 %v1069, 64
        %v1346 = vpop.permute.xlu0 %1345
        %1347 = vrot.lane.b32.xlu0 %v1074, 64
        %v1348 = vpop.permute.xlu0 %1347
        %1349 = vrot.lane.b32.xlu0 %v1088, 64
        %v1350 = vpop.permute.xlu0 %1349
        %1351 = vrot.lane.b32.xlu0 %v1093, 64
        %v1352 = vpop.permute.xlu0 %1351
        %1353 = vrot.lane.b32.xlu0 %v1107, 64
        %v1354 = vpop.permute.xlu0 %1353
        %1355 = vrot.lane.b32.xlu0 %v1112, 64
        %v1356 = vpop.permute.xlu0 %1355
        %1357 = vrot.lane.b32.xlu0 %v1126, 64
        %v1358 = vpop.permute.xlu0 %1357
        %1359 = vrot.lane.b32.xlu0 %v1131, 64
        %v1360 = vpop.permute.xlu0 %1359
        %1361 = vrot.lane.b32.xlu0 %v1145, 64
        %v1362 = vpop.permute.xlu0 %1361
        %1363 = vrot.lane.b32.xlu0 %v1150, 64
        %v1364 = vpop.permute.xlu0 %1363
        %1365 = vrot.lane.b32.xlu0 %v1164, 64
        %v1366 = vpop.permute.xlu0 %1365
        %1367 = vrot.lane.b32.xlu0 %v1169, 64
        %v1368 = vpop.permute.xlu0 %1367
        %1369 = vrot.lane.b32.xlu0 %v1183, 64
        %v1370 = vpop.permute.xlu0 %1369
        %1371 = vrot.lane.b32.xlu0 %v1188, 64
        %v1372 = vpop.permute.xlu0 %1371
        %1373 = vrot.lane.b32.xlu0 %v1202, 64
        %v1374 = vpop.permute.xlu0 %1373
        %1375 = vrot.lane.b32.xlu0 %v1207, 64
        %v1376 = vpop.permute.xlu0 %1375
        %1377 = vrot.lane.b32.xlu0 %v1221, 64
        %v1378 = vpop.permute.xlu0 %1377
        %1379 = vrot.lane.b32.xlu0 %v1226, 64
        %v1380 = vpop.permute.xlu0 %1379
        %1381 = vrot.lane.b32.xlu0 %v1240, 64
        %v1382 = vpop.permute.xlu0 %1381
        %1383 = vrot.lane.b32.xlu0 %v1245, 64
        %v1384 = vpop.permute.xlu0 %1383
        %1385 = vrot.lane.b32.xlu0 %v1259, 64
        %v1386 = vpop.permute.xlu0 %1385
        %1387 = vrot.lane.b32.xlu0 %v1264, 64
        %v1388 = vpop.permute.xlu0 %1387
        %1389 = vrot.lane.b32.xlu0 %v1278, 64
        %v1390 = vpop.permute.xlu0 %1389
        %1391 = vrot.lane.b32.xlu0 %v1283, 64
        %v1392 = vpop.permute.xlu0 %1391
        %1393 = vrot.lane.b32.xlu0 %v1297, 64
        %v1394 = vpop.permute.xlu0 %1393
        %1395 = vrot.lane.b32.xlu0 %v1302, 64
        %v1396 = vpop.permute.xlu0 %1395
        %1397 = vrot.lane.b32.xlu0 %v1316, 64
        %v1398 = vpop.permute.xlu0 %1397
        %1399 = vrot.lane.b32.xlu0 %v1321, 64
        %v1400 = vpop.permute.xlu0 %1399
        %1401 = vrot.lane.b32.xlu0 %v1335, 64
        %v1402 = vpop.permute.xlu0 %1401
        %1403 = vrot.lane.b32.xlu0 %v1340, 64
        %v1404 = vpop.permute.xlu0 %1403
        %vm1437 = vcmask 781824
        %1438 = vst.msk [vmem:[%s740] sm:$0xf] %vm1437, %v1342
        %vm1439 = vcmask 781824
        %vm1440 = vmand %vm1439, %vm1034
        %v1441 = vld [vmem:[%s740 + $0x4] sm:$0xf]
        %v1442 = vsel %vm1440, %v1344, %v1441
        %1443 = vst [vmem:[%s740 + $0x4] sm:$0xf] %v1442
        %1444 = vst.msk [vmem:[%s740 + $0x8] sm:$0xf] %vm1437, %v1346
        %v1445 = vld [vmem:[%s740 + $0xc] sm:$0xf]
        %v1446 = vsel %vm1440, %v1348, %v1445
        %1447 = vst [vmem:[%s740 + $0xc] sm:$0xf] %v1446
        %1448 = vst.msk [vmem:[%s740 + $0x10] sm:$0xf] %vm1437, %v1350
        %v1449 = vld [vmem:[%s740 + $0x14] sm:$0xf]
        %v1450 = vsel %vm1440, %v1352, %v1449
        %1451 = vst [vmem:[%s740 + $0x14] sm:$0xf] %v1450
        %1452 = vst.msk [vmem:[%s740 + $0x18] sm:$0xf] %vm1437, %v1354
        %v1453 = vld [vmem:[%s740 + $0x1c] sm:$0xf]
        %v1454 = vsel %vm1440, %v1356, %v1453
        %1455 = vst [vmem:[%s740 + $0x1c] sm:$0xf] %v1454
        %1456 = vst.msk [vmem:[%s740 + $0x20] sm:$0xf] %vm1437, %v1358
        %v1457 = vld [vmem:[%s740 + $0x24] sm:$0xf]
        %v1458 = vsel %vm1440, %v1360, %v1457
        %1459 = vst [vmem:[%s740 + $0x24] sm:$0xf] %v1458
        %1460 = vst.msk [vmem:[%s740 + $0x28] sm:$0xf] %vm1437, %v1362
        %v1461 = vld [vmem:[%s740 + $0x2c] sm:$0xf]
        %v1462 = vsel %vm1440, %v1364, %v1461
        %1463 = vst [vmem:[%s740 + $0x2c] sm:$0xf] %v1462
        %1464 = vst.msk [vmem:[%s740 + $0x30] sm:$0xf] %vm1437, %v1366
        %v1465 = vld [vmem:[%s740 + $0x34] sm:$0xf]
        %v1466 = vsel %vm1440, %v1368, %v1465
        %1467 = vst [vmem:[%s740 + $0x34] sm:$0xf] %v1466
        %1468 = vst.msk [vmem:[%s740 + $0x38] sm:$0xf] %vm1437, %v1370
        %v1469 = vld [vmem:[%s740 + $0x3c] sm:$0xf]
        %v1470 = vsel %vm1440, %v1372, %v1469
        %1471 = vst [vmem:[%s740 + $0x3c] sm:$0xf] %v1470
        %1472 = vst.msk [vmem:[%s740 + $0x40] sm:$0xf] %vm1437, %v1374
        %v1473 = vld [vmem:[%s740 + $0x44] sm:$0xf]
        %v1474 = vsel %vm1440, %v1376, %v1473
        %1475 = vst [vmem:[%s740 + $0x44] sm:$0xf] %v1474
        %1476 = vst.msk [vmem:[%s740 + $0x48] sm:$0xf] %vm1437, %v1378
        %v1477 = vld [vmem:[%s740 + $0x4c] sm:$0xf]
        %v1478 = vsel %vm1440, %v1380, %v1477
        %1479 = vst [vmem:[%s740 + $0x4c] sm:$0xf] %v1478
        %1480 = vst.msk [vmem:[%s740 + $0x50] sm:$0xf] %vm1437, %v1382
        %v1481 = vld [vmem:[%s740 + $0x54] sm:$0xf]
        %v1482 = vsel %vm1440, %v1384, %v1481
        %1483 = vst [vmem:[%s740 + $0x54] sm:$0xf] %v1482
        %1484 = vst.msk [vmem:[%s740 + $0x58] sm:$0xf] %vm1437, %v1386
        %v1485 = vld [vmem:[%s740 + $0x5c] sm:$0xf]
        %v1486 = vsel %vm1440, %v1388, %v1485
        %1487 = vst [vmem:[%s740 + $0x5c] sm:$0xf] %v1486
        %1488 = vst.msk [vmem:[%s740 + $0x60] sm:$0xf] %vm1437, %v1390
        %v1489 = vld [vmem:[%s740 + $0x64] sm:$0xf]
        %v1490 = vsel %vm1440, %v1392, %v1489
        %1491 = vst [vmem:[%s740 + $0x64] sm:$0xf] %v1490
        %1492 = vst.msk [vmem:[%s740 + $0x68] sm:$0xf] %vm1437, %v1394
        %v1493 = vld [vmem:[%s740 + $0x6c] sm:$0xf]
        %v1494 = vsel %vm1440, %v1396, %v1493
        %1495 = vst [vmem:[%s740 + $0x6c] sm:$0xf] %v1494
        %1496 = vst.msk [vmem:[%s740 + $0x70] sm:$0xf] %vm1437, %v1398
        %v1497 = vld [vmem:[%s740 + $0x74] sm:$0xf]
        %v1498 = vsel %vm1440, %v1400, %v1497
        %1499 = vst [vmem:[%s740 + $0x74] sm:$0xf] %v1498
        %1500 = vst.msk [vmem:[%s740 + $0x78] sm:$0xf] %vm1437, %v1402
        %v1501 = vld [vmem:[%s740 + $0x7c] sm:$0xf]
        %v1502 = vsel %vm1440, %v1404, %v1501
        %1503 = vst [vmem:[%s740 + $0x7c] sm:$0xf] %v1502
        %v1504 = vld [vmem:[#allocation2] sm:$0xf]
        %v1505 = vld [vmem:[#allocation2 + $0x4] sm:$0xf]
        %v1506 = vld [vmem:[#allocation2 + $0x8] sm:$0xf]
        %v1507 = vld [vmem:[#allocation2 + $0xc] sm:$0xf]
        %v1508 = vld [vmem:[#allocation2 + $0x10] sm:$0xf]
        %v1509 = vld [vmem:[#allocation2 + $0x14] sm:$0xf]
        %v1510 = vld [vmem:[#allocation2 + $0x18] sm:$0xf]
        %v1511 = vld [vmem:[#allocation2 + $0x1c] sm:$0xf]
        %v1512 = vld [vmem:[#allocation2 + $0x20] sm:$0xf]
        %v1513 = vld [vmem:[#allocation2 + $0x24] sm:$0xf]
        %v1514 = vld [vmem:[#allocation2 + $0x28] sm:$0xf]
        %v1515 = vld [vmem:[#allocation2 + $0x2c] sm:$0xf]
        %v1516 = vld [vmem:[#allocation2 + $0x30] sm:$0xf]
        %v1517 = vld [vmem:[#allocation2 + $0x34] sm:$0xf]
        %v1518 = vld [vmem:[#allocation2 + $0x38] sm:$0xf]
        %v1519 = vld [vmem:[#allocation2 + $0x3c] sm:$0xf]
        %v1520 = vld [vmem:[#allocation2 + $0x40] sm:$0xf]
        %v1521 = vld [vmem:[#allocation2 + $0x44] sm:$0xf]
        %v1522 = vld [vmem:[#allocation2 + $0x48] sm:$0xf]
        %v1523 = vld [vmem:[#allocation2 + $0x4c] sm:$0xf]
        %v1524 = vld [vmem:[#allocation2 + $0x50] sm:$0xf]
        %v1525 = vld [vmem:[#allocation2 + $0x54] sm:$0xf]
        %v1526 = vld [vmem:[#allocation2 + $0x58] sm:$0xf]
        %v1527 = vld [vmem:[#allocation2 + $0x5c] sm:$0xf]
        %v1528 = vld [vmem:[#allocation2 + $0x60] sm:$0xf]
        %v1529 = vld [vmem:[#allocation2 + $0x64] sm:$0xf]
        %v1530 = vld [vmem:[#allocation2 + $0x68] sm:$0xf]
        %v1531 = vld [vmem:[#allocation2 + $0x6c] sm:$0xf]
        %v1532 = vld [vmem:[#allocation2 + $0x70] sm:$0xf]
        %v1533 = vld [vmem:[#allocation2 + $0x74] sm:$0xf]
        %v1534 = vld [vmem:[#allocation2 + $0x78] sm:$0xf]
        %v1535 = vld [vmem:[#allocation2 + $0x7c] sm:$0xf]
        %v1536 = vld [vmem:[%s1] sm:$0xf]
        %v1537 = vld [vmem:[%s1 + $0x4] sm:$0xf]
        %v1538 = vld [vmem:[%s1 + $0x8] sm:$0xf]
        %v1539 = vld [vmem:[%s1 + $0xc] sm:$0xf]
        %v1540 = vld [vmem:[%s1 + $0x10] sm:$0xf]
        %v1541 = vld [vmem:[%s1 + $0x14] sm:$0xf]
        %v1542 = vld [vmem:[%s1 + $0x18] sm:$0xf]
        %v1543 = vld [vmem:[%s1 + $0x1c] sm:$0xf]
        %v1544 = vld [vmem:[%s1 + $0x20] sm:$0xf]
        %v1545 = vld [vmem:[%s1 + $0x24] sm:$0xf]
        %v1546 = vld [vmem:[%s1 + $0x28] sm:$0xf]
        %v1547 = vld [vmem:[%s1 + $0x2c] sm:$0xf]
        %v1548 = vld [vmem:[%s740] sm:$0xf]
        %v1549 = vld [vmem:[%s740 + $0x4] sm:$0xf]
        %v1550 = vld [vmem:[%s740 + $0x8] sm:$0xf]
        %v1551 = vld [vmem:[%s740 + $0xc] sm:$0xf]
        %v1552 = vld [vmem:[%s740 + $0x10] sm:$0xf]
        %v1553 = vld [vmem:[%s740 + $0x14] sm:$0xf]
        %v1554 = vld [vmem:[%s740 + $0x18] sm:$0xf]
        %v1555 = vld [vmem:[%s740 + $0x1c] sm:$0xf]
        %v1556 = vld [vmem:[%s740 + $0x20] sm:$0xf]
        %v1557 = vld [vmem:[%s740 + $0x24] sm:$0xf]
        %v1558 = vld [vmem:[%s740 + $0x28] sm:$0xf]
        %v1559 = vld [vmem:[%s740 + $0x2c] sm:$0xf]
        %v1560 = vld [vmem:[%s740 + $0x30] sm:$0xf]
        %v1561 = vld [vmem:[%s740 + $0x34] sm:$0xf]
        %v1562 = vld [vmem:[%s740 + $0x38] sm:$0xf]
        %v1563 = vld [vmem:[%s740 + $0x3c] sm:$0xf]
        %v1564 = vld [vmem:[%s740 + $0x40] sm:$0xf]
        %v1565 = vld [vmem:[%s740 + $0x44] sm:$0xf]
        %v1566 = vld [vmem:[%s740 + $0x48] sm:$0xf]
        %v1567 = vld [vmem:[%s740 + $0x4c] sm:$0xf]
        %v1568 = vld [vmem:[%s740 + $0x50] sm:$0xf]
        %v1569 = vld [vmem:[%s740 + $0x54] sm:$0xf]
        %v1570 = vld [vmem:[%s740 + $0x58] sm:$0xf]
        %v1571 = vld [vmem:[%s740 + $0x5c] sm:$0xf]
        %v1572 = vld [vmem:[%s740 + $0x60] sm:$0xf]
        %v1573 = vld [vmem:[%s740 + $0x64] sm:$0xf]
        %v1574 = vld [vmem:[%s740 + $0x68] sm:$0xf]
        %v1575 = vld [vmem:[%s740 + $0x6c] sm:$0xf]
        %v1576 = vld [vmem:[%s740 + $0x70] sm:$0xf]
        %v1577 = vld [vmem:[%s740 + $0x74] sm:$0xf]
        %v1578 = vld [vmem:[%s740 + $0x78] sm:$0xf]
        %v1579 = vld [vmem:[%s740 + $0x7c] sm:$0xf]
        %s1580 = scalar_lea.vmem %s1, 48
        %v1581 = vld [vmem:[%s1580] sm:$0xf]
        %v1582 = vld [vmem:[%s1580 + $0x4] sm:$0xf]
        %v1583 = vld [vmem:[%s1580 + $0x8] sm:$0xf]
        %v1584 = vld [vmem:[%s1580 + $0xc] sm:$0xf]
        %v1585 = vld [vmem:[%s1580 + $0x10] sm:$0xf]
        %v1586 = vld [vmem:[%s1580 + $0x14] sm:$0xf]
        %v1587 = vld [vmem:[%s1580 + $0x18] sm:$0xf]
        %v1588 = vld [vmem:[%s1580 + $0x1c] sm:$0xf]
        %v1589 = vld [vmem:[%s1580 + $0x20] sm:$0xf]
        %v1590 = vld [vmem:[%s1580 + $0x24] sm:$0xf]
        %v1591 = vld [vmem:[%s1580 + $0x28] sm:$0xf]
        %v1592 = vld [vmem:[%s1580 + $0x2c] sm:$0xf]
        %v1625 = vunpack.c.l.b16 %v1548
        %v1626 = vunpack.c.l.b16 %v1549
        %v1627 = vunpack.c.l.b16 %v1550
        %v1628 = vunpack.c.l.b16 %v1551
        %v1629 = vunpack.c.l.b16 %v1552
        %v1630 = vunpack.c.l.b16 %v1553
        %v1631 = vunpack.c.l.b16 %v1554
        %v1632 = vunpack.c.l.b16 %v1555
        %v1633 = vunpack.c.l.b16 %v1556
        %v1634 = vunpack.c.l.b16 %v1557
        %v1635 = vunpack.c.l.b16 %v1558
        %v1636 = vunpack.c.l.b16 %v1559
        %v1637 = vunpack.c.l.b16 %v1560
        %v1638 = vunpack.c.l.b16 %v1561
        %v1639 = vunpack.c.l.b16 %v1562
        %v1640 = vunpack.c.l.b16 %v1563
        %v1641 = vunpack.c.l.b16 %v1564
        %v1642 = vunpack.c.l.b16 %v1565
        %v1643 = vunpack.c.l.b16 %v1566
        %v1644 = vunpack.c.l.b16 %v1567
        %v1645 = vunpack.c.l.b16 %v1568
        %v1646 = vunpack.c.l.b16 %v1569
        %v1647 = vunpack.c.l.b16 %v1570
        %v1648 = vunpack.c.l.b16 %v1571
        %v1649 = vunpack.c.l.b16 %v1572
        %v1650 = vunpack.c.l.b16 %v1573
        %v1651 = vunpack.c.l.b16 %v1574
        %v1652 = vunpack.c.l.b16 %v1575
        %v1653 = vunpack.c.l.b16 %v1576
        %v1654 = vunpack.c.l.b16 %v1577
        %v1655 = vunpack.c.l.b16 %v1578
        %v1656 = vunpack.c.l.b16 %v1579
        %v1657 = vpack.c.b16 %v1626, %v1625
        %v1658 = vpack.c.b16 %v1628, %v1627
        %v1659 = vpack.c.b16 %v1630, %v1629
        %v1660 = vpack.c.b16 %v1632, %v1631
        %v1661 = vpack.c.b16 %v1634, %v1633
        %v1662 = vpack.c.b16 %v1636, %v1635
        %v1663 = vpack.c.b16 %v1638, %v1637
        %v1664 = vpack.c.b16 %v1640, %v1639
        %v1665 = vpack.c.b16 %v1642, %v1641
        %v1666 = vpack.c.b16 %v1644, %v1643
        %v1667 = vpack.c.b16 %v1646, %v1645
        %v1668 = vpack.c.b16 %v1648, %v1647
        %v1669 = vpack.c.b16 %v1650, %v1649
        %v1670 = vpack.c.b16 %v1652, %v1651
        %v1671 = vpack.c.b16 %v1654, %v1653
        %v1672 = vpack.c.b16 %v1656, %v1655
        %v1685 = vunpack.c.l.b16 %v1581
        %v1686 = vunpack.c.l.b16 %v1582
        %v1687 = vunpack.c.l.b16 %v1583
        %v1688 = vunpack.c.l.b16 %v1584
        %v1689 = vunpack.c.l.b16 %v1585
        %v1690 = vunpack.c.l.b16 %v1586
        %v1691 = vunpack.c.l.b16 %v1587
        %v1692 = vunpack.c.l.b16 %v1588
        %v1693 = vunpack.c.l.b16 %v1589
        %v1694 = vunpack.c.l.b16 %v1590
        %v1695 = vunpack.c.l.b16 %v1591
        %v1696 = vunpack.c.l.b16 %v1592
        %v1697 = vpack.c.b16 %v1686, %v1685
        %v1698 = vpack.c.b16 %v1688, %v1687
        %v1699 = vpack.c.b16 %v1690, %v1689
        %v1700 = vpack.c.b16 %v1692, %v1691
        %v1701 = vpack.c.b16 %v1694, %v1693
        %v1702 = vpack.c.b16 %v1696, %v1695
        %vm1709 = vcmask 785408
        %v1711 = vsel %vm1709, %v1657, 0
        %v1714 = vsel %vm1709, %v1658, 0
        %v1717 = vsel %vm1709, %v1659, 0
        %v1720 = vsel %vm1709, %v1660, 0
        %v1723 = vsel %vm1709, %v1661, 0
        %v1726 = vsel %vm1709, %v1662, 0
        %v1729 = vsel %vm1709, %v1663, 0
        %v1732 = vsel %vm1709, %v1664, 0
        %v1735 = vsel %vm1709, %v1665, 0
        %v1738 = vsel %vm1709, %v1666, 0
        %v1741 = vsel %vm1709, %v1667, 0
        %v1744 = vsel %vm1709, %v1668, 0
        %v1747 = vsel %vm1709, %v1669, 0
        %v1750 = vsel %vm1709, %v1670, 0
        %v1753 = vsel %vm1709, %v1671, 0
        %v1756 = vsel %vm1709, %v1672, 0
        %1758 = vmatprep.subr.bf16.mxu0 0
        %1759 = vmatpush1.bf16.msra.mxu0 0
        %1760 = vmatprep.subr.bf16.mxu0 0
        %1761 = vmatpush1.bf16.msra.mxu0 0
        %1762 = vmatprep.subr.bf16.mxu0 0
        %1763 = vmatpush1.bf16.msra.mxu0 %v1702
        %1764 = vmatprep.subr.bf16.mxu0 0
        %1765 = vmatpush1.bf16.msra.mxu0 %v1701
        %1766 = vmatprep.subr.bf16.mxu0 0
        %1767 = vmatpush1.bf16.msra.mxu0 %v1700
        %1768 = vmatprep.subr.bf16.mxu0 0
        %1769 = vmatpush1.bf16.msra.mxu0 %v1699
        %1770 = vmatprep.subr.bf16.mxu0 0
        %1771 = vmatpush1.bf16.msra.mxu0 %v1698
        %1772 = vmatprep.subr.bf16.mxu0 0
        %1773 = vmatpush1.bf16.msra.mxu0 %v1697
        %1774 = vmatprep.subr.bf16.mxu0 0
        %1775 = vmatpush2.bf16.msra.mxu0 0
        %1776 = vmatprep.subr.bf16.mxu0 0
        %1777 = vmatpush2.bf16.msra.mxu0 0
        %1778 = vmatprep.subr.bf16.mxu0 0
        %1779 = vmatpush2.bf16.msra.mxu0 0
        %1780 = vmatprep.subr.bf16.mxu0 0
        %1781 = vmatpush2.bf16.msra.mxu0 0
        %1782 = vmatprep.subr.bf16.mxu0 0
        %1783 = vmatpush2.bf16.msra.mxu0 0
        %1784 = vmatprep.subr.bf16.mxu0 0
        %1785 = vmatpush2.bf16.msra.mxu0 0
        %1786 = vmatprep.subr.bf16.mxu0 0
        %1787 = vmatpush2.bf16.msra.mxu0 0
        %1788 = vmatprep.subr.bf16.mxu0 0
        %1789 = vmatpush2.bf16.msra.mxu0 0
        %1790 = vmatprep.mubr.bf16.mxu0 0
        %1791 = vmatmul.mubr.bf16.gmra.mxu0 %v1711
        %v1792 = vpop.f32.mrf.mxu0
        %v1793 = vadd.f32 0.0, %v1792
        %v1794 = vpop.f32.mrf.mxu0
        %v1795 = vpop.f32.mrf.mxu0
        %v1796 = vadd.f32 0.0, %v1795
        %v1797 = vpop.f32.mrf.mxu0
        %1798 = vmatprep.mubr.bf16.mxu0 0
        %1799 = vmatmul.mubr.bf16.gmra.mxu0 %v1714
        %v1800 = vpop.f32.mrf.mxu0
        %v1801 = vadd.f32 0.0, %v1800
        %v1802 = vpop.f32.mrf.mxu0
        %v1803 = vpop.f32.mrf.mxu0
        %v1804 = vadd.f32 0.0, %v1803
        %v1805 = vpop.f32.mrf.mxu0
        %1806 = vmatprep.mubr.bf16.mxu0 0
        %1807 = vmatmul.mubr.bf16.gmra.mxu0 %v1717
        %v1808 = vpop.f32.mrf.mxu0
        %v1809 = vadd.f32 0.0, %v1808
        %v1810 = vpop.f32.mrf.mxu0
        %v1811 = vpop.f32.mrf.mxu0
        %v1812 = vadd.f32 0.0, %v1811
        %v1813 = vpop.f32.mrf.mxu0
        %1814 = vmatprep.mubr.bf16.mxu0 0
        %1815 = vmatmul.mubr.bf16.gmra.mxu0 %v1720
        %v1816 = vpop.f32.mrf.mxu0
        %v1817 = vadd.f32 0.0, %v1816
        %v1818 = vpop.f32.mrf.mxu0
        %v1819 = vpop.f32.mrf.mxu0
        %v1820 = vadd.f32 0.0, %v1819
        %v1821 = vpop.f32.mrf.mxu0
        %1822 = vmatprep.mubr.bf16.mxu0 0
        %1823 = vmatmul.mubr.bf16.gmra.mxu0 %v1723
        %v1824 = vpop.f32.mrf.mxu0
        %v1825 = vadd.f32 0.0, %v1824
        %v1826 = vpop.f32.mrf.mxu0
        %v1827 = vpop.f32.mrf.mxu0
        %v1828 = vadd.f32 0.0, %v1827
        %v1829 = vpop.f32.mrf.mxu0
        %1830 = vmatprep.mubr.bf16.mxu0 0
        %1831 = vmatmul.mubr.bf16.gmra.mxu0 %v1726
        %v1832 = vpop.f32.mrf.mxu0
        %v1833 = vadd.f32 0.0, %v1832
        %v1834 = vpop.f32.mrf.mxu0
        %v1835 = vpop.f32.mrf.mxu0
        %v1836 = vadd.f32 0.0, %v1835
        %v1837 = vpop.f32.mrf.mxu0
        %1838 = vmatprep.mubr.bf16.mxu0 0
        %1839 = vmatmul.mubr.bf16.gmra.mxu0 %v1729
        %v1840 = vpop.f32.mrf.mxu0
        %v1841 = vadd.f32 0.0, %v1840
        %v1842 = vpop.f32.mrf.mxu0
        %v1843 = vpop.f32.mrf.mxu0
        %v1844 = vadd.f32 0.0, %v1843
        %v1845 = vpop.f32.mrf.mxu0
        %1846 = vmatprep.mubr.bf16.mxu0 0
        %1847 = vmatmul.mubr.bf16.gmra.mxu0 %v1732
        %v1848 = vpop.f32.mrf.mxu0
        %v1849 = vadd.f32 0.0, %v1848
        %v1850 = vpop.f32.mrf.mxu0
        %v1851 = vpop.f32.mrf.mxu0
        %v1852 = vadd.f32 0.0, %v1851
        %v1853 = vpop.f32.mrf.mxu0
        %1854 = vmatprep.mubr.bf16.mxu0 0
        %1855 = vmatmul.mubr.bf16.gmra.mxu0 %v1735
        %v1856 = vpop.f32.mrf.mxu0
        %v1857 = vadd.f32 0.0, %v1856
        %v1858 = vpop.f32.mrf.mxu0
        %v1859 = vpop.f32.mrf.mxu0
        %v1860 = vadd.f32 0.0, %v1859
        %v1861 = vpop.f32.mrf.mxu0
        %1862 = vmatprep.mubr.bf16.mxu0 0
        %1863 = vmatmul.mubr.bf16.gmra.mxu0 %v1738
        %v1864 = vpop.f32.mrf.mxu0
        %v1865 = vadd.f32 0.0, %v1864
        %v1866 = vpop.f32.mrf.mxu0
        %v1867 = vpop.f32.mrf.mxu0
        %v1868 = vadd.f32 0.0, %v1867
        %v1869 = vpop.f32.mrf.mxu0
        %1870 = vmatprep.mubr.bf16.mxu0 0
        %1871 = vmatmul.mubr.bf16.gmra.mxu0 %v1741
        %v1872 = vpop.f32.mrf.mxu0
        %v1873 = vadd.f32 0.0, %v1872
        %v1874 = vpop.f32.mrf.mxu0
        %v1875 = vpop.f32.mrf.mxu0
        %v1876 = vadd.f32 0.0, %v1875
        %v1877 = vpop.f32.mrf.mxu0
        %1878 = vmatprep.mubr.bf16.mxu0 0
        %1879 = vmatmul.mubr.bf16.gmra.mxu0 %v1744
        %v1880 = vpop.f32.mrf.mxu0
        %v1881 = vadd.f32 0.0, %v1880
        %v1882 = vpop.f32.mrf.mxu0
        %v1883 = vpop.f32.mrf.mxu0
        %v1884 = vadd.f32 0.0, %v1883
        %v1885 = vpop.f32.mrf.mxu0
        %1886 = vmatprep.mubr.bf16.mxu0 0
        %1887 = vmatmul.mubr.bf16.gmra.mxu0 %v1747
        %v1888 = vpop.f32.mrf.mxu0
        %v1889 = vadd.f32 0.0, %v1888
        %v1890 = vpop.f32.mrf.mxu0
        %v1891 = vpop.f32.mrf.mxu0
        %v1892 = vadd.f32 0.0, %v1891
        %v1893 = vpop.f32.mrf.mxu0
        %1894 = vmatprep.mubr.bf16.mxu0 0
        %1895 = vmatmul.mubr.bf16.gmra.mxu0 %v1750
        %v1896 = vpop.f32.mrf.mxu0
        %v1897 = vadd.f32 0.0, %v1896
        %v1898 = vpop.f32.mrf.mxu0
        %v1899 = vpop.f32.mrf.mxu0
        %v1900 = vadd.f32 0.0, %v1899
        %v1901 = vpop.f32.mrf.mxu0
        %1902 = vmatprep.mubr.bf16.mxu0 0
        %1903 = vmatmul.mubr.bf16.gmra.mxu0 %v1753
        %v1904 = vpop.f32.mrf.mxu0
        %v1905 = vadd.f32 0.0, %v1904
        %v1906 = vpop.f32.mrf.mxu0
        %v1907 = vpop.f32.mrf.mxu0
        %v1908 = vadd.f32 0.0, %v1907
        %v1909 = vpop.f32.mrf.mxu0
        %1910 = vmatprep.mubr.bf16.mxu0 0
        %1911 = vmatmul.mubr.bf16.gmra.mxu0 %v1756
        %v1912 = vpop.f32.mrf.mxu0
        %v1913 = vadd.f32 0.0, %v1912
        %v1914 = vpop.f32.mrf.mxu0
        %v1915 = vpop.f32.mrf.mxu0
        %v1916 = vadd.f32 0.0, %v1915
        %v1917 = vpop.f32.mrf.mxu0
        %1918 = vdwg.mxu0
        %v1951 = vunpack.c.l.b16 %v1504
        %v1952 = vunpack.c.l.b16 %v1505
        %v1953 = vunpack.c.l.b16 %v1506
        %v1954 = vunpack.c.l.b16 %v1507
        %v1955 = vunpack.c.l.b16 %v1508
        %v1956 = vunpack.c.l.b16 %v1509
        %v1957 = vunpack.c.l.b16 %v1510
        %v1958 = vunpack.c.l.b16 %v1511
        %v1959 = vunpack.c.l.b16 %v1512
        %v1960 = vunpack.c.l.b16 %v1513
        %v1961 = vunpack.c.l.b16 %v1514
        %v1962 = vunpack.c.l.b16 %v1515
        %v1963 = vunpack.c.l.b16 %v1516
        %v1964 = vunpack.c.l.b16 %v1517
        %v1965 = vunpack.c.l.b16 %v1518
        %v1966 = vunpack.c.l.b16 %v1519
        %v1967 = vunpack.c.l.b16 %v1520
        %v1968 = vunpack.c.l.b16 %v1521
        %v1969 = vunpack.c.l.b16 %v1522
        %v1970 = vunpack.c.l.b16 %v1523
        %v1971 = vunpack.c.l.b16 %v1524
        %v1972 = vunpack.c.l.b16 %v1525
        %v1973 = vunpack.c.l.b16 %v1526
        %v1974 = vunpack.c.l.b16 %v1527
        %v1975 = vunpack.c.l.b16 %v1528
        %v1976 = vunpack.c.l.b16 %v1529
        %v1977 = vunpack.c.l.b16 %v1530
        %v1978 = vunpack.c.l.b16 %v1531
        %v1979 = vunpack.c.l.b16 %v1532
        %v1980 = vunpack.c.l.b16 %v1533
        %v1981 = vunpack.c.l.b16 %v1534
        %v1982 = vunpack.c.l.b16 %v1535
        %v1983 = vpack.c.b16 %v1952, %v1951
        %v1984 = vpack.c.b16 %v1954, %v1953
        %v1985 = vpack.c.b16 %v1956, %v1955
        %v1986 = vpack.c.b16 %v1958, %v1957
        %v1987 = vpack.c.b16 %v1960, %v1959
        %v1988 = vpack.c.b16 %v1962, %v1961
        %v1989 = vpack.c.b16 %v1964, %v1963
        %v1990 = vpack.c.b16 %v1966, %v1965
        %v1991 = vpack.c.b16 %v1968, %v1967
        %v1992 = vpack.c.b16 %v1970, %v1969
        %v1993 = vpack.c.b16 %v1972, %v1971
        %v1994 = vpack.c.b16 %v1974, %v1973
        %v1995 = vpack.c.b16 %v1976, %v1975
        %v1996 = vpack.c.b16 %v1978, %v1977
        %v1997 = vpack.c.b16 %v1980, %v1979
        %v1998 = vpack.c.b16 %v1982, %v1981
        %v2011 = vunpack.c.l.b16 %v1536
        %v2012 = vunpack.c.l.b16 %v1537
        %v2013 = vunpack.c.l.b16 %v1538
        %v2014 = vunpack.c.l.b16 %v1539
        %v2015 = vunpack.c.l.b16 %v1540
        %v2016 = vunpack.c.l.b16 %v1541
        %v2017 = vunpack.c.l.b16 %v1542
        %v2018 = vunpack.c.l.b16 %v1543
        %v2019 = vunpack.c.l.b16 %v1544
        %v2020 = vunpack.c.l.b16 %v1545
        %v2021 = vunpack.c.l.b16 %v1546
        %v2022 = vunpack.c.l.b16 %v1547
        %v2023 = vpack.c.b16 %v2012, %v2011
        %v2024 = vpack.c.b16 %v2014, %v2013
        %v2025 = vpack.c.b16 %v2016, %v2015
        %v2026 = vpack.c.b16 %v2018, %v2017
        %v2027 = vpack.c.b16 %v2020, %v2019
        %v2028 = vpack.c.b16 %v2022, %v2021
        %v2036 = vsel %vm1709, %v1983, 0
        %v2039 = vsel %vm1709, %v1984, 0
        %v2042 = vsel %vm1709, %v1985, 0
        %v2045 = vsel %vm1709, %v1986, 0
        %v2048 = vsel %vm1709, %v1987, 0
        %v2051 = vsel %vm1709, %v1988, 0
        %v2054 = vsel %vm1709, %v1989, 0
        %v2057 = vsel %vm1709, %v1990, 0
        %v2060 = vsel %vm1709, %v1991, 0
        %v2063 = vsel %vm1709, %v1992, 0
        %v2066 = vsel %vm1709, %v1993, 0
        %v2069 = vsel %vm1709, %v1994, 0
        %v2072 = vsel %vm1709, %v1995, 0
        %v2075 = vsel %vm1709, %v1996, 0
        %v2078 = vsel %vm1709, %v1997, 0
        %v2081 = vsel %vm1709, %v1998, 0
        %2083 = vmatprep.subr.bf16.mxu0 0
        %2084 = vmatpush1.bf16.msra.mxu0 0
        %2085 = vmatprep.subr.bf16.mxu0 0
        %2086 = vmatpush1.bf16.msra.mxu0 0
        %2087 = vmatprep.subr.bf16.mxu0 0
        %2088 = vmatpush1.bf16.msra.mxu0 %v2028
        %2089 = vmatprep.subr.bf16.mxu0 0
        %2090 = vmatpush1.bf16.msra.mxu0 %v2027
        %2091 = vmatprep.subr.bf16.mxu0 0
        %2092 = vmatpush1.bf16.msra.mxu0 %v2026
        %2093 = vmatprep.subr.bf16.mxu0 0
        %2094 = vmatpush1.bf16.msra.mxu0 %v2025
        %2095 = vmatprep.subr.bf16.mxu0 0
        %2096 = vmatpush1.bf16.msra.mxu0 %v2024
        %2097 = vmatprep.subr.bf16.mxu0 0
        %2098 = vmatpush1.bf16.msra.mxu0 %v2023
        %2099 = vmatprep.subr.bf16.mxu0 0
        %2100 = vmatpush2.bf16.msra.mxu0 0
        %2101 = vmatprep.subr.bf16.mxu0 0
        %2102 = vmatpush2.bf16.msra.mxu0 0
        %2103 = vmatprep.subr.bf16.mxu0 0
        %2104 = vmatpush2.bf16.msra.mxu0 0
        %2105 = vmatprep.subr.bf16.mxu0 0
        %2106 = vmatpush2.bf16.msra.mxu0 0
        %2107 = vmatprep.subr.bf16.mxu0 0
        %2108 = vmatpush2.bf16.msra.mxu0 0
        %2109 = vmatprep.subr.bf16.mxu0 0
        %2110 = vmatpush2.bf16.msra.mxu0 0
        %2111 = vmatprep.subr.bf16.mxu0 0
        %2112 = vmatpush2.bf16.msra.mxu0 0
        %2113 = vmatprep.subr.bf16.mxu0 0
        %2114 = vmatpush2.bf16.msra.mxu0 0
        %2115 = vmatprep.mubr.bf16.mxu0 0
        %2116 = vmatmul.mubr.bf16.gmra.mxu0 %v2036
        %v2117 = vpop.f32.mrf.mxu0
        %v2118 = vadd.f32 %v1793, %v2117
        %v2119 = vpop.f32.mrf.mxu0
        %v2120 = vpop.f32.mrf.mxu0
        %v2121 = vadd.f32 %v1796, %v2120
        %v2122 = vpop.f32.mrf.mxu0
        %2123 = vmatprep.mubr.bf16.mxu0 0
        %2124 = vmatmul.mubr.bf16.gmra.mxu0 %v2039
        %v2125 = vpop.f32.mrf.mxu0
        %v2126 = vadd.f32 %v1801, %v2125
        %v2127 = vpop.f32.mrf.mxu0
        %v2128 = vpop.f32.mrf.mxu0
        %v2129 = vadd.f32 %v1804, %v2128
        %v2130 = vpop.f32.mrf.mxu0
        %2131 = vmatprep.mubr.bf16.mxu0 0
        %2132 = vmatmul.mubr.bf16.gmra.mxu0 %v2042
        %v2133 = vpop.f32.mrf.mxu0
        %v2134 = vadd.f32 %v1809, %v2133
        %v2135 = vpop.f32.mrf.mxu0
        %v2136 = vpop.f32.mrf.mxu0
        %v2137 = vadd.f32 %v1812, %v2136
        %v2138 = vpop.f32.mrf.mxu0
        %2139 = vmatprep.mubr.bf16.mxu0 0
        %2140 = vmatmul.mubr.bf16.gmra.mxu0 %v2045
        %v2141 = vpop.f32.mrf.mxu0
        %v2142 = vadd.f32 %v1817, %v2141
        %v2143 = vpop.f32.mrf.mxu0
        %v2144 = vpop.f32.mrf.mxu0
        %v2145 = vadd.f32 %v1820, %v2144
        %v2146 = vpop.f32.mrf.mxu0
        %2147 = vmatprep.mubr.bf16.mxu0 0
        %2148 = vmatmul.mubr.bf16.gmra.mxu0 %v2048
        %v2149 = vpop.f32.mrf.mxu0
        %v2150 = vadd.f32 %v1825, %v2149
        %v2151 = vpop.f32.mrf.mxu0
        %v2152 = vpop.f32.mrf.mxu0
        %v2153 = vadd.f32 %v1828, %v2152
        %v2154 = vpop.f32.mrf.mxu0
        %2155 = vmatprep.mubr.bf16.mxu0 0
        %2156 = vmatmul.mubr.bf16.gmra.mxu0 %v2051
        %v2157 = vpop.f32.mrf.mxu0
        %v2158 = vadd.f32 %v1833, %v2157
        %v2159 = vpop.f32.mrf.mxu0
        %v2160 = vpop.f32.mrf.mxu0
        %v2161 = vadd.f32 %v1836, %v2160
        %v2162 = vpop.f32.mrf.mxu0
        %2163 = vmatprep.mubr.bf16.mxu0 0
        %2164 = vmatmul.mubr.bf16.gmra.mxu0 %v2054
        %v2165 = vpop.f32.mrf.mxu0
        %v2166 = vadd.f32 %v1841, %v2165
        %v2167 = vpop.f32.mrf.mxu0
        %v2168 = vpop.f32.mrf.mxu0
        %v2169 = vadd.f32 %v1844, %v2168
        %v2170 = vpop.f32.mrf.mxu0
        %2171 = vmatprep.mubr.bf16.mxu0 0
        %2172 = vmatmul.mubr.bf16.gmra.mxu0 %v2057
        %v2173 = vpop.f32.mrf.mxu0
        %v2174 = vadd.f32 %v1849, %v2173
        %v2175 = vpop.f32.mrf.mxu0
        %v2176 = vpop.f32.mrf.mxu0
        %v2177 = vadd.f32 %v1852, %v2176
        %v2178 = vpop.f32.mrf.mxu0
        %2179 = vmatprep.mubr.bf16.mxu0 0
        %2180 = vmatmul.mubr.bf16.gmra.mxu0 %v2060
        %v2181 = vpop.f32.mrf.mxu0
        %v2182 = vadd.f32 %v1857, %v2181
        %v2183 = vpop.f32.mrf.mxu0
        %v2184 = vpop.f32.mrf.mxu0
        %v2185 = vadd.f32 %v1860, %v2184
        %v2186 = vpop.f32.mrf.mxu0
        %2187 = vmatprep.mubr.bf16.mxu0 0
        %2188 = vmatmul.mubr.bf16.gmra.mxu0 %v2063
        %v2189 = vpop.f32.mrf.mxu0
        %v2190 = vadd.f32 %v1865, %v2189
        %v2191 = vpop.f32.mrf.mxu0
        %v2192 = vpop.f32.mrf.mxu0
        %v2193 = vadd.f32 %v1868, %v2192
        %v2194 = vpop.f32.mrf.mxu0
        %2195 = vmatprep.mubr.bf16.mxu0 0
        %2196 = vmatmul.mubr.bf16.gmra.mxu0 %v2066
        %v2197 = vpop.f32.mrf.mxu0
        %v2198 = vadd.f32 %v1873, %v2197
        %v2199 = vpop.f32.mrf.mxu0
        %v2200 = vpop.f32.mrf.mxu0
        %v2201 = vadd.f32 %v1876, %v2200
        %v2202 = vpop.f32.mrf.mxu0
        %2203 = vmatprep.mubr.bf16.mxu0 0
        %2204 = vmatmul.mubr.bf16.gmra.mxu0 %v2069
        %v2205 = vpop.f32.mrf.mxu0
        %v2206 = vadd.f32 %v1881, %v2205
        %v2207 = vpop.f32.mrf.mxu0
        %v2208 = vpop.f32.mrf.mxu0
        %v2209 = vadd.f32 %v1884, %v2208
        %v2210 = vpop.f32.mrf.mxu0
        %2211 = vmatprep.mubr.bf16.mxu0 0
        %2212 = vmatmul.mubr.bf16.gmra.mxu0 %v2072
        %v2213 = vpop.f32.mrf.mxu0
        %v2214 = vadd.f32 %v1889, %v2213
        %v2215 = vpop.f32.mrf.mxu0
        %v2216 = vpop.f32.mrf.mxu0
        %v2217 = vadd.f32 %v1892, %v2216
        %v2218 = vpop.f32.mrf.mxu0
        %2219 = vmatprep.mubr.bf16.mxu0 0
        %2220 = vmatmul.mubr.bf16.gmra.mxu0 %v2075
        %v2221 = vpop.f32.mrf.mxu0
        %v2222 = vadd.f32 %v1897, %v2221
        %v2223 = vpop.f32.mrf.mxu0
        %v2224 = vpop.f32.mrf.mxu0
        %v2225 = vadd.f32 %v1900, %v2224
        %v2226 = vpop.f32.mrf.mxu0
        %2227 = vmatprep.mubr.bf16.mxu0 0
        %2228 = vmatmul.mubr.bf16.gmra.mxu0 %v2078
        %v2229 = vpop.f32.mrf.mxu0
        %v2230 = vadd.f32 %v1905, %v2229
        %v2231 = vpop.f32.mrf.mxu0
        %v2232 = vpop.f32.mrf.mxu0
        %v2233 = vadd.f32 %v1908, %v2232
        %v2234 = vpop.f32.mrf.mxu0
        %2235 = vmatprep.mubr.bf16.mxu0 0
        %2236 = vmatmul.mubr.bf16.gmra.mxu0 %v2081
        %v2237 = vpop.f32.mrf.mxu0
        %v2238 = vadd.f32 %v1913, %v2237
        %v2239 = vpop.f32.mrf.mxu0
        %v2240 = vpop.f32.mrf.mxu0
        %v2241 = vadd.f32 %v1916, %v2240
        %v2242 = vpop.f32.mrf.mxu0
        %2243 = vdwg.mxu0
        %s2244 = scalar_lea.vmem [#allocation2], 16
        %v2245 = vld [vmem:[%s2244] sm:$0xf]
        %v2246 = vld [vmem:[%s2244 + $0x4] sm:$0xf]
        %v2247 = vld [vmem:[%s2244 + $0x8] sm:$0xf]
        %v2248 = vld [vmem:[%s2244 + $0xc] sm:$0xf]
        %v2249 = vld [vmem:[%s2244 + $0x10] sm:$0xf]
        %v2250 = vld [vmem:[%s2244 + $0x14] sm:$0xf]
        %v2251 = vld [vmem:[%s2244 + $0x18] sm:$0xf]
        %v2252 = vld [vmem:[%s2244 + $0x1c] sm:$0xf]
        %v2253 = vld [vmem:[%s2244 + $0x20] sm:$0xf]
        %v2254 = vld [vmem:[%s2244 + $0x24] sm:$0xf]
        %v2255 = vld [vmem:[%s2244 + $0x28] sm:$0xf]
        %v2256 = vld [vmem:[%s2244 + $0x2c] sm:$0xf]
        %v2257 = vld [vmem:[%s2244 + $0x30] sm:$0xf]
        %v2258 = vld [vmem:[%s2244 + $0x34] sm:$0xf]
        %v2259 = vld [vmem:[%s2244 + $0x38] sm:$0xf]
        %v2260 = vld [vmem:[%s2244 + $0x3c] sm:$0xf]
        %v2261 = vld [vmem:[%s2244 + $0x40] sm:$0xf]
        %v2262 = vld [vmem:[%s2244 + $0x44] sm:$0xf]
        %v2263 = vld [vmem:[%s2244 + $0x48] sm:$0xf]
        %v2264 = vld [vmem:[%s2244 + $0x4c] sm:$0xf]
        %v2265 = vld [vmem:[%s2244 + $0x50] sm:$0xf]
        %v2266 = vld [vmem:[%s2244 + $0x54] sm:$0xf]
        %v2267 = vld [vmem:[%s2244 + $0x58] sm:$0xf]
        %v2268 = vld [vmem:[%s2244 + $0x5c] sm:$0xf]
        %v2269 = vld [vmem:[%s2244 + $0x60] sm:$0xf]
        %v2270 = vld [vmem:[%s2244 + $0x64] sm:$0xf]
        %v2271 = vld [vmem:[%s2244 + $0x68] sm:$0xf]
        %v2272 = vld [vmem:[%s2244 + $0x6c] sm:$0xf]
        %v2273 = vld [vmem:[%s2244 + $0x70] sm:$0xf]
        %v2274 = vld [vmem:[%s2244 + $0x74] sm:$0xf]
        %v2275 = vld [vmem:[%s2244 + $0x78] sm:$0xf]
        %v2276 = vld [vmem:[%s2244 + $0x7c] sm:$0xf]
        %s2277 = scalar_lea.vmem %s1, 96
        %v2278 = vld [vmem:[%s2277] sm:$0xf]
        %v2279 = vld [vmem:[%s2277 + $0x4] sm:$0xf]
        %v2280 = vld [vmem:[%s2277 + $0x8] sm:$0xf]
        %v2281 = vld [vmem:[%s2277 + $0xc] sm:$0xf]
        %v2282 = vld [vmem:[%s2277 + $0x10] sm:$0xf]
        %v2283 = vld [vmem:[%s2277 + $0x14] sm:$0xf]
        %v2284 = vld [vmem:[%s2277 + $0x18] sm:$0xf]
        %v2285 = vld [vmem:[%s2277 + $0x1c] sm:$0xf]
        %v2286 = vld [vmem:[%s2277 + $0x20] sm:$0xf]
        %v2287 = vld [vmem:[%s2277 + $0x24] sm:$0xf]
        %v2288 = vld [vmem:[%s2277 + $0x28] sm:$0xf]
        %v2289 = vld [vmem:[%s2277 + $0x2c] sm:$0xf]
        %v2322 = vunpack.c.l.b16 %v2245
        %v2323 = vunpack.c.l.b16 %v2246
        %v2324 = vunpack.c.l.b16 %v2247
        %v2325 = vunpack.c.l.b16 %v2248
        %v2326 = vunpack.c.l.b16 %v2249
        %v2327 = vunpack.c.l.b16 %v2250
        %v2328 = vunpack.c.l.b16 %v2251
        %v2329 = vunpack.c.l.b16 %v2252
        %v2330 = vunpack.c.l.b16 %v2253
        %v2331 = vunpack.c.l.b16 %v2254
        %v2332 = vunpack.c.l.b16 %v2255
        %v2333 = vunpack.c.l.b16 %v2256
        %v2334 = vunpack.c.l.b16 %v2257
        %v2335 = vunpack.c.l.b16 %v2258
        %v2336 = vunpack.c.l.b16 %v2259
        %v2337 = vunpack.c.l.b16 %v2260
        %v2338 = vunpack.c.l.b16 %v2261
        %v2339 = vunpack.c.l.b16 %v2262
        %v2340 = vunpack.c.l.b16 %v2263
        %v2341 = vunpack.c.l.b16 %v2264
        %v2342 = vunpack.c.l.b16 %v2265
        %v2343 = vunpack.c.l.b16 %v2266
        %v2344 = vunpack.c.l.b16 %v2267
        %v2345 = vunpack.c.l.b16 %v2268
        %v2346 = vunpack.c.l.b16 %v2269
        %v2347 = vunpack.c.l.b16 %v2270
        %v2348 = vunpack.c.l.b16 %v2271
        %v2349 = vunpack.c.l.b16 %v2272
        %v2350 = vunpack.c.l.b16 %v2273
        %v2351 = vunpack.c.l.b16 %v2274
        %v2352 = vunpack.c.l.b16 %v2275
        %v2353 = vunpack.c.l.b16 %v2276
        %v2354 = vpack.c.b16 %v2323, %v2322
        %v2355 = vpack.c.b16 %v2325, %v2324
        %v2356 = vpack.c.b16 %v2327, %v2326
        %v2357 = vpack.c.b16 %v2329, %v2328
        %v2358 = vpack.c.b16 %v2331, %v2330
        %v2359 = vpack.c.b16 %v2333, %v2332
        %v2360 = vpack.c.b16 %v2335, %v2334
        %v2361 = vpack.c.b16 %v2337, %v2336
        %v2362 = vpack.c.b16 %v2339, %v2338
        %v2363 = vpack.c.b16 %v2341, %v2340
        %v2364 = vpack.c.b16 %v2343, %v2342
        %v2365 = vpack.c.b16 %v2345, %v2344
        %v2366 = vpack.c.b16 %v2347, %v2346
        %v2367 = vpack.c.b16 %v2349, %v2348
        %v2368 = vpack.c.b16 %v2351, %v2350
        %v2369 = vpack.c.b16 %v2353, %v2352
        %v2382 = vunpack.c.l.b16 %v2278
        %v2383 = vunpack.c.l.b16 %v2279
        %v2384 = vunpack.c.l.b16 %v2280
        %v2385 = vunpack.c.l.b16 %v2281
        %v2386 = vunpack.c.l.b16 %v2282
        %v2387 = vunpack.c.l.b16 %v2283
        %v2388 = vunpack.c.l.b16 %v2284
        %v2389 = vunpack.c.l.b16 %v2285
        %v2390 = vunpack.c.l.b16 %v2286
        %v2391 = vunpack.c.l.b16 %v2287
        %v2392 = vunpack.c.l.b16 %v2288
        %v2393 = vunpack.c.l.b16 %v2289
        %v2394 = vpack.c.b16 %v2383, %v2382
        %v2395 = vpack.c.b16 %v2385, %v2384
        %v2396 = vpack.c.b16 %v2387, %v2386
        %v2397 = vpack.c.b16 %v2389, %v2388
        %v2398 = vpack.c.b16 %v2391, %v2390
        %v2399 = vpack.c.b16 %v2393, %v2392
        %v2407 = vsel %vm1709, %v2354, 0
        %v2410 = vsel %vm1709, %v2355, 0
        %v2413 = vsel %vm1709, %v2356, 0
        %v2416 = vsel %vm1709, %v2357, 0
        %v2419 = vsel %vm1709, %v2358, 0
        %v2422 = vsel %vm1709, %v2359, 0
        %v2425 = vsel %vm1709, %v2360, 0
        %v2428 = vsel %vm1709, %v2361, 0
        %v2431 = vsel %vm1709, %v2362, 0
        %v2434 = vsel %vm1709, %v2363, 0
        %v2437 = vsel %vm1709, %v2364, 0
        %v2440 = vsel %vm1709, %v2365, 0
        %v2443 = vsel %vm1709, %v2366, 0
        %v2446 = vsel %vm1709, %v2367, 0
        %v2449 = vsel %vm1709, %v2368, 0
        %v2452 = vsel %vm1709, %v2369, 0
        %2454 = vmatprep.subr.bf16.mxu0 0
        %2455 = vmatpush1.bf16.msra.mxu0 0
        %2456 = vmatprep.subr.bf16.mxu0 0
        %2457 = vmatpush1.bf16.msra.mxu0 0
        %2458 = vmatprep.subr.bf16.mxu0 0
        %2459 = vmatpush1.bf16.msra.mxu0 %v2399
        %2460 = vmatprep.subr.bf16.mxu0 0
        %2461 = vmatpush1.bf16.msra.mxu0 %v2398
        %2462 = vmatprep.subr.bf16.mxu0 0
        %2463 = vmatpush1.bf16.msra.mxu0 %v2397
        %2464 = vmatprep.subr.bf16.mxu0 0
        %2465 = vmatpush1.bf16.msra.mxu0 %v2396
        %2466 = vmatprep.subr.bf16.mxu0 0
        %2467 = vmatpush1.bf16.msra.mxu0 %v2395
        %2468 = vmatprep.subr.bf16.mxu0 0
        %2469 = vmatpush1.bf16.msra.mxu0 %v2394
        %2470 = vmatprep.subr.bf16.mxu0 0
        %2471 = vmatpush2.bf16.msra.mxu0 0
        %2472 = vmatprep.subr.bf16.mxu0 0
        %2473 = vmatpush2.bf16.msra.mxu0 0
        %2474 = vmatprep.subr.bf16.mxu0 0
        %2475 = vmatpush2.bf16.msra.mxu0 0
        %2476 = vmatprep.subr.bf16.mxu0 0
        %2477 = vmatpush2.bf16.msra.mxu0 0
        %2478 = vmatprep.subr.bf16.mxu0 0
        %2479 = vmatpush2.bf16.msra.mxu0 0
        %2480 = vmatprep.subr.bf16.mxu0 0
        %2481 = vmatpush2.bf16.msra.mxu0 0
        %2482 = vmatprep.subr.bf16.mxu0 0
        %2483 = vmatpush2.bf16.msra.mxu0 0
        %2484 = vmatprep.subr.bf16.mxu0 0
        %2485 = vmatpush2.bf16.msra.mxu0 0
        %2486 = vmatprep.mubr.bf16.mxu0 0
        %2487 = vmatmul.mubr.bf16.gmra.mxu0 %v2407
        %v2488 = vpop.f32.mrf.mxu0
        %v2489 = vadd.f32 0.0, %v2488
        %v2490 = vpop.f32.mrf.mxu0
        %v2491 = vpop.f32.mrf.mxu0
        %v2492 = vadd.f32 0.0, %v2491
        %v2493 = vpop.f32.mrf.mxu0
        %2494 = vmatprep.mubr.bf16.mxu0 0
        %2495 = vmatmul.mubr.bf16.gmra.mxu0 %v2410
        %v2496 = vpop.f32.mrf.mxu0
        %v2497 = vadd.f32 0.0, %v2496
        %v2498 = vpop.f32.mrf.mxu0
        %v2499 = vpop.f32.mrf.mxu0
        %v2500 = vadd.f32 0.0, %v2499
        %v2501 = vpop.f32.mrf.mxu0
        %2502 = vmatprep.mubr.bf16.mxu0 0
        %2503 = vmatmul.mubr.bf16.gmra.mxu0 %v2413
        %v2504 = vpop.f32.mrf.mxu0
        %v2505 = vadd.f32 0.0, %v2504
        %v2506 = vpop.f32.mrf.mxu0
        %v2507 = vpop.f32.mrf.mxu0
        %v2508 = vadd.f32 0.0, %v2507
        %v2509 = vpop.f32.mrf.mxu0
        %2510 = vmatprep.mubr.bf16.mxu0 0
        %2511 = vmatmul.mubr.bf16.gmra.mxu0 %v2416
        %v2512 = vpop.f32.mrf.mxu0
        %v2513 = vadd.f32 0.0, %v2512
        %v2514 = vpop.f32.mrf.mxu0
        %v2515 = vpop.f32.mrf.mxu0
        %v2516 = vadd.f32 0.0, %v2515
        %v2517 = vpop.f32.mrf.mxu0
        %2518 = vmatprep.mubr.bf16.mxu0 0
        %2519 = vmatmul.mubr.bf16.gmra.mxu0 %v2419
        %v2520 = vpop.f32.mrf.mxu0
        %v2521 = vadd.f32 0.0, %v2520
        %v2522 = vpop.f32.mrf.mxu0
        %v2523 = vpop.f32.mrf.mxu0
        %v2524 = vadd.f32 0.0, %v2523
        %v2525 = vpop.f32.mrf.mxu0
        %2526 = vmatprep.mubr.bf16.mxu0 0
        %2527 = vmatmul.mubr.bf16.gmra.mxu0 %v2422
        %v2528 = vpop.f32.mrf.mxu0
        %v2529 = vadd.f32 0.0, %v2528
        %v2530 = vpop.f32.mrf.mxu0
        %v2531 = vpop.f32.mrf.mxu0
        %v2532 = vadd.f32 0.0, %v2531
        %v2533 = vpop.f32.mrf.mxu0
        %2534 = vmatprep.mubr.bf16.mxu0 0
        %2535 = vmatmul.mubr.bf16.gmra.mxu0 %v2425
        %v2536 = vpop.f32.mrf.mxu0
        %v2537 = vadd.f32 0.0, %v2536
        %v2538 = vpop.f32.mrf.mxu0
        %v2539 = vpop.f32.mrf.mxu0
        %v2540 = vadd.f32 0.0, %v2539
        %v2541 = vpop.f32.mrf.mxu0
        %2542 = vmatprep.mubr.bf16.mxu0 0
        %2543 = vmatmul.mubr.bf16.gmra.mxu0 %v2428
        %v2544 = vpop.f32.mrf.mxu0
        %v2545 = vadd.f32 0.0, %v2544
        %v2546 = vpop.f32.mrf.mxu0
        %v2547 = vpop.f32.mrf.mxu0
        %v2548 = vadd.f32 0.0, %v2547
        %v2549 = vpop.f32.mrf.mxu0
        %2550 = vmatprep.mubr.bf16.mxu0 0
        %2551 = vmatmul.mubr.bf16.gmra.mxu0 %v2431
        %v2552 = vpop.f32.mrf.mxu0
        %v2553 = vadd.f32 0.0, %v2552
        %v2554 = vpop.f32.mrf.mxu0
        %v2555 = vpop.f32.mrf.mxu0
        %v2556 = vadd.f32 0.0, %v2555
        %v2557 = vpop.f32.mrf.mxu0
        %2558 = vmatprep.mubr.bf16.mxu0 0
        %2559 = vmatmul.mubr.bf16.gmra.mxu0 %v2434
        %v2560 = vpop.f32.mrf.mxu0
        %v2561 = vadd.f32 0.0, %v2560
        %v2562 = vpop.f32.mrf.mxu0
        %v2563 = vpop.f32.mrf.mxu0
        %v2564 = vadd.f32 0.0, %v2563
        %v2565 = vpop.f32.mrf.mxu0
        %2566 = vmatprep.mubr.bf16.mxu0 0
        %2567 = vmatmul.mubr.bf16.gmra.mxu0 %v2437
        %v2568 = vpop.f32.mrf.mxu0
        %v2569 = vadd.f32 0.0, %v2568
        %v2570 = vpop.f32.mrf.mxu0
        %v2571 = vpop.f32.mrf.mxu0
        %v2572 = vadd.f32 0.0, %v2571
        %v2573 = vpop.f32.mrf.mxu0
        %2574 = vmatprep.mubr.bf16.mxu0 0
        %2575 = vmatmul.mubr.bf16.gmra.mxu0 %v2440
        %v2576 = vpop.f32.mrf.mxu0
        %v2577 = vadd.f32 0.0, %v2576
        %v2578 = vpop.f32.mrf.mxu0
        %v2579 = vpop.f32.mrf.mxu0
        %v2580 = vadd.f32 0.0, %v2579
        %v2581 = vpop.f32.mrf.mxu0
        %2582 = vmatprep.mubr.bf16.mxu0 0
        %2583 = vmatmul.mubr.bf16.gmra.mxu0 %v2443
        %v2584 = vpop.f32.mrf.mxu0
        %v2585 = vadd.f32 0.0, %v2584
        %v2586 = vpop.f32.mrf.mxu0
        %v2587 = vpop.f32.mrf.mxu0
        %v2588 = vadd.f32 0.0, %v2587
        %v2589 = vpop.f32.mrf.mxu0
        %2590 = vmatprep.mubr.bf16.mxu0 0
        %2591 = vmatmul.mubr.bf16.gmra.mxu0 %v2446
        %v2592 = vpop.f32.mrf.mxu0
        %v2593 = vadd.f32 0.0, %v2592
        %v2594 = vpop.f32.mrf.mxu0
        %v2595 = vpop.f32.mrf.mxu0
        %v2596 = vadd.f32 0.0, %v2595
        %v2597 = vpop.f32.mrf.mxu0
        %2598 = vmatprep.mubr.bf16.mxu0 0
        %2599 = vmatmul.mubr.bf16.gmra.mxu0 %v2449
        %v2600 = vpop.f32.mrf.mxu0
        %v2601 = vadd.f32 0.0, %v2600
        %v2602 = vpop.f32.mrf.mxu0
        %v2603 = vpop.f32.mrf.mxu0
        %v2604 = vadd.f32 0.0, %v2603
        %v2605 = vpop.f32.mrf.mxu0
        %2606 = vmatprep.mubr.bf16.mxu0 0
        %2607 = vmatmul.mubr.bf16.gmra.mxu0 %v2452
        %v2608 = vpop.f32.mrf.mxu0
        %v2609 = vadd.f32 0.0, %v2608
        %v2610 = vpop.f32.mrf.mxu0
        %v2611 = vpop.f32.mrf.mxu0
        %v2612 = vadd.f32 0.0, %v2611
        %v2613 = vpop.f32.mrf.mxu0
        %2614 = vdwg.mxu0
        %v2615 = vadd.f32 %v2118, %v2489
        %v2616 = vadd.f32 %v2121, %v2492
        %v2617 = vadd.f32 %v2126, %v2497
        %v2618 = vadd.f32 %v2129, %v2500
        %v2619 = vadd.f32 %v2134, %v2505
        %v2620 = vadd.f32 %v2137, %v2508
        %v2621 = vadd.f32 %v2142, %v2513
        %v2622 = vadd.f32 %v2145, %v2516
        %v2623 = vadd.f32 %v2150, %v2521
        %v2624 = vadd.f32 %v2153, %v2524
        %v2625 = vadd.f32 %v2158, %v2529
        %v2626 = vadd.f32 %v2161, %v2532
        %v2627 = vadd.f32 %v2166, %v2537
        %v2628 = vadd.f32 %v2169, %v2540
        %v2629 = vadd.f32 %v2174, %v2545
        %v2630 = vadd.f32 %v2177, %v2548
        %v2631 = vadd.f32 %v2182, %v2553
        %v2632 = vadd.f32 %v2185, %v2556
        %v2633 = vadd.f32 %v2190, %v2561
        %v2634 = vadd.f32 %v2193, %v2564
        %v2635 = vadd.f32 %v2198, %v2569
        %v2636 = vadd.f32 %v2201, %v2572
        %v2637 = vadd.f32 %v2206, %v2577
        %v2638 = vadd.f32 %v2209, %v2580
        %v2639 = vadd.f32 %v2214, %v2585
        %v2640 = vadd.f32 %v2217, %v2588
        %v2641 = vadd.f32 %v2222, %v2593
        %v2642 = vadd.f32 %v2225, %v2596
        %v2643 = vadd.f32 %v2230, %v2601
        %v2644 = vadd.f32 %v2233, %v2604
        %v2645 = vadd.f32 %v2238, %v2609
        %v2646 = vadd.f32 %v2241, %v2612
        %v2647 = vld [vmem:[%s2] sm:$0x1]
        %v2649 = vlaneseq
        %v2650 = vshrl.u32 %v2649, 7
        %v2651 = vsub.s32 0, %v2650
        %v2652 = vrot.slane %v2647, %v2651
        %v2654 = vmul.f32 %v2615, %v2652
        %v2655 = vmul.f32 %v2616, %v2652
        %v2656 = vmul.f32 %v2617, %v2652
        %v2657 = vmul.f32 %v2618, %v2652
        %v2658 = vmul.f32 %v2619, %v2652
        %v2659 = vmul.f32 %v2620, %v2652
        %v2660 = vmul.f32 %v2621, %v2652
        %v2661 = vmul.f32 %v2622, %v2652
        %v2662 = vmul.f32 %v2623, %v2652
        %v2663 = vmul.f32 %v2624, %v2652
        %v2664 = vmul.f32 %v2625, %v2652
        %v2665 = vmul.f32 %v2626, %v2652
        %v2666 = vmul.f32 %v2627, %v2652
        %v2667 = vmul.f32 %v2628, %v2652
        %v2668 = vmul.f32 %v2629, %v2652
        %v2669 = vmul.f32 %v2630, %v2652
        %v2670 = vmul.f32 %v2631, %v2652
        %v2671 = vmul.f32 %v2632, %v2652
        %v2672 = vmul.f32 %v2633, %v2652
        %v2673 = vmul.f32 %v2634, %v2652
        %v2674 = vmul.f32 %v2635, %v2652
        %v2675 = vmul.f32 %v2636, %v2652
        %v2676 = vmul.f32 %v2637, %v2652
        %v2677 = vmul.f32 %v2638, %v2652
        %v2678 = vmul.f32 %v2639, %v2652
        %v2679 = vmul.f32 %v2640, %v2652
        %v2680 = vmul.f32 %v2641, %v2652
        %v2681 = vmul.f32 %v2642, %v2652
        %v2682 = vmul.f32 %v2643, %v2652
        %v2683 = vmul.f32 %v2644, %v2652
        %v2684 = vmul.f32 %v2645, %v2652
        %v2685 = vmul.f32 %v2646, %v2652
        %v2686 = vld [vmem:[%s3] sm:$0x1]
        %v2688 = vlaneseq
        %v2689 = vshrl.u32 %v2688, 7
        %v2690 = vsub.s32 0, %v2689
        %v2691 = vrot.slane %v2686, %v2690
        %v2693 = vadd.f32 %v2654, %v2691
        %v2694 = vadd.f32 %v2655, %v2691
        %v2695 = vadd.f32 %v2656, %v2691
        %v2696 = vadd.f32 %v2657, %v2691
        %v2697 = vadd.f32 %v2658, %v2691
        %v2698 = vadd.f32 %v2659, %v2691
        %v2699 = vadd.f32 %v2660, %v2691
        %v2700 = vadd.f32 %v2661, %v2691
        %v2701 = vadd.f32 %v2662, %v2691
        %v2702 = vadd.f32 %v2663, %v2691
        %v2703 = vadd.f32 %v2664, %v2691
        %v2704 = vadd.f32 %v2665, %v2691
        %v2705 = vadd.f32 %v2666, %v2691
        %v2706 = vadd.f32 %v2667, %v2691
        %v2707 = vadd.f32 %v2668, %v2691
        %v2708 = vadd.f32 %v2669, %v2691
        %v2709 = vadd.f32 %v2670, %v2691
        %v2710 = vadd.f32 %v2671, %v2691
        %v2711 = vadd.f32 %v2672, %v2691
        %v2712 = vadd.f32 %v2673, %v2691
        %v2713 = vadd.f32 %v2674, %v2691
        %v2714 = vadd.f32 %v2675, %v2691
        %v2715 = vadd.f32 %v2676, %v2691
        %v2716 = vadd.f32 %v2677, %v2691
        %v2717 = vadd.f32 %v2678, %v2691
        %v2718 = vadd.f32 %v2679, %v2691
        %v2719 = vadd.f32 %v2680, %v2691
        %v2720 = vadd.f32 %v2681, %v2691
        %v2721 = vadd.f32 %v2682, %v2691
        %v2722 = vadd.f32 %v2683, %v2691
        %v2723 = vadd.f32 %v2684, %v2691
        %v2724 = vadd.f32 %v2685, %v2691
        %v2725 = vmax.f32 %v2693, 0.0
        %v2726 = vmax.f32 %v2694, 0.0
        %v2727 = vmax.f32 %v2695, 0.0
        %v2728 = vmax.f32 %v2696, 0.0
        %v2729 = vmax.f32 %v2697, 0.0
        %v2730 = vmax.f32 %v2698, 0.0
        %v2731 = vmax.f32 %v2699, 0.0
        %v2732 = vmax.f32 %v2700, 0.0
        %v2733 = vmax.f32 %v2701, 0.0
        %v2734 = vmax.f32 %v2702, 0.0
        %v2735 = vmax.f32 %v2703, 0.0
        %v2736 = vmax.f32 %v2704, 0.0
        %v2737 = vmax.f32 %v2705, 0.0
        %v2738 = vmax.f32 %v2706, 0.0
        %v2739 = vmax.f32 %v2707, 0.0
        %v2740 = vmax.f32 %v2708, 0.0
        %v2741 = vmax.f32 %v2709, 0.0
        %v2742 = vmax.f32 %v2710, 0.0
        %v2743 = vmax.f32 %v2711, 0.0
        %v2744 = vmax.f32 %v2712, 0.0
        %v2745 = vmax.f32 %v2713, 0.0
        %v2746 = vmax.f32 %v2714, 0.0
        %v2747 = vmax.f32 %v2715, 0.0
        %v2748 = vmax.f32 %v2716, 0.0
        %v2749 = vmax.f32 %v2717, 0.0
        %v2750 = vmax.f32 %v2718, 0.0
        %v2751 = vmax.f32 %v2719, 0.0
        %v2752 = vmax.f32 %v2720, 0.0
        %v2753 = vmax.f32 %v2721, 0.0
        %v2754 = vmax.f32 %v2722, 0.0
        %v2755 = vmax.f32 %v2723, 0.0
        %v2756 = vmax.f32 %v2724, 0.0
        %v2757 = vpack.c.bf16 %v2726, %v2725
        %v2758 = vpack.c.bf16 %v2728, %v2727
        %v2759 = vpack.c.bf16 %v2730, %v2729
        %v2760 = vpack.c.bf16 %v2732, %v2731
        %v2761 = vpack.c.bf16 %v2734, %v2733
        %v2762 = vpack.c.bf16 %v2736, %v2735
        %v2763 = vpack.c.bf16 %v2738, %v2737
        %v2764 = vpack.c.bf16 %v2740, %v2739
        %v2765 = vpack.c.bf16 %v2742, %v2741
        %v2766 = vpack.c.bf16 %v2744, %v2743
        %v2767 = vpack.c.bf16 %v2746, %v2745
        %v2768 = vpack.c.bf16 %v2748, %v2747
        %v2769 = vpack.c.bf16 %v2750, %v2749
        %v2770 = vpack.c.bf16 %v2752, %v2751
        %v2771 = vpack.c.bf16 %v2754, %v2753
        %v2772 = vpack.c.bf16 %v2756, %v2755
        %2773 = vst.msk [vmem:[#allocation3] sm:$0xf] %vm298, 0
        %2774 = vst.msk [vmem:[#allocation3 + $0x4] sm:$0xf] %vm298, 0
        %s2775 = scalar_lea.vmem [#allocation3], 136
        %2776 = vst.msk [vmem:[%s2775] sm:$0xf] %vm298, 0
        %2777 = vst.msk [vmem:[%s2775 + $0x4] sm:$0xf] %vm298, 0
        %v2778 = vld [vmem:[#allocation3] sm:$0x1]
        %v2779 = vsel %vm306, 0, %v2778
        %2780 = vst [vmem:[#allocation3] sm:$0x1] %v2779
        %v2781 = vld [vmem:[#allocation3 + $0x8] sm:$0x1]
        %v2782 = vsel %vm306, 0, %v2781
        %2783 = vst [vmem:[#allocation3 + $0x8] sm:$0x1] %v2782
        %v2784 = vld [vmem:[#allocation3 + $0x10] sm:$0x1]
        %v2785 = vsel %vm306, 0, %v2784
        %2786 = vst [vmem:[#allocation3 + $0x10] sm:$0x1] %v2785
        %v2787 = vld [vmem:[#allocation3 + $0x18] sm:$0x1]
        %v2788 = vsel %vm306, 0, %v2787
        %2789 = vst [vmem:[#allocation3 + $0x18] sm:$0x1] %v2788
        %v2790 = vld [vmem:[#allocation3 + $0x20] sm:$0x1]
        %v2791 = vsel %vm306, 0, %v2790
        %2792 = vst [vmem:[#allocation3 + $0x20] sm:$0x1] %v2791
        %v2793 = vld [vmem:[#allocation3 + $0x28] sm:$0x1]
        %v2794 = vsel %vm306, 0, %v2793
        %2795 = vst [vmem:[#allocation3 + $0x28] sm:$0x1] %v2794
        %v2796 = vld [vmem:[#allocation3 + $0x30] sm:$0x1]
        %v2797 = vsel %vm306, 0, %v2796
        %2798 = vst [vmem:[#allocation3 + $0x30] sm:$0x1] %v2797
        %v2799 = vld [vmem:[#allocation3 + $0x38] sm:$0x1]
        %v2800 = vsel %vm306, 0, %v2799
        %2801 = vst [vmem:[#allocation3 + $0x38] sm:$0x1] %v2800
        %v2802 = vld [vmem:[#allocation3 + $0x40] sm:$0x1]
        %v2803 = vsel %vm306, 0, %v2802
        %2804 = vst [vmem:[#allocation3 + $0x40] sm:$0x1] %v2803
        %v2805 = vld [vmem:[#allocation3 + $0x48] sm:$0x1]
        %v2806 = vsel %vm306, 0, %v2805
        %2807 = vst [vmem:[#allocation3 + $0x48] sm:$0x1] %v2806
        %v2808 = vld [vmem:[#allocation3 + $0x50] sm:$0x1]
        %v2809 = vsel %vm306, 0, %v2808
        %2810 = vst [vmem:[#allocation3 + $0x50] sm:$0x1] %v2809
        %v2811 = vld [vmem:[#allocation3 + $0x58] sm:$0x1]
        %v2812 = vsel %vm306, 0, %v2811
        %2813 = vst [vmem:[#allocation3 + $0x58] sm:$0x1] %v2812
        %v2814 = vld [vmem:[#allocation3 + $0x60] sm:$0x1]
        %v2815 = vsel %vm306, 0, %v2814
        %2816 = vst [vmem:[#allocation3 + $0x60] sm:$0x1] %v2815
        %v2817 = vld [vmem:[#allocation3 + $0x68] sm:$0x1]
        %v2818 = vsel %vm306, 0, %v2817
        %2819 = vst [vmem:[#allocation3 + $0x68] sm:$0x1] %v2818
        %v2820 = vld [vmem:[#allocation3 + $0x70] sm:$0x1]
        %v2821 = vsel %vm306, 0, %v2820
        %2822 = vst [vmem:[#allocation3 + $0x70] sm:$0x1] %v2821
        %v2823 = vld [vmem:[#allocation3 + $0x78] sm:$0x1]
        %v2824 = vsel %vm306, 0, %v2823
        %2825 = vst [vmem:[#allocation3 + $0x78] sm:$0x1] %v2824
        %v2826 = vld [vmem:[#allocation3 + $0x80] sm:$0x1]
        %v2827 = vsel %vm306, 0, %v2826
        %2828 = vst [vmem:[#allocation3 + $0x80] sm:$0x1] %v2827
        %v2829 = vld [vmem:[#allocation3 + $0x88] sm:$0x1]
        %v2830 = vsel %vm306, 0, %v2829
        %2831 = vst [vmem:[#allocation3 + $0x88] sm:$0x1] %v2830
        %v2832 = vld [vmem:[#allocation3 + $0x4] sm:$0x8]
        %v2833 = vsel %vm363, 0, %v2832
        %2834 = vst [vmem:[#allocation3 + $0x4] sm:$0x8] %v2833
        %v2835 = vld [vmem:[#allocation3 + $0xc] sm:$0x8]
        %v2836 = vsel %vm363, 0, %v2835
        %2837 = vst [vmem:[#allocation3 + $0xc] sm:$0x8] %v2836
        %v2838 = vld [vmem:[#allocation3 + $0x14] sm:$0x8]
        %v2839 = vsel %vm363, 0, %v2838
        %2840 = vst [vmem:[#allocation3 + $0x14] sm:$0x8] %v2839
        %v2841 = vld [vmem:[#allocation3 + $0x1c] sm:$0x8]
        %v2842 = vsel %vm363, 0, %v2841
        %2843 = vst [vmem:[#allocation3 + $0x1c] sm:$0x8] %v2842
        %v2844 = vld [vmem:[#allocation3 + $0x24] sm:$0x8]
        %v2845 = vsel %vm363, 0, %v2844
        %2846 = vst [vmem:[#allocation3 + $0x24] sm:$0x8] %v2845
        %v2847 = vld [vmem:[#allocation3 + $0x2c] sm:$0x8]
        %v2848 = vsel %vm363, 0, %v2847
        %2849 = vst [vmem:[#allocation3 + $0x2c] sm:$0x8] %v2848
        %v2850 = vld [vmem:[#allocation3 + $0x34] sm:$0x8]
        %v2851 = vsel %vm363, 0, %v2850
        %2852 = vst [vmem:[#allocation3 + $0x34] sm:$0x8] %v2851
        %v2853 = vld [vmem:[#allocation3 + $0x3c] sm:$0x8]
        %v2854 = vsel %vm363, 0, %v2853
        %2855 = vst [vmem:[#allocation3 + $0x3c] sm:$0x8] %v2854
        %v2856 = vld [vmem:[#allocation3 + $0x44] sm:$0x8]
        %v2857 = vsel %vm363, 0, %v2856
        %2858 = vst [vmem:[#allocation3 + $0x44] sm:$0x8] %v2857
        %v2859 = vld [vmem:[#allocation3 + $0x4c] sm:$0x8]
        %v2860 = vsel %vm363, 0, %v2859
        %2861 = vst [vmem:[#allocation3 + $0x4c] sm:$0x8] %v2860
        %v2862 = vld [vmem:[#allocation3 + $0x54] sm:$0x8]
        %v2863 = vsel %vm363, 0, %v2862
        %2864 = vst [vmem:[#allocation3 + $0x54] sm:$0x8] %v2863
        %v2865 = vld [vmem:[#allocation3 + $0x5c] sm:$0x8]
        %v2866 = vsel %vm363, 0, %v2865
        %2867 = vst [vmem:[#allocation3 + $0x5c] sm:$0x8] %v2866
        %v2868 = vld [vmem:[#allocation3 + $0x64] sm:$0x8]
        %v2869 = vsel %vm363, 0, %v2868
        %2870 = vst [vmem:[#allocation3 + $0x64] sm:$0x8] %v2869
        %v2871 = vld [vmem:[#allocation3 + $0x6c] sm:$0x8]
        %v2872 = vsel %vm363, 0, %v2871
        %2873 = vst [vmem:[#allocation3 + $0x6c] sm:$0x8] %v2872
        %v2874 = vld [vmem:[#allocation3 + $0x74] sm:$0x8]
        %v2875 = vsel %vm363, 0, %v2874
        %2876 = vst [vmem:[#allocation3 + $0x74] sm:$0x8] %v2875
        %v2877 = vld [vmem:[#allocation3 + $0x7c] sm:$0x8]
        %v2878 = vsel %vm363, 0, %v2877
        %2879 = vst [vmem:[#allocation3 + $0x7c] sm:$0x8] %v2878
        %v2880 = vld [vmem:[#allocation3 + $0x84] sm:$0x8]
        %v2881 = vsel %vm363, 0, %v2880
        %2882 = vst [vmem:[#allocation3 + $0x84] sm:$0x8] %v2881
        %v2883 = vld [vmem:[#allocation3 + $0x8c] sm:$0x8]
        %v2884 = vsel %vm363, 0, %v2883
        %2885 = vst [vmem:[#allocation3 + $0x8c] sm:$0x8] %v2884
        %v2902 = vunpack.c.l.b16 %v2757
        %v2903 = vunpack.c.h.b16 %v2757
        %v2904 = vunpack.c.l.b16 %v2758
        %v2905 = vunpack.c.h.b16 %v2758
        %v2906 = vunpack.c.l.b16 %v2759
        %v2907 = vunpack.c.h.b16 %v2759
        %v2908 = vunpack.c.l.b16 %v2760
        %v2909 = vunpack.c.h.b16 %v2760
        %v2910 = vunpack.c.l.b16 %v2761
        %v2911 = vunpack.c.h.b16 %v2761
        %v2912 = vunpack.c.l.b16 %v2762
        %v2913 = vunpack.c.h.b16 %v2762
        %v2914 = vunpack.c.l.b16 %v2763
        %v2915 = vunpack.c.h.b16 %v2763
        %v2916 = vunpack.c.l.b16 %v2764
        %v2917 = vunpack.c.h.b16 %v2764
        %v2918 = vunpack.c.l.b16 %v2765
        %v2919 = vunpack.c.h.b16 %v2765
        %v2920 = vunpack.c.l.b16 %v2766
        %v2921 = vunpack.c.h.b16 %v2766
        %v2922 = vunpack.c.l.b16 %v2767
        %v2923 = vunpack.c.h.b16 %v2767
        %v2924 = vunpack.c.l.b16 %v2768
        %v2925 = vunpack.c.h.b16 %v2768
        %v2926 = vunpack.c.l.b16 %v2769
        %v2927 = vunpack.c.h.b16 %v2769
        %v2928 = vunpack.c.l.b16 %v2770
        %v2929 = vunpack.c.h.b16 %v2770
        %v2930 = vunpack.c.l.b16 %v2771
        %v2931 = vunpack.c.h.b16 %v2771
        %v2932 = vunpack.c.l.b16 %v2772
        %v2933 = vunpack.c.h.b16 %v2772
        %v2934 = vpack.c.b16 %v2902, %v2902
        %v2935 = vpack.c.b16 %v2903, %v2903
        %v2936 = vpack.c.b16 %v2904, %v2904
        %v2937 = vpack.c.b16 %v2905, %v2905
        %v2938 = vpack.c.b16 %v2906, %v2906
        %v2939 = vpack.c.b16 %v2907, %v2907
        %v2940 = vpack.c.b16 %v2908, %v2908
        %v2941 = vpack.c.b16 %v2909, %v2909
        %v2942 = vpack.c.b16 %v2910, %v2910
        %v2943 = vpack.c.b16 %v2911, %v2911
        %v2944 = vpack.c.b16 %v2912, %v2912
        %v2945 = vpack.c.b16 %v2913, %v2913
        %v2946 = vpack.c.b16 %v2914, %v2914
        %v2947 = vpack.c.b16 %v2915, %v2915
        %v2948 = vpack.c.b16 %v2916, %v2916
        %v2949 = vpack.c.b16 %v2917, %v2917
        %v2950 = vpack.c.b16 %v2918, %v2918
        %v2951 = vpack.c.b16 %v2919, %v2919
        %v2952 = vpack.c.b16 %v2920, %v2920
        %v2953 = vpack.c.b16 %v2921, %v2921
        %v2954 = vpack.c.b16 %v2922, %v2922
        %v2955 = vpack.c.b16 %v2923, %v2923
        %v2956 = vpack.c.b16 %v2924, %v2924
        %v2957 = vpack.c.b16 %v2925, %v2925
        %v2958 = vpack.c.b16 %v2926, %v2926
        %v2959 = vpack.c.b16 %v2927, %v2927
        %v2960 = vpack.c.b16 %v2928, %v2928
        %v2961 = vpack.c.b16 %v2929, %v2929
        %v2962 = vpack.c.b16 %v2930, %v2930
        %v2963 = vpack.c.b16 %v2931, %v2931
        %v2964 = vpack.c.b16 %v2932, %v2932
        %v2965 = vpack.c.b16 %v2933, %v2933
        %v2967 = vshrl.u32 %v2934, 16
        %v2969 = vrot.slane %v2967, 7
        %v2970 = vshll.u32 %v2934, 16
        %v2972 = vor.u32 %v2969, %v2970
        %v2973 = vrot.slane %v2969, 4
        %v2975 = vshrl.u32 %v2935, 16
        %v2977 = vrot.slane %v2975, 7
        %v2978 = vshll.u32 %v2935, 16
        %v2980 = vor.u32 %v2977, %v2978
        %v2981 = vsel %vm451, %v2973, %v2980
        %v2983 = vshrl.u32 %v2936, 16
        %v2985 = vrot.slane %v2983, 7
        %v2986 = vshll.u32 %v2936, 16
        %v2988 = vor.u32 %v2985, %v2986
        %v2989 = vrot.slane %v2985, 4
        %v2991 = vshrl.u32 %v2937, 16
        %v2993 = vrot.slane %v2991, 7
        %v2994 = vshll.u32 %v2937, 16
        %v2996 = vor.u32 %v2993, %v2994
        %v2997 = vsel %vm451, %v2989, %v2996
        %v2999 = vshrl.u32 %v2938, 16
        %v3001 = vrot.slane %v2999, 7
        %v3002 = vshll.u32 %v2938, 16
        %v3004 = vor.u32 %v3001, %v3002
        %v3005 = vrot.slane %v3001, 4
        %v3007 = vshrl.u32 %v2939, 16
        %v3009 = vrot.slane %v3007, 7
        %v3010 = vshll.u32 %v2939, 16
        %v3012 = vor.u32 %v3009, %v3010
        %v3013 = vsel %vm451, %v3005, %v3012
        %v3015 = vshrl.u32 %v2940, 16
        %v3017 = vrot.slane %v3015, 7
        %v3018 = vshll.u32 %v2940, 16
        %v3020 = vor.u32 %v3017, %v3018
        %v3021 = vrot.slane %v3017, 4
        %v3023 = vshrl.u32 %v2941, 16
        %v3025 = vrot.slane %v3023, 7
        %v3026 = vshll.u32 %v2941, 16
        %v3028 = vor.u32 %v3025, %v3026
        %v3029 = vsel %vm451, %v3021, %v3028
        %v3031 = vshrl.u32 %v2942, 16
        %v3033 = vrot.slane %v3031, 7
        %v3034 = vshll.u32 %v2942, 16
        %v3036 = vor.u32 %v3033, %v3034
        %v3037 = vrot.slane %v3033, 4
        %v3039 = vshrl.u32 %v2943, 16
        %v3041 = vrot.slane %v3039, 7
        %v3042 = vshll.u32 %v2943, 16
        %v3044 = vor.u32 %v3041, %v3042
        %v3045 = vsel %vm451, %v3037, %v3044
        %v3047 = vshrl.u32 %v2944, 16
        %v3049 = vrot.slane %v3047, 7
        %v3050 = vshll.u32 %v2944, 16
        %v3052 = vor.u32 %v3049, %v3050
        %v3053 = vrot.slane %v3049, 4
        %v3055 = vshrl.u32 %v2945, 16
        %v3057 = vrot.slane %v3055, 7
        %v3058 = vshll.u32 %v2945, 16
        %v3060 = vor.u32 %v3057, %v3058
        %v3061 = vsel %vm451, %v3053, %v3060
        %v3063 = vshrl.u32 %v2946, 16
        %v3065 = vrot.slane %v3063, 7
        %v3066 = vshll.u32 %v2946, 16
        %v3068 = vor.u32 %v3065, %v3066
        %v3069 = vrot.slane %v3065, 4
        %v3071 = vshrl.u32 %v2947, 16
        %v3073 = vrot.slane %v3071, 7
        %v3074 = vshll.u32 %v2947, 16
        %v3076 = vor.u32 %v3073, %v3074
        %v3077 = vsel %vm451, %v3069, %v3076
        %v3079 = vshrl.u32 %v2948, 16
        %v3081 = vrot.slane %v3079, 7
        %v3082 = vshll.u32 %v2948, 16
        %v3084 = vor.u32 %v3081, %v3082
        %v3085 = vrot.slane %v3081, 4
        %v3087 = vshrl.u32 %v2949, 16
        %v3089 = vrot.slane %v3087, 7
        %v3090 = vshll.u32 %v2949, 16
        %v3092 = vor.u32 %v3089, %v3090
        %v3093 = vsel %vm451, %v3085, %v3092
        %v3095 = vshrl.u32 %v2950, 16
        %v3097 = vrot.slane %v3095, 7
        %v3098 = vshll.u32 %v2950, 16
        %v3100 = vor.u32 %v3097, %v3098
        %v3101 = vrot.slane %v3097, 4
        %v3103 = vshrl.u32 %v2951, 16
        %v3105 = vrot.slane %v3103, 7
        %v3106 = vshll.u32 %v2951, 16
        %v3108 = vor.u32 %v3105, %v3106
        %v3109 = vsel %vm451, %v3101, %v3108
        %v3111 = vshrl.u32 %v2952, 16
        %v3113 = vrot.slane %v3111, 7
        %v3114 = vshll.u32 %v2952, 16
        %v3116 = vor.u32 %v3113, %v3114
        %v3117 = vrot.slane %v3113, 4
        %v3119 = vshrl.u32 %v2953, 16
        %v3121 = vrot.slane %v3119, 7
        %v3122 = vshll.u32 %v2953, 16
        %v3124 = vor.u32 %v3121, %v3122
        %v3125 = vsel %vm451, %v3117, %v3124
        %v3127 = vshrl.u32 %v2954, 16
        %v3129 = vrot.slane %v3127, 7
        %v3130 = vshll.u32 %v2954, 16
        %v3132 = vor.u32 %v3129, %v3130
        %v3133 = vrot.slane %v3129, 4
        %v3135 = vshrl.u32 %v2955, 16
        %v3137 = vrot.slane %v3135, 7
        %v3138 = vshll.u32 %v2955, 16
        %v3140 = vor.u32 %v3137, %v3138
        %v3141 = vsel %vm451, %v3133, %v3140
        %v3143 = vshrl.u32 %v2956, 16
        %v3145 = vrot.slane %v3143, 7
        %v3146 = vshll.u32 %v2956, 16
        %v3148 = vor.u32 %v3145, %v3146
        %v3149 = vrot.slane %v3145, 4
        %v3151 = vshrl.u32 %v2957, 16
        %v3153 = vrot.slane %v3151, 7
        %v3154 = vshll.u32 %v2957, 16
        %v3156 = vor.u32 %v3153, %v3154
        %v3157 = vsel %vm451, %v3149, %v3156
        %v3159 = vshrl.u32 %v2958, 16
        %v3161 = vrot.slane %v3159, 7
        %v3162 = vshll.u32 %v2958, 16
        %v3164 = vor.u32 %v3161, %v3162
        %v3165 = vrot.slane %v3161, 4
        %v3167 = vshrl.u32 %v2959, 16
        %v3169 = vrot.slane %v3167, 7
        %v3170 = vshll.u32 %v2959, 16
        %v3172 = vor.u32 %v3169, %v3170
        %v3173 = vsel %vm451, %v3165, %v3172
        %v3175 = vshrl.u32 %v2960, 16
        %v3177 = vrot.slane %v3175, 7
        %v3178 = vshll.u32 %v2960, 16
        %v3180 = vor.u32 %v3177, %v3178
        %v3181 = vrot.slane %v3177, 4
        %v3183 = vshrl.u32 %v2961, 16
        %v3185 = vrot.slane %v3183, 7
        %v3186 = vshll.u32 %v2961, 16
        %v3188 = vor.u32 %v3185, %v3186
        %v3189 = vsel %vm451, %v3181, %v3188
        %v3191 = vshrl.u32 %v2962, 16
        %v3193 = vrot.slane %v3191, 7
        %v3194 = vshll.u32 %v2962, 16
        %v3196 = vor.u32 %v3193, %v3194
        %v3197 = vrot.slane %v3193, 4
        %v3199 = vshrl.u32 %v2963, 16
        %v3201 = vrot.slane %v3199, 7
        %v3202 = vshll.u32 %v2963, 16
        %v3204 = vor.u32 %v3201, %v3202
        %v3205 = vsel %vm451, %v3197, %v3204
        %v3207 = vshrl.u32 %v2964, 16
        %v3209 = vrot.slane %v3207, 7
        %v3210 = vshll.u32 %v2964, 16
        %v3212 = vor.u32 %v3209, %v3210
        %v3213 = vrot.slane %v3209, 4
        %v3215 = vshrl.u32 %v2965, 16
        %v3217 = vrot.slane %v3215, 7
        %v3218 = vshll.u32 %v2965, 16
        %v3220 = vor.u32 %v3217, %v3218
        %v3221 = vsel %vm451, %v3213, %v3220
        %s3254 = scalar_lea.vmem [#allocation3], 8
        %v3255 = vld [vmem:[%s3254] sm:$0xf]
        %v3256 = vsel %vm743, %v2972, %v3255
        %3257 = vst [vmem:[%s3254] sm:$0xf] %v3256
        %3258 = vst.msk [vmem:[%s3254 + $0x4] sm:$0xf] %vm747, %v2981
        %v3259 = vld [vmem:[%s3254 + $0x8] sm:$0xf]
        %v3260 = vsel %vm743, %v2988, %v3259
        %3261 = vst [vmem:[%s3254 + $0x8] sm:$0xf] %v3260
        %3262 = vst.msk [vmem:[%s3254 + $0xc] sm:$0xf] %vm747, %v2997
        %v3263 = vld [vmem:[%s3254 + $0x10] sm:$0xf]
        %v3264 = vsel %vm743, %v3004, %v3263
        %3265 = vst [vmem:[%s3254 + $0x10] sm:$0xf] %v3264
        %3266 = vst.msk [vmem:[%s3254 + $0x14] sm:$0xf] %vm747, %v3013
        %v3267 = vld [vmem:[%s3254 + $0x18] sm:$0xf]
        %v3268 = vsel %vm743, %v3020, %v3267
        %3269 = vst [vmem:[%s3254 + $0x18] sm:$0xf] %v3268
        %3270 = vst.msk [vmem:[%s3254 + $0x1c] sm:$0xf] %vm747, %v3029
        %v3271 = vld [vmem:[%s3254 + $0x20] sm:$0xf]
        %v3272 = vsel %vm743, %v3036, %v3271
        %3273 = vst [vmem:[%s3254 + $0x20] sm:$0xf] %v3272
        %3274 = vst.msk [vmem:[%s3254 + $0x24] sm:$0xf] %vm747, %v3045
        %v3275 = vld [vmem:[%s3254 + $0x28] sm:$0xf]
        %v3276 = vsel %vm743, %v3052, %v3275
        %3277 = vst [vmem:[%s3254 + $0x28] sm:$0xf] %v3276
        %3278 = vst.msk [vmem:[%s3254 + $0x2c] sm:$0xf] %vm747, %v3061
        %v3279 = vld [vmem:[%s3254 + $0x30] sm:$0xf]
        %v3280 = vsel %vm743, %v3068, %v3279
        %3281 = vst [vmem:[%s3254 + $0x30] sm:$0xf] %v3280
        %3282 = vst.msk [vmem:[%s3254 + $0x34] sm:$0xf] %vm747, %v3077
        %v3283 = vld [vmem:[%s3254 + $0x38] sm:$0xf]
        %v3284 = vsel %vm743, %v3084, %v3283
        %3285 = vst [vmem:[%s3254 + $0x38] sm:$0xf] %v3284
        %3286 = vst.msk [vmem:[%s3254 + $0x3c] sm:$0xf] %vm747, %v3093
        %v3287 = vld [vmem:[%s3254 + $0x40] sm:$0xf]
        %v3288 = vsel %vm743, %v3100, %v3287
        %3289 = vst [vmem:[%s3254 + $0x40] sm:$0xf] %v3288
        %3290 = vst.msk [vmem:[%s3254 + $0x44] sm:$0xf] %vm747, %v3109
        %v3291 = vld [vmem:[%s3254 + $0x48] sm:$0xf]
        %v3292 = vsel %vm743, %v3116, %v3291
        %3293 = vst [vmem:[%s3254 + $0x48] sm:$0xf] %v3292
        %3294 = vst.msk [vmem:[%s3254 + $0x4c] sm:$0xf] %vm747, %v3125
        %v3295 = vld [vmem:[%s3254 + $0x50] sm:$0xf]
        %v3296 = vsel %vm743, %v3132, %v3295
        %3297 = vst [vmem:[%s3254 + $0x50] sm:$0xf] %v3296
        %3298 = vst.msk [vmem:[%s3254 + $0x54] sm:$0xf] %vm747, %v3141
        %v3299 = vld [vmem:[%s3254 + $0x58] sm:$0xf]
        %v3300 = vsel %vm743, %v3148, %v3299
        %3301 = vst [vmem:[%s3254 + $0x58] sm:$0xf] %v3300
        %3302 = vst.msk [vmem:[%s3254 + $0x5c] sm:$0xf] %vm747, %v3157
        %v3303 = vld [vmem:[%s3254 + $0x60] sm:$0xf]
        %v3304 = vsel %vm743, %v3164, %v3303
        %3305 = vst [vmem:[%s3254 + $0x60] sm:$0xf] %v3304
        %3306 = vst.msk [vmem:[%s3254 + $0x64] sm:$0xf] %vm747, %v3173
        %v3307 = vld [vmem:[%s3254 + $0x68] sm:$0xf]
        %v3308 = vsel %vm743, %v3180, %v3307
        %3309 = vst [vmem:[%s3254 + $0x68] sm:$0xf] %v3308
        %3310 = vst.msk [vmem:[%s3254 + $0x6c] sm:$0xf] %vm747, %v3189
        %v3311 = vld [vmem:[%s3254 + $0x70] sm:$0xf]
        %v3312 = vsel %vm743, %v3196, %v3311
        %3313 = vst [vmem:[%s3254 + $0x70] sm:$0xf] %v3312
        %3314 = vst.msk [vmem:[%s3254 + $0x74] sm:$0xf] %vm747, %v3205
        %v3315 = vld [vmem:[%s3254 + $0x78] sm:$0xf]
        %v3316 = vsel %vm743, %v3212, %v3315
        %3317 = vst [vmem:[%s3254 + $0x78] sm:$0xf] %v3316
        %3318 = vst.msk [vmem:[%s3254 + $0x7c] sm:$0xf] %vm747, %v3221
        %3319 = vrot.lane.b32.xlu0 %v2934, 32
        %v3320 = vpop.permute.xlu0 %3319
        %3321 = vrot.lane.b32.xlu0 %v2935, 32
        %v3322 = vpop.permute.xlu0 %3321
        %3323 = vrot.lane.b32.xlu0 %v2936, 32
        %v3324 = vpop.permute.xlu0 %3323
        %3325 = vrot.lane.b32.xlu0 %v2937, 32
        %v3326 = vpop.permute.xlu0 %3325
        %3327 = vrot.lane.b32.xlu0 %v2938, 32
        %v3328 = vpop.permute.xlu0 %3327
        %3329 = vrot.lane.b32.xlu0 %v2939, 32
        %v3330 = vpop.permute.xlu0 %3329
        %3331 = vrot.lane.b32.xlu0 %v2940, 32
        %v3332 = vpop.permute.xlu0 %3331
        %3333 = vrot.lane.b32.xlu0 %v2941, 32
        %v3334 = vpop.permute.xlu0 %3333
        %3335 = vrot.lane.b32.xlu0 %v2942, 32
        %v3336 = vpop.permute.xlu0 %3335
        %3337 = vrot.lane.b32.xlu0 %v2943, 32
        %v3338 = vpop.permute.xlu0 %3337
        %3339 = vrot.lane.b32.xlu0 %v2944, 32
        %v3340 = vpop.permute.xlu0 %3339
        %3341 = vrot.lane.b32.xlu0 %v2945, 32
        %v3342 = vpop.permute.xlu0 %3341
        %3343 = vrot.lane.b32.xlu0 %v2946, 32
        %v3344 = vpop.permute.xlu0 %3343
        %3345 = vrot.lane.b32.xlu0 %v2947, 32
        %v3346 = vpop.permute.xlu0 %3345
        %3347 = vrot.lane.b32.xlu0 %v2948, 32
        %v3348 = vpop.permute.xlu0 %3347
        %3349 = vrot.lane.b32.xlu0 %v2949, 32
        %v3350 = vpop.permute.xlu0 %3349
        %3351 = vrot.lane.b32.xlu0 %v2950, 32
        %v3352 = vpop.permute.xlu0 %3351
        %3353 = vrot.lane.b32.xlu0 %v2951, 32
        %v3354 = vpop.permute.xlu0 %3353
        %3355 = vrot.lane.b32.xlu0 %v2952, 32
        %v3356 = vpop.permute.xlu0 %3355
        %3357 = vrot.lane.b32.xlu0 %v2953, 32
        %v3358 = vpop.permute.xlu0 %3357
        %3359 = vrot.lane.b32.xlu0 %v2954, 32
        %v3360 = vpop.permute.xlu0 %3359
        %3361 = vrot.lane.b32.xlu0 %v2955, 32
        %v3362 = vpop.permute.xlu0 %3361
        %3363 = vrot.lane.b32.xlu0 %v2956, 32
        %v3364 = vpop.permute.xlu0 %3363
        %3365 = vrot.lane.b32.xlu0 %v2957, 32
        %v3366 = vpop.permute.xlu0 %3365
        %3367 = vrot.lane.b32.xlu0 %v2958, 32
        %v3368 = vpop.permute.xlu0 %3367
        %3369 = vrot.lane.b32.xlu0 %v2959, 32
        %v3370 = vpop.permute.xlu0 %3369
        %3371 = vrot.lane.b32.xlu0 %v2960, 32
        %v3372 = vpop.permute.xlu0 %3371
        %3373 = vrot.lane.b32.xlu0 %v2961, 32
        %v3374 = vpop.permute.xlu0 %3373
        %3375 = vrot.lane.b32.xlu0 %v2962, 32
        %v3376 = vpop.permute.xlu0 %3375
        %3377 = vrot.lane.b32.xlu0 %v2963, 32
        %v3378 = vpop.permute.xlu0 %3377
        %3379 = vrot.lane.b32.xlu0 %v2964, 32
        %v3380 = vpop.permute.xlu0 %3379
        %3381 = vrot.lane.b32.xlu0 %v2965, 32
        %v3382 = vpop.permute.xlu0 %3381
        %3415 = vst.msk [vmem:[%s3254] sm:$0xf] %vm969, %v3320
        %3416 = vst.msk [vmem:[%s3254 + $0x4] sm:$0xf] %vm969, %v3322
        %3417 = vst.msk [vmem:[%s3254 + $0x8] sm:$0xf] %vm969, %v3324
        %3418 = vst.msk [vmem:[%s3254 + $0xc] sm:$0xf] %vm969, %v3326
        %3419 = vst.msk [vmem:[%s3254 + $0x10] sm:$0xf] %vm969, %v3328
        %3420 = vst.msk [vmem:[%s3254 + $0x14] sm:$0xf] %vm969, %v3330
        %3421 = vst.msk [vmem:[%s3254 + $0x18] sm:$0xf] %vm969, %v3332
        %3422 = vst.msk [vmem:[%s3254 + $0x1c] sm:$0xf] %vm969, %v3334
        %3423 = vst.msk [vmem:[%s3254 + $0x20] sm:$0xf] %vm969, %v3336
        %3424 = vst.msk [vmem:[%s3254 + $0x24] sm:$0xf] %vm969, %v3338
        %3425 = vst.msk [vmem:[%s3254 + $0x28] sm:$0xf] %vm969, %v3340
        %3426 = vst.msk [vmem:[%s3254 + $0x2c] sm:$0xf] %vm969, %v3342
        %3427 = vst.msk [vmem:[%s3254 + $0x30] sm:$0xf] %vm969, %v3344
        %3428 = vst.msk [vmem:[%s3254 + $0x34] sm:$0xf] %vm969, %v3346
        %3429 = vst.msk [vmem:[%s3254 + $0x38] sm:$0xf] %vm969, %v3348
        %3430 = vst.msk [vmem:[%s3254 + $0x3c] sm:$0xf] %vm969, %v3350
        %3431 = vst.msk [vmem:[%s3254 + $0x40] sm:$0xf] %vm969, %v3352
        %3432 = vst.msk [vmem:[%s3254 + $0x44] sm:$0xf] %vm969, %v3354
        %3433 = vst.msk [vmem:[%s3254 + $0x48] sm:$0xf] %vm969, %v3356
        %3434 = vst.msk [vmem:[%s3254 + $0x4c] sm:$0xf] %vm969, %v3358
        %3435 = vst.msk [vmem:[%s3254 + $0x50] sm:$0xf] %vm969, %v3360
        %3436 = vst.msk [vmem:[%s3254 + $0x54] sm:$0xf] %vm969, %v3362
        %3437 = vst.msk [vmem:[%s3254 + $0x58] sm:$0xf] %vm969, %v3364
        %3438 = vst.msk [vmem:[%s3254 + $0x5c] sm:$0xf] %vm969, %v3366
        %3439 = vst.msk [vmem:[%s3254 + $0x60] sm:$0xf] %vm969, %v3368
        %3440 = vst.msk [vmem:[%s3254 + $0x64] sm:$0xf] %vm969, %v3370
        %3441 = vst.msk [vmem:[%s3254 + $0x68] sm:$0xf] %vm969, %v3372
        %3442 = vst.msk [vmem:[%s3254 + $0x6c] sm:$0xf] %vm969, %v3374
        %3443 = vst.msk [vmem:[%s3254 + $0x70] sm:$0xf] %vm969, %v3376
        %3444 = vst.msk [vmem:[%s3254 + $0x74] sm:$0xf] %vm969, %v3378
        %3445 = vst.msk [vmem:[%s3254 + $0x78] sm:$0xf] %vm969, %v3380
        %3446 = vst.msk [vmem:[%s3254 + $0x7c] sm:$0xf] %vm969, %v3382
        %v3447 = vrot.slane %v2967, 4
        %v3448 = vrot.slane %v2970, 5
        %v3449 = vor.u32 %v3447, %v3448
        %v3450 = vrot.slane %v3449, 4
        %v3451 = vrot.slane %v2978, 5
        %v3452 = vsel %vm1036, %v3450, %v3451
        %v3453 = vrot.slane %v2975, 4
        %v3454 = vor.u32 %v3453, %v3451
        %v3455 = vrot.slane %v3454, 4
        %v3456 = vrot.slane %v2983, 4
        %v3457 = vrot.slane %v2986, 5
        %v3458 = vor.u32 %v3456, %v3457
        %v3459 = vrot.slane %v3458, 4
        %v3460 = vrot.slane %v2994, 5
        %v3461 = vsel %vm1036, %v3459, %v3460
        %v3462 = vrot.slane %v2991, 4
        %v3463 = vor.u32 %v3462, %v3460
        %v3464 = vrot.slane %v3463, 4
        %v3465 = vrot.slane %v2999, 4
        %v3466 = vrot.slane %v3002, 5
        %v3467 = vor.u32 %v3465, %v3466
        %v3468 = vrot.slane %v3467, 4
        %v3469 = vrot.slane %v3010, 5
        %v3470 = vsel %vm1036, %v3468, %v3469
        %v3471 = vrot.slane %v3007, 4
        %v3472 = vor.u32 %v3471, %v3469
        %v3473 = vrot.slane %v3472, 4
        %v3474 = vrot.slane %v3015, 4
        %v3475 = vrot.slane %v3018, 5
        %v3476 = vor.u32 %v3474, %v3475
        %v3477 = vrot.slane %v3476, 4
        %v3478 = vrot.slane %v3026, 5
        %v3479 = vsel %vm1036, %v3477, %v3478
        %v3480 = vrot.slane %v3023, 4
        %v3481 = vor.u32 %v3480, %v3478
        %v3482 = vrot.slane %v3481, 4
        %v3483 = vrot.slane %v3031, 4
        %v3484 = vrot.slane %v3034, 5
        %v3485 = vor.u32 %v3483, %v3484
        %v3486 = vrot.slane %v3485, 4
        %v3487 = vrot.slane %v3042, 5
        %v3488 = vsel %vm1036, %v3486, %v3487
        %v3489 = vrot.slane %v3039, 4
        %v3490 = vor.u32 %v3489, %v3487
        %v3491 = vrot.slane %v3490, 4
        %v3492 = vrot.slane %v3047, 4
        %v3493 = vrot.slane %v3050, 5
        %v3494 = vor.u32 %v3492, %v3493
        %v3495 = vrot.slane %v3494, 4
        %v3496 = vrot.slane %v3058, 5
        %v3497 = vsel %vm1036, %v3495, %v3496
        %v3498 = vrot.slane %v3055, 4
        %v3499 = vor.u32 %v3498, %v3496
        %v3500 = vrot.slane %v3499, 4
        %v3501 = vrot.slane %v3063, 4
        %v3502 = vrot.slane %v3066, 5
        %v3503 = vor.u32 %v3501, %v3502
        %v3504 = vrot.slane %v3503, 4
        %v3505 = vrot.slane %v3074, 5
        %v3506 = vsel %vm1036, %v3504, %v3505
        %v3507 = vrot.slane %v3071, 4
        %v3508 = vor.u32 %v3507, %v3505
        %v3509 = vrot.slane %v3508, 4
        %v3510 = vrot.slane %v3079, 4
        %v3511 = vrot.slane %v3082, 5
        %v3512 = vor.u32 %v3510, %v3511
        %v3513 = vrot.slane %v3512, 4
        %v3514 = vrot.slane %v3090, 5
        %v3515 = vsel %vm1036, %v3513, %v3514
        %v3516 = vrot.slane %v3087, 4
        %v3517 = vor.u32 %v3516, %v3514
        %v3518 = vrot.slane %v3517, 4
        %v3519 = vrot.slane %v3095, 4
        %v3520 = vrot.slane %v3098, 5
        %v3521 = vor.u32 %v3519, %v3520
        %v3522 = vrot.slane %v3521, 4
        %v3523 = vrot.slane %v3106, 5
        %v3524 = vsel %vm1036, %v3522, %v3523
        %v3525 = vrot.slane %v3103, 4
        %v3526 = vor.u32 %v3525, %v3523
        %v3527 = vrot.slane %v3526, 4
        %v3528 = vrot.slane %v3111, 4
        %v3529 = vrot.slane %v3114, 5
        %v3530 = vor.u32 %v3528, %v3529
        %v3531 = vrot.slane %v3530, 4
        %v3532 = vrot.slane %v3122, 5
        %v3533 = vsel %vm1036, %v3531, %v3532
        %v3534 = vrot.slane %v3119, 4
        %v3535 = vor.u32 %v3534, %v3532
        %v3536 = vrot.slane %v3535, 4
        %v3537 = vrot.slane %v3127, 4
        %v3538 = vrot.slane %v3130, 5
        %v3539 = vor.u32 %v3537, %v3538
        %v3540 = vrot.slane %v3539, 4
        %v3541 = vrot.slane %v3138, 5
        %v3542 = vsel %vm1036, %v3540, %v3541
        %v3543 = vrot.slane %v3135, 4
        %v3544 = vor.u32 %v3543, %v3541
        %v3545 = vrot.slane %v3544, 4
        %v3546 = vrot.slane %v3143, 4
        %v3547 = vrot.slane %v3146, 5
        %v3548 = vor.u32 %v3546, %v3547
        %v3549 = vrot.slane %v3548, 4
        %v3550 = vrot.slane %v3154, 5
        %v3551 = vsel %vm1036, %v3549, %v3550
        %v3552 = vrot.slane %v3151, 4
        %v3553 = vor.u32 %v3552, %v3550
        %v3554 = vrot.slane %v3553, 4
        %v3555 = vrot.slane %v3159, 4
        %v3556 = vrot.slane %v3162, 5
        %v3557 = vor.u32 %v3555, %v3556
        %v3558 = vrot.slane %v3557, 4
        %v3559 = vrot.slane %v3170, 5
        %v3560 = vsel %vm1036, %v3558, %v3559
        %v3561 = vrot.slane %v3167, 4
        %v3562 = vor.u32 %v3561, %v3559
        %v3563 = vrot.slane %v3562, 4
        %v3564 = vrot.slane %v3175, 4
        %v3565 = vrot.slane %v3178, 5
        %v3566 = vor.u32 %v3564, %v3565
        %v3567 = vrot.slane %v3566, 4
        %v3568 = vrot.slane %v3186, 5
        %v3569 = vsel %vm1036, %v3567, %v3568
        %v3570 = vrot.slane %v3183, 4
        %v3571 = vor.u32 %v3570, %v3568
        %v3572 = vrot.slane %v3571, 4
        %v3573 = vrot.slane %v3191, 4
        %v3574 = vrot.slane %v3194, 5
        %v3575 = vor.u32 %v3573, %v3574
        %v3576 = vrot.slane %v3575, 4
        %v3577 = vrot.slane %v3202, 5
        %v3578 = vsel %vm1036, %v3576, %v3577
        %v3579 = vrot.slane %v3199, 4
        %v3580 = vor.u32 %v3579, %v3577
        %v3581 = vrot.slane %v3580, 4
        %v3582 = vrot.slane %v3207, 4
        %v3583 = vrot.slane %v3210, 5
        %v3584 = vor.u32 %v3582, %v3583
        %v3585 = vrot.slane %v3584, 4
        %v3586 = vrot.slane %v3218, 5
        %v3587 = vsel %vm1036, %v3585, %v3586
        %v3588 = vrot.slane %v3215, 4
        %v3589 = vor.u32 %v3588, %v3586
        %v3590 = vrot.slane %v3589, 4
        %3591 = vrot.lane.b32.xlu0 %v3452, 64
        %v3592 = vpop.permute.xlu0 %3591
        %3593 = vrot.lane.b32.xlu0 %v3455, 64
        %v3594 = vpop.permute.xlu0 %3593
        %3595 = vrot.lane.b32.xlu0 %v3461, 64
        %v3596 = vpop.permute.xlu0 %3595
        %3597 = vrot.lane.b32.xlu0 %v3464, 64
        %v3598 = vpop.permute.xlu0 %3597
        %3599 = vrot.lane.b32.xlu0 %v3470, 64
        %v3600 = vpop.permute.xlu0 %3599
        %3601 = vrot.lane.b32.xlu0 %v3473, 64
        %v3602 = vpop.permute.xlu0 %3601
        %3603 = vrot.lane.b32.xlu0 %v3479, 64
        %v3604 = vpop.permute.xlu0 %3603
        %3605 = vrot.lane.b32.xlu0 %v3482, 64
        %v3606 = vpop.permute.xlu0 %3605
        %3607 = vrot.lane.b32.xlu0 %v3488, 64
        %v3608 = vpop.permute.xlu0 %3607
        %3609 = vrot.lane.b32.xlu0 %v3491, 64
        %v3610 = vpop.permute.xlu0 %3609
        %3611 = vrot.lane.b32.xlu0 %v3497, 64
        %v3612 = vpop.permute.xlu0 %3611
        %3613 = vrot.lane.b32.xlu0 %v3500, 64
        %v3614 = vpop.permute.xlu0 %3613
        %3615 = vrot.lane.b32.xlu0 %v3506, 64
        %v3616 = vpop.permute.xlu0 %3615
        %3617 = vrot.lane.b32.xlu0 %v3509, 64
        %v3618 = vpop.permute.xlu0 %3617
        %3619 = vrot.lane.b32.xlu0 %v3515, 64
        %v3620 = vpop.permute.xlu0 %3619
        %3621 = vrot.lane.b32.xlu0 %v3518, 64
        %v3622 = vpop.permute.xlu0 %3621
        %3623 = vrot.lane.b32.xlu0 %v3524, 64
        %v3624 = vpop.permute.xlu0 %3623
        %3625 = vrot.lane.b32.xlu0 %v3527, 64
        %v3626 = vpop.permute.xlu0 %3625
        %3627 = vrot.lane.b32.xlu0 %v3533, 64
        %v3628 = vpop.permute.xlu0 %3627
        %3629 = vrot.lane.b32.xlu0 %v3536, 64
        %v3630 = vpop.permute.xlu0 %3629
        %3631 = vrot.lane.b32.xlu0 %v3542, 64
        %v3632 = vpop.permute.xlu0 %3631
        %3633 = vrot.lane.b32.xlu0 %v3545, 64
        %v3634 = vpop.permute.xlu0 %3633
        %3635 = vrot.lane.b32.xlu0 %v3551, 64
        %v3636 = vpop.permute.xlu0 %3635
        %3637 = vrot.lane.b32.xlu0 %v3554, 64
        %v3638 = vpop.permute.xlu0 %3637
        %3639 = vrot.lane.b32.xlu0 %v3560, 64
        %v3640 = vpop.permute.xlu0 %3639
        %3641 = vrot.lane.b32.xlu0 %v3563, 64
        %v3642 = vpop.permute.xlu0 %3641
        %3643 = vrot.lane.b32.xlu0 %v3569, 64
        %v3644 = vpop.permute.xlu0 %3643
        %3645 = vrot.lane.b32.xlu0 %v3572, 64
        %v3646 = vpop.permute.xlu0 %3645
        %3647 = vrot.lane.b32.xlu0 %v3578, 64
        %v3648 = vpop.permute.xlu0 %3647
        %3649 = vrot.lane.b32.xlu0 %v3581, 64
        %v3650 = vpop.permute.xlu0 %3649
        %3651 = vrot.lane.b32.xlu0 %v3587, 64
        %v3652 = vpop.permute.xlu0 %3651
        %3653 = vrot.lane.b32.xlu0 %v3590, 64
        %v3654 = vpop.permute.xlu0 %3653
        %3687 = vst.msk [vmem:[%s3254] sm:$0xf] %vm1437, %v3592
        %v3688 = vld [vmem:[%s3254 + $0x4] sm:$0xf]
        %v3689 = vsel %vm1440, %v3594, %v3688
        %3690 = vst [vmem:[%s3254 + $0x4] sm:$0xf] %v3689
        %3691 = vst.msk [vmem:[%s3254 + $0x8] sm:$0xf] %vm1437, %v3596
        %v3692 = vld [vmem:[%s3254 + $0xc] sm:$0xf]
        %v3693 = vsel %vm1440, %v3598, %v3692
        %3694 = vst [vmem:[%s3254 + $0xc] sm:$0xf] %v3693
        %3695 = vst.msk [vmem:[%s3254 + $0x10] sm:$0xf] %vm1437, %v3600
        %v3696 = vld [vmem:[%s3254 + $0x14] sm:$0xf]
        %v3697 = vsel %vm1440, %v3602, %v3696
        %3698 = vst [vmem:[%s3254 + $0x14] sm:$0xf] %v3697
        %3699 = vst.msk [vmem:[%s3254 + $0x18] sm:$0xf] %vm1437, %v3604
        %v3700 = vld [vmem:[%s3254 + $0x1c] sm:$0xf]
        %v3701 = vsel %vm1440, %v3606, %v3700
        %3702 = vst [vmem:[%s3254 + $0x1c] sm:$0xf] %v3701
        %3703 = vst.msk [vmem:[%s3254 + $0x20] sm:$0xf] %vm1437, %v3608
        %v3704 = vld [vmem:[%s3254 + $0x24] sm:$0xf]
        %v3705 = vsel %vm1440, %v3610, %v3704
        %3706 = vst [vmem:[%s3254 + $0x24] sm:$0xf] %v3705
        %3707 = vst.msk [vmem:[%s3254 + $0x28] sm:$0xf] %vm1437, %v3612
        %v3708 = vld [vmem:[%s3254 + $0x2c] sm:$0xf]
        %v3709 = vsel %vm1440, %v3614, %v3708
        %3710 = vst [vmem:[%s3254 + $0x2c] sm:$0xf] %v3709
        %3711 = vst.msk [vmem:[%s3254 + $0x30] sm:$0xf] %vm1437, %v3616
        %v3712 = vld [vmem:[%s3254 + $0x34] sm:$0xf]
        %v3713 = vsel %vm1440, %v3618, %v3712
        %3714 = vst [vmem:[%s3254 + $0x34] sm:$0xf] %v3713
        %3715 = vst.msk [vmem:[%s3254 + $0x38] sm:$0xf] %vm1437, %v3620
        %v3716 = vld [vmem:[%s3254 + $0x3c] sm:$0xf]
        %v3717 = vsel %vm1440, %v3622, %v3716
        %3718 = vst [vmem:[%s3254 + $0x3c] sm:$0xf] %v3717
        %3719 = vst.msk [vmem:[%s3254 + $0x40] sm:$0xf] %vm1437, %v3624
        %v3720 = vld [vmem:[%s3254 + $0x44] sm:$0xf]
        %v3721 = vsel %vm1440, %v3626, %v3720
        %3722 = vst [vmem:[%s3254 + $0x44] sm:$0xf] %v3721
        %3723 = vst.msk [vmem:[%s3254 + $0x48] sm:$0xf] %vm1437, %v3628
        %v3724 = vld [vmem:[%s3254 + $0x4c] sm:$0xf]
        %v3725 = vsel %vm1440, %v3630, %v3724
        %3726 = vst [vmem:[%s3254 + $0x4c] sm:$0xf] %v3725
        %3727 = vst.msk [vmem:[%s3254 + $0x50] sm:$0xf] %vm1437, %v3632
        %v3728 = vld [vmem:[%s3254 + $0x54] sm:$0xf]
        %v3729 = vsel %vm1440, %v3634, %v3728
        %3730 = vst [vmem:[%s3254 + $0x54] sm:$0xf] %v3729
        %3731 = vst.msk [vmem:[%s3254 + $0x58] sm:$0xf] %vm1437, %v3636
        %v3732 = vld [vmem:[%s3254 + $0x5c] sm:$0xf]
        %v3733 = vsel %vm1440, %v3638, %v3732
        %3734 = vst [vmem:[%s3254 + $0x5c] sm:$0xf] %v3733
        %3735 = vst.msk [vmem:[%s3254 + $0x60] sm:$0xf] %vm1437, %v3640
        %v3736 = vld [vmem:[%s3254 + $0x64] sm:$0xf]
        %v3737 = vsel %vm1440, %v3642, %v3736
        %3738 = vst [vmem:[%s3254 + $0x64] sm:$0xf] %v3737
        %3739 = vst.msk [vmem:[%s3254 + $0x68] sm:$0xf] %vm1437, %v3644
        %v3740 = vld [vmem:[%s3254 + $0x6c] sm:$0xf]
        %v3741 = vsel %vm1440, %v3646, %v3740
        %3742 = vst [vmem:[%s3254 + $0x6c] sm:$0xf] %v3741
        %3743 = vst.msk [vmem:[%s3254 + $0x70] sm:$0xf] %vm1437, %v3648
        %v3744 = vld [vmem:[%s3254 + $0x74] sm:$0xf]
        %v3745 = vsel %vm1440, %v3650, %v3744
        %3746 = vst [vmem:[%s3254 + $0x74] sm:$0xf] %v3745
        %3747 = vst.msk [vmem:[%s3254 + $0x78] sm:$0xf] %vm1437, %v3652
        %v3748 = vld [vmem:[%s3254 + $0x7c] sm:$0xf]
        %v3749 = vsel %vm1440, %v3654, %v3748
        %3750 = vst [vmem:[%s3254 + $0x7c] sm:$0xf] %v3749
        %v3751 = vld [vmem:[#allocation3] sm:$0xf]
        %v3752 = vld [vmem:[#allocation3 + $0x4] sm:$0xf]
        %v3753 = vld [vmem:[#allocation3 + $0x8] sm:$0xf]
        %v3754 = vld [vmem:[#allocation3 + $0xc] sm:$0xf]
        %v3755 = vld [vmem:[#allocation3 + $0x10] sm:$0xf]
        %v3756 = vld [vmem:[#allocation3 + $0x14] sm:$0xf]
        %v3757 = vld [vmem:[#allocation3 + $0x18] sm:$0xf]
        %v3758 = vld [vmem:[#allocation3 + $0x1c] sm:$0xf]
        %v3759 = vld [vmem:[#allocation3 + $0x20] sm:$0xf]
        %v3760 = vld [vmem:[#allocation3 + $0x24] sm:$0xf]
        %v3761 = vld [vmem:[#allocation3 + $0x28] sm:$0xf]
        %v3762 = vld [vmem:[#allocation3 + $0x2c] sm:$0xf]
        %v3763 = vld [vmem:[#allocation3 + $0x30] sm:$0xf]
        %v3764 = vld [vmem:[#allocation3 + $0x34] sm:$0xf]
        %v3765 = vld [vmem:[#allocation3 + $0x38] sm:$0xf]
        %v3766 = vld [vmem:[#allocation3 + $0x3c] sm:$0xf]
        %v3767 = vld [vmem:[#allocation3 + $0x40] sm:$0xf]
        %v3768 = vld [vmem:[#allocation3 + $0x44] sm:$0xf]
        %v3769 = vld [vmem:[#allocation3 + $0x48] sm:$0xf]
        %v3770 = vld [vmem:[#allocation3 + $0x4c] sm:$0xf]
        %v3771 = vld [vmem:[#allocation3 + $0x50] sm:$0xf]
        %v3772 = vld [vmem:[#allocation3 + $0x54] sm:$0xf]
        %v3773 = vld [vmem:[#allocation3 + $0x58] sm:$0xf]
        %v3774 = vld [vmem:[#allocation3 + $0x5c] sm:$0xf]
        %v3775 = vld [vmem:[#allocation3 + $0x60] sm:$0xf]
        %v3776 = vld [vmem:[#allocation3 + $0x64] sm:$0xf]
        %v3777 = vld [vmem:[#allocation3 + $0x68] sm:$0xf]
        %v3778 = vld [vmem:[#allocation3 + $0x6c] sm:$0xf]
        %v3779 = vld [vmem:[#allocation3 + $0x70] sm:$0xf]
        %v3780 = vld [vmem:[#allocation3 + $0x74] sm:$0xf]
        %v3781 = vld [vmem:[#allocation3 + $0x78] sm:$0xf]
        %v3782 = vld [vmem:[#allocation3 + $0x7c] sm:$0xf]
        %v3783 = vld [vmem:[%s4] sm:$0xf]
        %v3784 = vld [vmem:[%s4 + $0x4] sm:$0xf]
        %v3785 = vld [vmem:[%s4 + $0x8] sm:$0xf]
        %v3786 = vld [vmem:[%s4 + $0xc] sm:$0xf]
        %v3787 = vld [vmem:[%s4 + $0x10] sm:$0xf]
        %v3788 = vld [vmem:[%s4 + $0x14] sm:$0xf]
        %v3789 = vld [vmem:[%s4 + $0x18] sm:$0xf]
        %v3790 = vld [vmem:[%s4 + $0x1c] sm:$0xf]
        %v3791 = vld [vmem:[%s4 + $0x20] sm:$0xf]
        %v3792 = vld [vmem:[%s4 + $0x24] sm:$0xf]
        %v3793 = vld [vmem:[%s4 + $0x28] sm:$0xf]
        %v3794 = vld [vmem:[%s4 + $0x2c] sm:$0xf]
        %v3795 = vld [vmem:[%s3254] sm:$0xf]
        %v3796 = vld [vmem:[%s3254 + $0x4] sm:$0xf]
        %v3797 = vld [vmem:[%s3254 + $0x8] sm:$0xf]
        %v3798 = vld [vmem:[%s3254 + $0xc] sm:$0xf]
        %v3799 = vld [vmem:[%s3254 + $0x10] sm:$0xf]
        %v3800 = vld [vmem:[%s3254 + $0x14] sm:$0xf]
        %v3801 = vld [vmem:[%s3254 + $0x18] sm:$0xf]
        %v3802 = vld [vmem:[%s3254 + $0x1c] sm:$0xf]
        %v3803 = vld [vmem:[%s3254 + $0x20] sm:$0xf]
        %v3804 = vld [vmem:[%s3254 + $0x24] sm:$0xf]
        %v3805 = vld [vmem:[%s3254 + $0x28] sm:$0xf]
        %v3806 = vld [vmem:[%s3254 + $0x2c] sm:$0xf]
        %v3807 = vld [vmem:[%s3254 + $0x30] sm:$0xf]
        %v3808 = vld [vmem:[%s3254 + $0x34] sm:$0xf]
        %v3809 = vld [vmem:[%s3254 + $0x38] sm:$0xf]
        %v3810 = vld [vmem:[%s3254 + $0x3c] sm:$0xf]
        %v3811 = vld [vmem:[%s3254 + $0x40] sm:$0xf]
        %v3812 = vld [vmem:[%s3254 + $0x44] sm:$0xf]
        %v3813 = vld [vmem:[%s3254 + $0x48] sm:$0xf]
        %v3814 = vld [vmem:[%s3254 + $0x4c] sm:$0xf]
        %v3815 = vld [vmem:[%s3254 + $0x50] sm:$0xf]
        %v3816 = vld [vmem:[%s3254 + $0x54] sm:$0xf]
        %v3817 = vld [vmem:[%s3254 + $0x58] sm:$0xf]
        %v3818 = vld [vmem:[%s3254 + $0x5c] sm:$0xf]
        %v3819 = vld [vmem:[%s3254 + $0x60] sm:$0xf]
        %v3820 = vld [vmem:[%s3254 + $0x64] sm:$0xf]
        %v3821 = vld [vmem:[%s3254 + $0x68] sm:$0xf]
        %v3822 = vld [vmem:[%s3254 + $0x6c] sm:$0xf]
        %v3823 = vld [vmem:[%s3254 + $0x70] sm:$0xf]
        %v3824 = vld [vmem:[%s3254 + $0x74] sm:$0xf]
        %v3825 = vld [vmem:[%s3254 + $0x78] sm:$0xf]
        %v3826 = vld [vmem:[%s3254 + $0x7c] sm:$0xf]
        %s3827 = scalar_lea.vmem %s4, 48
        %v3828 = vld [vmem:[%s3827] sm:$0xf]
        %v3829 = vld [vmem:[%s3827 + $0x4] sm:$0xf]
        %v3830 = vld [vmem:[%s3827 + $0x8] sm:$0xf]
        %v3831 = vld [vmem:[%s3827 + $0xc] sm:$0xf]
        %v3832 = vld [vmem:[%s3827 + $0x10] sm:$0xf]
        %v3833 = vld [vmem:[%s3827 + $0x14] sm:$0xf]
        %v3834 = vld [vmem:[%s3827 + $0x18] sm:$0xf]
        %v3835 = vld [vmem:[%s3827 + $0x1c] sm:$0xf]
        %v3836 = vld [vmem:[%s3827 + $0x20] sm:$0xf]
        %v3837 = vld [vmem:[%s3827 + $0x24] sm:$0xf]
        %v3838 = vld [vmem:[%s3827 + $0x28] sm:$0xf]
        %v3839 = vld [vmem:[%s3827 + $0x2c] sm:$0xf]
        %v3872 = vunpack.c.l.b16 %v3795
        %v3873 = vunpack.c.l.b16 %v3796
        %v3874 = vunpack.c.l.b16 %v3797
        %v3875 = vunpack.c.l.b16 %v3798
        %v3876 = vunpack.c.l.b16 %v3799
        %v3877 = vunpack.c.l.b16 %v3800
        %v3878 = vunpack.c.l.b16 %v3801
        %v3879 = vunpack.c.l.b16 %v3802
        %v3880 = vunpack.c.l.b16 %v3803
        %v3881 = vunpack.c.l.b16 %v3804
        %v3882 = vunpack.c.l.b16 %v3805
        %v3883 = vunpack.c.l.b16 %v3806
        %v3884 = vunpack.c.l.b16 %v3807
        %v3885 = vunpack.c.l.b16 %v3808
        %v3886 = vunpack.c.l.b16 %v3809
        %v3887 = vunpack.c.l.b16 %v3810
        %v3888 = vunpack.c.l.b16 %v3811
        %v3889 = vunpack.c.l.b16 %v3812
        %v3890 = vunpack.c.l.b16 %v3813
        %v3891 = vunpack.c.l.b16 %v3814
        %v3892 = vunpack.c.l.b16 %v3815
        %v3893 = vunpack.c.l.b16 %v3816
        %v3894 = vunpack.c.l.b16 %v3817
        %v3895 = vunpack.c.l.b16 %v3818
        %v3896 = vunpack.c.l.b16 %v3819
        %v3897 = vunpack.c.l.b16 %v3820
        %v3898 = vunpack.c.l.b16 %v3821
        %v3899 = vunpack.c.l.b16 %v3822
        %v3900 = vunpack.c.l.b16 %v3823
        %v3901 = vunpack.c.l.b16 %v3824
        %v3902 = vunpack.c.l.b16 %v3825
        %v3903 = vunpack.c.l.b16 %v3826
        %v3904 = vpack.c.b16 %v3873, %v3872
        %v3905 = vpack.c.b16 %v3875, %v3874
        %v3906 = vpack.c.b16 %v3877, %v3876
        %v3907 = vpack.c.b16 %v3879, %v3878
        %v3908 = vpack.c.b16 %v3881, %v3880
        %v3909 = vpack.c.b16 %v3883, %v3882
        %v3910 = vpack.c.b16 %v3885, %v3884
        %v3911 = vpack.c.b16 %v3887, %v3886
        %v3912 = vpack.c.b16 %v3889, %v3888
        %v3913 = vpack.c.b16 %v3891, %v3890
        %v3914 = vpack.c.b16 %v3893, %v3892
        %v3915 = vpack.c.b16 %v3895, %v3894
        %v3916 = vpack.c.b16 %v3897, %v3896
        %v3917 = vpack.c.b16 %v3899, %v3898
        %v3918 = vpack.c.b16 %v3901, %v3900
        %v3919 = vpack.c.b16 %v3903, %v3902
        %v3932 = vunpack.c.l.b16 %v3828
        %v3933 = vunpack.c.l.b16 %v3829
        %v3934 = vunpack.c.l.b16 %v3830
        %v3935 = vunpack.c.l.b16 %v3831
        %v3936 = vunpack.c.l.b16 %v3832
        %v3937 = vunpack.c.l.b16 %v3833
        %v3938 = vunpack.c.l.b16 %v3834
        %v3939 = vunpack.c.l.b16 %v3835
        %v3940 = vunpack.c.l.b16 %v3836
        %v3941 = vunpack.c.l.b16 %v3837
        %v3942 = vunpack.c.l.b16 %v3838
        %v3943 = vunpack.c.l.b16 %v3839
        %v3944 = vpack.c.b16 %v3933, %v3932
        %v3945 = vpack.c.b16 %v3935, %v3934
        %v3946 = vpack.c.b16 %v3937, %v3936
        %v3947 = vpack.c.b16 %v3939, %v3938
        %v3948 = vpack.c.b16 %v3941, %v3940
        %v3949 = vpack.c.b16 %v3943, %v3942
        %v3957 = vsel %vm1709, %v3904, 0
        %v3960 = vsel %vm1709, %v3905, 0
        %v3963 = vsel %vm1709, %v3906, 0
        %v3966 = vsel %vm1709, %v3907, 0
        %v3969 = vsel %vm1709, %v3908, 0
        %v3972 = vsel %vm1709, %v3909, 0
        %v3975 = vsel %vm1709, %v3910, 0
        %v3978 = vsel %vm1709, %v3911, 0
        %v3981 = vsel %vm1709, %v3912, 0
        %v3984 = vsel %vm1709, %v3913, 0
        %v3987 = vsel %vm1709, %v3914, 0
        %v3990 = vsel %vm1709, %v3915, 0
        %v3993 = vsel %vm1709, %v3916, 0
        %v3996 = vsel %vm1709, %v3917, 0
        %v3999 = vsel %vm1709, %v3918, 0
        %v4002 = vsel %vm1709, %v3919, 0
        %4004 = vmatprep.subr.bf16.mxu0 0
        %4005 = vmatpush1.bf16.msra.mxu0 0
        %4006 = vmatprep.subr.bf16.mxu0 0
        %4007 = vmatpush1.bf16.msra.mxu0 0
        %4008 = vmatprep.subr.bf16.mxu0 0
        %4009 = vmatpush1.bf16.msra.mxu0 %v3949
        %4010 = vmatprep.subr.bf16.mxu0 0
        %4011 = vmatpush1.bf16.msra.mxu0 %v3948
        %4012 = vmatprep.subr.bf16.mxu0 0
        %4013 = vmatpush1.bf16.msra.mxu0 %v3947
        %4014 = vmatprep.subr.bf16.mxu0 0
        %4015 = vmatpush1.bf16.msra.mxu0 %v3946
        %4016 = vmatprep.subr.bf16.mxu0 0
        %4017 = vmatpush1.bf16.msra.mxu0 %v3945
        %4018 = vmatprep.subr.bf16.mxu0 0
        %4019 = vmatpush1.bf16.msra.mxu0 %v3944
        %4020 = vmatprep.subr.bf16.mxu0 0
        %4021 = vmatpush2.bf16.msra.mxu0 0
        %4022 = vmatprep.subr.bf16.mxu0 0
        %4023 = vmatpush2.bf16.msra.mxu0 0
        %4024 = vmatprep.subr.bf16.mxu0 0
        %4025 = vmatpush2.bf16.msra.mxu0 0
        %4026 = vmatprep.subr.bf16.mxu0 0
        %4027 = vmatpush2.bf16.msra.mxu0 0
        %4028 = vmatprep.subr.bf16.mxu0 0
        %4029 = vmatpush2.bf16.msra.mxu0 0
        %4030 = vmatprep.subr.bf16.mxu0 0
        %4031 = vmatpush2.bf16.msra.mxu0 0
        %4032 = vmatprep.subr.bf16.mxu0 0
        %4033 = vmatpush2.bf16.msra.mxu0 0
        %4034 = vmatprep.subr.bf16.mxu0 0
        %4035 = vmatpush2.bf16.msra.mxu0 0
        %4036 = vmatprep.mubr.bf16.mxu0 0
        %4037 = vmatmul.mubr.bf16.gmra.mxu0 %v3957
        %v4038 = vpop.f32.mrf.mxu0
        %v4039 = vadd.f32 0.0, %v4038
        %v4040 = vpop.f32.mrf.mxu0
        %v4041 = vpop.f32.mrf.mxu0
        %v4042 = vadd.f32 0.0, %v4041
        %v4043 = vpop.f32.mrf.mxu0
        %4044 = vmatprep.mubr.bf16.mxu0 0
        %4045 = vmatmul.mubr.bf16.gmra.mxu0 %v3960
        %v4046 = vpop.f32.mrf.mxu0
        %v4047 = vadd.f32 0.0, %v4046
        %v4048 = vpop.f32.mrf.mxu0
        %v4049 = vpop.f32.mrf.mxu0
        %v4050 = vadd.f32 0.0, %v4049
        %v4051 = vpop.f32.mrf.mxu0
        %4052 = vmatprep.mubr.bf16.mxu0 0
        %4053 = vmatmul.mubr.bf16.gmra.mxu0 %v3963
        %v4054 = vpop.f32.mrf.mxu0
        %v4055 = vadd.f32 0.0, %v4054
        %v4056 = vpop.f32.mrf.mxu0
        %v4057 = vpop.f32.mrf.mxu0
        %v4058 = vadd.f32 0.0, %v4057
        %v4059 = vpop.f32.mrf.mxu0
        %4060 = vmatprep.mubr.bf16.mxu0 0
        %4061 = vmatmul.mubr.bf16.gmra.mxu0 %v3966
        %v4062 = vpop.f32.mrf.mxu0
        %v4063 = vadd.f32 0.0, %v4062
        %v4064 = vpop.f32.mrf.mxu0
        %v4065 = vpop.f32.mrf.mxu0
        %v4066 = vadd.f32 0.0, %v4065
        %v4067 = vpop.f32.mrf.mxu0
        %4068 = vmatprep.mubr.bf16.mxu0 0
        %4069 = vmatmul.mubr.bf16.gmra.mxu0 %v3969
        %v4070 = vpop.f32.mrf.mxu0
        %v4071 = vadd.f32 0.0, %v4070
        %v4072 = vpop.f32.mrf.mxu0
        %v4073 = vpop.f32.mrf.mxu0
        %v4074 = vadd.f32 0.0, %v4073
        %v4075 = vpop.f32.mrf.mxu0
        %4076 = vmatprep.mubr.bf16.mxu0 0
        %4077 = vmatmul.mubr.bf16.gmra.mxu0 %v3972
        %v4078 = vpop.f32.mrf.mxu0
        %v4079 = vadd.f32 0.0, %v4078
        %v4080 = vpop.f32.mrf.mxu0
        %v4081 = vpop.f32.mrf.mxu0
        %v4082 = vadd.f32 0.0, %v4081
        %v4083 = vpop.f32.mrf.mxu0
        %4084 = vmatprep.mubr.bf16.mxu0 0
        %4085 = vmatmul.mubr.bf16.gmra.mxu0 %v3975
        %v4086 = vpop.f32.mrf.mxu0
        %v4087 = vadd.f32 0.0, %v4086
        %v4088 = vpop.f32.mrf.mxu0
        %v4089 = vpop.f32.mrf.mxu0
        %v4090 = vadd.f32 0.0, %v4089
        %v4091 = vpop.f32.mrf.mxu0
        %4092 = vmatprep.mubr.bf16.mxu0 0
        %4093 = vmatmul.mubr.bf16.gmra.mxu0 %v3978
        %v4094 = vpop.f32.mrf.mxu0
        %v4095 = vadd.f32 0.0, %v4094
        %v4096 = vpop.f32.mrf.mxu0
        %v4097 = vpop.f32.mrf.mxu0
        %v4098 = vadd.f32 0.0, %v4097
        %v4099 = vpop.f32.mrf.mxu0
        %4100 = vmatprep.mubr.bf16.mxu0 0
        %4101 = vmatmul.mubr.bf16.gmra.mxu0 %v3981
        %v4102 = vpop.f32.mrf.mxu0
        %v4103 = vadd.f32 0.0, %v4102
        %v4104 = vpop.f32.mrf.mxu0
        %v4105 = vpop.f32.mrf.mxu0
        %v4106 = vadd.f32 0.0, %v4105
        %v4107 = vpop.f32.mrf.mxu0
        %4108 = vmatprep.mubr.bf16.mxu0 0
        %4109 = vmatmul.mubr.bf16.gmra.mxu0 %v3984
        %v4110 = vpop.f32.mrf.mxu0
        %v4111 = vadd.f32 0.0, %v4110
        %v4112 = vpop.f32.mrf.mxu0
        %v4113 = vpop.f32.mrf.mxu0
        %v4114 = vadd.f32 0.0, %v4113
        %v4115 = vpop.f32.mrf.mxu0
        %4116 = vmatprep.mubr.bf16.mxu0 0
        %4117 = vmatmul.mubr.bf16.gmra.mxu0 %v3987
        %v4118 = vpop.f32.mrf.mxu0
        %v4119 = vadd.f32 0.0, %v4118
        %v4120 = vpop.f32.mrf.mxu0
        %v4121 = vpop.f32.mrf.mxu0
        %v4122 = vadd.f32 0.0, %v4121
        %v4123 = vpop.f32.mrf.mxu0
        %4124 = vmatprep.mubr.bf16.mxu0 0
        %4125 = vmatmul.mubr.bf16.gmra.mxu0 %v3990
        %v4126 = vpop.f32.mrf.mxu0
        %v4127 = vadd.f32 0.0, %v4126
        %v4128 = vpop.f32.mrf.mxu0
        %v4129 = vpop.f32.mrf.mxu0
        %v4130 = vadd.f32 0.0, %v4129
        %v4131 = vpop.f32.mrf.mxu0
        %4132 = vmatprep.mubr.bf16.mxu0 0
        %4133 = vmatmul.mubr.bf16.gmra.mxu0 %v3993
        %v4134 = vpop.f32.mrf.mxu0
        %v4135 = vadd.f32 0.0, %v4134
        %v4136 = vpop.f32.mrf.mxu0
        %v4137 = vpop.f32.mrf.mxu0
        %v4138 = vadd.f32 0.0, %v4137
        %v4139 = vpop.f32.mrf.mxu0
        %4140 = vmatprep.mubr.bf16.mxu0 0
        %4141 = vmatmul.mubr.bf16.gmra.mxu0 %v3996
        %v4142 = vpop.f32.mrf.mxu0
        %v4143 = vadd.f32 0.0, %v4142
        %v4144 = vpop.f32.mrf.mxu0
        %v4145 = vpop.f32.mrf.mxu0
        %v4146 = vadd.f32 0.0, %v4145
        %v4147 = vpop.f32.mrf.mxu0
        %4148 = vmatprep.mubr.bf16.mxu0 0
        %4149 = vmatmul.mubr.bf16.gmra.mxu0 %v3999
        %v4150 = vpop.f32.mrf.mxu0
        %v4151 = vadd.f32 0.0, %v4150
        %v4152 = vpop.f32.mrf.mxu0
        %v4153 = vpop.f32.mrf.mxu0
        %v4154 = vadd.f32 0.0, %v4153
        %v4155 = vpop.f32.mrf.mxu0
        %4156 = vmatprep.mubr.bf16.mxu0 0
        %4157 = vmatmul.mubr.bf16.gmra.mxu0 %v4002
        %v4158 = vpop.f32.mrf.mxu0
        %v4159 = vadd.f32 0.0, %v4158
        %v4160 = vpop.f32.mrf.mxu0
        %v4161 = vpop.f32.mrf.mxu0
        %v4162 = vadd.f32 0.0, %v4161
        %v4163 = vpop.f32.mrf.mxu0
        %4164 = vdwg.mxu0
        %v4197 = vunpack.c.l.b16 %v3751
        %v4198 = vunpack.c.l.b16 %v3752
        %v4199 = vunpack.c.l.b16 %v3753
        %v4200 = vunpack.c.l.b16 %v3754
        %v4201 = vunpack.c.l.b16 %v3755
        %v4202 = vunpack.c.l.b16 %v3756
        %v4203 = vunpack.c.l.b16 %v3757
        %v4204 = vunpack.c.l.b16 %v3758
        %v4205 = vunpack.c.l.b16 %v3759
        %v4206 = vunpack.c.l.b16 %v3760
        %v4207 = vunpack.c.l.b16 %v3761
        %v4208 = vunpack.c.l.b16 %v3762
        %v4209 = vunpack.c.l.b16 %v3763
        %v4210 = vunpack.c.l.b16 %v3764
        %v4211 = vunpack.c.l.b16 %v3765
        %v4212 = vunpack.c.l.b16 %v3766
        %v4213 = vunpack.c.l.b16 %v3767
        %v4214 = vunpack.c.l.b16 %v3768
        %v4215 = vunpack.c.l.b16 %v3769
        %v4216 = vunpack.c.l.b16 %v3770
        %v4217 = vunpack.c.l.b16 %v3771
        %v4218 = vunpack.c.l.b16 %v3772
        %v4219 = vunpack.c.l.b16 %v3773
        %v4220 = vunpack.c.l.b16 %v3774
        %v4221 = vunpack.c.l.b16 %v3775
        %v4222 = vunpack.c.l.b16 %v3776
        %v4223 = vunpack.c.l.b16 %v3777
        %v4224 = vunpack.c.l.b16 %v3778
        %v4225 = vunpack.c.l.b16 %v3779
        %v4226 = vunpack.c.l.b16 %v3780
        %v4227 = vunpack.c.l.b16 %v3781
        %v4228 = vunpack.c.l.b16 %v3782
        %v4229 = vpack.c.b16 %v4198, %v4197
        %v4230 = vpack.c.b16 %v4200, %v4199
        %v4231 = vpack.c.b16 %v4202, %v4201
        %v4232 = vpack.c.b16 %v4204, %v4203
        %v4233 = vpack.c.b16 %v4206, %v4205
        %v4234 = vpack.c.b16 %v4208, %v4207
        %v4235 = vpack.c.b16 %v4210, %v4209
        %v4236 = vpack.c.b16 %v4212, %v4211
        %v4237 = vpack.c.b16 %v4214, %v4213
        %v4238 = vpack.c.b16 %v4216, %v4215
        %v4239 = vpack.c.b16 %v4218, %v4217
        %v4240 = vpack.c.b16 %v4220, %v4219
        %v4241 = vpack.c.b16 %v4222, %v4221
        %v4242 = vpack.c.b16 %v4224, %v4223
        %v4243 = vpack.c.b16 %v4226, %v4225
        %v4244 = vpack.c.b16 %v4228, %v4227
        %v4257 = vunpack.c.l.b16 %v3783
        %v4258 = vunpack.c.l.b16 %v3784
        %v4259 = vunpack.c.l.b16 %v3785
        %v4260 = vunpack.c.l.b16 %v3786
        %v4261 = vunpack.c.l.b16 %v3787
        %v4262 = vunpack.c.l.b16 %v3788
        %v4263 = vunpack.c.l.b16 %v3789
        %v4264 = vunpack.c.l.b16 %v3790
        %v4265 = vunpack.c.l.b16 %v3791
        %v4266 = vunpack.c.l.b16 %v3792
        %v4267 = vunpack.c.l.b16 %v3793
        %v4268 = vunpack.c.l.b16 %v3794
        %v4269 = vpack.c.b16 %v4258, %v4257
        %v4270 = vpack.c.b16 %v4260, %v4259
        %v4271 = vpack.c.b16 %v4262, %v4261
        %v4272 = vpack.c.b16 %v4264, %v4263
        %v4273 = vpack.c.b16 %v4266, %v4265
        %v4274 = vpack.c.b16 %v4268, %v4267
        %v4282 = vsel %vm1709, %v4229, 0
        %v4285 = vsel %vm1709, %v4230, 0
        %v4288 = vsel %vm1709, %v4231, 0
        %v4291 = vsel %vm1709, %v4232, 0
        %v4294 = vsel %vm1709, %v4233, 0
        %v4297 = vsel %vm1709, %v4234, 0
        %v4300 = vsel %vm1709, %v4235, 0
        %v4303 = vsel %vm1709, %v4236, 0
        %v4306 = vsel %vm1709, %v4237, 0
        %v4309 = vsel %vm1709, %v4238, 0
        %v4312 = vsel %vm1709, %v4239, 0
        %v4315 = vsel %vm1709, %v4240, 0
        %v4318 = vsel %vm1709, %v4241, 0
        %v4321 = vsel %vm1709, %v4242, 0
        %v4324 = vsel %vm1709, %v4243, 0
        %v4327 = vsel %vm1709, %v4244, 0
        %4329 = vmatprep.subr.bf16.mxu0 0
        %4330 = vmatpush1.bf16.msra.mxu0 0
        %4331 = vmatprep.subr.bf16.mxu0 0
        %4332 = vmatpush1.bf16.msra.mxu0 0
        %4333 = vmatprep.subr.bf16.mxu0 0
        %4334 = vmatpush1.bf16.msra.mxu0 %v4274
        %4335 = vmatprep.subr.bf16.mxu0 0
        %4336 = vmatpush1.bf16.msra.mxu0 %v4273
        %4337 = vmatprep.subr.bf16.mxu0 0
        %4338 = vmatpush1.bf16.msra.mxu0 %v4272
        %4339 = vmatprep.subr.bf16.mxu0 0
        %4340 = vmatpush1.bf16.msra.mxu0 %v4271
        %4341 = vmatprep.subr.bf16.mxu0 0
        %4342 = vmatpush1.bf16.msra.mxu0 %v4270
        %4343 = vmatprep.subr.bf16.mxu0 0
        %4344 = vmatpush1.bf16.msra.mxu0 %v4269
        %4345 = vmatprep.subr.bf16.mxu0 0
        %4346 = vmatpush2.bf16.msra.mxu0 0
        %4347 = vmatprep.subr.bf16.mxu0 0
        %4348 = vmatpush2.bf16.msra.mxu0 0
        %4349 = vmatprep.subr.bf16.mxu0 0
        %4350 = vmatpush2.bf16.msra.mxu0 0
        %4351 = vmatprep.subr.bf16.mxu0 0
        %4352 = vmatpush2.bf16.msra.mxu0 0
        %4353 = vmatprep.subr.bf16.mxu0 0
        %4354 = vmatpush2.bf16.msra.mxu0 0
        %4355 = vmatprep.subr.bf16.mxu0 0
        %4356 = vmatpush2.bf16.msra.mxu0 0
        %4357 = vmatprep.subr.bf16.mxu0 0
        %4358 = vmatpush2.bf16.msra.mxu0 0
        %4359 = vmatprep.subr.bf16.mxu0 0
        %4360 = vmatpush2.bf16.msra.mxu0 0
        %4361 = vmatprep.mubr.bf16.mxu0 0
        %4362 = vmatmul.mubr.bf16.gmra.mxu0 %v4282
        %v4363 = vpop.f32.mrf.mxu0
        %v4364 = vadd.f32 %v4039, %v4363
        %v4365 = vpop.f32.mrf.mxu0
        %v4366 = vpop.f32.mrf.mxu0
        %v4367 = vadd.f32 %v4042, %v4366
        %v4368 = vpop.f32.mrf.mxu0
        %4369 = vmatprep.mubr.bf16.mxu0 0
        %4370 = vmatmul.mubr.bf16.gmra.mxu0 %v4285
        %v4371 = vpop.f32.mrf.mxu0
        %v4372 = vadd.f32 %v4047, %v4371
        %v4373 = vpop.f32.mrf.mxu0
        %v4374 = vpop.f32.mrf.mxu0
        %v4375 = vadd.f32 %v4050, %v4374
        %v4376 = vpop.f32.mrf.mxu0
        %4377 = vmatprep.mubr.bf16.mxu0 0
        %4378 = vmatmul.mubr.bf16.gmra.mxu0 %v4288
        %v4379 = vpop.f32.mrf.mxu0
        %v4380 = vadd.f32 %v4055, %v4379
        %v4381 = vpop.f32.mrf.mxu0
        %v4382 = vpop.f32.mrf.mxu0
        %v4383 = vadd.f32 %v4058, %v4382
        %v4384 = vpop.f32.mrf.mxu0
        %4385 = vmatprep.mubr.bf16.mxu0 0
        %4386 = vmatmul.mubr.bf16.gmra.mxu0 %v4291
        %v4387 = vpop.f32.mrf.mxu0
        %v4388 = vadd.f32 %v4063, %v4387
        %v4389 = vpop.f32.mrf.mxu0
        %v4390 = vpop.f32.mrf.mxu0
        %v4391 = vadd.f32 %v4066, %v4390
        %v4392 = vpop.f32.mrf.mxu0
        %4393 = vmatprep.mubr.bf16.mxu0 0
        %4394 = vmatmul.mubr.bf16.gmra.mxu0 %v4294
        %v4395 = vpop.f32.mrf.mxu0
        %v4396 = vadd.f32 %v4071, %v4395
        %v4397 = vpop.f32.mrf.mxu0
        %v4398 = vpop.f32.mrf.mxu0
        %v4399 = vadd.f32 %v4074, %v4398
        %v4400 = vpop.f32.mrf.mxu0
        %4401 = vmatprep.mubr.bf16.mxu0 0
        %4402 = vmatmul.mubr.bf16.gmra.mxu0 %v4297
        %v4403 = vpop.f32.mrf.mxu0
        %v4404 = vadd.f32 %v4079, %v4403
        %v4405 = vpop.f32.mrf.mxu0
        %v4406 = vpop.f32.mrf.mxu0
        %v4407 = vadd.f32 %v4082, %v4406
        %v4408 = vpop.f32.mrf.mxu0
        %4409 = vmatprep.mubr.bf16.mxu0 0
        %4410 = vmatmul.mubr.bf16.gmra.mxu0 %v4300
        %v4411 = vpop.f32.mrf.mxu0
        %v4412 = vadd.f32 %v4087, %v4411
        %v4413 = vpop.f32.mrf.mxu0
        %v4414 = vpop.f32.mrf.mxu0
        %v4415 = vadd.f32 %v4090, %v4414
        %v4416 = vpop.f32.mrf.mxu0
        %4417 = vmatprep.mubr.bf16.mxu0 0
        %4418 = vmatmul.mubr.bf16.gmra.mxu0 %v4303
        %v4419 = vpop.f32.mrf.mxu0
        %v4420 = vadd.f32 %v4095, %v4419
        %v4421 = vpop.f32.mrf.mxu0
        %v4422 = vpop.f32.mrf.mxu0
        %v4423 = vadd.f32 %v4098, %v4422
        %v4424 = vpop.f32.mrf.mxu0
        %4425 = vmatprep.mubr.bf16.mxu0 0
        %4426 = vmatmul.mubr.bf16.gmra.mxu0 %v4306
        %v4427 = vpop.f32.mrf.mxu0
        %v4428 = vadd.f32 %v4103, %v4427
        %v4429 = vpop.f32.mrf.mxu0
        %v4430 = vpop.f32.mrf.mxu0
        %v4431 = vadd.f32 %v4106, %v4430
        %v4432 = vpop.f32.mrf.mxu0
        %4433 = vmatprep.mubr.bf16.mxu0 0
        %4434 = vmatmul.mubr.bf16.gmra.mxu0 %v4309
        %v4435 = vpop.f32.mrf.mxu0
        %v4436 = vadd.f32 %v4111, %v4435
        %v4437 = vpop.f32.mrf.mxu0
        %v4438 = vpop.f32.mrf.mxu0
        %v4439 = vadd.f32 %v4114, %v4438
        %v4440 = vpop.f32.mrf.mxu0
        %4441 = vmatprep.mubr.bf16.mxu0 0
        %4442 = vmatmul.mubr.bf16.gmra.mxu0 %v4312
        %v4443 = vpop.f32.mrf.mxu0
        %v4444 = vadd.f32 %v4119, %v4443
        %v4445 = vpop.f32.mrf.mxu0
        %v4446 = vpop.f32.mrf.mxu0
        %v4447 = vadd.f32 %v4122, %v4446
        %v4448 = vpop.f32.mrf.mxu0
        %4449 = vmatprep.mubr.bf16.mxu0 0
        %4450 = vmatmul.mubr.bf16.gmra.mxu0 %v4315
        %v4451 = vpop.f32.mrf.mxu0
        %v4452 = vadd.f32 %v4127, %v4451
        %v4453 = vpop.f32.mrf.mxu0
        %v4454 = vpop.f32.mrf.mxu0
        %v4455 = vadd.f32 %v4130, %v4454
        %v4456 = vpop.f32.mrf.mxu0
        %4457 = vmatprep.mubr.bf16.mxu0 0
        %4458 = vmatmul.mubr.bf16.gmra.mxu0 %v4318
        %v4459 = vpop.f32.mrf.mxu0
        %v4460 = vadd.f32 %v4135, %v4459
        %v4461 = vpop.f32.mrf.mxu0
        %v4462 = vpop.f32.mrf.mxu0
        %v4463 = vadd.f32 %v4138, %v4462
        %v4464 = vpop.f32.mrf.mxu0
        %4465 = vmatprep.mubr.bf16.mxu0 0
        %4466 = vmatmul.mubr.bf16.gmra.mxu0 %v4321
        %v4467 = vpop.f32.mrf.mxu0
        %v4468 = vadd.f32 %v4143, %v4467
        %v4469 = vpop.f32.mrf.mxu0
        %v4470 = vpop.f32.mrf.mxu0
        %v4471 = vadd.f32 %v4146, %v4470
        %v4472 = vpop.f32.mrf.mxu0
        %4473 = vmatprep.mubr.bf16.mxu0 0
        %4474 = vmatmul.mubr.bf16.gmra.mxu0 %v4324
        %v4475 = vpop.f32.mrf.mxu0
        %v4476 = vadd.f32 %v4151, %v4475
        %v4477 = vpop.f32.mrf.mxu0
        %v4478 = vpop.f32.mrf.mxu0
        %v4479 = vadd.f32 %v4154, %v4478
        %v4480 = vpop.f32.mrf.mxu0
        %4481 = vmatprep.mubr.bf16.mxu0 0
        %4482 = vmatmul.mubr.bf16.gmra.mxu0 %v4327
        %v4483 = vpop.f32.mrf.mxu0
        %v4484 = vadd.f32 %v4159, %v4483
        %v4485 = vpop.f32.mrf.mxu0
        %v4486 = vpop.f32.mrf.mxu0
        %v4487 = vadd.f32 %v4162, %v4486
        %v4488 = vpop.f32.mrf.mxu0
        %4489 = vdwg.mxu0
        %s4490 = scalar_lea.vmem [#allocation3], 16
        %v4491 = vld [vmem:[%s4490] sm:$0xf]
        %v4492 = vld [vmem:[%s4490 + $0x4] sm:$0xf]
        %v4493 = vld [vmem:[%s4490 + $0x8] sm:$0xf]
        %v4494 = vld [vmem:[%s4490 + $0xc] sm:$0xf]
        %v4495 = vld [vmem:[%s4490 + $0x10] sm:$0xf]
        %v4496 = vld [vmem:[%s4490 + $0x14] sm:$0xf]
        %v4497 = vld [vmem:[%s4490 + $0x18] sm:$0xf]
        %v4498 = vld [vmem:[%s4490 + $0x1c] sm:$0xf]
        %v4499 = vld [vmem:[%s4490 + $0x20] sm:$0xf]
        %v4500 = vld [vmem:[%s4490 + $0x24] sm:$0xf]
        %v4501 = vld [vmem:[%s4490 + $0x28] sm:$0xf]
        %v4502 = vld [vmem:[%s4490 + $0x2c] sm:$0xf]
        %v4503 = vld [vmem:[%s4490 + $0x30] sm:$0xf]
        %v4504 = vld [vmem:[%s4490 + $0x34] sm:$0xf]
        %v4505 = vld [vmem:[%s4490 + $0x38] sm:$0xf]
        %v4506 = vld [vmem:[%s4490 + $0x3c] sm:$0xf]
        %v4507 = vld [vmem:[%s4490 + $0x40] sm:$0xf]
        %v4508 = vld [vmem:[%s4490 + $0x44] sm:$0xf]
        %v4509 = vld [vmem:[%s4490 + $0x48] sm:$0xf]
        %v4510 = vld [vmem:[%s4490 + $0x4c] sm:$0xf]
        %v4511 = vld [vmem:[%s4490 + $0x50] sm:$0xf]
        %v4512 = vld [vmem:[%s4490 + $0x54] sm:$0xf]
        %v4513 = vld [vmem:[%s4490 + $0x58] sm:$0xf]
        %v4514 = vld [vmem:[%s4490 + $0x5c] sm:$0xf]
        %v4515 = vld [vmem:[%s4490 + $0x60] sm:$0xf]
        %v4516 = vld [vmem:[%s4490 + $0x64] sm:$0xf]
        %v4517 = vld [vmem:[%s4490 + $0x68] sm:$0xf]
        %v4518 = vld [vmem:[%s4490 + $0x6c] sm:$0xf]
        %v4519 = vld [vmem:[%s4490 + $0x70] sm:$0xf]
        %v4520 = vld [vmem:[%s4490 + $0x74] sm:$0xf]
        %v4521 = vld [vmem:[%s4490 + $0x78] sm:$0xf]
        %v4522 = vld [vmem:[%s4490 + $0x7c] sm:$0xf]
        %s4523 = scalar_lea.vmem %s4, 96
        %v4524 = vld [vmem:[%s4523] sm:$0xf]
        %v4525 = vld [vmem:[%s4523 + $0x4] sm:$0xf]
        %v4526 = vld [vmem:[%s4523 + $0x8] sm:$0xf]
        %v4527 = vld [vmem:[%s4523 + $0xc] sm:$0xf]
        %v4528 = vld [vmem:[%s4523 + $0x10] sm:$0xf]
        %v4529 = vld [vmem:[%s4523 + $0x14] sm:$0xf]
        %v4530 = vld [vmem:[%s4523 + $0x18] sm:$0xf]
        %v4531 = vld [vmem:[%s4523 + $0x1c] sm:$0xf]
        %v4532 = vld [vmem:[%s4523 + $0x20] sm:$0xf]
        %v4533 = vld [vmem:[%s4523 + $0x24] sm:$0xf]
        %v4534 = vld [vmem:[%s4523 + $0x28] sm:$0xf]
        %v4535 = vld [vmem:[%s4523 + $0x2c] sm:$0xf]
        %v4568 = vunpack.c.l.b16 %v4491
        %v4569 = vunpack.c.l.b16 %v4492
        %v4570 = vunpack.c.l.b16 %v4493
        %v4571 = vunpack.c.l.b16 %v4494
        %v4572 = vunpack.c.l.b16 %v4495
        %v4573 = vunpack.c.l.b16 %v4496
        %v4574 = vunpack.c.l.b16 %v4497
        %v4575 = vunpack.c.l.b16 %v4498
        %v4576 = vunpack.c.l.b16 %v4499
        %v4577 = vunpack.c.l.b16 %v4500
        %v4578 = vunpack.c.l.b16 %v4501
        %v4579 = vunpack.c.l.b16 %v4502
        %v4580 = vunpack.c.l.b16 %v4503
        %v4581 = vunpack.c.l.b16 %v4504
        %v4582 = vunpack.c.l.b16 %v4505
        %v4583 = vunpack.c.l.b16 %v4506
        %v4584 = vunpack.c.l.b16 %v4507
        %v4585 = vunpack.c.l.b16 %v4508
        %v4586 = vunpack.c.l.b16 %v4509
        %v4587 = vunpack.c.l.b16 %v4510
        %v4588 = vunpack.c.l.b16 %v4511
        %v4589 = vunpack.c.l.b16 %v4512
        %v4590 = vunpack.c.l.b16 %v4513
        %v4591 = vunpack.c.l.b16 %v4514
        %v4592 = vunpack.c.l.b16 %v4515
        %v4593 = vunpack.c.l.b16 %v4516
        %v4594 = vunpack.c.l.b16 %v4517
        %v4595 = vunpack.c.l.b16 %v4518
        %v4596 = vunpack.c.l.b16 %v4519
        %v4597 = vunpack.c.l.b16 %v4520
        %v4598 = vunpack.c.l.b16 %v4521
        %v4599 = vunpack.c.l.b16 %v4522
        %v4600 = vpack.c.b16 %v4569, %v4568
        %v4601 = vpack.c.b16 %v4571, %v4570
        %v4602 = vpack.c.b16 %v4573, %v4572
        %v4603 = vpack.c.b16 %v4575, %v4574
        %v4604 = vpack.c.b16 %v4577, %v4576
        %v4605 = vpack.c.b16 %v4579, %v4578
        %v4606 = vpack.c.b16 %v4581, %v4580
        %v4607 = vpack.c.b16 %v4583, %v4582
        %v4608 = vpack.c.b16 %v4585, %v4584
        %v4609 = vpack.c.b16 %v4587, %v4586
        %v4610 = vpack.c.b16 %v4589, %v4588
        %v4611 = vpack.c.b16 %v4591, %v4590
        %v4612 = vpack.c.b16 %v4593, %v4592
        %v4613 = vpack.c.b16 %v4595, %v4594
        %v4614 = vpack.c.b16 %v4597, %v4596
        %v4615 = vpack.c.b16 %v4599, %v4598
        %v4628 = vunpack.c.l.b16 %v4524
        %v4629 = vunpack.c.l.b16 %v4525
        %v4630 = vunpack.c.l.b16 %v4526
        %v4631 = vunpack.c.l.b16 %v4527
        %v4632 = vunpack.c.l.b16 %v4528
        %v4633 = vunpack.c.l.b16 %v4529
        %v4634 = vunpack.c.l.b16 %v4530
        %v4635 = vunpack.c.l.b16 %v4531
        %v4636 = vunpack.c.l.b16 %v4532
        %v4637 = vunpack.c.l.b16 %v4533
        %v4638 = vunpack.c.l.b16 %v4534
        %v4639 = vunpack.c.l.b16 %v4535
        %v4640 = vpack.c.b16 %v4629, %v4628
        %v4641 = vpack.c.b16 %v4631, %v4630
        %v4642 = vpack.c.b16 %v4633, %v4632
        %v4643 = vpack.c.b16 %v4635, %v4634
        %v4644 = vpack.c.b16 %v4637, %v4636
        %v4645 = vpack.c.b16 %v4639, %v4638
        %v4653 = vsel %vm1709, %v4600, 0
        %v4656 = vsel %vm1709, %v4601, 0
        %v4659 = vsel %vm1709, %v4602, 0
        %v4662 = vsel %vm1709, %v4603, 0
        %v4665 = vsel %vm1709, %v4604, 0
        %v4668 = vsel %vm1709, %v4605, 0
        %v4671 = vsel %vm1709, %v4606, 0
        %v4674 = vsel %vm1709, %v4607, 0
        %v4677 = vsel %vm1709, %v4608, 0
        %v4680 = vsel %vm1709, %v4609, 0
        %v4683 = vsel %vm1709, %v4610, 0
        %v4686 = vsel %vm1709, %v4611, 0
        %v4689 = vsel %vm1709, %v4612, 0
        %v4692 = vsel %vm1709, %v4613, 0
        %v4695 = vsel %vm1709, %v4614, 0
        %v4698 = vsel %vm1709, %v4615, 0
        %4700 = vmatprep.subr.bf16.mxu0 0
        %4701 = vmatpush1.bf16.msra.mxu0 0
        %4702 = vmatprep.subr.bf16.mxu0 0
        %4703 = vmatpush1.bf16.msra.mxu0 0
        %4704 = vmatprep.subr.bf16.mxu0 0
        %4705 = vmatpush1.bf16.msra.mxu0 %v4645
        %4706 = vmatprep.subr.bf16.mxu0 0
        %4707 = vmatpush1.bf16.msra.mxu0 %v4644
        %4708 = vmatprep.subr.bf16.mxu0 0
        %4709 = vmatpush1.bf16.msra.mxu0 %v4643
        %4710 = vmatprep.subr.bf16.mxu0 0
        %4711 = vmatpush1.bf16.msra.mxu0 %v4642
        %4712 = vmatprep.subr.bf16.mxu0 0
        %4713 = vmatpush1.bf16.msra.mxu0 %v4641
        %4714 = vmatprep.subr.bf16.mxu0 0
        %4715 = vmatpush1.bf16.msra.mxu0 %v4640
        %4716 = vmatprep.subr.bf16.mxu0 0
        %4717 = vmatpush2.bf16.msra.mxu0 0
        %4718 = vmatprep.subr.bf16.mxu0 0
        %4719 = vmatpush2.bf16.msra.mxu0 0
        %4720 = vmatprep.subr.bf16.mxu0 0
        %4721 = vmatpush2.bf16.msra.mxu0 0
        %4722 = vmatprep.subr.bf16.mxu0 0
        %4723 = vmatpush2.bf16.msra.mxu0 0
        %4724 = vmatprep.subr.bf16.mxu0 0
        %4725 = vmatpush2.bf16.msra.mxu0 0
        %4726 = vmatprep.subr.bf16.mxu0 0
        %4727 = vmatpush2.bf16.msra.mxu0 0
        %4728 = vmatprep.subr.bf16.mxu0 0
        %4729 = vmatpush2.bf16.msra.mxu0 0
        %4730 = vmatprep.subr.bf16.mxu0 0
        %4731 = vmatpush2.bf16.msra.mxu0 0
        %4732 = vmatprep.mubr.bf16.mxu0 0
        %4733 = vmatmul.mubr.bf16.gmra.mxu0 %v4653
        %v4734 = vpop.f32.mrf.mxu0
        %v4735 = vadd.f32 0.0, %v4734
        %v4736 = vpop.f32.mrf.mxu0
        %v4737 = vpop.f32.mrf.mxu0
        %v4738 = vadd.f32 0.0, %v4737
        %v4739 = vpop.f32.mrf.mxu0
        %4740 = vmatprep.mubr.bf16.mxu0 0
        %4741 = vmatmul.mubr.bf16.gmra.mxu0 %v4656
        %v4742 = vpop.f32.mrf.mxu0
        %v4743 = vadd.f32 0.0, %v4742
        %v4744 = vpop.f32.mrf.mxu0
        %v4745 = vpop.f32.mrf.mxu0
        %v4746 = vadd.f32 0.0, %v4745
        %v4747 = vpop.f32.mrf.mxu0
        %4748 = vmatprep.mubr.bf16.mxu0 0
        %4749 = vmatmul.mubr.bf16.gmra.mxu0 %v4659
        %v4750 = vpop.f32.mrf.mxu0
        %v4751 = vadd.f32 0.0, %v4750
        %v4752 = vpop.f32.mrf.mxu0
        %v4753 = vpop.f32.mrf.mxu0
        %v4754 = vadd.f32 0.0, %v4753
        %v4755 = vpop.f32.mrf.mxu0
        %4756 = vmatprep.mubr.bf16.mxu0 0
        %4757 = vmatmul.mubr.bf16.gmra.mxu0 %v4662
        %v4758 = vpop.f32.mrf.mxu0
        %v4759 = vadd.f32 0.0, %v4758
        %v4760 = vpop.f32.mrf.mxu0
        %v4761 = vpop.f32.mrf.mxu0
        %v4762 = vadd.f32 0.0, %v4761
        %v4763 = vpop.f32.mrf.mxu0
        %4764 = vmatprep.mubr.bf16.mxu0 0
        %4765 = vmatmul.mubr.bf16.gmra.mxu0 %v4665
        %v4766 = vpop.f32.mrf.mxu0
        %v4767 = vadd.f32 0.0, %v4766
        %v4768 = vpop.f32.mrf.mxu0
        %v4769 = vpop.f32.mrf.mxu0
        %v4770 = vadd.f32 0.0, %v4769
        %v4771 = vpop.f32.mrf.mxu0
        %4772 = vmatprep.mubr.bf16.mxu0 0
        %4773 = vmatmul.mubr.bf16.gmra.mxu0 %v4668
        %v4774 = vpop.f32.mrf.mxu0
        %v4775 = vadd.f32 0.0, %v4774
        %v4776 = vpop.f32.mrf.mxu0
        %v4777 = vpop.f32.mrf.mxu0
        %v4778 = vadd.f32 0.0, %v4777
        %v4779 = vpop.f32.mrf.mxu0
        %4780 = vmatprep.mubr.bf16.mxu0 0
        %4781 = vmatmul.mubr.bf16.gmra.mxu0 %v4671
        %v4782 = vpop.f32.mrf.mxu0
        %v4783 = vadd.f32 0.0, %v4782
        %v4784 = vpop.f32.mrf.mxu0
        %v4785 = vpop.f32.mrf.mxu0
        %v4786 = vadd.f32 0.0, %v4785
        %v4787 = vpop.f32.mrf.mxu0
        %4788 = vmatprep.mubr.bf16.mxu0 0
        %4789 = vmatmul.mubr.bf16.gmra.mxu0 %v4674
        %v4790 = vpop.f32.mrf.mxu0
        %v4791 = vadd.f32 0.0, %v4790
        %v4792 = vpop.f32.mrf.mxu0
        %v4793 = vpop.f32.mrf.mxu0
        %v4794 = vadd.f32 0.0, %v4793
        %v4795 = vpop.f32.mrf.mxu0
        %4796 = vmatprep.mubr.bf16.mxu0 0
        %4797 = vmatmul.mubr.bf16.gmra.mxu0 %v4677
        %v4798 = vpop.f32.mrf.mxu0
        %v4799 = vadd.f32 0.0, %v4798
        %v4800 = vpop.f32.mrf.mxu0
        %v4801 = vpop.f32.mrf.mxu0
        %v4802 = vadd.f32 0.0, %v4801
        %v4803 = vpop.f32.mrf.mxu0
        %4804 = vmatprep.mubr.bf16.mxu0 0
        %4805 = vmatmul.mubr.bf16.gmra.mxu0 %v4680
        %v4806 = vpop.f32.mrf.mxu0
        %v4807 = vadd.f32 0.0, %v4806
        %v4808 = vpop.f32.mrf.mxu0
        %v4809 = vpop.f32.mrf.mxu0
        %v4810 = vadd.f32 0.0, %v4809
        %v4811 = vpop.f32.mrf.mxu0
        %4812 = vmatprep.mubr.bf16.mxu0 0
        %4813 = vmatmul.mubr.bf16.gmra.mxu0 %v4683
        %v4814 = vpop.f32.mrf.mxu0
        %v4815 = vadd.f32 0.0, %v4814
        %v4816 = vpop.f32.mrf.mxu0
        %v4817 = vpop.f32.mrf.mxu0
        %v4818 = vadd.f32 0.0, %v4817
        %v4819 = vpop.f32.mrf.mxu0
        %4820 = vmatprep.mubr.bf16.mxu0 0
        %4821 = vmatmul.mubr.bf16.gmra.mxu0 %v4686
        %v4822 = vpop.f32.mrf.mxu0
        %v4823 = vadd.f32 0.0, %v4822
        %v4824 = vpop.f32.mrf.mxu0
        %v4825 = vpop.f32.mrf.mxu0
        %v4826 = vadd.f32 0.0, %v4825
        %v4827 = vpop.f32.mrf.mxu0
        %4828 = vmatprep.mubr.bf16.mxu0 0
        %4829 = vmatmul.mubr.bf16.gmra.mxu0 %v4689
        %v4830 = vpop.f32.mrf.mxu0
        %v4831 = vadd.f32 0.0, %v4830
        %v4832 = vpop.f32.mrf.mxu0
        %v4833 = vpop.f32.mrf.mxu0
        %v4834 = vadd.f32 0.0, %v4833
        %v4835 = vpop.f32.mrf.mxu0
        %4836 = vmatprep.mubr.bf16.mxu0 0
        %4837 = vmatmul.mubr.bf16.gmra.mxu0 %v4692
        %v4838 = vpop.f32.mrf.mxu0
        %v4839 = vadd.f32 0.0, %v4838
        %v4840 = vpop.f32.mrf.mxu0
        %v4841 = vpop.f32.mrf.mxu0
        %v4842 = vadd.f32 0.0, %v4841
        %v4843 = vpop.f32.mrf.mxu0
        %4844 = vmatprep.mubr.bf16.mxu0 0
        %4845 = vmatmul.mubr.bf16.gmra.mxu0 %v4695
        %v4846 = vpop.f32.mrf.mxu0
        %v4847 = vadd.f32 0.0, %v4846
        %v4848 = vpop.f32.mrf.mxu0
        %v4849 = vpop.f32.mrf.mxu0
        %v4850 = vadd.f32 0.0, %v4849
        %v4851 = vpop.f32.mrf.mxu0
        %4852 = vmatprep.mubr.bf16.mxu0 0
        %4853 = vmatmul.mubr.bf16.gmra.mxu0 %v4698
        %v4854 = vpop.f32.mrf.mxu0
        %v4855 = vadd.f32 0.0, %v4854
        %v4856 = vpop.f32.mrf.mxu0
        %v4857 = vpop.f32.mrf.mxu0
        %v4858 = vadd.f32 0.0, %v4857
        %v4859 = vpop.f32.mrf.mxu0
        %4860 = vdwg.mxu0
        %v4861 = vadd.f32 %v4364, %v4735
        %v4862 = vadd.f32 %v4367, %v4738
        %v4863 = vadd.f32 %v4372, %v4743
        %v4864 = vadd.f32 %v4375, %v4746
        %v4865 = vadd.f32 %v4380, %v4751
        %v4866 = vadd.f32 %v4383, %v4754
        %v4867 = vadd.f32 %v4388, %v4759
        %v4868 = vadd.f32 %v4391, %v4762
        %v4869 = vadd.f32 %v4396, %v4767
        %v4870 = vadd.f32 %v4399, %v4770
        %v4871 = vadd.f32 %v4404, %v4775
        %v4872 = vadd.f32 %v4407, %v4778
        %v4873 = vadd.f32 %v4412, %v4783
        %v4874 = vadd.f32 %v4415, %v4786
        %v4875 = vadd.f32 %v4420, %v4791
        %v4876 = vadd.f32 %v4423, %v4794
        %v4877 = vadd.f32 %v4428, %v4799
        %v4878 = vadd.f32 %v4431, %v4802
        %v4879 = vadd.f32 %v4436, %v4807
        %v4880 = vadd.f32 %v4439, %v4810
        %v4881 = vadd.f32 %v4444, %v4815
        %v4882 = vadd.f32 %v4447, %v4818
        %v4883 = vadd.f32 %v4452, %v4823
        %v4884 = vadd.f32 %v4455, %v4826
        %v4885 = vadd.f32 %v4460, %v4831
        %v4886 = vadd.f32 %v4463, %v4834
        %v4887 = vadd.f32 %v4468, %v4839
        %v4888 = vadd.f32 %v4471, %v4842
        %v4889 = vadd.f32 %v4476, %v4847
        %v4890 = vadd.f32 %v4479, %v4850
        %v4891 = vadd.f32 %v4484, %v4855
        %v4892 = vadd.f32 %v4487, %v4858
        %v4893 = vld [vmem:[%s5] sm:$0x1]
        %v4895 = vlaneseq
        %v4896 = vshrl.u32 %v4895, 7
        %v4897 = vsub.s32 0, %v4896
        %v4898 = vrot.slane %v4893, %v4897
        %v4900 = vmul.f32 %v4861, %v4898
        %v4901 = vmul.f32 %v4862, %v4898
        %v4902 = vmul.f32 %v4863, %v4898
        %v4903 = vmul.f32 %v4864, %v4898
        %v4904 = vmul.f32 %v4865, %v4898
        %v4905 = vmul.f32 %v4866, %v4898
        %v4906 = vmul.f32 %v4867, %v4898
        %v4907 = vmul.f32 %v4868, %v4898
        %v4908 = vmul.f32 %v4869, %v4898
        %v4909 = vmul.f32 %v4870, %v4898
        %v4910 = vmul.f32 %v4871, %v4898
        %v4911 = vmul.f32 %v4872, %v4898
        %v4912 = vmul.f32 %v4873, %v4898
        %v4913 = vmul.f32 %v4874, %v4898
        %v4914 = vmul.f32 %v4875, %v4898
        %v4915 = vmul.f32 %v4876, %v4898
        %v4916 = vmul.f32 %v4877, %v4898
        %v4917 = vmul.f32 %v4878, %v4898
        %v4918 = vmul.f32 %v4879, %v4898
        %v4919 = vmul.f32 %v4880, %v4898
        %v4920 = vmul.f32 %v4881, %v4898
        %v4921 = vmul.f32 %v4882, %v4898
        %v4922 = vmul.f32 %v4883, %v4898
        %v4923 = vmul.f32 %v4884, %v4898
        %v4924 = vmul.f32 %v4885, %v4898
        %v4925 = vmul.f32 %v4886, %v4898
        %v4926 = vmul.f32 %v4887, %v4898
        %v4927 = vmul.f32 %v4888, %v4898
        %v4928 = vmul.f32 %v4889, %v4898
        %v4929 = vmul.f32 %v4890, %v4898
        %v4930 = vmul.f32 %v4891, %v4898
        %v4931 = vmul.f32 %v4892, %v4898
        %v4932 = vld [vmem:[%s6] sm:$0x1]
        %v4934 = vlaneseq
        %v4935 = vshrl.u32 %v4934, 7
        %v4936 = vsub.s32 0, %v4935
        %v4937 = vrot.slane %v4932, %v4936
        %v4939 = vadd.f32 %v4900, %v4937
        %v4940 = vadd.f32 %v4901, %v4937
        %v4941 = vadd.f32 %v4902, %v4937
        %v4942 = vadd.f32 %v4903, %v4937
        %v4943 = vadd.f32 %v4904, %v4937
        %v4944 = vadd.f32 %v4905, %v4937
        %v4945 = vadd.f32 %v4906, %v4937
        %v4946 = vadd.f32 %v4907, %v4937
        %v4947 = vadd.f32 %v4908, %v4937
        %v4948 = vadd.f32 %v4909, %v4937
        %v4949 = vadd.f32 %v4910, %v4937
        %v4950 = vadd.f32 %v4911, %v4937
        %v4951 = vadd.f32 %v4912, %v4937
        %v4952 = vadd.f32 %v4913, %v4937
        %v4953 = vadd.f32 %v4914, %v4937
        %v4954 = vadd.f32 %v4915, %v4937
        %v4955 = vadd.f32 %v4916, %v4937
        %v4956 = vadd.f32 %v4917, %v4937
        %v4957 = vadd.f32 %v4918, %v4937
        %v4958 = vadd.f32 %v4919, %v4937
        %v4959 = vadd.f32 %v4920, %v4937
        %v4960 = vadd.f32 %v4921, %v4937
        %v4961 = vadd.f32 %v4922, %v4937
        %v4962 = vadd.f32 %v4923, %v4937
        %v4963 = vadd.f32 %v4924, %v4937
        %v4964 = vadd.f32 %v4925, %v4937
        %v4965 = vadd.f32 %v4926, %v4937
        %v4966 = vadd.f32 %v4927, %v4937
        %v4967 = vadd.f32 %v4928, %v4937
        %v4968 = vadd.f32 %v4929, %v4937
        %v4969 = vadd.f32 %v4930, %v4937
        %v4970 = vadd.f32 %v4931, %v4937
        %v4971 = vld [vmem:[%s740] sm:$0xf]
        %v4972 = vld [vmem:[%s740 + $0x4] sm:$0xf]
        %v4973 = vld [vmem:[%s740 + $0x8] sm:$0xf]
        %v4974 = vld [vmem:[%s740 + $0xc] sm:$0xf]
        %v4975 = vld [vmem:[%s740 + $0x10] sm:$0xf]
        %v4976 = vld [vmem:[%s740 + $0x14] sm:$0xf]
        %v4977 = vld [vmem:[%s740 + $0x18] sm:$0xf]
        %v4978 = vld [vmem:[%s740 + $0x1c] sm:$0xf]
        %v4979 = vld [vmem:[%s740 + $0x20] sm:$0xf]
        %v4980 = vld [vmem:[%s740 + $0x24] sm:$0xf]
        %v4981 = vld [vmem:[%s740 + $0x28] sm:$0xf]
        %v4982 = vld [vmem:[%s740 + $0x2c] sm:$0xf]
        %v4983 = vld [vmem:[%s740 + $0x30] sm:$0xf]
        %v4984 = vld [vmem:[%s740 + $0x34] sm:$0xf]
        %v4985 = vld [vmem:[%s740 + $0x38] sm:$0xf]
        %v4986 = vld [vmem:[%s740 + $0x3c] sm:$0xf]
        %v4987 = vld [vmem:[%s740 + $0x40] sm:$0xf]
        %v4988 = vld [vmem:[%s740 + $0x44] sm:$0xf]
        %v4989 = vld [vmem:[%s740 + $0x48] sm:$0xf]
        %v4990 = vld [vmem:[%s740 + $0x4c] sm:$0xf]
        %v4991 = vld [vmem:[%s740 + $0x50] sm:$0xf]
        %v4992 = vld [vmem:[%s740 + $0x54] sm:$0xf]
        %v4993 = vld [vmem:[%s740 + $0x58] sm:$0xf]
        %v4994 = vld [vmem:[%s740 + $0x5c] sm:$0xf]
        %v4995 = vld [vmem:[%s740 + $0x60] sm:$0xf]
        %v4996 = vld [vmem:[%s740 + $0x64] sm:$0xf]
        %v4997 = vld [vmem:[%s740 + $0x68] sm:$0xf]
        %v4998 = vld [vmem:[%s740 + $0x6c] sm:$0xf]
        %v4999 = vld [vmem:[%s740 + $0x70] sm:$0xf]
        %v5000 = vld [vmem:[%s740 + $0x74] sm:$0xf]
        %v5001 = vld [vmem:[%s740 + $0x78] sm:$0xf]
        %v5002 = vld [vmem:[%s740 + $0x7c] sm:$0xf]
        %v5003 = vunpack.c.l.bf16 %v4971
        %v5004 = vunpack.c.l.bf16 %v4972
        %v5005 = vunpack.c.l.bf16 %v4973
        %v5006 = vunpack.c.l.bf16 %v4974
        %v5007 = vunpack.c.l.bf16 %v4975
        %v5008 = vunpack.c.l.bf16 %v4976
        %v5009 = vunpack.c.l.bf16 %v4977
        %v5010 = vunpack.c.l.bf16 %v4978
        %v5011 = vunpack.c.l.bf16 %v4979
        %v5012 = vunpack.c.l.bf16 %v4980
        %v5013 = vunpack.c.l.bf16 %v4981
        %v5014 = vunpack.c.l.bf16 %v4982
        %v5015 = vunpack.c.l.bf16 %v4983
        %v5016 = vunpack.c.l.bf16 %v4984
        %v5017 = vunpack.c.l.bf16 %v4985
        %v5018 = vunpack.c.l.bf16 %v4986
        %v5019 = vunpack.c.l.bf16 %v4987
        %v5020 = vunpack.c.l.bf16 %v4988
        %v5021 = vunpack.c.l.bf16 %v4989
        %v5022 = vunpack.c.l.bf16 %v4990
        %v5023 = vunpack.c.l.bf16 %v4991
        %v5024 = vunpack.c.l.bf16 %v4992
        %v5025 = vunpack.c.l.bf16 %v4993
        %v5026 = vunpack.c.l.bf16 %v4994
        %v5027 = vunpack.c.l.bf16 %v4995
        %v5028 = vunpack.c.l.bf16 %v4996
        %v5029 = vunpack.c.l.bf16 %v4997
        %v5030 = vunpack.c.l.bf16 %v4998
        %v5031 = vunpack.c.l.bf16 %v4999
        %v5032 = vunpack.c.l.bf16 %v5000
        %v5033 = vunpack.c.l.bf16 %v5001
        %v5034 = vunpack.c.l.bf16 %v5002
        %5067 = vrot.lane.b32.xlu0 %v5003, 96
        %v5068 = vpop.permute.xlu0 %5067
        %5069 = vrot.lane.b32.xlu0 %v5004, 96
        %v5070 = vpop.permute.xlu0 %5069
        %5071 = vrot.lane.b32.xlu0 %v5005, 96
        %v5072 = vpop.permute.xlu0 %5071
        %5073 = vrot.lane.b32.xlu0 %v5006, 96
        %v5074 = vpop.permute.xlu0 %5073
        %5075 = vrot.lane.b32.xlu0 %v5007, 96
        %v5076 = vpop.permute.xlu0 %5075
        %5077 = vrot.lane.b32.xlu0 %v5008, 96
        %v5078 = vpop.permute.xlu0 %5077
        %5079 = vrot.lane.b32.xlu0 %v5009, 96
        %v5080 = vpop.permute.xlu0 %5079
        %5081 = vrot.lane.b32.xlu0 %v5010, 96
        %v5082 = vpop.permute.xlu0 %5081
        %5083 = vrot.lane.b32.xlu0 %v5011, 96
        %v5084 = vpop.permute.xlu0 %5083
        %5085 = vrot.lane.b32.xlu0 %v5012, 96
        %v5086 = vpop.permute.xlu0 %5085
        %5087 = vrot.lane.b32.xlu0 %v5013, 96
        %v5088 = vpop.permute.xlu0 %5087
        %5089 = vrot.lane.b32.xlu0 %v5014, 96
        %v5090 = vpop.permute.xlu0 %5089
        %5091 = vrot.lane.b32.xlu0 %v5015, 96
        %v5092 = vpop.permute.xlu0 %5091
        %5093 = vrot.lane.b32.xlu0 %v5016, 96
        %v5094 = vpop.permute.xlu0 %5093
        %5095 = vrot.lane.b32.xlu0 %v5017, 96
        %v5096 = vpop.permute.xlu0 %5095
        %5097 = vrot.lane.b32.xlu0 %v5018, 96
        %v5098 = vpop.permute.xlu0 %5097
        %5099 = vrot.lane.b32.xlu0 %v5019, 96
        %v5100 = vpop.permute.xlu0 %5099
        %5101 = vrot.lane.b32.xlu0 %v5020, 96
        %v5102 = vpop.permute.xlu0 %5101
        %5103 = vrot.lane.b32.xlu0 %v5021, 96
        %v5104 = vpop.permute.xlu0 %5103
        %5105 = vrot.lane.b32.xlu0 %v5022, 96
        %v5106 = vpop.permute.xlu0 %5105
        %5107 = vrot.lane.b32.xlu0 %v5023, 96
        %v5108 = vpop.permute.xlu0 %5107
        %5109 = vrot.lane.b32.xlu0 %v5024, 96
        %v5110 = vpop.permute.xlu0 %5109
        %5111 = vrot.lane.b32.xlu0 %v5025, 96
        %v5112 = vpop.permute.xlu0 %5111
        %5113 = vrot.lane.b32.xlu0 %v5026, 96
        %v5114 = vpop.permute.xlu0 %5113
        %5115 = vrot.lane.b32.xlu0 %v5027, 96
        %v5116 = vpop.permute.xlu0 %5115
        %5117 = vrot.lane.b32.xlu0 %v5028, 96
        %v5118 = vpop.permute.xlu0 %5117
        %5119 = vrot.lane.b32.xlu0 %v5029, 96
        %v5120 = vpop.permute.xlu0 %5119
        %5121 = vrot.lane.b32.xlu0 %v5030, 96
        %v5122 = vpop.permute.xlu0 %5121
        %5123 = vrot.lane.b32.xlu0 %v5031, 96
        %v5124 = vpop.permute.xlu0 %5123
        %5125 = vrot.lane.b32.xlu0 %v5032, 96
        %v5126 = vpop.permute.xlu0 %5125
        %5127 = vrot.lane.b32.xlu0 %v5033, 96
        %v5128 = vpop.permute.xlu0 %5127
        %5129 = vrot.lane.b32.xlu0 %v5034, 96
        %v5130 = vpop.permute.xlu0 %5129
        %v5163 = vadd.f32 %v4939, %v5068
        %v5164 = vadd.f32 %v4940, %v5070
        %v5165 = vadd.f32 %v4941, %v5072
        %v5166 = vadd.f32 %v4942, %v5074
        %v5167 = vadd.f32 %v4943, %v5076
        %v5168 = vadd.f32 %v4944, %v5078
        %v5169 = vadd.f32 %v4945, %v5080
        %v5170 = vadd.f32 %v4946, %v5082
        %v5171 = vadd.f32 %v4947, %v5084
        %v5172 = vadd.f32 %v4948, %v5086
        %v5173 = vadd.f32 %v4949, %v5088
        %v5174 = vadd.f32 %v4950, %v5090
        %v5175 = vadd.f32 %v4951, %v5092
        %v5176 = vadd.f32 %v4952, %v5094
        %v5177 = vadd.f32 %v4953, %v5096
        %v5178 = vadd.f32 %v4954, %v5098
        %v5179 = vadd.f32 %v4955, %v5100
        %v5180 = vadd.f32 %v4956, %v5102
        %v5181 = vadd.f32 %v4957, %v5104
        %v5182 = vadd.f32 %v4958, %v5106
        %v5183 = vadd.f32 %v4959, %v5108
        %v5184 = vadd.f32 %v4960, %v5110
        %v5185 = vadd.f32 %v4961, %v5112
        %v5186 = vadd.f32 %v4962, %v5114
        %v5187 = vadd.f32 %v4963, %v5116
        %v5188 = vadd.f32 %v4964, %v5118
        %v5189 = vadd.f32 %v4965, %v5120
        %v5190 = vadd.f32 %v4966, %v5122
        %v5191 = vadd.f32 %v4967, %v5124
        %v5192 = vadd.f32 %v4968, %v5126
        %v5193 = vadd.f32 %v4969, %v5128
        %v5194 = vadd.f32 %v4970, %v5130
        %v5195 = vmax.f32 %v5163, 0.0
        %v5196 = vmax.f32 %v5164, 0.0
        %v5197 = vmax.f32 %v5165, 0.0
        %v5198 = vmax.f32 %v5166, 0.0
        %v5199 = vmax.f32 %v5167, 0.0
        %v5200 = vmax.f32 %v5168, 0.0
        %v5201 = vmax.f32 %v5169, 0.0
        %v5202 = vmax.f32 %v5170, 0.0
        %v5203 = vmax.f32 %v5171, 0.0
        %v5204 = vmax.f32 %v5172, 0.0
        %v5205 = vmax.f32 %v5173, 0.0
        %v5206 = vmax.f32 %v5174, 0.0
        %v5207 = vmax.f32 %v5175, 0.0
        %v5208 = vmax.f32 %v5176, 0.0
        %v5209 = vmax.f32 %v5177, 0.0
        %v5210 = vmax.f32 %v5178, 0.0
        %v5211 = vmax.f32 %v5179, 0.0
        %v5212 = vmax.f32 %v5180, 0.0
        %v5213 = vmax.f32 %v5181, 0.0
        %v5214 = vmax.f32 %v5182, 0.0
        %v5215 = vmax.f32 %v5183, 0.0
        %v5216 = vmax.f32 %v5184, 0.0
        %v5217 = vmax.f32 %v5185, 0.0
        %v5218 = vmax.f32 %v5186, 0.0
        %v5219 = vmax.f32 %v5187, 0.0
        %v5220 = vmax.f32 %v5188, 0.0
        %v5221 = vmax.f32 %v5189, 0.0
        %v5222 = vmax.f32 %v5190, 0.0
        %v5223 = vmax.f32 %v5191, 0.0
        %v5224 = vmax.f32 %v5192, 0.0
        %v5225 = vmax.f32 %v5193, 0.0
        %v5226 = vmax.f32 %v5194, 0.0
        %v5227 = vpack.c.bf16 %v5196, %v5195
        %v5228 = vpack.c.bf16 %v5198, %v5197
        %v5229 = vpack.c.bf16 %v5200, %v5199
        %v5230 = vpack.c.bf16 %v5202, %v5201
        %v5231 = vpack.c.bf16 %v5204, %v5203
        %v5232 = vpack.c.bf16 %v5206, %v5205
        %v5233 = vpack.c.bf16 %v5208, %v5207
        %v5234 = vpack.c.bf16 %v5210, %v5209
        %v5235 = vpack.c.bf16 %v5212, %v5211
        %v5236 = vpack.c.bf16 %v5214, %v5213
        %v5237 = vpack.c.bf16 %v5216, %v5215
        %v5238 = vpack.c.bf16 %v5218, %v5217
        %v5239 = vpack.c.bf16 %v5220, %v5219
        %v5240 = vpack.c.bf16 %v5222, %v5221
        %v5241 = vpack.c.bf16 %v5224, %v5223
        %v5242 = vpack.c.bf16 %v5226, %v5225
        %v5259 = vunpack.c.l.b16 %v5227
        %v5260 = vunpack.c.h.b16 %v5227
        %v5261 = vunpack.c.l.b16 %v5228
        %v5262 = vunpack.c.h.b16 %v5228
        %v5263 = vunpack.c.l.b16 %v5229
        %v5264 = vunpack.c.h.b16 %v5229
        %v5265 = vunpack.c.l.b16 %v5230
        %v5266 = vunpack.c.h.b16 %v5230
        %v5267 = vunpack.c.l.b16 %v5231
        %v5268 = vunpack.c.h.b16 %v5231
        %v5269 = vunpack.c.l.b16 %v5232
        %v5270 = vunpack.c.h.b16 %v5232
        %v5271 = vunpack.c.l.b16 %v5233
        %v5272 = vunpack.c.h.b16 %v5233
        %v5273 = vunpack.c.l.b16 %v5234
        %v5274 = vunpack.c.h.b16 %v5234
        %v5275 = vunpack.c.l.b16 %v5235
        %v5276 = vunpack.c.h.b16 %v5235
        %v5277 = vunpack.c.l.b16 %v5236
        %v5278 = vunpack.c.h.b16 %v5236
        %v5279 = vunpack.c.l.b16 %v5237
        %v5280 = vunpack.c.h.b16 %v5237
        %v5281 = vunpack.c.l.b16 %v5238
        %v5282 = vunpack.c.h.b16 %v5238
        %v5283 = vunpack.c.l.b16 %v5239
        %v5284 = vunpack.c.h.b16 %v5239
        %v5285 = vunpack.c.l.b16 %v5240
        %v5286 = vunpack.c.h.b16 %v5240
        %v5287 = vunpack.c.l.b16 %v5241
        %v5288 = vunpack.c.h.b16 %v5241
        %v5289 = vunpack.c.l.b16 %v5242
        %v5290 = vunpack.c.h.b16 %v5242
        %v5291 = vpack.c.b16 %v5259, %v5259
        %v5292 = vpack.c.b16 %v5260, %v5260
        %v5293 = vpack.c.b16 %v5261, %v5261
        %v5294 = vpack.c.b16 %v5262, %v5262
        %v5295 = vpack.c.b16 %v5263, %v5263
        %v5296 = vpack.c.b16 %v5264, %v5264
        %v5297 = vpack.c.b16 %v5265, %v5265
        %v5298 = vpack.c.b16 %v5266, %v5266
        %v5299 = vpack.c.b16 %v5267, %v5267
        %v5300 = vpack.c.b16 %v5268, %v5268
        %v5301 = vpack.c.b16 %v5269, %v5269
        %v5302 = vpack.c.b16 %v5270, %v5270
        %v5303 = vpack.c.b16 %v5271, %v5271
        %v5304 = vpack.c.b16 %v5272, %v5272
        %v5305 = vpack.c.b16 %v5273, %v5273
        %v5306 = vpack.c.b16 %v5274, %v5274
        %v5307 = vpack.c.b16 %v5275, %v5275
        %v5308 = vpack.c.b16 %v5276, %v5276
        %v5309 = vpack.c.b16 %v5277, %v5277
        %v5310 = vpack.c.b16 %v5278, %v5278
        %v5311 = vpack.c.b16 %v5279, %v5279
        %v5312 = vpack.c.b16 %v5280, %v5280
        %v5313 = vpack.c.b16 %v5281, %v5281
        %v5314 = vpack.c.b16 %v5282, %v5282
        %v5315 = vpack.c.b16 %v5283, %v5283
        %v5316 = vpack.c.b16 %v5284, %v5284
        %v5317 = vpack.c.b16 %v5285, %v5285
        %v5318 = vpack.c.b16 %v5286, %v5286
        %v5319 = vpack.c.b16 %v5287, %v5287
        %v5320 = vpack.c.b16 %v5288, %v5288
        %v5321 = vpack.c.b16 %v5289, %v5289
        %v5322 = vpack.c.b16 %v5290, %v5290
        %5355 = vst.msk [vmem:[%s296] sm:$0xf] %vm747, %v5291
        %5356 = vst.msk [vmem:[%s296 + $0x4] sm:$0xf] %vm747, %v5292
        %5357 = vst.msk [vmem:[%s296 + $0x8] sm:$0xf] %vm747, %v5293
        %5358 = vst.msk [vmem:[%s296 + $0xc] sm:$0xf] %vm747, %v5294
        %5359 = vst.msk [vmem:[%s296 + $0x10] sm:$0xf] %vm747, %v5295
        %5360 = vst.msk [vmem:[%s296 + $0x14] sm:$0xf] %vm747, %v5296
        %5361 = vst.msk [vmem:[%s296 + $0x18] sm:$0xf] %vm747, %v5297
        %5362 = vst.msk [vmem:[%s296 + $0x1c] sm:$0xf] %vm747, %v5298
        %5363 = vst.msk [vmem:[%s296 + $0x20] sm:$0xf] %vm747, %v5299
        %5364 = vst.msk [vmem:[%s296 + $0x24] sm:$0xf] %vm747, %v5300
        %5365 = vst.msk [vmem:[%s296 + $0x28] sm:$0xf] %vm747, %v5301
        %5366 = vst.msk [vmem:[%s296 + $0x2c] sm:$0xf] %vm747, %v5302
        %5367 = vst.msk [vmem:[%s296 + $0x30] sm:$0xf] %vm747, %v5303
        %5368 = vst.msk [vmem:[%s296 + $0x34] sm:$0xf] %vm747, %v5304
        %5369 = vst.msk [vmem:[%s296 + $0x38] sm:$0xf] %vm747, %v5305
        %5370 = vst.msk [vmem:[%s296 + $0x3c] sm:$0xf] %vm747, %v5306
        %5371 = vst.msk [vmem:[%s296 + $0x40] sm:$0xf] %vm747, %v5307
        %5372 = vst.msk [vmem:[%s296 + $0x44] sm:$0xf] %vm747, %v5308
        %5373 = vst.msk [vmem:[%s296 + $0x48] sm:$0xf] %vm747, %v5309
        %5374 = vst.msk [vmem:[%s296 + $0x4c] sm:$0xf] %vm747, %v5310
        %5375 = vst.msk [vmem:[%s296 + $0x50] sm:$0xf] %vm747, %v5311
        %5376 = vst.msk [vmem:[%s296 + $0x54] sm:$0xf] %vm747, %v5312
        %5377 = vst.msk [vmem:[%s296 + $0x58] sm:$0xf] %vm747, %v5313
        %5378 = vst.msk [vmem:[%s296 + $0x5c] sm:$0xf] %vm747, %v5314
        %5379 = vst.msk [vmem:[%s296 + $0x60] sm:$0xf] %vm747, %v5315
        %5380 = vst.msk [vmem:[%s296 + $0x64] sm:$0xf] %vm747, %v5316
        %5381 = vst.msk [vmem:[%s296 + $0x68] sm:$0xf] %vm747, %v5317
        %5382 = vst.msk [vmem:[%s296 + $0x6c] sm:$0xf] %vm747, %v5318
        %5383 = vst.msk [vmem:[%s296 + $0x70] sm:$0xf] %vm747, %v5319
        %5384 = vst.msk [vmem:[%s296 + $0x74] sm:$0xf] %vm747, %v5320
        %5385 = vst.msk [vmem:[%s296 + $0x78] sm:$0xf] %vm747, %v5321
        %5386 = vst.msk [vmem:[%s296 + $0x7c] sm:$0xf] %vm747, %v5322
        %s5387 = sand.u32 %s184, 1
        %s5388 = scalar_lea.sflag [#allocation6], %s5387
        %s5389 = sand.u32 %s184, 1
        %s5390 = smul.addr %s5389, 128
        %s5391 = scalar_lea.vmem [#allocation7], %s5390
        // Predicated region
        $region53: #{tpu_custom_call.1} parent=47 // pred_check
          %p5392 = pneg %p194
        $region54: #{tpu_custom_call.1} parent=47 // pred_check_branch
          %5394 = sbr.rel (%p5392) target = $region56
        $region55: #{tpu_custom_call.1} parent=47 // pred_region
          %s5396 = ssub.s32 2048, 2048
          %5397 = vsyncadd %s5388, %s5396
          %s5398 = smul.addr %s24, 32
          %s5399 = smul.addr %s5398, 64
          %s5400 = scalar_lea.hbm %s7, %s5399
          %s5401 = sshll.u32 %s5391, 4
          %s5402 = int_to_ptr.vmem [resolvable:$true] %s5401
          %5407 = dma.vmem_to_hbm [thread:$0]  %s5402, 2048, %s5400, %s5388, 64, 64, 4
        $region56: #{tpu_custom_call.1} parent=47 // pred_fallthru
          _
      $region48: #{tpu_custom_call.1} parent=5 // pred_fallthru
        _
      %p5408 = scmp.le.s32.totalorder 2, %s19
      // Predicated region
      $region57: #{tpu_custom_call.1} parent=5 // pred_check
        %p5409 = pneg %p5408
      $region58: #{tpu_custom_call.1} parent=5 // pred_check_branch
        %5411 = sbr.rel (%p5409) target = $region60
      $region59: #{tpu_custom_call.1} parent=5 // pred_region
        %s5412 = ssub.s32 %s19, 2
        // Predicated region
        $region61: #{tpu_custom_call.1} parent=59 // pred_check
          %p5413 = pneg %p200
        $region62: #{tpu_custom_call.1} parent=59 // pred_check_branch
          %5415 = sbr.rel (%p5413) target = $region64
        $region63: #{tpu_custom_call.1} parent=59 // pred_region
          %s5416 = sand.u32 %s185, 1
          %s5417 = scalar_lea.sflag [#allocation6], %s5416
          %s5418 = sand.u32 %s185, 1
          %s5419 = smul.addr %s5418, 128
          %s5420 = scalar_lea.vmem [#allocation7], %s5419
          %5421 = dma.done %s5417, 2048
        $region64: #{tpu_custom_call.1} parent=59 // pred_fallthru
          _
      $region60: #{tpu_custom_call.1} parent=5 // pred_fallthru
        _
    $region6: #{tpu_custom_call.1} parent=1 // loop_footer
      %s23 = sadd.s32 1, %s19
    $region7: #{tpu_custom_call.1} parent=1 // loop_footer_branch
      %18 = sbr.rel target = $region3
    $region8: #{tpu_custom_call.1} parent=1 // loop_exit
      _
    %5422 = vsyncpa [#allocation5], 1
    %s5423 = scalar_lea.sflag [#allocation5], 1
    %5424 = vsyncpa %s5423, 1
    %5425 = vsyncpa [#allocation6], 1
    %s5426 = scalar_lea.sflag [#allocation6], 1
    %5427 = vsyncpa %s5426, 1

// kernel: tpu_custom_call.1
$region0: #{tpu_custom_call.1}
  #allocation0 [shape = 'u32[]', space=smem, size = 0x4, offset = 0x4, fixed_abs, tag = 'smem constant byte address 0x4 - core index']
  #allocation1 [shape = 'u32[144,128]{1,0:T(1,128)}', space=vmem, size = 0x12000, scoped, tag = 'internal scratch']
  #allocation2 [shape = 'bf16[18,16,96]{2,1,0:T(8,128)(2,1)}', space=vmem, size = 0x12000, scoped, tag = 'scratch operand']
  #allocation3 [shape = 'bf16[18,16,96]{2,1,0:T(8,128)(2,1)}', space=vmem, size = 0x12000, scoped, tag = 'scratch operand']
  %s0 = inlined_call_operand.hbm [shape: bf16[4,16,16,32], index: 0, kind: input, shape index: {}]
  %s1 = inlined_call_operand.vmem [shape: bf16[3,96,32], index: 1, kind: input, shape index: {}]
  %s2 = inlined_call_operand.vmem [shape: f32[1,32], index: 2, kind: input, shape index: {}]
  %s3 = inlined_call_operand.vmem [shape: f32[1,32], index: 3, kind: input, shape index: {}]
  %s4 = inlined_call_operand.vmem [shape: bf16[3,96,32], index: 4, kind: input, shape index: {}]
  %s5 = inlined_call_operand.vmem [shape: f32[1,32], index: 5, kind: input, shape index: {}]
  %s6 = inlined_call_operand.vmem [shape: f32[1,32], index: 6, kind: input, shape index: {}]
  %s7 = inlined_call_operand.hbm [shape: bf16[4,16,16,32], index: 7, kind: output, shape index: {}]
  %s8 = sld [smem:[#allocation0]]
  $region65: #{tpu_custom_call.1} parent=0
    _
  %s10 = ssub.s32 1, %s8
  %s11 = scalar_select 0, %s10, %s8
  $region1: #{tpu_custom_call.1} parent=0
    #allocation4 [shape = 'u8[131072]{0}', space=vmem, size = 0x20000, scoped, tag = 'input window, operand 0']
    #allocation5 [shape = 's32[2]{0}', space=sflag, size = 0x8, scoped, tag = 'scoped memory for tpu_custom_call.1']
    #allocation6 [shape = 's32[2]{0}', space=sflag, size = 0x8, scoped, tag = 'scoped memory for tpu_custom_call.1']
    #allocation7 [shape = 'u8[131072]{0}', space=vmem, size = 0x20000, scoped, tag = 'output window, operand 0']
    %12 = vsyncpa [#allocation5], 0
    %s13 = scalar_lea.sflag [#allocation5], 1
    %14 = vsyncpa %s13, 0
    %15 = vsyncpa [#allocation6], 0
    %s16 = scalar_lea.sflag [#allocation6], 1
    %17 = vsyncpa %s16, 0
    loop: start=0, step=1, limit=6
    $region2: #{tpu_custom_call.1} parent=1 // loop_pre_header
      _
    $region3: #{tpu_custom_call.1} parent=1 // loop_header
      %s19 = sphi 0, %s23
      %p20 = scmp.ge.s32.totalorder %s19, 6
      %s29 = sphi 0, %s31
      %s32 = sphi 0, %s29
      %s33 = sphi 0, %s32
      %s49 = sphi 0, %s33
      %s53 = sphi 0, %s53
      %s55 = sphi 0, %s53
      %s56 = sphi 0, %s55
      %s70 = sphi 0, %s56
      %s74 = sphi 0, %s74
      %s76 = sphi 0, %s74
      %s77 = sphi 0, %s76
      %s91 = sphi 0, %s77
      %s95 = sphi 0, %s95
      %s97 = sphi 0, %s95
      %s98 = sphi 0, %s97
      %s112 = sphi 0, %s98
      %s116 = sphi 0, %s116
      %s118 = sphi 0, %s116
      %s119 = sphi 0, %s118
      %s133 = sphi 0, %s119
      %s137 = sphi 0, %s137
      %s139 = sphi 0, %s137
      %s140 = sphi 0, %s139
      %s154 = sphi 0, %s140
      %s158 = sphi 0, %s158
      %s160 = sphi 0, %s158
      %s161 = sphi 0, %s160
      %s175 = sphi 0, %s161
      %s181 = sphi 0, %s183
      %s184 = sphi 0, %s181
      %s185 = sphi 0, %s184
      %s201 = sphi 0, %s185
    $region4: #{tpu_custom_call.1} parent=1 // loop_header_branch
      %22 = sbr.rel (%p20) target = $region8
    $region5: #{tpu_custom_call.1} parent=1 // loop_body
      %s24 = ssub.s32 %s19, 1
      %s25 = ssub.s32 %s19, 2
      %s26 = sadd.s32 %s19, 1
      %s27 = ssub.s32 %s19, %s26
      %p28 = scmp.eq.s32.totalorder %s27, 0
      %s30 = sadd.s32 %s29, 1
      %s31 = scalar_select %p28, %s29, %s30
      %p34 = pneg %p28
      %p35 = scmp.eq.s32.totalorder %s19, 3
      %p36 = por %p34, %p35
      %p37 = scmp.ne.s32.totalorder %s29, %s32
      %p38 = scmp.eq.s32.totalorder %s19, 0
      %p39 = por %p37, %p38
      %p40 = scmp.ne.s32.totalorder %s29, %s32
      %p41 = scmp.eq.s32.totalorder %s24, 3
      %p42 = por %p40, %p41
      %p43 = scmp.ne.s32.totalorder %s32, %s33
      %p44 = scmp.eq.s32.totalorder %s24, 0
      %p45 = por %p43, %p44
      %p46 = scmp.ne.s32.totalorder %s32, %s33
      %p47 = scmp.eq.s32.totalorder %s25, 3
      %p48 = por %p46, %p47
      %p50 = scmp.ne.s32.totalorder %s33, %s49
      %p51 = scmp.eq.s32.totalorder %s25, 0
      %p52 = por %p50, %p51
      %s54 = sadd.s32 %s53, 1
      %p57 = scmp.eq.s32.totalorder %s19, 3
      %p58 = scmp.ne.s32.totalorder %s53, %s55
      %p59 = scmp.eq.s32.totalorder %s19, 0
      %p60 = por %p58, %p59
      %p61 = scmp.ne.s32.totalorder %s53, %s55
      %p62 = scmp.eq.s32.totalorder %s24, 3
      %p63 = por %p61, %p62
      %p64 = scmp.ne.s32.totalorder %s55, %s56
      %p65 = scmp.eq.s32.totalorder %s24, 0
      %p66 = por %p64, %p65
      %p67 = scmp.ne.s32.totalorder %s55, %s56
      %p68 = scmp.eq.s32.totalorder %s25, 3
      %p69 = por %p67, %p68
      %p71 = scmp.ne.s32.totalorder %s56, %s70
      %p72 = scmp.eq.s32.totalorder %s25, 0
      %p73 = por %p71, %p72
      %s75 = sadd.s32 %s74, 1
      %p78 = scmp.eq.s32.totalorder %s19, 3
      %p79 = scmp.ne.s32.totalorder %s74, %s76
      %p80 = scmp.eq.s32.totalorder %s19, 0
      %p81 = por %p79, %p80
      %p82 = scmp.ne.s32.totalorder %s74, %s76
      %p83 = scmp.eq.s32.totalorder %s24, 3
      %p84 = por %p82, %p83
      %p85 = scmp.ne.s32.totalorder %s76, %s77
      %p86 = scmp.eq.s32.totalorder %s24, 0
      %p87 = por %p85, %p86
      %p88 = scmp.ne.s32.totalorder %s76, %s77
      %p89 = scmp.eq.s32.totalorder %s25, 3
      %p90 = por %p88, %p89
      %p92 = scmp.ne.s32.totalorder %s77, %s91
      %p93 = scmp.eq.s32.totalorder %s25, 0
      %p94 = por %p92, %p93
      %s96 = sadd.s32 %s95, 1
      %p99 = scmp.eq.s32.totalorder %s19, 3
      %p100 = scmp.ne.s32.totalorder %s95, %s97
      %p101 = scmp.eq.s32.totalorder %s19, 0
      %p102 = por %p100, %p101
      %p103 = scmp.ne.s32.totalorder %s95, %s97
      %p104 = scmp.eq.s32.totalorder %s24, 3
      %p105 = por %p103, %p104
      %p106 = scmp.ne.s32.totalorder %s97, %s98
      %p107 = scmp.eq.s32.totalorder %s24, 0
      %p108 = por %p106, %p107
      %p109 = scmp.ne.s32.totalorder %s97, %s98
      %p110 = scmp.eq.s32.totalorder %s25, 3
      %p111 = por %p109, %p110
      %p113 = scmp.ne.s32.totalorder %s98, %s112
      %p114 = scmp.eq.s32.totalorder %s25, 0
      %p115 = por %p113, %p114
      %s117 = sadd.s32 %s116, 1
      %p120 = scmp.eq.s32.totalorder %s19, 3
      %p121 = scmp.ne.s32.totalorder %s116, %s118
      %p122 = scmp.eq.s32.totalorder %s19, 0
      %p123 = por %p121, %p122
      %p124 = scmp.ne.s32.totalorder %s116, %s118
      %p125 = scmp.eq.s32.totalorder %s24, 3
      %p126 = por %p124, %p125
      %p127 = scmp.ne.s32.totalorder %s118, %s119
      %p128 = scmp.eq.s32.totalorder %s24, 0
      %p129 = por %p127, %p128
      %p130 = scmp.ne.s32.totalorder %s118, %s119
      %p131 = scmp.eq.s32.totalorder %s25, 3
      %p132 = por %p130, %p131
      %p134 = scmp.ne.s32.totalorder %s119, %s133
      %p135 = scmp.eq.s32.totalorder %s25, 0
      %p136 = por %p134, %p135
      %s138 = sadd.s32 %s137, 1
      %p141 = scmp.eq.s32.totalorder %s19, 3
      %p142 = scmp.ne.s32.totalorder %s137, %s139
      %p143 = scmp.eq.s32.totalorder %s19, 0
      %p144 = por %p142, %p143
      %p145 = scmp.ne.s32.totalorder %s137, %s139
      %p146 = scmp.eq.s32.totalorder %s24, 3
      %p147 = por %p145, %p146
      %p148 = scmp.ne.s32.totalorder %s139, %s140
      %p149 = scmp.eq.s32.totalorder %s24, 0
      %p150 = por %p148, %p149
      %p151 = scmp.ne.s32.totalorder %s139, %s140
      %p152 = scmp.eq.s32.totalorder %s25, 3
      %p153 = por %p151, %p152
      %p155 = scmp.ne.s32.totalorder %s140, %s154
      %p156 = scmp.eq.s32.totalorder %s25, 0
      %p157 = por %p155, %p156
      %s159 = sadd.s32 %s158, 1
      %p162 = scmp.eq.s32.totalorder %s19, 3
      %p163 = scmp.ne.s32.totalorder %s158, %s160
      %p164 = scmp.eq.s32.totalorder %s19, 0
      %p165 = por %p163, %p164
      %p166 = scmp.ne.s32.totalorder %s158, %s160
      %p167 = scmp.eq.s32.totalorder %s24, 3
      %p168 = por %p166, %p167
      %p169 = scmp.ne.s32.totalorder %s160, %s161
      %p170 = scmp.eq.s32.totalorder %s24, 0
      %p171 = por %p169, %p170
      %p172 = scmp.ne.s32.totalorder %s160, %s161
      %p173 = scmp.eq.s32.totalorder %s25, 3
      %p174 = por %p172, %p173
      %p176 = scmp.ne.s32.totalorder %s161, %s175
      %p177 = scmp.eq.s32.totalorder %s25, 0
      %p178 = por %p176, %p177
      %s179 = ssub.s32 %s19, %s26
      %p180 = scmp.eq.s32.totalorder %s179, 0
      %s182 = sadd.s32 %s181, 1
      %s183 = scalar_select %p180, %s181, %s182
      %p186 = pneg %p180
      %p187 = scmp.eq.s32.totalorder %s19, 3
      %p188 = por %p186, %p187
      %p189 = scmp.ne.s32.totalorder %s181, %s184
      %p190 = scmp.eq.s32.totalorder %s19, 0
      %p191 = por %p189, %p190
      %p192 = scmp.ne.s32.totalorder %s181, %s184
      %p193 = scmp.eq.s32.totalorder %s24, 3
      %p194 = por %p192, %p193
      %p195 = scmp.ne.s32.totalorder %s184, %s185
      %p196 = scmp.eq.s32.totalorder %s24, 0
      %p197 = por %p195, %p196
      %p198 = scmp.ne.s32.totalorder %s184, %s185
      %p199 = scmp.eq.s32.totalorder %s25, 3
      %p200 = por %p198, %p199
      %p202 = scmp.ne.s32.totalorder %s185, %s201
      %p203 = scmp.eq.s32.totalorder %s25, 0
      %p204 = por %p202, %p203
      %p205 = scmp.le.s32.totalorder 1, %s19
      %p206 = scmp.lt.s32.totalorder %s19, 5
      %p207 = pnand %p205, %p206
      %p208 = pneg %p207
      // Predicated region
      $region9: #{tpu_custom_call.1} parent=5 // pred_check
        _
      $region10: #{tpu_custom_call.1} parent=5 // pred_check_branch
        %210 = sbr.rel (%p207) target = $region12
      $region11: #{tpu_custom_call.1} parent=5 // pred_region
        %s211 = ssub.s32 %s19, 1
        // Predicated region
        $region13: #{tpu_custom_call.1} parent=11 // pred_check
          %p212 = pneg %p66
        $region14: #{tpu_custom_call.1} parent=11 // pred_check_branch
          %214 = sbr.rel (%p212) target = $region16
        $region15: #{tpu_custom_call.1} parent=11 // pred_region
          _
        $region16: #{tpu_custom_call.1} parent=11 // pred_fallthru
          _
        // Predicated region
        $region17: #{tpu_custom_call.1} parent=11 // pred_check
          %p215 = pneg %p87
        $region18: #{tpu_custom_call.1} parent=11 // pred_check_branch
          %217 = sbr.rel (%p215) target = $region20
        $region19: #{tpu_custom_call.1} parent=11 // pred_region
          _
        $region20: #{tpu_custom_call.1} parent=11 // pred_fallthru
          _
        // Predicated region
        $region21: #{tpu_custom_call.1} parent=11 // pred_check
          %p218 = pneg %p108
        $region22: #{tpu_custom_call.1} parent=11 // pred_check_branch
          %220 = sbr.rel (%p218) target = $region24
        $region23: #{tpu_custom_call.1} parent=11 // pred_region
          _
        $region24: #{tpu_custom_call.1} parent=11 // pred_fallthru
          _
        // Predicated region
        $region25: #{tpu_custom_call.1} parent=11 // pred_check
          %p221 = pneg %p129
        $region26: #{tpu_custom_call.1} parent=11 // pred_check_branch
          %223 = sbr.rel (%p221) target = $region28
        $region27: #{tpu_custom_call.1} parent=11 // pred_region
          _
        $region28: #{tpu_custom_call.1} parent=11 // pred_fallthru
          _
        // Predicated region
        $region29: #{tpu_custom_call.1} parent=11 // pred_check
          %p224 = pneg %p150
        $region30: #{tpu_custom_call.1} parent=11 // pred_check_branch
          %226 = sbr.rel (%p224) target = $region32
        $region31: #{tpu_custom_call.1} parent=11 // pred_region
          _
        $region32: #{tpu_custom_call.1} parent=11 // pred_fallthru
          _
        // Predicated region
        $region33: #{tpu_custom_call.1} parent=11 // pred_check
          %p227 = pneg %p171
        $region34: #{tpu_custom_call.1} parent=11 // pred_check_branch
          %229 = sbr.rel (%p227) target = $region36
        $region35: #{tpu_custom_call.1} parent=11 // pred_region
          _
        $region36: #{tpu_custom_call.1} parent=11 // pred_fallthru
          _
      $region12: #{tpu_custom_call.1} parent=5 // pred_fallthru
        _
      %p230 = scmp.lt.s32.totalorder %s19, 4
      // Predicated region
      $region37: #{tpu_custom_call.1} parent=5 // pred_check
        %p231 = pneg %p230
      $region38: #{tpu_custom_call.1} parent=5 // pred_check_branch
        %233 = sbr.rel (%p231) target = $region40
      $region39: #{tpu_custom_call.1} parent=5 // pred_region
        // Predicated region
        $region41: #{tpu_custom_call.1} parent=39 // pred_check
          %p234 = pneg %p39
        $region42: #{tpu_custom_call.1} parent=39 // pred_check_branch
          %236 = sbr.rel (%p234) target = $region44
        $region43: #{tpu_custom_call.1} parent=39 // pred_region
          %s237 = sand.u32 %s29, 1
          %s238 = scalar_lea.sflag [#allocation5], %s237
          %s239 = sand.u32 %s29, 1
          %s240 = smul.addr %s239, 128
          %s241 = scalar_lea.vmem [#allocation4], %s240
          %s243 = ssub.s32 2048, 2048
          %244 = vsyncadd %s238, %s243
          %s245 = smul.addr %s19, 32
          %s246 = smul.addr %s245, 64
          %s247 = scalar_lea.hbm %s0, %s246
          %s248 = sshll.u32 %s241, 4
          %s249 = int_to_ptr.vmem [resolvable:$true] %s248
          %254 = dma.hbm_to_vmem [thread:$0]  %s247, 2048, %s249, %s238, 64, 64, 4
        $region44: #{tpu_custom_call.1} parent=39 // pred_fallthru
          _
      $region40: #{tpu_custom_call.1} parent=5 // pred_fallthru
        _
      %p255 = scmp.le.s32.totalorder 1, %s19
      %p256 = scmp.lt.s32.totalorder %s19, 5
      %p257 = pnand %p255, %p256
      %p258 = pneg %p257
      // Predicated region
      $region45: #{tpu_custom_call.1} parent=5 // pred_check
        _
      $region46: #{tpu_custom_call.1} parent=5 // pred_check_branch
        %260 = sbr.rel (%p257) target = $region48
      $region47: #{tpu_custom_call.1} parent=5 // pred_region
        %s261 = ssub.s32 %s19, 1
        %s262 = sand.u32 %s32, 1
        %s263 = scalar_lea.sflag [#allocation5], %s262
        %s264 = sand.u32 %s32, 1
        %s265 = smul.addr %s264, 128
        %s266 = scalar_lea.vmem [#allocation4], %s265
        // Predicated region
        $region49: #{tpu_custom_call.1} parent=47 // pred_check
          %p267 = pneg %p45
        $region50: #{tpu_custom_call.1} parent=47 // pred_check_branch
          %269 = sbr.rel (%p267) target = $region52
        $region51: #{tpu_custom_call.1} parent=47 // pred_region
          %270 = dma.done %s263, 2048
        $region52: #{tpu_custom_call.1} parent=47 // pred_fallthru
          _
        %s271 = sand.u32 %s32, 1
        %s272 = scalar_lea.sflag [#allocation5], %s271
        %s273 = sand.u32 %s32, 1
        %s274 = smul.addr %s273, 128
        %s275 = scalar_lea.vmem [#allocation4], %s274
        %p276 = pneg %p45
        %p277 = pneg %p42
        %p278 = pneg %p66
        %p279 = pneg %p63
        %p280 = pneg %p87
        %p281 = pneg %p84
        %p282 = pneg %p108
        %p283 = pneg %p105
        %p284 = pneg %p129
        %p285 = pneg %p126
        %p286 = pneg %p150
        %p287 = pneg %p147
        %p288 = pneg %p171
        %p289 = pneg %p168
        %p290 = pneg %p197
        %p291 = pneg %p194
        %s292 = sand.u32 %s184, 1
        %s293 = scalar_lea.sflag [#allocation6], %s292
        %s294 = sand.u32 %s184, 1
        %s295 = smul.addr %s294, 128
        %s296 = scalar_lea.vmem [#allocation7], %s295
        %vm298 = vcmask 781312
        %299 = vst.msk [vmem:[#allocation2] sm:$0xf] %vm298, 0
        %300 = vst.msk [vmem:[#allocation2 + $0x4] sm:$0xf] %vm298, 0
        %s301 = scalar_lea.vmem [#allocation2], 136
        %302 = vst.msk [vmem:[%s301] sm:$0xf] %vm298, 0
        %303 = vst.msk [vmem:[%s301 + $0x4] sm:$0xf] %vm298, 0
        %vm304 = vcmask 778240
        %vm305 = vsmask.f32 256
        %vm306 = vmand %vm304, %vm305
        %v307 = vld [vmem:[#allocation2] sm:$0x1]
        %v308 = vsel %vm306, 0, %v307
        %309 = vst [vmem:[#allocation2] sm:$0x1] %v308
        %v310 = vld [vmem:[#allocation2 + $0x8] sm:$0x1]
        %v311 = vsel %vm306, 0, %v310
        %312 = vst [vmem:[#allocation2 + $0x8] sm:$0x1] %v311
        %v313 = vld [vmem:[#allocation2 + $0x10] sm:$0x1]
        %v314 = vsel %vm306, 0, %v313
        %315 = vst [vmem:[#allocation2 + $0x10] sm:$0x1] %v314
        %v316 = vld [vmem:[#allocation2 + $0x18] sm:$0x1]
        %v317 = vsel %vm306, 0, %v316
        %318 = vst [vmem:[#allocation2 + $0x18] sm:$0x1] %v317
        %v319 = vld [vmem:[#allocation2 + $0x20] sm:$0x1]
        %v320 = vsel %vm306, 0, %v319
        %321 = vst [vmem:[#allocation2 + $0x20] sm:$0x1] %v320
        %v322 = vld [vmem:[#allocation2 + $0x28] sm:$0x1]
        %v323 = vsel %vm306, 0, %v322
        %324 = vst [vmem:[#allocation2 + $0x28] sm:$0x1] %v323
        %v325 = vld [vmem:[#allocation2 + $0x30] sm:$0x1]
        %v326 = vsel %vm306, 0, %v325
        %327 = vst [vmem:[#allocation2 + $0x30] sm:$0x1] %v326
        %v328 = vld [vmem:[#allocation2 + $0x38] sm:$0x1]
        %v329 = vsel %vm306, 0, %v328
        %330 = vst [vmem:[#allocation2 + $0x38] sm:$0x1] %v329
        %v331 = vld [vmem:[#allocation2 + $0x40] sm:$0x1]
        %v332 = vsel %vm306, 0, %v331
        %333 = vst [vmem:[#allocation2 + $0x40] sm:$0x1] %v332
        %v334 = vld [vmem:[#allocation2 + $0x48] sm:$0x1]
        %v335 = vsel %vm306, 0, %v334
        %336 = vst [vmem:[#allocation2 + $0x48] sm:$0x1] %v335
        %v337 = vld [vmem:[#allocation2 + $0x50] sm:$0x1]
        %v338 = vsel %vm306, 0, %v337
        %339 = vst [vmem:[#allocation2 + $0x50] sm:$0x1] %v338
        %v340 = vld [vmem:[#allocation2 + $0x58] sm:$0x1]
        %v341 = vsel %vm306, 0, %v340
        %342 = vst [vmem:[#allocation2 + $0x58] sm:$0x1] %v341
        %v343 = vld [vmem:[#allocation2 + $0x60] sm:$0x1]
        %v344 = vsel %vm306, 0, %v343
        %345 = vst [vmem:[#allocation2 + $0x60] sm:$0x1] %v344
        %v346 = vld [vmem:[#allocation2 + $0x68] sm:$0x1]
        %v347 = vsel %vm306, 0, %v346
        %348 = vst [vmem:[#allocation2 + $0x68] sm:$0x1] %v347
        %v349 = vld [vmem:[#allocation2 + $0x70] sm:$0x1]
        %v350 = vsel %vm306, 0, %v349
        %351 = vst [vmem:[#allocation2 + $0x70] sm:$0x1] %v350
        %v352 = vld [vmem:[#allocation2 + $0x78] sm:$0x1]
        %v353 = vsel %vm306, 0, %v352
        %354 = vst [vmem:[#allocation2 + $0x78] sm:$0x1] %v353
        %v355 = vld [vmem:[#allocation2 + $0x80] sm:$0x1]
        %v356 = vsel %vm306, 0, %v355
        %357 = vst [vmem:[#allocation2 + $0x80] sm:$0x1] %v356
        %v358 = vld [vmem:[#allocation2 + $0x88] sm:$0x1]
        %v359 = vsel %vm306, 0, %v358
        %360 = vst [vmem:[#allocation2 + $0x88] sm:$0x1] %v359
        %vm361 = vcmask 781315
        %vm362 = vsmask.f32 7950
        %vm363 = vmand %vm361, %vm362
        %v364 = vld [vmem:[#allocation2 + $0x4] sm:$0x8]
        %v365 = vsel %vm363, 0, %v364
        %366 = vst [vmem:[#allocation2 + $0x4] sm:$0x8] %v365
        %v367 = vld [vmem:[#allocation2 + $0xc] sm:$0x8]
        %v368 = vsel %vm363, 0, %v367
        %369 = vst [vmem:[#allocation2 + $0xc] sm:$0x8] %v368
        %v370 = vld [vmem:[#allocation2 + $0x14] sm:$0x8]
        %v371 = vsel %vm363, 0, %v370
        %372 = vst [vmem:[#allocation2 + $0x14] sm:$0x8] %v371
        %v373 = vld [vmem:[#allocation2 + $0x1c] sm:$0x8]
        %v374 = vsel %vm363, 0, %v373
        %375 = vst [vmem:[#allocation2 + $0x1c] sm:$0x8] %v374
        %v376 = vld [vmem:[#allocation2 + $0x24] sm:$0x8]
        %v377 = vsel %vm363, 0, %v376
        %378 = vst [vmem:[#allocation2 + $0x24] sm:$0x8] %v377
        %v379 = vld [vmem:[#allocation2 + $0x2c] sm:$0x8]
        %v380 = vsel %vm363, 0, %v379
        %381 = vst [vmem:[#allocation2 + $0x2c] sm:$0x8] %v380
        %v382 = vld [vmem:[#allocation2 + $0x34] sm:$0x8]
        %v383 = vsel %vm363, 0, %v382
        %384 = vst [vmem:[#allocation2 + $0x34] sm:$0x8] %v383
        %v385 = vld [vmem:[#allocation2 + $0x3c] sm:$0x8]
        %v386 = vsel %vm363, 0, %v385
        %387 = vst [vmem:[#allocation2 + $0x3c] sm:$0x8] %v386
        %v388 = vld [vmem:[#allocation2 + $0x44] sm:$0x8]
        %v389 = vsel %vm363, 0, %v388
        %390 = vst [vmem:[#allocation2 + $0x44] sm:$0x8] %v389
        %v391 = vld [vmem:[#allocation2 + $0x4c] sm:$0x8]
        %v392 = vsel %vm363, 0, %v391
        %393 = vst [vmem:[#allocation2 + $0x4c] sm:$0x8] %v392
        %v394 = vld [vmem:[#allocation2 + $0x54] sm:$0x8]
        %v395 = vsel %vm363, 0, %v394
        %396 = vst [vmem:[#allocation2 + $0x54] sm:$0x8] %v395
        %v397 = vld [vmem:[#allocation2 + $0x5c] sm:$0x8]
        %v398 = vsel %vm363, 0, %v397
        %399 = vst [vmem:[#allocation2 + $0x5c] sm:$0x8] %v398
        %v400 = vld [vmem:[#allocation2 + $0x64] sm:$0x8]
        %v401 = vsel %vm363, 0, %v400
        %402 = vst [vmem:[#allocation2 + $0x64] sm:$0x8] %v401
        %v403 = vld [vmem:[#allocation2 + $0x6c] sm:$0x8]
        %v404 = vsel %vm363, 0, %v403
        %405 = vst [vmem:[#allocation2 + $0x6c] sm:$0x8] %v404
        %v406 = vld [vmem:[#allocation2 + $0x74] sm:$0x8]
        %v407 = vsel %vm363, 0, %v406
        %408 = vst [vmem:[#allocation2 + $0x74] sm:$0x8] %v407
        %v409 = vld [vmem:[#allocation2 + $0x7c] sm:$0x8]
        %v410 = vsel %vm363, 0, %v409
        %411 = vst [vmem:[#allocation2 + $0x7c] sm:$0x8] %v410
        %v412 = vld [vmem:[#allocation2 + $0x84] sm:$0x8]
        %v413 = vsel %vm363, 0, %v412
        %414 = vst [vmem:[#allocation2 + $0x84] sm:$0x8] %v413
        %v415 = vld [vmem:[#allocation2 + $0x8c] sm:$0x8]
        %v416 = vsel %vm363, 0, %v415
        %417 = vst [vmem:[#allocation2 + $0x8c] sm:$0x8] %v416
        %v418 = vld [vmem:[%s266] sm:$0xf]
        %v419 = vld [vmem:[%s266 + $0x4] sm:$0xf]
        %v420 = vld [vmem:[%s266 + $0x8] sm:$0xf]
        %v421 = vld [vmem:[%s266 + $0xc] sm:$0xf]
        %v422 = vld [vmem:[%s266 + $0x10] sm:$0xf]
        %v423 = vld [vmem:[%s266 + $0x14] sm:$0xf]
        %v424 = vld [vmem:[%s266 + $0x18] sm:$0xf]
        %v425 = vld [vmem:[%s266 + $0x1c] sm:$0xf]
        %v426 = vld [vmem:[%s266 + $0x20] sm:$0xf]
        %v427 = vld [vmem:[%s266 + $0x24] sm:$0xf]
        %v428 = vld [vmem:[%s266 + $0x28] sm:$0xf]
        %v429 = vld [vmem:[%s266 + $0x2c] sm:$0xf]
        %v430 = vld [vmem:[%s266 + $0x30] sm:$0xf]
        %v431 = vld [vmem:[%s266 + $0x34] sm:$0xf]
        %v432 = vld [vmem:[%s266 + $0x38] sm:$0xf]
        %v433 = vld [vmem:[%s266 + $0x3c] sm:$0xf]
        %v434 = vld [vmem:[%s266 + $0x40] sm:$0xf]
        %v435 = vld [vmem:[%s266 + $0x44] sm:$0xf]
        %v436 = vld [vmem:[%s266 + $0x48] sm:$0xf]
        %v437 = vld [vmem:[%s266 + $0x4c] sm:$0xf]
        %v438 = vld [vmem:[%s266 + $0x50] sm:$0xf]
        %v439 = vld [vmem:[%s266 + $0x54] sm:$0xf]
        %v440 = vld [vmem:[%s266 + $0x58] sm:$0xf]
        %v441 = vld [vmem:[%s266 + $0x5c] sm:$0xf]
        %v442 = vld [vmem:[%s266 + $0x60] sm:$0xf]
        %v443 = vld [vmem:[%s266 + $0x64] sm:$0xf]
        %v444 = vld [vmem:[%s266 + $0x68] sm:$0xf]
        %v445 = vld [vmem:[%s266 + $0x6c] sm:$0xf]
        %v446 = vld [vmem:[%s266 + $0x70] sm:$0xf]
        %v447 = vld [vmem:[%s266 + $0x74] sm:$0xf]
        %v448 = vld [vmem:[%s266 + $0x78] sm:$0xf]
        %v449 = vld [vmem:[%s266 + $0x7c] sm:$0xf]
        %vm450 = vsmask.f32 4368
        %vm451 = vmor %vm305, %vm450
        %v453 = vshrl.u32 %v418, 16
        %v455 = vrot.slane %v453, 7
        %v456 = vshll.u32 %v418, 16
        %v458 = vor.u32 %v455, %v456
        %v459 = vrot.slane %v455, 4
        %v461 = vshrl.u32 %v419, 16
        %v463 = vrot.slane %v461, 7
        %v464 = vshll.u32 %v419, 16
        %v466 = vor.u32 %v463, %v464
        %v467 = vsel %vm451, %v459, %v466
        %v469 = vshrl.u32 %v420, 16
        %v471 = vrot.slane %v469, 7
        %v472 = vshll.u32 %v420, 16
        %v474 = vor.u32 %v471, %v472
        %v475 = vrot.slane %v471, 4
        %v477 = vshrl.u32 %v421, 16
        %v479 = vrot.slane %v477, 7
        %v480 = vshll.u32 %v421, 16
        %v482 = vor.u32 %v479, %v480
        %v483 = vsel %vm451, %v475, %v482
        %v485 = vshrl.u32 %v422, 16
        %v487 = vrot.slane %v485, 7
        %v488 = vshll.u32 %v422, 16
        %v490 = vor.u32 %v487, %v488
        %v491 = vrot.slane %v487, 4
        %v493 = vshrl.u32 %v423, 16
        %v495 = vrot.slane %v493, 7
        %v496 = vshll.u32 %v423, 16
        %v498 = vor.u32 %v495, %v496
        %v499 = vsel %vm451, %v491, %v498
        %v501 = vshrl.u32 %v424, 16
        %v503 = vrot.slane %v501, 7
        %v504 = vshll.u32 %v424, 16
        %v506 = vor.u32 %v503, %v504
        %v507 = vrot.slane %v503, 4
        %v509 = vshrl.u32 %v425, 16
        %v511 = vrot.slane %v509, 7
        %v512 = vshll.u32 %v425, 16
        %v514 = vor.u32 %v511, %v512
        %v515 = vsel %vm451, %v507, %v514
        %v517 = vshrl.u32 %v426, 16
        %v519 = vrot.slane %v517, 7
        %v520 = vshll.u32 %v426, 16
        %v522 = vor.u32 %v519, %v520
        %v523 = vrot.slane %v519, 4
        %v525 = vshrl.u32 %v427, 16
        %v527 = vrot.slane %v525, 7
        %v528 = vshll.u32 %v427, 16
        %v530 = vor.u32 %v527, %v528
        %v531 = vsel %vm451, %v523, %v530
        %v533 = vshrl.u32 %v428, 16
        %v535 = vrot.slane %v533, 7
        %v536 = vshll.u32 %v428, 16
        %v538 = vor.u32 %v535, %v536
        %v539 = vrot.slane %v535, 4
        %v541 = vshrl.u32 %v429, 16
        %v543 = vrot.slane %v541, 7
        %v544 = vshll.u32 %v429, 16
        %v546 = vor.u32 %v543, %v544
        %v547 = vsel %vm451, %v539, %v546
        %v549 = vshrl.u32 %v430, 16
        %v551 = vrot.slane %v549, 7
        %v552 = vshll.u32 %v430, 16
        %v554 = vor.u32 %v551, %v552
        %v555 = vrot.slane %v551, 4
        %v557 = vshrl.u32 %v431, 16
        %v559 = vrot.slane %v557, 7
        %v560 = vshll.u32 %v431, 16
        %v562 = vor.u32 %v559, %v560
        %v563 = vsel %vm451, %v555, %v562
        %v565 = vshrl.u32 %v432, 16
        %v567 = vrot.slane %v565, 7
        %v568 = vshll.u32 %v432, 16
        %v570 = vor.u32 %v567, %v568
        %v571 = vrot.slane %v567, 4
        %v573 = vshrl.u32 %v433, 16
        %v575 = vrot.slane %v573, 7
        %v576 = vshll.u32 %v433, 16
        %v578 = vor.u32 %v575, %v576
        %v579 = vsel %vm451, %v571, %v578
        %v581 = vshrl.u32 %v434, 16
        %v583 = vrot.slane %v581, 7
        %v584 = vshll.u32 %v434, 16
        %v586 = vor.u32 %v583, %v584
        %v587 = vrot.slane %v583, 4
        %v589 = vshrl.u32 %v435, 16
        %v591 = vrot.slane %v589, 7
        %v592 = vshll.u32 %v435, 16
        %v594 = vor.u32 %v591, %v592
        %v595 = vsel %vm451, %v587, %v594
        %v597 = vshrl.u32 %v436, 16
        %v599 = vrot.slane %v597, 7
        %v600 = vshll.u32 %v436, 16
        %v602 = vor.u32 %v599, %v600
        %v603 = vrot.slane %v599, 4
        %v605 = vshrl.u32 %v437, 16
        %v607 = vrot.slane %v605, 7
        %v608 = vshll.u32 %v437, 16
        %v610 = vor.u32 %v607, %v608
        %v611 = vsel %vm451, %v603, %v610
        %v613 = vshrl.u32 %v438, 16
        %v615 = vrot.slane %v613, 7
        %v616 = vshll.u32 %v438, 16
        %v618 = vor.u32 %v615, %v616
        %v619 = vrot.slane %v615, 4
        %v621 = vshrl.u32 %v439, 16
        %v623 = vrot.slane %v621, 7
        %v624 = vshll.u32 %v439, 16
        %v626 = vor.u32 %v623, %v624
        %v627 = vsel %vm451, %v619, %v626
        %v629 = vshrl.u32 %v440, 16
        %v631 = vrot.slane %v629, 7
        %v632 = vshll.u32 %v440, 16
        %v634 = vor.u32 %v631, %v632
        %v635 = vrot.slane %v631, 4
        %v637 = vshrl.u32 %v441, 16
        %v639 = vrot.slane %v637, 7
        %v640 = vshll.u32 %v441, 16
        %v642 = vor.u32 %v639, %v640
        %v643 = vsel %vm451, %v635, %v642
        %v645 = vshrl.u32 %v442, 16
        %v647 = vrot.slane %v645, 7
        %v648 = vshll.u32 %v442, 16
        %v650 = vor.u32 %v647, %v648
        %v651 = vrot.slane %v647, 4
        %v653 = vshrl.u32 %v443, 16
        %v655 = vrot.slane %v653, 7
        %v656 = vshll.u32 %v443, 16
        %v658 = vor.u32 %v655, %v656
        %v659 = vsel %vm451, %v651, %v658
        %v661 = vshrl.u32 %v444, 16
        %v663 = vrot.slane %v661, 7
        %v664 = vshll.u32 %v444, 16
        %v666 = vor.u32 %v663, %v664
        %v667 = vrot.slane %v663, 4
        %v669 = vshrl.u32 %v445, 16
        %v671 = vrot.slane %v669, 7
        %v672 = vshll.u32 %v445, 16
        %v674 = vor.u32 %v671, %v672
        %v675 = vsel %vm451, %v667, %v674
        %v677 = vshrl.u32 %v446, 16
        %v679 = vrot.slane %v677, 7
        %v680 = vshll.u32 %v446, 16
        %v682 = vor.u32 %v679, %v680
        %v683 = vrot.slane %v679, 4
        %v685 = vshrl.u32 %v447, 16
        %v687 = vrot.slane %v685, 7
        %v688 = vshll.u32 %v447, 16
        %v690 = vor.u32 %v687, %v688
        %v691 = vsel %vm451, %v683, %v690
        %v693 = vshrl.u32 %v448, 16
        %v695 = vrot.slane %v693, 7
        %v696 = vshll.u32 %v448, 16
        %v698 = vor.u32 %v695, %v696
        %v699 = vrot.slane %v695, 4
        %v701 = vshrl.u32 %v449, 16
        %v703 = vrot.slane %v701, 7
        %v704 = vshll.u32 %v449, 16
        %v706 = vor.u32 %v703, %v704
        %v707 = vsel %vm451, %v699, %v706
        %s740 = scalar_lea.vmem [#allocation2], 8
        %vm741 = vcmask 257024
        %vm742 = vsmask.f32 7938
        %vm743 = vmand %vm741, %vm742
        %v744 = vld [vmem:[%s740] sm:$0xf]
        %v745 = vsel %vm743, %v458, %v744
        %746 = vst [vmem:[%s740] sm:$0xf] %v745
        %vm747 = vcmask 257024
        %748 = vst.msk [vmem:[%s740 + $0x4] sm:$0xf] %vm747, %v467
        %v749 = vld [vmem:[%s740 + $0x8] sm:$0xf]
        %v750 = vsel %vm743, %v474, %v749
        %751 = vst [vmem:[%s740 + $0x8] sm:$0xf] %v750
        %752 = vst.msk [vmem:[%s740 + $0xc] sm:$0xf] %vm747, %v483
        %v753 = vld [vmem:[%s740 + $0x10] sm:$0xf]
        %v754 = vsel %vm743, %v490, %v753
        %755 = vst [vmem:[%s740 + $0x10] sm:$0xf] %v754
        %756 = vst.msk [vmem:[%s740 + $0x14] sm:$0xf] %vm747, %v499
        %v757 = vld [vmem:[%s740 + $0x18] sm:$0xf]
        %v758 = vsel %vm743, %v506, %v757
        %759 = vst [vmem:[%s740 + $0x18] sm:$0xf] %v758
        %760 = vst.msk [vmem:[%s740 + $0x1c] sm:$0xf] %vm747, %v515
        %v761 = vld [vmem:[%s740 + $0x20] sm:$0xf]
        %v762 = vsel %vm743, %v522, %v761
        %763 = vst [vmem:[%s740 + $0x20] sm:$0xf] %v762
        %764 = vst.msk [vmem:[%s740 + $0x24] sm:$0xf] %vm747, %v531
        %v765 = vld [vmem:[%s740 + $0x28] sm:$0xf]
        %v766 = vsel %vm743, %v538, %v765
        %767 = vst [vmem:[%s740 + $0x28] sm:$0xf] %v766
        %768 = vst.msk [vmem:[%s740 + $0x2c] sm:$0xf] %vm747, %v547
        %v769 = vld [vmem:[%s740 + $0x30] sm:$0xf]
        %v770 = vsel %vm743, %v554, %v769
        %771 = vst [vmem:[%s740 + $0x30] sm:$0xf] %v770
        %772 = vst.msk [vmem:[%s740 + $0x34] sm:$0xf] %vm747, %v563
        %v773 = vld [vmem:[%s740 + $0x38] sm:$0xf]
        %v774 = vsel %vm743, %v570, %v773
        %775 = vst [vmem:[%s740 + $0x38] sm:$0xf] %v774
        %776 = vst.msk [vmem:[%s740 + $0x3c] sm:$0xf] %vm747, %v579
        %v777 = vld [vmem:[%s740 + $0x40] sm:$0xf]
        %v778 = vsel %vm743, %v586, %v777
        %779 = vst [vmem:[%s740 + $0x40] sm:$0xf] %v778
        %780 = vst.msk [vmem:[%s740 + $0x44] sm:$0xf] %vm747, %v595
        %v781 = vld [vmem:[%s740 + $0x48] sm:$0xf]
        %v782 = vsel %vm743, %v602, %v781
        %783 = vst [vmem:[%s740 + $0x48] sm:$0xf] %v782
        %784 = vst.msk [vmem:[%s740 + $0x4c] sm:$0xf] %vm747, %v611
        %v785 = vld [vmem:[%s740 + $0x50] sm:$0xf]
        %v786 = vsel %vm743, %v618, %v785
        %787 = vst [vmem:[%s740 + $0x50] sm:$0xf] %v786
        %788 = vst.msk [vmem:[%s740 + $0x54] sm:$0xf] %vm747, %v627
        %v789 = vld [vmem:[%s740 + $0x58] sm:$0xf]
        %v790 = vsel %vm743, %v634, %v789
        %791 = vst [vmem:[%s740 + $0x58] sm:$0xf] %v790
        %792 = vst.msk [vmem:[%s740 + $0x5c] sm:$0xf] %vm747, %v643
        %v793 = vld [vmem:[%s740 + $0x60] sm:$0xf]
        %v794 = vsel %vm743, %v650, %v793
        %795 = vst [vmem:[%s740 + $0x60] sm:$0xf] %v794
        %796 = vst.msk [vmem:[%s740 + $0x64] sm:$0xf] %vm747, %v659
        %v797 = vld [vmem:[%s740 + $0x68] sm:$0xf]
        %v798 = vsel %vm743, %v666, %v797
        %799 = vst [vmem:[%s740 + $0x68] sm:$0xf] %v798
        %800 = vst.msk [vmem:[%s740 + $0x6c] sm:$0xf] %vm747, %v675
        %v801 = vld [vmem:[%s740 + $0x70] sm:$0xf]
        %v802 = vsel %vm743, %v682, %v801
        %803 = vst [vmem:[%s740 + $0x70] sm:$0xf] %v802
        %804 = vst.msk [vmem:[%s740 + $0x74] sm:$0xf] %vm747, %v691
        %v805 = vld [vmem:[%s740 + $0x78] sm:$0xf]
        %v806 = vsel %vm743, %v698, %v805
        %807 = vst [vmem:[%s740 + $0x78] sm:$0xf] %v806
        %808 = vst.msk [vmem:[%s740 + $0x7c] sm:$0xf] %vm747, %v707
        %v809 = vld [vmem:[%s266] sm:$0xf]
        %v810 = vld [vmem:[%s266 + $0x4] sm:$0xf]
        %v811 = vld [vmem:[%s266 + $0x8] sm:$0xf]
        %v812 = vld [vmem:[%s266 + $0xc] sm:$0xf]
        %v813 = vld [vmem:[%s266 + $0x10] sm:$0xf]
        %v814 = vld [vmem:[%s266 + $0x14] sm:$0xf]
        %v815 = vld [vmem:[%s266 + $0x18] sm:$0xf]
        %v816 = vld [vmem:[%s266 + $0x1c] sm:$0xf]
        %v817 = vld [vmem:[%s266 + $0x20] sm:$0xf]
        %v818 = vld [vmem:[%s266 + $0x24] sm:$0xf]
        %v819 = vld [vmem:[%s266 + $0x28] sm:$0xf]
        %v820 = vld [vmem:[%s266 + $0x2c] sm:$0xf]
        %v821 = vld [vmem:[%s266 + $0x30] sm:$0xf]
        %v822 = vld [vmem:[%s266 + $0x34] sm:$0xf]
        %v823 = vld [vmem:[%s266 + $0x38] sm:$0xf]
        %v824 = vld [vmem:[%s266 + $0x3c] sm:$0xf]
        %v825 = vld [vmem:[%s266 + $0x40] sm:$0xf]
        %v826 = vld [vmem:[%s266 + $0x44] sm:$0xf]
        %v827 = vld [vmem:[%s266 + $0x48] sm:$0xf]
        %v828 = vld [vmem:[%s266 + $0x4c] sm:$0xf]
        %v829 = vld [vmem:[%s266 + $0x50] sm:$0xf]
        %v830 = vld [vmem:[%s266 + $0x54] sm:$0xf]
        %v831 = vld [vmem:[%s266 + $0x58] sm:$0xf]
        %v832 = vld [vmem:[%s266 + $0x5c] sm:$0xf]
        %v833 = vld [vmem:[%s266 + $0x60] sm:$0xf]
        %v834 = vld [vmem:[%s266 + $0x64] sm:$0xf]
        %v835 = vld [vmem:[%s266 + $0x68] sm:$0xf]
        %v836 = vld [vmem:[%s266 + $0x6c] sm:$0xf]
        %v837 = vld [vmem:[%s266 + $0x70] sm:$0xf]
        %v838 = vld [vmem:[%s266 + $0x74] sm:$0xf]
        %v839 = vld [vmem:[%s266 + $0x78] sm:$0xf]
        %v840 = vld [vmem:[%s266 + $0x7c] sm:$0xf]
        %873 = vrot.lane.b32.xlu0 %v809, 32
        %v874 = vpop.permute.xlu0 %873
        %875 = vrot.lane.b32.xlu0 %v810, 32
        %v876 = vpop.permute.xlu0 %875
        %877 = vrot.lane.b32.xlu0 %v811, 32
        %v878 = vpop.permute.xlu0 %877
        %879 = vrot.lane.b32.xlu0 %v812, 32
        %v880 = vpop.permute.xlu0 %879
        %881 = vrot.lane.b32.xlu0 %v813, 32
        %v882 = vpop.permute.xlu0 %881
        %883 = vrot.lane.b32.xlu0 %v814, 32
        %v884 = vpop.permute.xlu0 %883
        %885 = vrot.lane.b32.xlu0 %v815, 32
        %v886 = vpop.permute.xlu0 %885
        %887 = vrot.lane.b32.xlu0 %v816, 32
        %v888 = vpop.permute.xlu0 %887
        %889 = vrot.lane.b32.xlu0 %v817, 32
        %v890 = vpop.permute.xlu0 %889
        %891 = vrot.lane.b32.xlu0 %v818, 32
        %v892 = vpop.permute.xlu0 %891
        %893 = vrot.lane.b32.xlu0 %v819, 32
        %v894 = vpop.permute.xlu0 %893
        %895 = vrot.lane.b32.xlu0 %v820, 32
        %v896 = vpop.permute.xlu0 %895
        %897 = vrot.lane.b32.xlu0 %v821, 32
        %v898 = vpop.permute.xlu0 %897
        %899 = vrot.lane.b32.xlu0 %v822, 32
        %v900 = vpop.permute.xlu0 %899
        %901 = vrot.lane.b32.xlu0 %v823, 32
        %v902 = vpop.permute.xlu0 %901
        %903 = vrot.lane.b32.xlu0 %v824, 32
        %v904 = vpop.permute.xlu0 %903
        %905 = vrot.lane.b32.xlu0 %v825, 32
        %v906 = vpop.permute.xlu0 %905
        %907 = vrot.lane.b32.xlu0 %v826, 32
        %v908 = vpop.permute.xlu0 %907
        %909 = vrot.lane.b32.xlu0 %v827, 32
        %v910 = vpop.permute.xlu0 %909
        %911 = vrot.lane.b32.xlu0 %v828, 32
        %v912 = vpop.permute.xlu0 %911
        %913 = vrot.lane.b32.xlu0 %v829, 32
        %v914 = vpop.permute.xlu0 %913
        %915 = vrot.lane.b32.xlu0 %v830, 32
        %v916 = vpop.permute.xlu0 %915
        %917 = vrot.lane.b32.xlu0 %v831, 32
        %v918 = vpop.permute.xlu0 %917
        %919 = vrot.lane.b32.xlu0 %v832, 32
        %v920 = vpop.permute.xlu0 %919
        %921 = vrot.lane.b32.xlu0 %v833, 32
        %v922 = vpop.permute.xlu0 %921
        %923 = vrot.lane.b32.xlu0 %v834, 32
        %v924 = vpop.permute.xlu0 %923
        %925 = vrot.lane.b32.xlu0 %v835, 32
        %v926 = vpop.permute.xlu0 %925
        %927 = vrot.lane.b32.xlu0 %v836, 32
        %v928 = vpop.permute.xlu0 %927
        %929 = vrot.lane.b32.xlu0 %v837, 32
        %v930 = vpop.permute.xlu0 %929
        %931 = vrot.lane.b32.xlu0 %v838, 32
        %v932 = vpop.permute.xlu0 %931
        %933 = vrot.lane.b32.xlu0 %v839, 32
        %v934 = vpop.permute.xlu0 %933
        %935 = vrot.lane.b32.xlu0 %v840, 32
        %v936 = vpop.permute.xlu0 %935
        %vm969 = vcmask 519424
        %970 = vst.msk [vmem:[%s740] sm:$0xf] %vm969, %v874
        %971 = vst.msk [vmem:[%s740 + $0x4] sm:$0xf] %vm969, %v876
        %972 = vst.msk [vmem:[%s740 + $0x8] sm:$0xf] %vm969, %v878
        %973 = vst.msk [vmem:[%s740 + $0xc] sm:$0xf] %vm969, %v880
        %974 = vst.msk [vmem:[%s740 + $0x10] sm:$0xf] %vm969, %v882
        %975 = vst.msk [vmem:[%s740 + $0x14] sm:$0xf] %vm969, %v884
        %976 = vst.msk [vmem:[%s740 + $0x18] sm:$0xf] %vm969, %v886
        %977 = vst.msk [vmem:[%s740 + $0x1c] sm:$0xf] %vm969, %v888
        %978 = vst.msk [vmem:[%s740 + $0x20] sm:$0xf] %vm969, %v890
        %979 = vst.msk [vmem:[%s740 + $0x24] sm:$0xf] %vm969, %v892
        %980 = vst.msk [vmem:[%s740 + $0x28] sm:$0xf] %vm969, %v894
        %981 = vst.msk [vmem:[%s740 + $0x2c] sm:$0xf] %vm969, %v896
        %982 = vst.msk [vmem:[%s740 + $0x30] sm:$0xf] %vm969, %v898
        %983 = vst.msk [vmem:[%s740 + $0x34] sm:$0xf] %vm969, %v900
        %984 = vst.msk [vmem:[%s740 + $0x38] sm:$0xf] %vm969, %v902
        %985 = vst.msk [vmem:[%s740 + $0x3c] sm:$0xf] %vm969, %v904
        %986 = vst.msk [vmem:[%s740 + $0x40] sm:$0xf] %vm969, %v906
        %987 = vst.msk [vmem:[%s740 + $0x44] sm:$0xf] %vm969, %v908
        %988 = vst.msk [vmem:[%s740 + $0x48] sm:$0xf] %vm969, %v910
        %989 = vst.msk [vmem:[%s740 + $0x4c] sm:$0xf] %vm969, %v912
        %990 = vst.msk [vmem:[%s740 + $0x50] sm:$0xf] %vm969, %v914
        %991 = vst.msk [vmem:[%s740 + $0x54] sm:$0xf] %vm969, %v916
        %992 = vst.msk [vmem:[%s740 + $0x58] sm:$0xf] %vm969, %v918
        %993 = vst.msk [vmem:[%s740 + $0x5c] sm:$0xf] %vm969, %v920
        %994 = vst.msk [vmem:[%s740 + $0x60] sm:$0xf] %vm969, %v922
        %995 = vst.msk [vmem:[%s740 + $0x64] sm:$0xf] %vm969, %v924
        %996 = vst.msk [vmem:[%s740 + $0x68] sm:$0xf] %vm969, %v926
        %997 = vst.msk [vmem:[%s740 + $0x6c] sm:$0xf] %vm969, %v928
        %998 = vst.msk [vmem:[%s740 + $0x70] sm:$0xf] %vm969, %v930
        %999 = vst.msk [vmem:[%s740 + $0x74] sm:$0xf] %vm969, %v932
        %1000 = vst.msk [vmem:[%s740 + $0x78] sm:$0xf] %vm969, %v934
        %1001 = vst.msk [vmem:[%s740 + $0x7c] sm:$0xf] %vm969, %v936
        %v1002 = vld [vmem:[%s266] sm:$0xf]
        %v1003 = vld [vmem:[%s266 + $0x4] sm:$0xf]
        %v1004 = vld [vmem:[%s266 + $0x8] sm:$0xf]
        %v1005 = vld [vmem:[%s266 + $0xc] sm:$0xf]
        %v1006 = vld [vmem:[%s266 + $0x10] sm:$0xf]
        %v1007 = vld [vmem:[%s266 + $0x14] sm:$0xf]
        %v1008 = vld [vmem:[%s266 + $0x18] sm:$0xf]
        %v1009 = vld [vmem:[%s266 + $0x1c] sm:$0xf]
        %v1010 = vld [vmem:[%s266 + $0x20] sm:$0xf]
        %v1011 = vld [vmem:[%s266 + $0x24] sm:$0xf]
        %v1012 = vld [vmem:[%s266 + $0x28] sm:$0xf]
        %v1013 = vld [vmem:[%s266 + $0x2c] sm:$0xf]
        %v1014 = vld [vmem:[%s266 + $0x30] sm:$0xf]
        %v1015 = vld [vmem:[%s266 + $0x34] sm:$0xf]
        %v1016 = vld [vmem:[%s266 + $0x38] sm:$0xf]
        %v1017 = vld [vmem:[%s266 + $0x3c] sm:$0xf]
        %v1018 = vld [vmem:[%s266 + $0x40] sm:$0xf]
        %v1019 = vld [vmem:[%s266 + $0x44] sm:$0xf]
        %v1020 = vld [vmem:[%s266 + $0x48] sm:$0xf]
        %v1021 = vld [vmem:[%s266 + $0x4c] sm:$0xf]
        %v1022 = vld [vmem:[%s266 + $0x50] sm:$0xf]
        %v1023 = vld [vmem:[%s266 + $0x54] sm:$0xf]
        %v1024 = vld [vmem:[%s266 + $0x58] sm:$0xf]
        %v1025 = vld [vmem:[%s266 + $0x5c] sm:$0xf]
        %v1026 = vld [vmem:[%s266 + $0x60] sm:$0xf]
        %v1027 = vld [vmem:[%s266 + $0x64] sm:$0xf]
        %v1028 = vld [vmem:[%s266 + $0x68] sm:$0xf]
        %v1029 = vld [vmem:[%s266 + $0x6c] sm:$0xf]
        %v1030 = vld [vmem:[%s266 + $0x70] sm:$0xf]
        %v1031 = vld [vmem:[%s266 + $0x74] sm:$0xf]
        %v1032 = vld [vmem:[%s266 + $0x78] sm:$0xf]
        %v1033 = vld [vmem:[%s266 + $0x7c] sm:$0xf]
        %vm1034 = vsmask.f32 3328
        %vm1035 = vsmask.f32 7440
        %vm1036 = vmor %vm1034, %vm1035
        %v1038 = vshrl.u32 %v1002, 16
        %v1040 = vrot.slane %v1038, 4
        %v1041 = vshll.u32 %v1002, 16
        %v1043 = vrot.slane %v1041, 5
        %v1044 = vor.u32 %v1040, %v1043
        %v1045 = vrot.slane %v1044, 4
        %v1047 = vshll.u32 %v1003, 16
        %v1049 = vrot.slane %v1047, 5
        %v1050 = vsel %vm1036, %v1045, %v1049
        %v1051 = vshrl.u32 %v1003, 16
        %v1053 = vrot.slane %v1051, 4
        %v1054 = vor.u32 %v1053, %v1049
        %v1055 = vrot.slane %v1054, 4
        %v1057 = vshrl.u32 %v1004, 16
        %v1059 = vrot.slane %v1057, 4
        %v1060 = vshll.u32 %v1004, 16
        %v1062 = vrot.slane %v1060, 5
        %v1063 = vor.u32 %v1059, %v1062
        %v1064 = vrot.slane %v1063, 4
        %v1066 = vshll.u32 %v1005, 16
        %v1068 = vrot.slane %v1066, 5
        %v1069 = vsel %vm1036, %v1064, %v1068
        %v1070 = vshrl.u32 %v1005, 16
        %v1072 = vrot.slane %v1070, 4
        %v1073 = vor.u32 %v1072, %v1068
        %v1074 = vrot.slane %v1073, 4
        %v1076 = vshrl.u32 %v1006, 16
        %v1078 = vrot.slane %v1076, 4
        %v1079 = vshll.u32 %v1006, 16
        %v1081 = vrot.slane %v1079, 5
        %v1082 = vor.u32 %v1078, %v1081
        %v1083 = vrot.slane %v1082, 4
        %v1085 = vshll.u32 %v1007, 16
        %v1087 = vrot.slane %v1085, 5
        %v1088 = vsel %vm1036, %v1083, %v1087
        %v1089 = vshrl.u32 %v1007, 16
        %v1091 = vrot.slane %v1089, 4
        %v1092 = vor.u32 %v1091, %v1087
        %v1093 = vrot.slane %v1092, 4
        %v1095 = vshrl.u32 %v1008, 16
        %v1097 = vrot.slane %v1095, 4
        %v1098 = vshll.u32 %v1008, 16
        %v1100 = vrot.slane %v1098, 5
        %v1101 = vor.u32 %v1097, %v1100
        %v1102 = vrot.slane %v1101, 4
        %v1104 = vshll.u32 %v1009, 16
        %v1106 = vrot.slane %v1104, 5
        %v1107 = vsel %vm1036, %v1102, %v1106
        %v1108 = vshrl.u32 %v1009, 16
        %v1110 = vrot.slane %v1108, 4
        %v1111 = vor.u32 %v1110, %v1106
        %v1112 = vrot.slane %v1111, 4
        %v1114 = vshrl.u32 %v1010, 16
        %v1116 = vrot.slane %v1114, 4
        %v1117 = vshll.u32 %v1010, 16
        %v1119 = vrot.slane %v1117, 5
        %v1120 = vor.u32 %v1116, %v1119
        %v1121 = vrot.slane %v1120, 4
        %v1123 = vshll.u32 %v1011, 16
        %v1125 = vrot.slane %v1123, 5
        %v1126 = vsel %vm1036, %v1121, %v1125
        %v1127 = vshrl.u32 %v1011, 16
        %v1129 = vrot.slane %v1127, 4
        %v1130 = vor.u32 %v1129, %v1125
        %v1131 = vrot.slane %v1130, 4
        %v1133 = vshrl.u32 %v1012, 16
        %v1135 = vrot.slane %v1133, 4
        %v1136 = vshll.u32 %v1012, 16
        %v1138 = vrot.slane %v1136, 5
        %v1139 = vor.u32 %v1135, %v1138
        %v1140 = vrot.slane %v1139, 4
        %v1142 = vshll.u32 %v1013, 16
        %v1144 = vrot.slane %v1142, 5
        %v1145 = vsel %vm1036, %v1140, %v1144
        %v1146 = vshrl.u32 %v1013, 16
        %v1148 = vrot.slane %v1146, 4
        %v1149 = vor.u32 %v1148, %v1144
        %v1150 = vrot.slane %v1149, 4
        %v1152 = vshrl.u32 %v1014, 16
        %v1154 = vrot.slane %v1152, 4
        %v1155 = vshll.u32 %v1014, 16
        %v1157 = vrot.slane %v1155, 5
        %v1158 = vor.u32 %v1154, %v1157
        %v1159 = vrot.slane %v1158, 4
        %v1161 = vshll.u32 %v1015, 16
        %v1163 = vrot.slane %v1161, 5
        %v1164 = vsel %vm1036, %v1159, %v1163
        %v1165 = vshrl.u32 %v1015, 16
        %v1167 = vrot.slane %v1165, 4
        %v1168 = vor.u32 %v1167, %v1163
        %v1169 = vrot.slane %v1168, 4
        %v1171 = vshrl.u32 %v1016, 16
        %v1173 = vrot.slane %v1171, 4
        %v1174 = vshll.u32 %v1016, 16
        %v1176 = vrot.slane %v1174, 5
        %v1177 = vor.u32 %v1173, %v1176
        %v1178 = vrot.slane %v1177, 4
        %v1180 = vshll.u32 %v1017, 16
        %v1182 = vrot.slane %v1180, 5
        %v1183 = vsel %vm1036, %v1178, %v1182
        %v1184 = vshrl.u32 %v1017, 16
        %v1186 = vrot.slane %v1184, 4
        %v1187 = vor.u32 %v1186, %v1182
        %v1188 = vrot.slane %v1187, 4
        %v1190 = vshrl.u32 %v1018, 16
        %v1192 = vrot.slane %v1190, 4
        %v1193 = vshll.u32 %v1018, 16
        %v1195 = vrot.slane %v1193, 5
        %v1196 = vor.u32 %v1192, %v1195
        %v1197 = vrot.slane %v1196, 4
        %v1199 = vshll.u32 %v1019, 16
        %v1201 = vrot.slane %v1199, 5
        %v1202 = vsel %vm1036, %v1197, %v1201
        %v1203 = vshrl.u32 %v1019, 16
        %v1205 = vrot.slane %v1203, 4
        %v1206 = vor.u32 %v1205, %v1201
        %v1207 = vrot.slane %v1206, 4
        %v1209 = vshrl.u32 %v1020, 16
        %v1211 = vrot.slane %v1209, 4
        %v1212 = vshll.u32 %v1020, 16
        %v1214 = vrot.slane %v1212, 5
        %v1215 = vor.u32 %v1211, %v1214
        %v1216 = vrot.slane %v1215, 4
        %v1218 = vshll.u32 %v1021, 16
        %v1220 = vrot.slane %v1218, 5
        %v1221 = vsel %vm1036, %v1216, %v1220
        %v1222 = vshrl.u32 %v1021, 16
        %v1224 = vrot.slane %v1222, 4
        %v1225 = vor.u32 %v1224, %v1220
        %v1226 = vrot.slane %v1225, 4
        %v1228 = vshrl.u32 %v1022, 16
        %v1230 = vrot.slane %v1228, 4
        %v1231 = vshll.u32 %v1022, 16
        %v1233 = vrot.slane %v1231, 5
        %v1234 = vor.u32 %v1230, %v1233
        %v1235 = vrot.slane %v1234, 4
        %v1237 = vshll.u32 %v1023, 16
        %v1239 = vrot.slane %v1237, 5
        %v1240 = vsel %vm1036, %v1235, %v1239
        %v1241 = vshrl.u32 %v1023, 16
        %v1243 = vrot.slane %v1241, 4
        %v1244 = vor.u32 %v1243, %v1239
        %v1245 = vrot.slane %v1244, 4
        %v1247 = vshrl.u32 %v1024, 16
        %v1249 = vrot.slane %v1247, 4
        %v1250 = vshll.u32 %v1024, 16
        %v1252 = vrot.slane %v1250, 5
        %v1253 = vor.u32 %v1249, %v1252
        %v1254 = vrot.slane %v1253, 4
        %v1256 = vshll.u32 %v1025, 16
        %v1258 = vrot.slane %v1256, 5
        %v1259 = vsel %vm1036, %v1254, %v1258
        %v1260 = vshrl.u32 %v1025, 16
        %v1262 = vrot.slane %v1260, 4
        %v1263 = vor.u32 %v1262, %v1258
        %v1264 = vrot.slane %v1263, 4
        %v1266 = vshrl.u32 %v1026, 16
        %v1268 = vrot.slane %v1266, 4
        %v1269 = vshll.u32 %v1026, 16
        %v1271 = vrot.slane %v1269, 5
        %v1272 = vor.u32 %v1268, %v1271
        %v1273 = vrot.slane %v1272, 4
        %v1275 = vshll.u32 %v1027, 16
        %v1277 = vrot.slane %v1275, 5
        %v1278 = vsel %vm1036, %v1273, %v1277
        %v1279 = vshrl.u32 %v1027, 16
        %v1281 = vrot.slane %v1279, 4
        %v1282 = vor.u32 %v1281, %v1277
        %v1283 = vrot.slane %v1282, 4
        %v1285 = vshrl.u32 %v1028, 16
        %v1287 = vrot.slane %v1285, 4
        %v1288 = vshll.u32 %v1028, 16
        %v1290 = vrot.slane %v1288, 5
        %v1291 = vor.u32 %v1287, %v1290
        %v1292 = vrot.slane %v1291, 4
        %v1294 = vshll.u32 %v1029, 16
        %v1296 = vrot.slane %v1294, 5
        %v1297 = vsel %vm1036, %v1292, %v1296
        %v1298 = vshrl.u32 %v1029, 16
        %v1300 = vrot.slane %v1298, 4
        %v1301 = vor.u32 %v1300, %v1296
        %v1302 = vrot.slane %v1301, 4
        %v1304 = vshrl.u32 %v1030, 16
        %v1306 = vrot.slane %v1304, 4
        %v1307 = vshll.u32 %v1030, 16
        %v1309 = vrot.slane %v1307, 5
        %v1310 = vor.u32 %v1306, %v1309
        %v1311 = vrot.slane %v1310, 4
        %v1313 = vshll.u32 %v1031, 16
        %v1315 = vrot.slane %v1313, 5
        %v1316 = vsel %vm1036, %v1311, %v1315
        %v1317 = vshrl.u32 %v1031, 16
        %v1319 = vrot.slane %v1317, 4
        %v1320 = vor.u32 %v1319, %v1315
        %v1321 = vrot.slane %v1320, 4
        %v1323 = vshrl.u32 %v1032, 16
        %v1325 = vrot.slane %v1323, 4
        %v1326 = vshll.u32 %v1032, 16
        %v1328 = vrot.slane %v1326, 5
        %v1329 = vor.u32 %v1325, %v1328
        %v1330 = vrot.slane %v1329, 4
        %v1332 = vshll.u32 %v1033, 16
        %v1334 = vrot.slane %v1332, 5
        %v1335 = vsel %vm1036, %v1330, %v1334
        %v1336 = vshrl.u32 %v1033, 16
        %v1338 = vrot.slane %v1336, 4
        %v1339 = vor.u32 %v1338, %v1334
        %v1340 = vrot.slane %v1339, 4
        %1341 = vrot.lane.b32.xlu0 %v1050, 64
        %v1342 = vpop.permute.xlu0 %1341
        %1343 = vrot.lane.b32.xlu0 %v1055, 64
        %v1344 = vpop.permute.xlu0 %1343
        %1345 = vrot.lane.b32.xlu0 %v1069, 64
        %v1346 = vpop.permute.xlu0 %1345
        %1347 = vrot.lane.b32.xlu0 %v1074, 64
        %v1348 = vpop.permute.xlu0 %1347
        %1349 = vrot.lane.b32.xlu0 %v1088, 64
        %v1350 = vpop.permute.xlu0 %1349
        %1351 = vrot.lane.b32.xlu0 %v1093, 64
        %v1352 = vpop.permute.xlu0 %1351
        %1353 = vrot.lane.b32.xlu0 %v1107, 64
        %v1354 = vpop.permute.xlu0 %1353
        %1355 = vrot.lane.b32.xlu0 %v1112, 64
        %v1356 = vpop.permute.xlu0 %1355
        %1357 = vrot.lane.b32.xlu0 %v1126, 64
        %v1358 = vpop.permute.xlu0 %1357
        %1359 = vrot.lane.b32.xlu0 %v1131, 64
        %v1360 = vpop.permute.xlu0 %1359
        %1361 = vrot.lane.b32.xlu0 %v1145, 64
        %v1362 = vpop.permute.xlu0 %1361
        %1363 = vrot.lane.b32.xlu0 %v1150, 64
        %v1364 = vpop.permute.xlu0 %1363
        %1365 = vrot.lane.b32.xlu0 %v1164, 64
        %v1366 = vpop.permute.xlu0 %1365
        %1367 = vrot.lane.b32.xlu0 %v1169, 64
        %v1368 = vpop.permute.xlu0 %1367
        %1369 = vrot.lane.b32.xlu0 %v1183, 64
        %v1370 = vpop.permute.xlu0 %1369
        %1371 = vrot.lane.b32.xlu0 %v1188, 64
        %v1372 = vpop.permute.xlu0 %1371
        %1373 = vrot.lane.b32.xlu0 %v1202, 64
        %v1374 = vpop.permute.xlu0 %1373
        %1375 = vrot.lane.b32.xlu0 %v1207, 64
        %v1376 = vpop.permute.xlu0 %1375
        %1377 = vrot.lane.b32.xlu0 %v1221, 64
        %v1378 = vpop.permute.xlu0 %1377
        %1379 = vrot.lane.b32.xlu0 %v1226, 64
        %v1380 = vpop.permute.xlu0 %1379
        %1381 = vrot.lane.b32.xlu0 %v1240, 64
        %v1382 = vpop.permute.xlu0 %1381
        %1383 = vrot.lane.b32.xlu0 %v1245, 64
        %v1384 = vpop.permute.xlu0 %1383
        %1385 = vrot.lane.b32.xlu0 %v1259, 64
        %v1386 = vpop.permute.xlu0 %1385
        %1387 = vrot.lane.b32.xlu0 %v1264, 64
        %v1388 = vpop.permute.xlu0 %1387
        %1389 = vrot.lane.b32.xlu0 %v1278, 64
        %v1390 = vpop.permute.xlu0 %1389
        %1391 = vrot.lane.b32.xlu0 %v1283, 64
        %v1392 = vpop.permute.xlu0 %1391
        %1393 = vrot.lane.b32.xlu0 %v1297, 64
        %v1394 = vpop.permute.xlu0 %1393
        %1395 = vrot.lane.b32.xlu0 %v1302, 64
        %v1396 = vpop.permute.xlu0 %1395
        %1397 = vrot.lane.b32.xlu0 %v1316, 64
        %v1398 = vpop.permute.xlu0 %1397
        %1399 = vrot.lane.b32.xlu0 %v1321, 64
        %v1400 = vpop.permute.xlu0 %1399
        %1401 = vrot.lane.b32.xlu0 %v1335, 64
        %v1402 = vpop.permute.xlu0 %1401
        %1403 = vrot.lane.b32.xlu0 %v1340, 64
        %v1404 = vpop.permute.xlu0 %1403
        %vm1437 = vcmask 781824
        %1438 = vst.msk [vmem:[%s740] sm:$0xf] %vm1437, %v1342
        %vm1439 = vcmask 781824
        %vm1440 = vmand %vm1439, %vm1034
        %v1441 = vld [vmem:[%s740 + $0x4] sm:$0xf]
        %v1442 = vsel %vm1440, %v1344, %v1441
        %1443 = vst [vmem:[%s740 + $0x4] sm:$0xf] %v1442
        %1444 = vst.msk [vmem:[%s740 + $0x8] sm:$0xf] %vm1437, %v1346
        %v1445 = vld [vmem:[%s740 + $0xc] sm:$0xf]
        %v1446 = vsel %vm1440, %v1348, %v1445
        %1447 = vst [vmem:[%s740 + $0xc] sm:$0xf] %v1446
        %1448 = vst.msk [vmem:[%s740 + $0x10] sm:$0xf] %vm1437, %v1350
        %v1449 = vld [vmem:[%s740 + $0x14] sm:$0xf]
        %v1450 = vsel %vm1440, %v1352, %v1449
        %1451 = vst [vmem:[%s740 + $0x14] sm:$0xf] %v1450
        %1452 = vst.msk [vmem:[%s740 + $0x18] sm:$0xf] %vm1437, %v1354
        %v1453 = vld [vmem:[%s740 + $0x1c] sm:$0xf]
        %v1454 = vsel %vm1440, %v1356, %v1453
        %1455 = vst [vmem:[%s740 + $0x1c] sm:$0xf] %v1454
        %1456 = vst.msk [vmem:[%s740 + $0x20] sm:$0xf] %vm1437, %v1358
        %v1457 = vld [vmem:[%s740 + $0x24] sm:$0xf]
        %v1458 = vsel %vm1440, %v1360, %v1457
        %1459 = vst [vmem:[%s740 + $0x24] sm:$0xf] %v1458
        %1460 = vst.msk [vmem:[%s740 + $0x28] sm:$0xf] %vm1437, %v1362
        %v1461 = vld [vmem:[%s740 + $0x2c] sm:$0xf]
        %v1462 = vsel %vm1440, %v1364, %v1461
        %1463 = vst [vmem:[%s740 + $0x2c] sm:$0xf] %v1462
        %1464 = vst.msk [vmem:[%s740 + $0x30] sm:$0xf] %vm1437, %v1366
        %v1465 = vld [vmem:[%s740 + $0x34] sm:$0xf]
        %v1466 = vsel %vm1440, %v1368, %v1465
        %1467 = vst [vmem:[%s740 + $0x34] sm:$0xf] %v1466
        %1468 = vst.msk [vmem:[%s740 + $0x38] sm:$0xf] %vm1437, %v1370
        %v1469 = vld [vmem:[%s740 + $0x3c] sm:$0xf]
        %v1470 = vsel %vm1440, %v1372, %v1469
        %1471 = vst [vmem:[%s740 + $0x3c] sm:$0xf] %v1470
        %1472 = vst.msk [vmem:[%s740 + $0x40] sm:$0xf] %vm1437, %v1374
        %v1473 = vld [vmem:[%s740 + $0x44] sm:$0xf]
        %v1474 = vsel %vm1440, %v1376, %v1473
        %1475 = vst [vmem:[%s740 + $0x44] sm:$0xf] %v1474
        %1476 = vst.msk [vmem:[%s740 + $0x48] sm:$0xf] %vm1437, %v1378
        %v1477 = vld [vmem:[%s740 + $0x4c] sm:$0xf]
        %v1478 = vsel %vm1440, %v1380, %v1477
        %1479 = vst [vmem:[%s740 + $0x4c] sm:$0xf] %v1478
        %1480 = vst.msk [vmem:[%s740 + $0x50] sm:$0xf] %vm1437, %v1382
        %v1481 = vld [vmem:[%s740 + $0x54] sm:$0xf]
        %v1482 = vsel %vm1440, %v1384, %v1481
        %1483 = vst [vmem:[%s740 + $0x54] sm:$0xf] %v1482
        %1484 = vst.msk [vmem:[%s740 + $0x58] sm:$0xf] %vm1437, %v1386
        %v1485 = vld [vmem:[%s740 + $0x5c] sm:$0xf]
        %v1486 = vsel %vm1440, %v1388, %v1485
        %1487 = vst [vmem:[%s740 + $0x5c] sm:$0xf] %v1486
        %1488 = vst.msk [vmem:[%s740 + $0x60] sm:$0xf] %vm1437, %v1390
        %v1489 = vld [vmem:[%s740 + $0x64] sm:$0xf]
        %v1490 = vsel %vm1440, %v1392, %v1489
        %1491 = vst [vmem:[%s740 + $0x64] sm:$0xf] %v1490
        %1492 = vst.msk [vmem:[%s740 + $0x68] sm:$0xf] %vm1437, %v1394
        %v1493 = vld [vmem:[%s740 + $0x6c] sm:$0xf]
        %v1494 = vsel %vm1440, %v1396, %v1493
        %1495 = vst [vmem:[%s740 + $0x6c] sm:$0xf] %v1494
        %1496 = vst.msk [vmem:[%s740 + $0x70] sm:$0xf] %vm1437, %v1398
        %v1497 = vld [vmem:[%s740 + $0x74] sm:$0xf]
        %v1498 = vsel %vm1440, %v1400, %v1497
        %1499 = vst [vmem:[%s740 + $0x74] sm:$0xf] %v1498
        %1500 = vst.msk [vmem:[%s740 + $0x78] sm:$0xf] %vm1437, %v1402
        %v1501 = vld [vmem:[%s740 + $0x7c] sm:$0xf]
        %v1502 = vsel %vm1440, %v1404, %v1501
        %1503 = vst [vmem:[%s740 + $0x7c] sm:$0xf] %v1502
        %v1504 = vld [vmem:[#allocation2] sm:$0xf]
        %v1505 = vld [vmem:[#allocation2 + $0x4] sm:$0xf]
        %v1506 = vld [vmem:[#allocation2 + $0x8] sm:$0xf]
        %v1507 = vld [vmem:[#allocation2 + $0xc] sm:$0xf]
        %v1508 = vld [vmem:[#allocation2 + $0x10] sm:$0xf]
        %v1509 = vld [vmem:[#allocation2 + $0x14] sm:$0xf]
        %v1510 = vld [vmem:[#allocation2 + $0x18] sm:$0xf]
        %v1511 = vld [vmem:[#allocation2 + $0x1c] sm:$0xf]
        %v1512 = vld [vmem:[#allocation2 + $0x20] sm:$0xf]
        %v1513 = vld [vmem:[#allocation2 + $0x24] sm:$0xf]
        %v1514 = vld [vmem:[#allocation2 + $0x28] sm:$0xf]
        %v1515 = vld [vmem:[#allocation2 + $0x2c] sm:$0xf]
        %v1516 = vld [vmem:[#allocation2 + $0x30] sm:$0xf]
        %v1517 = vld [vmem:[#allocation2 + $0x34] sm:$0xf]
        %v1518 = vld [vmem:[#allocation2 + $0x38] sm:$0xf]
        %v1519 = vld [vmem:[#allocation2 + $0x3c] sm:$0xf]
        %v1520 = vld [vmem:[#allocation2 + $0x40] sm:$0xf]
        %v1521 = vld [vmem:[#allocation2 + $0x44] sm:$0xf]
        %v1522 = vld [vmem:[#allocation2 + $0x48] sm:$0xf]
        %v1523 = vld [vmem:[#allocation2 + $0x4c] sm:$0xf]
        %v1524 = vld [vmem:[#allocation2 + $0x50] sm:$0xf]
        %v1525 = vld [vmem:[#allocation2 + $0x54] sm:$0xf]
        %v1526 = vld [vmem:[#allocation2 + $0x58] sm:$0xf]
        %v1527 = vld [vmem:[#allocation2 + $0x5c] sm:$0xf]
        %v1528 = vld [vmem:[#allocation2 + $0x60] sm:$0xf]
        %v1529 = vld [vmem:[#allocation2 + $0x64] sm:$0xf]
        %v1530 = vld [vmem:[#allocation2 + $0x68] sm:$0xf]
        %v1531 = vld [vmem:[#allocation2 + $0x6c] sm:$0xf]
        %v1532 = vld [vmem:[#allocation2 + $0x70] sm:$0xf]
        %v1533 = vld [vmem:[#allocation2 + $0x74] sm:$0xf]
        %v1534 = vld [vmem:[#allocation2 + $0x78] sm:$0xf]
        %v1535 = vld [vmem:[#allocation2 + $0x7c] sm:$0xf]
        %v1536 = vld [vmem:[%s1] sm:$0xf]
        %v1537 = vld [vmem:[%s1 + $0x4] sm:$0xf]
        %v1538 = vld [vmem:[%s1 + $0x8] sm:$0xf]
        %v1539 = vld [vmem:[%s1 + $0xc] sm:$0xf]
        %v1540 = vld [vmem:[%s1 + $0x10] sm:$0xf]
        %v1541 = vld [vmem:[%s1 + $0x14] sm:$0xf]
        %v1542 = vld [vmem:[%s1 + $0x18] sm:$0xf]
        %v1543 = vld [vmem:[%s1 + $0x1c] sm:$0xf]
        %v1544 = vld [vmem:[%s1 + $0x20] sm:$0xf]
        %v1545 = vld [vmem:[%s1 + $0x24] sm:$0xf]
        %v1546 = vld [vmem:[%s1 + $0x28] sm:$0xf]
        %v1547 = vld [vmem:[%s1 + $0x2c] sm:$0xf]
        %v1548 = vld [vmem:[%s740] sm:$0xf]
        %v1549 = vld [vmem:[%s740 + $0x4] sm:$0xf]
        %v1550 = vld [vmem:[%s740 + $0x8] sm:$0xf]
        %v1551 = vld [vmem:[%s740 + $0xc] sm:$0xf]
        %v1552 = vld [vmem:[%s740 + $0x10] sm:$0xf]
        %v1553 = vld [vmem:[%s740 + $0x14] sm:$0xf]
        %v1554 = vld [vmem:[%s740 + $0x18] sm:$0xf]
        %v1555 = vld [vmem:[%s740 + $0x1c] sm:$0xf]
        %v1556 = vld [vmem:[%s740 + $0x20] sm:$0xf]
        %v1557 = vld [vmem:[%s740 + $0x24] sm:$0xf]
        %v1558 = vld [vmem:[%s740 + $0x28] sm:$0xf]
        %v1559 = vld [vmem:[%s740 + $0x2c] sm:$0xf]
        %v1560 = vld [vmem:[%s740 + $0x30] sm:$0xf]
        %v1561 = vld [vmem:[%s740 + $0x34] sm:$0xf]
        %v1562 = vld [vmem:[%s740 + $0x38] sm:$0xf]
        %v1563 = vld [vmem:[%s740 + $0x3c] sm:$0xf]
        %v1564 = vld [vmem:[%s740 + $0x40] sm:$0xf]
        %v1565 = vld [vmem:[%s740 + $0x44] sm:$0xf]
        %v1566 = vld [vmem:[%s740 + $0x48] sm:$0xf]
        %v1567 = vld [vmem:[%s740 + $0x4c] sm:$0xf]
        %v1568 = vld [vmem:[%s740 + $0x50] sm:$0xf]
        %v1569 = vld [vmem:[%s740 + $0x54] sm:$0xf]
        %v1570 = vld [vmem:[%s740 + $0x58] sm:$0xf]
        %v1571 = vld [vmem:[%s740 + $0x5c] sm:$0xf]
        %v1572 = vld [vmem:[%s740 + $0x60] sm:$0xf]
        %v1573 = vld [vmem:[%s740 + $0x64] sm:$0xf]
        %v1574 = vld [vmem:[%s740 + $0x68] sm:$0xf]
        %v1575 = vld [vmem:[%s740 + $0x6c] sm:$0xf]
        %v1576 = vld [vmem:[%s740 + $0x70] sm:$0xf]
        %v1577 = vld [vmem:[%s740 + $0x74] sm:$0xf]
        %v1578 = vld [vmem:[%s740 + $0x78] sm:$0xf]
        %v1579 = vld [vmem:[%s740 + $0x7c] sm:$0xf]
        %s1580 = scalar_lea.vmem %s1, 48
        %v1581 = vld [vmem:[%s1580] sm:$0xf]
        %v1582 = vld [vmem:[%s1580 + $0x4] sm:$0xf]
        %v1583 = vld [vmem:[%s1580 + $0x8] sm:$0xf]
        %v1584 = vld [vmem:[%s1580 + $0xc] sm:$0xf]
        %v1585 = vld [vmem:[%s1580 + $0x10] sm:$0xf]
        %v1586 = vld [vmem:[%s1580 + $0x14] sm:$0xf]
        %v1587 = vld [vmem:[%s1580 + $0x18] sm:$0xf]
        %v1588 = vld [vmem:[%s1580 + $0x1c] sm:$0xf]
        %v1589 = vld [vmem:[%s1580 + $0x20] sm:$0xf]
        %v1590 = vld [vmem:[%s1580 + $0x24] sm:$0xf]
        %v1591 = vld [vmem:[%s1580 + $0x28] sm:$0xf]
        %v1592 = vld [vmem:[%s1580 + $0x2c] sm:$0xf]
        %v1625 = vunpack.c.l.b16 %v1548
        %v1626 = vunpack.c.l.b16 %v1549
        %v1627 = vunpack.c.l.b16 %v1550
        %v1628 = vunpack.c.l.b16 %v1551
        %v1629 = vunpack.c.l.b16 %v1552
        %v1630 = vunpack.c.l.b16 %v1553
        %v1631 = vunpack.c.l.b16 %v1554
        %v1632 = vunpack.c.l.b16 %v1555
        %v1633 = vunpack.c.l.b16 %v1556
        %v1634 = vunpack.c.l.b16 %v1557
        %v1635 = vunpack.c.l.b16 %v1558
        %v1636 = vunpack.c.l.b16 %v1559
        %v1637 = vunpack.c.l.b16 %v1560
        %v1638 = vunpack.c.l.b16 %v1561
        %v1639 = vunpack.c.l.b16 %v1562
        %v1640 = vunpack.c.l.b16 %v1563
        %v1641 = vunpack.c.l.b16 %v1564
        %v1642 = vunpack.c.l.b16 %v1565
        %v1643 = vunpack.c.l.b16 %v1566
        %v1644 = vunpack.c.l.b16 %v1567
        %v1645 = vunpack.c.l.b16 %v1568
        %v1646 = vunpack.c.l.b16 %v1569
        %v1647 = vunpack.c.l.b16 %v1570
        %v1648 = vunpack.c.l.b16 %v1571
        %v1649 = vunpack.c.l.b16 %v1572
        %v1650 = vunpack.c.l.b16 %v1573
        %v1651 = vunpack.c.l.b16 %v1574
        %v1652 = vunpack.c.l.b16 %v1575
        %v1653 = vunpack.c.l.b16 %v1576
        %v1654 = vunpack.c.l.b16 %v1577
        %v1655 = vunpack.c.l.b16 %v1578
        %v1656 = vunpack.c.l.b16 %v1579
        %v1657 = vpack.c.b16 %v1626, %v1625
        %v1658 = vpack.c.b16 %v1628, %v1627
        %v1659 = vpack.c.b16 %v1630, %v1629
        %v1660 = vpack.c.b16 %v1632, %v1631
        %v1661 = vpack.c.b16 %v1634, %v1633
        %v1662 = vpack.c.b16 %v1636, %v1635
        %v1663 = vpack.c.b16 %v1638, %v1637
        %v1664 = vpack.c.b16 %v1640, %v1639
        %v1665 = vpack.c.b16 %v1642, %v1641
        %v1666 = vpack.c.b16 %v1644, %v1643
        %v1667 = vpack.c.b16 %v1646, %v1645
        %v1668 = vpack.c.b16 %v1648, %v1647
        %v1669 = vpack.c.b16 %v1650, %v1649
        %v1670 = vpack.c.b16 %v1652, %v1651
        %v1671 = vpack.c.b16 %v1654, %v1653
        %v1672 = vpack.c.b16 %v1656, %v1655
        %v1685 = vunpack.c.l.b16 %v1581
        %v1686 = vunpack.c.l.b16 %v1582
        %v1687 = vunpack.c.l.b16 %v1583
        %v1688 = vunpack.c.l.b16 %v1584
        %v1689 = vunpack.c.l.b16 %v1585
        %v1690 = vunpack.c.l.b16 %v1586
        %v1691 = vunpack.c.l.b16 %v1587
        %v1692 = vunpack.c.l.b16 %v1588
        %v1693 = vunpack.c.l.b16 %v1589
        %v1694 = vunpack.c.l.b16 %v1590
        %v1695 = vunpack.c.l.b16 %v1591
        %v1696 = vunpack.c.l.b16 %v1592
        %v1697 = vpack.c.b16 %v1686, %v1685
        %v1698 = vpack.c.b16 %v1688, %v1687
        %v1699 = vpack.c.b16 %v1690, %v1689
        %v1700 = vpack.c.b16 %v1692, %v1691
        %v1701 = vpack.c.b16 %v1694, %v1693
        %v1702 = vpack.c.b16 %v1696, %v1695
        %vm1709 = vcmask 785408
        %v1711 = vsel %vm1709, %v1657, 0
        %v1714 = vsel %vm1709, %v1658, 0
        %v1717 = vsel %vm1709, %v1659, 0
        %v1720 = vsel %vm1709, %v1660, 0
        %v1723 = vsel %vm1709, %v1661, 0
        %v1726 = vsel %vm1709, %v1662, 0
        %v1729 = vsel %vm1709, %v1663, 0
        %v1732 = vsel %vm1709, %v1664, 0
        %v1735 = vsel %vm1709, %v1665, 0
        %v1738 = vsel %vm1709, %v1666, 0
        %v1741 = vsel %vm1709, %v1667, 0
        %v1744 = vsel %vm1709, %v1668, 0
        %v1747 = vsel %vm1709, %v1669, 0
        %v1750 = vsel %vm1709, %v1670, 0
        %v1753 = vsel %vm1709, %v1671, 0
        %v1756 = vsel %vm1709, %v1672, 0
        %1758 = vmatprep.subr.bf16.mxu0 0
        %1759 = vmatpush1.bf16.msra.mxu0 0
        %1760 = vmatprep.subr.bf16.mxu0 0
        %1761 = vmatpush1.bf16.msra.mxu0 0
        %1762 = vmatprep.subr.bf16.mxu0 0
        %1763 = vmatpush1.bf16.msra.mxu0 %v1702
        %1764 = vmatprep.subr.bf16.mxu0 0
        %1765 = vmatpush1.bf16.msra.mxu0 %v1701
        %1766 = vmatprep.subr.bf16.mxu0 0
        %1767 = vmatpush1.bf16.msra.mxu0 %v1700
        %1768 = vmatprep.subr.bf16.mxu0 0
        %1769 = vmatpush1.bf16.msra.mxu0 %v1699
        %1770 = vmatprep.subr.bf16.mxu0 0
        %1771 = vmatpush1.bf16.msra.mxu0 %v1698
        %1772 = vmatprep.subr.bf16.mxu0 0
        %1773 = vmatpush1.bf16.msra.mxu0 %v1697
        %1774 = vmatprep.subr.bf16.mxu0 0
        %1775 = vmatpush2.bf16.msra.mxu0 0
        %1776 = vmatprep.subr.bf16.mxu0 0
        %1777 = vmatpush2.bf16.msra.mxu0 0
        %1778 = vmatprep.subr.bf16.mxu0 0
        %1779 = vmatpush2.bf16.msra.mxu0 0
        %1780 = vmatprep.subr.bf16.mxu0 0
        %1781 = vmatpush2.bf16.msra.mxu0 0
        %1782 = vmatprep.subr.bf16.mxu0 0
        %1783 = vmatpush2.bf16.msra.mxu0 0
        %1784 = vmatprep.subr.bf16.mxu0 0
        %1785 = vmatpush2.bf16.msra.mxu0 0
        %1786 = vmatprep.subr.bf16.mxu0 0
        %1787 = vmatpush2.bf16.msra.mxu0 0
        %1788 = vmatprep.subr.bf16.mxu0 0
        %1789 = vmatpush2.bf16.msra.mxu0 0
        %1790 = vmatprep.mubr.bf16.mxu0 0
        %1791 = vmatmul.mubr.bf16.gmra.mxu0 %v1711
        %v1792 = vpop.f32.mrf.mxu0
        %v1793 = vadd.f32 0.0, %v1792
        %v1794 = vpop.f32.mrf.mxu0
        %v1795 = vpop.f32.mrf.mxu0
        %v1796 = vadd.f32 0.0, %v1795
        %v1797 = vpop.f32.mrf.mxu0
        %1798 = vmatprep.mubr.bf16.mxu0 0
        %1799 = vmatmul.mubr.bf16.gmra.mxu0 %v1714
        %v1800 = vpop.f32.mrf.mxu0
        %v1801 = vadd.f32 0.0, %v1800
        %v1802 = vpop.f32.mrf.mxu0
        %v1803 = vpop.f32.mrf.mxu0
        %v1804 = vadd.f32 0.0, %v1803
        %v1805 = vpop.f32.mrf.mxu0
        %1806 = vmatprep.mubr.bf16.mxu0 0
        %1807 = vmatmul.mubr.bf16.gmra.mxu0 %v1717
        %v1808 = vpop.f32.mrf.mxu0
        %v1809 = vadd.f32 0.0, %v1808
        %v1810 = vpop.f32.mrf.mxu0
        %v1811 = vpop.f32.mrf.mxu0
        %v1812 = vadd.f32 0.0, %v1811
        %v1813 = vpop.f32.mrf.mxu0
        %1814 = vmatprep.mubr.bf16.mxu0 0
        %1815 = vmatmul.mubr.bf16.gmra.mxu0 %v1720
        %v1816 = vpop.f32.mrf.mxu0
        %v1817 = vadd.f32 0.0, %v1816
        %v1818 = vpop.f32.mrf.mxu0
        %v1819 = vpop.f32.mrf.mxu0
        %v1820 = vadd.f32 0.0, %v1819
        %v1821 = vpop.f32.mrf.mxu0
        %1822 = vmatprep.mubr.bf16.mxu0 0
        %1823 = vmatmul.mubr.bf16.gmra.mxu0 %v1723
        %v1824 = vpop.f32.mrf.mxu0
        %v1825 = vadd.f32 0.0, %v1824
        %v1826 = vpop.f32.mrf.mxu0
        %v1827 = vpop.f32.mrf.mxu0
        %v1828 = vadd.f32 0.0, %v1827
        %v1829 = vpop.f32.mrf.mxu0
        %1830 = vmatprep.mubr.bf16.mxu0 0
        %1831 = vmatmul.mubr.bf16.gmra.mxu0 %v1726
        %v1832 = vpop.f32.mrf.mxu0
        %v1833 = vadd.f32 0.0, %v1832
        %v1834 = vpop.f32.mrf.mxu0
        %v1835 = vpop.f32.mrf.mxu0
        %v1836 = vadd.f32 0.0, %v1835
        %v1837 = vpop.f32.mrf.mxu0
        %1838 = vmatprep.mubr.bf16.mxu0 0
        %1839 = vmatmul.mubr.bf16.gmra.mxu0 %v1729
        %v1840 = vpop.f32.mrf.mxu0
        %v1841 = vadd.f32 0.0, %v1840
        %v1842 = vpop.f32.mrf.mxu0
        %v1843 = vpop.f32.mrf.mxu0
        %v1844 = vadd.f32 0.0, %v1843
        %v1845 = vpop.f32.mrf.mxu0
        %1846 = vmatprep.mubr.bf16.mxu0 0
        %1847 = vmatmul.mubr.bf16.gmra.mxu0 %v1732
        %v1848 = vpop.f32.mrf.mxu0
        %v1849 = vadd.f32 0.0, %v1848
        %v1850 = vpop.f32.mrf.mxu0
        %v1851 = vpop.f32.mrf.mxu0
        %v1852 = vadd.f32 0.0, %v1851
        %v1853 = vpop.f32.mrf.mxu0
        %1854 = vmatprep.mubr.bf16.mxu0 0
        %1855 = vmatmul.mubr.bf16.gmra.mxu0 %v1735
        %v1856 = vpop.f32.mrf.mxu0
        %v1857 = vadd.f32 0.0, %v1856
        %v1858 = vpop.f32.mrf.mxu0
        %v1859 = vpop.f32.mrf.mxu0
        %v1860 = vadd.f32 0.0, %v1859
        %v1861 = vpop.f32.mrf.mxu0
        %1862 = vmatprep.mubr.bf16.mxu0 0
        %1863 = vmatmul.mubr.bf16.gmra.mxu0 %v1738
        %v1864 = vpop.f32.mrf.mxu0
        %v1865 = vadd.f32 0.0, %v1864
        %v1866 = vpop.f32.mrf.mxu0
        %v1867 = vpop.f32.mrf.mxu0
        %v1868 = vadd.f32 0.0, %v1867
        %v1869 = vpop.f32.mrf.mxu0
        %1870 = vmatprep.mubr.bf16.mxu0 0
        %1871 = vmatmul.mubr.bf16.gmra.mxu0 %v1741
        %v1872 = vpop.f32.mrf.mxu0
        %v1873 = vadd.f32 0.0, %v1872
        %v1874 = vpop.f32.mrf.mxu0
        %v1875 = vpop.f32.mrf.mxu0
        %v1876 = vadd.f32 0.0, %v1875
        %v1877 = vpop.f32.mrf.mxu0
        %1878 = vmatprep.mubr.bf16.mxu0 0
        %1879 = vmatmul.mubr.bf16.gmra.mxu0 %v1744
        %v1880 = vpop.f32.mrf.mxu0
        %v1881 = vadd.f32 0.0, %v1880
        %v1882 = vpop.f32.mrf.mxu0
        %v1883 = vpop.f32.mrf.mxu0
        %v1884 = vadd.f32 0.0, %v1883
        %v1885 = vpop.f32.mrf.mxu0
        %1886 = vmatprep.mubr.bf16.mxu0 0
        %1887 = vmatmul.mubr.bf16.gmra.mxu0 %v1747
        %v1888 = vpop.f32.mrf.mxu0
        %v1889 = vadd.f32 0.0, %v1888
        %v1890 = vpop.f32.mrf.mxu0
        %v1891 = vpop.f32.mrf.mxu0
        %v1892 = vadd.f32 0.0, %v1891
        %v1893 = vpop.f32.mrf.mxu0
        %1894 = vmatprep.mubr.bf16.mxu0 0
        %1895 = vmatmul.mubr.bf16.gmra.mxu0 %v1750
        %v1896 = vpop.f32.mrf.mxu0
        %v1897 = vadd.f32 0.0, %v1896
        %v1898 = vpop.f32.mrf.mxu0
        %v1899 = vpop.f32.mrf.mxu0
        %v1900 = vadd.f32 0.0, %v1899
        %v1901 = vpop.f32.mrf.mxu0
        %1902 = vmatprep.mubr.bf16.mxu0 0
        %1903 = vmatmul.mubr.bf16.gmra.mxu0 %v1753
        %v1904 = vpop.f32.mrf.mxu0
        %v1905 = vadd.f32 0.0, %v1904
        %v1906 = vpop.f32.mrf.mxu0
        %v1907 = vpop.f32.mrf.mxu0
        %v1908 = vadd.f32 0.0, %v1907
        %v1909 = vpop.f32.mrf.mxu0
        %1910 = vmatprep.mubr.bf16.mxu0 0
        %1911 = vmatmul.mubr.bf16.gmra.mxu0 %v1756
        %v1912 = vpop.f32.mrf.mxu0
        %v1913 = vadd.f32 0.0, %v1912
        %v1914 = vpop.f32.mrf.mxu0
        %v1915 = vpop.f32.mrf.mxu0
        %v1916 = vadd.f32 0.0, %v1915
        %v1917 = vpop.f32.mrf.mxu0
        %1918 = vdwg.mxu0
        %v1951 = vunpack.c.l.b16 %v1504
        %v1952 = vunpack.c.l.b16 %v1505
        %v1953 = vunpack.c.l.b16 %v1506
        %v1954 = vunpack.c.l.b16 %v1507
        %v1955 = vunpack.c.l.b16 %v1508
        %v1956 = vunpack.c.l.b16 %v1509
        %v1957 = vunpack.c.l.b16 %v1510
        %v1958 = vunpack.c.l.b16 %v1511
        %v1959 = vunpack.c.l.b16 %v1512
        %v1960 = vunpack.c.l.b16 %v1513
        %v1961 = vunpack.c.l.b16 %v1514
        %v1962 = vunpack.c.l.b16 %v1515
        %v1963 = vunpack.c.l.b16 %v1516
        %v1964 = vunpack.c.l.b16 %v1517
        %v1965 = vunpack.c.l.b16 %v1518
        %v1966 = vunpack.c.l.b16 %v1519
        %v1967 = vunpack.c.l.b16 %v1520
        %v1968 = vunpack.c.l.b16 %v1521
        %v1969 = vunpack.c.l.b16 %v1522
        %v1970 = vunpack.c.l.b16 %v1523
        %v1971 = vunpack.c.l.b16 %v1524
        %v1972 = vunpack.c.l.b16 %v1525
        %v1973 = vunpack.c.l.b16 %v1526
        %v1974 = vunpack.c.l.b16 %v1527
        %v1975 = vunpack.c.l.b16 %v1528
        %v1976 = vunpack.c.l.b16 %v1529
        %v1977 = vunpack.c.l.b16 %v1530
        %v1978 = vunpack.c.l.b16 %v1531
        %v1979 = vunpack.c.l.b16 %v1532
        %v1980 = vunpack.c.l.b16 %v1533
        %v1981 = vunpack.c.l.b16 %v1534
        %v1982 = vunpack.c.l.b16 %v1535
        %v1983 = vpack.c.b16 %v1952, %v1951
        %v1984 = vpack.c.b16 %v1954, %v1953
        %v1985 = vpack.c.b16 %v1956, %v1955
        %v1986 = vpack.c.b16 %v1958, %v1957
        %v1987 = vpack.c.b16 %v1960, %v1959
        %v1988 = vpack.c.b16 %v1962, %v1961
        %v1989 = vpack.c.b16 %v1964, %v1963
        %v1990 = vpack.c.b16 %v1966, %v1965
        %v1991 = vpack.c.b16 %v1968, %v1967
        %v1992 = vpack.c.b16 %v1970, %v1969
        %v1993 = vpack.c.b16 %v1972, %v1971
        %v1994 = vpack.c.b16 %v1974, %v1973
        %v1995 = vpack.c.b16 %v1976, %v1975
        %v1996 = vpack.c.b16 %v1978, %v1977
        %v1997 = vpack.c.b16 %v1980, %v1979
        %v1998 = vpack.c.b16 %v1982, %v1981
        %v2011 = vunpack.c.l.b16 %v1536
        %v2012 = vunpack.c.l.b16 %v1537
        %v2013 = vunpack.c.l.b16 %v1538
        %v2014 = vunpack.c.l.b16 %v1539
        %v2015 = vunpack.c.l.b16 %v1540
        %v2016 = vunpack.c.l.b16 %v1541
        %v2017 = vunpack.c.l.b16 %v1542
        %v2018 = vunpack.c.l.b16 %v1543
        %v2019 = vunpack.c.l.b16 %v1544
        %v2020 = vunpack.c.l.b16 %v1545
        %v2021 = vunpack.c.l.b16 %v1546
        %v2022 = vunpack.c.l.b16 %v1547
        %v2023 = vpack.c.b16 %v2012, %v2011
        %v2024 = vpack.c.b16 %v2014, %v2013
        %v2025 = vpack.c.b16 %v2016, %v2015
        %v2026 = vpack.c.b16 %v2018, %v2017
        %v2027 = vpack.c.b16 %v2020, %v2019
        %v2028 = vpack.c.b16 %v2022, %v2021
        %v2036 = vsel %vm1709, %v1983, 0
        %v2039 = vsel %vm1709, %v1984, 0
        %v2042 = vsel %vm1709, %v1985, 0
        %v2045 = vsel %vm1709, %v1986, 0
        %v2048 = vsel %vm1709, %v1987, 0
        %v2051 = vsel %vm1709, %v1988, 0
        %v2054 = vsel %vm1709, %v1989, 0
        %v2057 = vsel %vm1709, %v1990, 0
        %v2060 = vsel %vm1709, %v1991, 0
        %v2063 = vsel %vm1709, %v1992, 0
        %v2066 = vsel %vm1709, %v1993, 0
        %v2069 = vsel %vm1709, %v1994, 0
        %v2072 = vsel %vm1709, %v1995, 0
        %v2075 = vsel %vm1709, %v1996, 0
        %v2078 = vsel %vm1709, %v1997, 0
        %v2081 = vsel %vm1709, %v1998, 0
        %2083 = vmatprep.subr.bf16.mxu0 0
        %2084 = vmatpush1.bf16.msra.mxu0 0
        %2085 = vmatprep.subr.bf16.mxu0 0
        %2086 = vmatpush1.bf16.msra.mxu0 0
        %2087 = vmatprep.subr.bf16.mxu0 0
        %2088 = vmatpush1.bf16.msra.mxu0 %v2028
        %2089 = vmatprep.subr.bf16.mxu0 0
        %2090 = vmatpush1.bf16.msra.mxu0 %v2027
        %2091 = vmatprep.subr.bf16.mxu0 0
        %2092 = vmatpush1.bf16.msra.mxu0 %v2026
        %2093 = vmatprep.subr.bf16.mxu0 0
        %2094 = vmatpush1.bf16.msra.mxu0 %v2025
        %2095 = vmatprep.subr.bf16.mxu0 0
        %2096 = vmatpush1.bf16.msra.mxu0 %v2024
        %2097 = vmatprep.subr.bf16.mxu0 0
        %2098 = vmatpush1.bf16.msra.mxu0 %v2023
        %2099 = vmatprep.subr.bf16.mxu0 0
        %2100 = vmatpush2.bf16.msra.mxu0 0
        %2101 = vmatprep.subr.bf16.mxu0 0
        %2102 = vmatpush2.bf16.msra.mxu0 0
        %2103 = vmatprep.subr.bf16.mxu0 0
        %2104 = vmatpush2.bf16.msra.mxu0 0
        %2105 = vmatprep.subr.bf16.mxu0 0
        %2106 = vmatpush2.bf16.msra.mxu0 0
        %2107 = vmatprep.subr.bf16.mxu0 0
        %2108 = vmatpush2.bf16.msra.mxu0 0
        %2109 = vmatprep.subr.bf16.mxu0 0
        %2110 = vmatpush2.bf16.msra.mxu0 0
        %2111 = vmatprep.subr.bf16.mxu0 0
        %2112 = vmatpush2.bf16.msra.mxu0 0
        %2113 = vmatprep.subr.bf16.mxu0 0
        %2114 = vmatpush2.bf16.msra.mxu0 0
        %2115 = vmatprep.mubr.bf16.mxu0 0
        %2116 = vmatmul.mubr.bf16.gmra.mxu0 %v2036
        %v2117 = vpop.f32.mrf.mxu0
        %v2118 = vadd.f32 %v1793, %v2117
        %v2119 = vpop.f32.mrf.mxu0
        %v2120 = vpop.f32.mrf.mxu0
        %v2121 = vadd.f32 %v1796, %v2120
        %v2122 = vpop.f32.mrf.mxu0
        %2123 = vmatprep.mubr.bf16.mxu0 0
        %2124 = vmatmul.mubr.bf16.gmra.mxu0 %v2039
        %v2125 = vpop.f32.mrf.mxu0
        %v2126 = vadd.f32 %v1801, %v2125
        %v2127 = vpop.f32.mrf.mxu0
        %v2128 = vpop.f32.mrf.mxu0
        %v2129 = vadd.f32 %v1804, %v2128
        %v2130 = vpop.f32.mrf.mxu0
        %2131 = vmatprep.mubr.bf16.mxu0 0
        %2132 = vmatmul.mubr.bf16.gmra.mxu0 %v2042
        %v2133 = vpop.f32.mrf.mxu0
        %v2134 = vadd.f32 %v1809, %v2133
        %v2135 = vpop.f32.mrf.mxu0
        %v2136 = vpop.f32.mrf.mxu0
        %v2137 = vadd.f32 %v1812, %v2136
        %v2138 = vpop.f32.mrf.mxu0
        %2139 = vmatprep.mubr.bf16.mxu0 0
        %2140 = vmatmul.mubr.bf16.gmra.mxu0 %v2045
        %v2141 = vpop.f32.mrf.mxu0
        %v2142 = vadd.f32 %v1817, %v2141
        %v2143 = vpop.f32.mrf.mxu0
        %v2144 = vpop.f32.mrf.mxu0
        %v2145 = vadd.f32 %v1820, %v2144
        %v2146 = vpop.f32.mrf.mxu0
        %2147 = vmatprep.mubr.bf16.mxu0 0
        %2148 = vmatmul.mubr.bf16.gmra.mxu0 %v2048
        %v2149 = vpop.f32.mrf.mxu0
        %v2150 = vadd.f32 %v1825, %v2149
        %v2151 = vpop.f32.mrf.mxu0
        %v2152 = vpop.f32.mrf.mxu0
        %v2153 = vadd.f32 %v1828, %v2152
        %v2154 = vpop.f32.mrf.mxu0
        %2155 = vmatprep.mubr.bf16.mxu0 0
        %2156 = vmatmul.mubr.bf16.gmra.mxu0 %v2051
        %v2157 = vpop.f32.mrf.mxu0
        %v2158 = vadd.f32 %v1833, %v2157
        %v2159 = vpop.f32.mrf.mxu0
        %v2160 = vpop.f32.mrf.mxu0
        %v2161 = vadd.f32 %v1836, %v2160
        %v2162 = vpop.f32.mrf.mxu0
        %2163 = vmatprep.mubr.bf16.mxu0 0
        %2164 = vmatmul.mubr.bf16.gmra.mxu0 %v2054
        %v2165 = vpop.f32.mrf.mxu0
        %v2166 = vadd.f32 %v1841, %v2165
        %v2167 = vpop.f32.mrf.mxu0
        %v2168 = vpop.f32.mrf.mxu0
        %v2169 = vadd.f32 %v1844, %v2168
        %v2170 = vpop.f32.mrf.mxu0
        %2171 = vmatprep.mubr.bf16.mxu0 0
        %2172 = vmatmul.mubr.bf16.gmra.mxu0 %v2057
        %v2173 = vpop.f32.mrf.mxu0
        %v2174 = vadd.f32 %v1849, %v2173
        %v2175 = vpop.f32.mrf.mxu0
        %v2176 = vpop.f32.mrf.mxu0
        %v2177 = vadd.f32 %v1852, %v2176
        %v2178 = vpop.f32.mrf.mxu0
        %2179 = vmatprep.mubr.bf16.mxu0 0
        %2180 = vmatmul.mubr.bf16.gmra.mxu0 %v2060
        %v2181 = vpop.f32.mrf.mxu0
        %v2182 = vadd.f32 %v1857, %v2181
        %v2183 = vpop.f32.mrf.mxu0
        %v2184 = vpop.f32.mrf.mxu0
        %v2185 = vadd.f32 %v1860, %v2184
        %v2186 = vpop.f32.mrf.mxu0
        %2187 = vmatprep.mubr.bf16.mxu0 0
        %2188 = vmatmul.mubr.bf16.gmra.mxu0 %v2063
        %v2189 = vpop.f32.mrf.mxu0
        %v2190 = vadd.f32 %v1865, %v2189
        %v2191 = vpop.f32.mrf.mxu0
        %v2192 = vpop.f32.mrf.mxu0
        %v2193 = vadd.f32 %v1868, %v2192
        %v2194 = vpop.f32.mrf.mxu0
        %2195 = vmatprep.mubr.bf16.mxu0 0
        %2196 = vmatmul.mubr.bf16.gmra.mxu0 %v2066
        %v2197 = vpop.f32.mrf.mxu0
        %v2198 = vadd.f32 %v1873, %v2197
        %v2199 = vpop.f32.mrf.mxu0
        %v2200 = vpop.f32.mrf.mxu0
        %v2201 = vadd.f32 %v1876, %v2200
        %v2202 = vpop.f32.mrf.mxu0
        %2203 = vmatprep.mubr.bf16.mxu0 0
        %2204 = vmatmul.mubr.bf16.gmra.mxu0 %v2069
        %v2205 = vpop.f32.mrf.mxu0
        %v2206 = vadd.f32 %v1881, %v2205
        %v2207 = vpop.f32.mrf.mxu0
        %v2208 = vpop.f32.mrf.mxu0
        %v2209 = vadd.f32 %v1884, %v2208
        %v2210 = vpop.f32.mrf.mxu0
        %2211 = vmatprep.mubr.bf16.mxu0 0
        %2212 = vmatmul.mubr.bf16.gmra.mxu0 %v2072
        %v2213 = vpop.f32.mrf.mxu0
        %v2214 = vadd.f32 %v1889, %v2213
        %v2215 = vpop.f32.mrf.mxu0
        %v2216 = vpop.f32.mrf.mxu0
        %v2217 = vadd.f32 %v1892, %v2216
        %v2218 = vpop.f32.mrf.mxu0
        %2219 = vmatprep.mubr.bf16.mxu0 0
        %2220 = vmatmul.mubr.bf16.gmra.mxu0 %v2075
        %v2221 = vpop.f32.mrf.mxu0
        %v2222 = vadd.f32 %v1897, %v2221
        %v2223 = vpop.f32.mrf.mxu0
        %v2224 = vpop.f32.mrf.mxu0
        %v2225 = vadd.f32 %v1900, %v2224
        %v2226 = vpop.f32.mrf.mxu0
        %2227 = vmatprep.mubr.bf16.mxu0 0
        %2228 = vmatmul.mubr.bf16.gmra.mxu0 %v2078
        %v2229 = vpop.f32.mrf.mxu0
        %v2230 = vadd.f32 %v1905, %v2229
        %v2231 = vpop.f32.mrf.mxu0
        %v2232 = vpop.f32.mrf.mxu0
        %v2233 = vadd.f32 %v1908, %v2232
        %v2234 = vpop.f32.mrf.mxu0
        %2235 = vmatprep.mubr.bf16.mxu0 0
        %2236 = vmatmul.mubr.bf16.gmra.mxu0 %v2081
        %v2237 = vpop.f32.mrf.mxu0
        %v2238 = vadd.f32 %v1913, %v2237
        %v2239 = vpop.f32.mrf.mxu0
        %v2240 = vpop.f32.mrf.mxu0
        %v2241 = vadd.f32 %v1916, %v2240
        %v2242 = vpop.f32.mrf.mxu0
        %2243 = vdwg.mxu0
        %s2244 = scalar_lea.vmem [#allocation2], 16
        %v2245 = vld [vmem:[%s2244] sm:$0xf]
        %v2246 = vld [vmem:[%s2244 + $0x4] sm:$0xf]
        %v2247 = vld [vmem:[%s2244 + $0x8] sm:$0xf]
        %v2248 = vld [vmem:[%s2244 + $0xc] sm:$0xf]
        %v2249 = vld [vmem:[%s2244 + $0x10] sm:$0xf]
        %v2250 = vld [vmem:[%s2244 + $0x14] sm:$0xf]
        %v2251 = vld [vmem:[%s2244 + $0x18] sm:$0xf]
        %v2252 = vld [vmem:[%s2244 + $0x1c] sm:$0xf]
        %v2253 = vld [vmem:[%s2244 + $0x20] sm:$0xf]
        %v2254 = vld [vmem:[%s2244 + $0x24] sm:$0xf]
        %v2255 = vld [vmem:[%s2244 + $0x28] sm:$0xf]
        %v2256 = vld [vmem:[%s2244 + $0x2c] sm:$0xf]
        %v2257 = vld [vmem:[%s2244 + $0x30] sm:$0xf]
        %v2258 = vld [vmem:[%s2244 + $0x34] sm:$0xf]
        %v2259 = vld [vmem:[%s2244 + $0x38] sm:$0xf]
        %v2260 = vld [vmem:[%s2244 + $0x3c] sm:$0xf]
        %v2261 = vld [vmem:[%s2244 + $0x40] sm:$0xf]
        %v2262 = vld [vmem:[%s2244 + $0x44] sm:$0xf]
        %v2263 = vld [vmem:[%s2244 + $0x48] sm:$0xf]
        %v2264 = vld [vmem:[%s2244 + $0x4c] sm:$0xf]
        %v2265 = vld [vmem:[%s2244 + $0x50] sm:$0xf]
        %v2266 = vld [vmem:[%s2244 + $0x54] sm:$0xf]
        %v2267 = vld [vmem:[%s2244 + $0x58] sm:$0xf]
        %v2268 = vld [vmem:[%s2244 + $0x5c] sm:$0xf]
        %v2269 = vld [vmem:[%s2244 + $0x60] sm:$0xf]
        %v2270 = vld [vmem:[%s2244 + $0x64] sm:$0xf]
        %v2271 = vld [vmem:[%s2244 + $0x68] sm:$0xf]
        %v2272 = vld [vmem:[%s2244 + $0x6c] sm:$0xf]
        %v2273 = vld [vmem:[%s2244 + $0x70] sm:$0xf]
        %v2274 = vld [vmem:[%s2244 + $0x74] sm:$0xf]
        %v2275 = vld [vmem:[%s2244 + $0x78] sm:$0xf]
        %v2276 = vld [vmem:[%s2244 + $0x7c] sm:$0xf]
        %s2277 = scalar_lea.vmem %s1, 96
        %v2278 = vld [vmem:[%s2277] sm:$0xf]
        %v2279 = vld [vmem:[%s2277 + $0x4] sm:$0xf]
        %v2280 = vld [vmem:[%s2277 + $0x8] sm:$0xf]
        %v2281 = vld [vmem:[%s2277 + $0xc] sm:$0xf]
        %v2282 = vld [vmem:[%s2277 + $0x10] sm:$0xf]
        %v2283 = vld [vmem:[%s2277 + $0x14] sm:$0xf]
        %v2284 = vld [vmem:[%s2277 + $0x18] sm:$0xf]
        %v2285 = vld [vmem:[%s2277 + $0x1c] sm:$0xf]
        %v2286 = vld [vmem:[%s2277 + $0x20] sm:$0xf]
        %v2287 = vld [vmem:[%s2277 + $0x24] sm:$0xf]
        %v2288 = vld [vmem:[%s2277 + $0x28] sm:$0xf]
        %v2289 = vld [vmem:[%s2277 + $0x2c] sm:$0xf]
        %v2322 = vunpack.c.l.b16 %v2245
        %v2323 = vunpack.c.l.b16 %v2246
        %v2324 = vunpack.c.l.b16 %v2247
        %v2325 = vunpack.c.l.b16 %v2248
        %v2326 = vunpack.c.l.b16 %v2249
        %v2327 = vunpack.c.l.b16 %v2250
        %v2328 = vunpack.c.l.b16 %v2251
        %v2329 = vunpack.c.l.b16 %v2252
        %v2330 = vunpack.c.l.b16 %v2253
        %v2331 = vunpack.c.l.b16 %v2254
        %v2332 = vunpack.c.l.b16 %v2255
        %v2333 = vunpack.c.l.b16 %v2256
        %v2334 = vunpack.c.l.b16 %v2257
        %v2335 = vunpack.c.l.b16 %v2258
        %v2336 = vunpack.c.l.b16 %v2259
        %v2337 = vunpack.c.l.b16 %v2260
        %v2338 = vunpack.c.l.b16 %v2261
        %v2339 = vunpack.c.l.b16 %v2262
        %v2340 = vunpack.c.l.b16 %v2263
        %v2341 = vunpack.c.l.b16 %v2264
        %v2342 = vunpack.c.l.b16 %v2265
        %v2343 = vunpack.c.l.b16 %v2266
        %v2344 = vunpack.c.l.b16 %v2267
        %v2345 = vunpack.c.l.b16 %v2268
        %v2346 = vunpack.c.l.b16 %v2269
        %v2347 = vunpack.c.l.b16 %v2270
        %v2348 = vunpack.c.l.b16 %v2271
        %v2349 = vunpack.c.l.b16 %v2272
        %v2350 = vunpack.c.l.b16 %v2273
        %v2351 = vunpack.c.l.b16 %v2274
        %v2352 = vunpack.c.l.b16 %v2275
        %v2353 = vunpack.c.l.b16 %v2276
        %v2354 = vpack.c.b16 %v2323, %v2322
        %v2355 = vpack.c.b16 %v2325, %v2324
        %v2356 = vpack.c.b16 %v2327, %v2326
        %v2357 = vpack.c.b16 %v2329, %v2328
        %v2358 = vpack.c.b16 %v2331, %v2330
        %v2359 = vpack.c.b16 %v2333, %v2332
        %v2360 = vpack.c.b16 %v2335, %v2334
        %v2361 = vpack.c.b16 %v2337, %v2336
        %v2362 = vpack.c.b16 %v2339, %v2338
        %v2363 = vpack.c.b16 %v2341, %v2340
        %v2364 = vpack.c.b16 %v2343, %v2342
        %v2365 = vpack.c.b16 %v2345, %v2344
        %v2366 = vpack.c.b16 %v2347, %v2346
        %v2367 = vpack.c.b16 %v2349, %v2348
        %v2368 = vpack.c.b16 %v2351, %v2350
        %v2369 = vpack.c.b16 %v2353, %v2352
        %v2382 = vunpack.c.l.b16 %v2278
        %v2383 = vunpack.c.l.b16 %v2279
        %v2384 = vunpack.c.l.b16 %v2280
        %v2385 = vunpack.c.l.b16 %v2281
        %v2386 = vunpack.c.l.b16 %v2282
        %v2387 = vunpack.c.l.b16 %v2283
        %v2388 = vunpack.c.l.b16 %v2284
        %v2389 = vunpack.c.l.b16 %v2285
        %v2390 = vunpack.c.l.b16 %v2286
        %v2391 = vunpack.c.l.b16 %v2287
        %v2392 = vunpack.c.l.b16 %v2288
        %v2393 = vunpack.c.l.b16 %v2289
        %v2394 = vpack.c.b16 %v2383, %v2382
        %v2395 = vpack.c.b16 %v2385, %v2384
        %v2396 = vpack.c.b16 %v2387, %v2386
        %v2397 = vpack.c.b16 %v2389, %v2388
        %v2398 = vpack.c.b16 %v2391, %v2390
        %v2399 = vpack.c.b16 %v2393, %v2392
        %v2407 = vsel %vm1709, %v2354, 0
        %v2410 = vsel %vm1709, %v2355, 0
        %v2413 = vsel %vm1709, %v2356, 0
        %v2416 = vsel %vm1709, %v2357, 0
        %v2419 = vsel %vm1709, %v2358, 0
        %v2422 = vsel %vm1709, %v2359, 0
        %v2425 = vsel %vm1709, %v2360, 0
        %v2428 = vsel %vm1709, %v2361, 0
        %v2431 = vsel %vm1709, %v2362, 0
        %v2434 = vsel %vm1709, %v2363, 0
        %v2437 = vsel %vm1709, %v2364, 0
        %v2440 = vsel %vm1709, %v2365, 0
        %v2443 = vsel %vm1709, %v2366, 0
        %v2446 = vsel %vm1709, %v2367, 0
        %v2449 = vsel %vm1709, %v2368, 0
        %v2452 = vsel %vm1709, %v2369, 0
        %2454 = vmatprep.subr.bf16.mxu0 0
        %2455 = vmatpush1.bf16.msra.mxu0 0
        %2456 = vmatprep.subr.bf16.mxu0 0
        %2457 = vmatpush1.bf16.msra.mxu0 0
        %2458 = vmatprep.subr.bf16.mxu0 0
        %2459 = vmatpush1.bf16.msra.mxu0 %v2399
        %2460 = vmatprep.subr.bf16.mxu0 0
        %2461 = vmatpush1.bf16.msra.mxu0 %v2398
        %2462 = vmatprep.subr.bf16.mxu0 0
        %2463 = vmatpush1.bf16.msra.mxu0 %v2397
        %2464 = vmatprep.subr.bf16.mxu0 0
        %2465 = vmatpush1.bf16.msra.mxu0 %v2396
        %2466 = vmatprep.subr.bf16.mxu0 0
        %2467 = vmatpush1.bf16.msra.mxu0 %v2395
        %2468 = vmatprep.subr.bf16.mxu0 0
        %2469 = vmatpush1.bf16.msra.mxu0 %v2394
        %2470 = vmatprep.subr.bf16.mxu0 0
        %2471 = vmatpush2.bf16.msra.mxu0 0
        %2472 = vmatprep.subr.bf16.mxu0 0
        %2473 = vmatpush2.bf16.msra.mxu0 0
        %2474 = vmatprep.subr.bf16.mxu0 0
        %2475 = vmatpush2.bf16.msra.mxu0 0
        %2476 = vmatprep.subr.bf16.mxu0 0
        %2477 = vmatpush2.bf16.msra.mxu0 0
        %2478 = vmatprep.subr.bf16.mxu0 0
        %2479 = vmatpush2.bf16.msra.mxu0 0
        %2480 = vmatprep.subr.bf16.mxu0 0
        %2481 = vmatpush2.bf16.msra.mxu0 0
        %2482 = vmatprep.subr.bf16.mxu0 0
        %2483 = vmatpush2.bf16.msra.mxu0 0
        %2484 = vmatprep.subr.bf16.mxu0 0
        %2485 = vmatpush2.bf16.msra.mxu0 0
        %2486 = vmatprep.mubr.bf16.mxu0 0
        %2487 = vmatmul.mubr.bf16.gmra.mxu0 %v2407
        %v2488 = vpop.f32.mrf.mxu0
        %v2489 = vadd.f32 0.0, %v2488
        %v2490 = vpop.f32.mrf.mxu0
        %v2491 = vpop.f32.mrf.mxu0
        %v2492 = vadd.f32 0.0, %v2491
        %v2493 = vpop.f32.mrf.mxu0
        %2494 = vmatprep.mubr.bf16.mxu0 0
        %2495 = vmatmul.mubr.bf16.gmra.mxu0 %v2410
        %v2496 = vpop.f32.mrf.mxu0
        %v2497 = vadd.f32 0.0, %v2496
        %v2498 = vpop.f32.mrf.mxu0
        %v2499 = vpop.f32.mrf.mxu0
        %v2500 = vadd.f32 0.0, %v2499
        %v2501 = vpop.f32.mrf.mxu0
        %2502 = vmatprep.mubr.bf16.mxu0 0
        %2503 = vmatmul.mubr.bf16.gmra.mxu0 %v2413
        %v2504 = vpop.f32.mrf.mxu0
        %v2505 = vadd.f32 0.0, %v2504
        %v2506 = vpop.f32.mrf.mxu0
        %v2507 = vpop.f32.mrf.mxu0
        %v2508 = vadd.f32 0.0, %v2507
        %v2509 = vpop.f32.mrf.mxu0
        %2510 = vmatprep.mubr.bf16.mxu0 0
        %2511 = vmatmul.mubr.bf16.gmra.mxu0 %v2416
        %v2512 = vpop.f32.mrf.mxu0
        %v2513 = vadd.f32 0.0, %v2512
        %v2514 = vpop.f32.mrf.mxu0
        %v2515 = vpop.f32.mrf.mxu0
        %v2516 = vadd.f32 0.0, %v2515
        %v2517 = vpop.f32.mrf.mxu0
        %2518 = vmatprep.mubr.bf16.mxu0 0
        %2519 = vmatmul.mubr.bf16.gmra.mxu0 %v2419
        %v2520 = vpop.f32.mrf.mxu0
        %v2521 = vadd.f32 0.0, %v2520
        %v2522 = vpop.f32.mrf.mxu0
        %v2523 = vpop.f32.mrf.mxu0
        %v2524 = vadd.f32 0.0, %v2523
        %v2525 = vpop.f32.mrf.mxu0
        %2526 = vmatprep.mubr.bf16.mxu0 0
        %2527 = vmatmul.mubr.bf16.gmra.mxu0 %v2422
        %v2528 = vpop.f32.mrf.mxu0
        %v2529 = vadd.f32 0.0, %v2528
        %v2530 = vpop.f32.mrf.mxu0
        %v2531 = vpop.f32.mrf.mxu0
        %v2532 = vadd.f32 0.0, %v2531
        %v2533 = vpop.f32.mrf.mxu0
        %2534 = vmatprep.mubr.bf16.mxu0 0
        %2535 = vmatmul.mubr.bf16.gmra.mxu0 %v2425
        %v2536 = vpop.f32.mrf.mxu0
        %v2537 = vadd.f32 0.0, %v2536
        %v2538 = vpop.f32.mrf.mxu0
        %v2539 = vpop.f32.mrf.mxu0
        %v2540 = vadd.f32 0.0, %v2539
        %v2541 = vpop.f32.mrf.mxu0
        %2542 = vmatprep.mubr.bf16.mxu0 0
        %2543 = vmatmul.mubr.bf16.gmra.mxu0 %v2428
        %v2544 = vpop.f32.mrf.mxu0
        %v2545 = vadd.f32 0.0, %v2544
        %v2546 = vpop.f32.mrf.mxu0
        %v2547 = vpop.f32.mrf.mxu0
        %v2548 = vadd.f32 0.0, %v2547
        %v2549 = vpop.f32.mrf.mxu0
        %2550 = vmatprep.mubr.bf16.mxu0 0
        %2551 = vmatmul.mubr.bf16.gmra.mxu0 %v2431
        %v2552 = vpop.f32.mrf.mxu0
        %v2553 = vadd.f32 0.0, %v2552
        %v2554 = vpop.f32.mrf.mxu0
        %v2555 = vpop.f32.mrf.mxu0
        %v2556 = vadd.f32 0.0, %v2555
        %v2557 = vpop.f32.mrf.mxu0
        %2558 = vmatprep.mubr.bf16.mxu0 0
        %2559 = vmatmul.mubr.bf16.gmra.mxu0 %v2434
        %v2560 = vpop.f32.mrf.mxu0
        %v2561 = vadd.f32 0.0, %v2560
        %v2562 = vpop.f32.mrf.mxu0
        %v2563 = vpop.f32.mrf.mxu0
        %v2564 = vadd.f32 0.0, %v2563
        %v2565 = vpop.f32.mrf.mxu0
        %2566 = vmatprep.mubr.bf16.mxu0 0
        %2567 = vmatmul.mubr.bf16.gmra.mxu0 %v2437
        %v2568 = vpop.f32.mrf.mxu0
        %v2569 = vadd.f32 0.0, %v2568
        %v2570 = vpop.f32.mrf.mxu0
        %v2571 = vpop.f32.mrf.mxu0
        %v2572 = vadd.f32 0.0, %v2571
        %v2573 = vpop.f32.mrf.mxu0
        %2574 = vmatprep.mubr.bf16.mxu0 0
        %2575 = vmatmul.mubr.bf16.gmra.mxu0 %v2440
        %v2576 = vpop.f32.mrf.mxu0
        %v2577 = vadd.f32 0.0, %v2576
        %v2578 = vpop.f32.mrf.mxu0
        %v2579 = vpop.f32.mrf.mxu0
        %v2580 = vadd.f32 0.0, %v2579
        %v2581 = vpop.f32.mrf.mxu0
        %2582 = vmatprep.mubr.bf16.mxu0 0
        %2583 = vmatmul.mubr.bf16.gmra.mxu0 %v2443
        %v2584 = vpop.f32.mrf.mxu0
        %v2585 = vadd.f32 0.0, %v2584
        %v2586 = vpop.f32.mrf.mxu0
        %v2587 = vpop.f32.mrf.mxu0
        %v2588 = vadd.f32 0.0, %v2587
        %v2589 = vpop.f32.mrf.mxu0
        %2590 = vmatprep.mubr.bf16.mxu0 0
        %2591 = vmatmul.mubr.bf16.gmra.mxu0 %v2446
        %v2592 = vpop.f32.mrf.mxu0
        %v2593 = vadd.f32 0.0, %v2592
        %v2594 = vpop.f32.mrf.mxu0
        %v2595 = vpop.f32.mrf.mxu0
        %v2596 = vadd.f32 0.0, %v2595
        %v2597 = vpop.f32.mrf.mxu0
        %2598 = vmatprep.mubr.bf16.mxu0 0
        %2599 = vmatmul.mubr.bf16.gmra.mxu0 %v2449
        %v2600 = vpop.f32.mrf.mxu0
        %v2601 = vadd.f32 0.0, %v2600
        %v2602 = vpop.f32.mrf.mxu0
        %v2603 = vpop.f32.mrf.mxu0
        %v2604 = vadd.f32 0.0, %v2603
        %v2605 = vpop.f32.mrf.mxu0
        %2606 = vmatprep.mubr.bf16.mxu0 0
        %2607 = vmatmul.mubr.bf16.gmra.mxu0 %v2452
        %v2608 = vpop.f32.mrf.mxu0
        %v2609 = vadd.f32 0.0, %v2608
        %v2610 = vpop.f32.mrf.mxu0
        %v2611 = vpop.f32.mrf.mxu0
        %v2612 = vadd.f32 0.0, %v2611
        %v2613 = vpop.f32.mrf.mxu0
        %2614 = vdwg.mxu0
        %v2615 = vadd.f32 %v2118, %v2489
        %v2616 = vadd.f32 %v2121, %v2492
        %v2617 = vadd.f32 %v2126, %v2497
        %v2618 = vadd.f32 %v2129, %v2500
        %v2619 = vadd.f32 %v2134, %v2505
        %v2620 = vadd.f32 %v2137, %v2508
        %v2621 = vadd.f32 %v2142, %v2513
        %v2622 = vadd.f32 %v2145, %v2516
        %v2623 = vadd.f32 %v2150, %v2521
        %v2624 = vadd.f32 %v2153, %v2524
        %v2625 = vadd.f32 %v2158, %v2529
        %v2626 = vadd.f32 %v2161, %v2532
        %v2627 = vadd.f32 %v2166, %v2537
        %v2628 = vadd.f32 %v2169, %v2540
        %v2629 = vadd.f32 %v2174, %v2545
        %v2630 = vadd.f32 %v2177, %v2548
        %v2631 = vadd.f32 %v2182, %v2553
        %v2632 = vadd.f32 %v2185, %v2556
        %v2633 = vadd.f32 %v2190, %v2561
        %v2634 = vadd.f32 %v2193, %v2564
        %v2635 = vadd.f32 %v2198, %v2569
        %v2636 = vadd.f32 %v2201, %v2572
        %v2637 = vadd.f32 %v2206, %v2577
        %v2638 = vadd.f32 %v2209, %v2580
        %v2639 = vadd.f32 %v2214, %v2585
        %v2640 = vadd.f32 %v2217, %v2588
        %v2641 = vadd.f32 %v2222, %v2593
        %v2642 = vadd.f32 %v2225, %v2596
        %v2643 = vadd.f32 %v2230, %v2601
        %v2644 = vadd.f32 %v2233, %v2604
        %v2645 = vadd.f32 %v2238, %v2609
        %v2646 = vadd.f32 %v2241, %v2612
        %v2647 = vld [vmem:[%s2] sm:$0x1]
        %v2649 = vlaneseq
        %v2650 = vshrl.u32 %v2649, 7
        %v2651 = vsub.s32 0, %v2650
        %v2652 = vrot.slane %v2647, %v2651
        %v2654 = vmul.f32 %v2615, %v2652
        %v2655 = vmul.f32 %v2616, %v2652
        %v2656 = vmul.f32 %v2617, %v2652
        %v2657 = vmul.f32 %v2618, %v2652
        %v2658 = vmul.f32 %v2619, %v2652
        %v2659 = vmul.f32 %v2620, %v2652
        %v2660 = vmul.f32 %v2621, %v2652
        %v2661 = vmul.f32 %v2622, %v2652
        %v2662 = vmul.f32 %v2623, %v2652
        %v2663 = vmul.f32 %v2624, %v2652
        %v2664 = vmul.f32 %v2625, %v2652
        %v2665 = vmul.f32 %v2626, %v2652
        %v2666 = vmul.f32 %v2627, %v2652
        %v2667 = vmul.f32 %v2628, %v2652
        %v2668 = vmul.f32 %v2629, %v2652
        %v2669 = vmul.f32 %v2630, %v2652
        %v2670 = vmul.f32 %v2631, %v2652
        %v2671 = vmul.f32 %v2632, %v2652
        %v2672 = vmul.f32 %v2633, %v2652
        %v2673 = vmul.f32 %v2634, %v2652
        %v2674 = vmul.f32 %v2635, %v2652
        %v2675 = vmul.f32 %v2636, %v2652
        %v2676 = vmul.f32 %v2637, %v2652
        %v2677 = vmul.f32 %v2638, %v2652
        %v2678 = vmul.f32 %v2639, %v2652
        %v2679 = vmul.f32 %v2640, %v2652
        %v2680 = vmul.f32 %v2641, %v2652
        %v2681 = vmul.f32 %v2642, %v2652
        %v2682 = vmul.f32 %v2643, %v2652
        %v2683 = vmul.f32 %v2644, %v2652
        %v2684 = vmul.f32 %v2645, %v2652
        %v2685 = vmul.f32 %v2646, %v2652
        %v2686 = vld [vmem:[%s3] sm:$0x1]
        %v2688 = vlaneseq
        %v2689 = vshrl.u32 %v2688, 7
        %v2690 = vsub.s32 0, %v2689
        %v2691 = vrot.slane %v2686, %v2690
        %v2693 = vadd.f32 %v2654, %v2691
        %v2694 = vadd.f32 %v2655, %v2691
        %v2695 = vadd.f32 %v2656, %v2691
        %v2696 = vadd.f32 %v2657, %v2691
        %v2697 = vadd.f32 %v2658, %v2691
        %v2698 = vadd.f32 %v2659, %v2691
        %v2699 = vadd.f32 %v2660, %v2691
        %v2700 = vadd.f32 %v2661, %v2691
        %v2701 = vadd.f32 %v2662, %v2691
        %v2702 = vadd.f32 %v2663, %v2691
        %v2703 = vadd.f32 %v2664, %v2691
        %v2704 = vadd.f32 %v2665, %v2691
        %v2705 = vadd.f32 %v2666, %v2691
        %v2706 = vadd.f32 %v2667, %v2691
        %v2707 = vadd.f32 %v2668, %v2691
        %v2708 = vadd.f32 %v2669, %v2691
        %v2709 = vadd.f32 %v2670, %v2691
        %v2710 = vadd.f32 %v2671, %v2691
        %v2711 = vadd.f32 %v2672, %v2691
        %v2712 = vadd.f32 %v2673, %v2691
        %v2713 = vadd.f32 %v2674, %v2691
        %v2714 = vadd.f32 %v2675, %v2691
        %v2715 = vadd.f32 %v2676, %v2691
        %v2716 = vadd.f32 %v2677, %v2691
        %v2717 = vadd.f32 %v2678, %v2691
        %v2718 = vadd.f32 %v2679, %v2691
        %v2719 = vadd.f32 %v2680, %v2691
        %v2720 = vadd.f32 %v2681, %v2691
        %v2721 = vadd.f32 %v2682, %v2691
        %v2722 = vadd.f32 %v2683, %v2691
        %v2723 = vadd.f32 %v2684, %v2691
        %v2724 = vadd.f32 %v2685, %v2691
        %v2725 = vmax.f32 %v2693, 0.0
        %v2726 = vmax.f32 %v2694, 0.0
        %v2727 = vmax.f32 %v2695, 0.0
        %v2728 = vmax.f32 %v2696, 0.0
        %v2729 = vmax.f32 %v2697, 0.0
        %v2730 = vmax.f32 %v2698, 0.0
        %v2731 = vmax.f32 %v2699, 0.0
        %v2732 = vmax.f32 %v2700, 0.0
        %v2733 = vmax.f32 %v2701, 0.0
        %v2734 = vmax.f32 %v2702, 0.0
        %v2735 = vmax.f32 %v2703, 0.0
        %v2736 = vmax.f32 %v2704, 0.0
        %v2737 = vmax.f32 %v2705, 0.0
        %v2738 = vmax.f32 %v2706, 0.0
        %v2739 = vmax.f32 %v2707, 0.0
        %v2740 = vmax.f32 %v2708, 0.0
        %v2741 = vmax.f32 %v2709, 0.0
        %v2742 = vmax.f32 %v2710, 0.0
        %v2743 = vmax.f32 %v2711, 0.0
        %v2744 = vmax.f32 %v2712, 0.0
        %v2745 = vmax.f32 %v2713, 0.0
        %v2746 = vmax.f32 %v2714, 0.0
        %v2747 = vmax.f32 %v2715, 0.0
        %v2748 = vmax.f32 %v2716, 0.0
        %v2749 = vmax.f32 %v2717, 0.0
        %v2750 = vmax.f32 %v2718, 0.0
        %v2751 = vmax.f32 %v2719, 0.0
        %v2752 = vmax.f32 %v2720, 0.0
        %v2753 = vmax.f32 %v2721, 0.0
        %v2754 = vmax.f32 %v2722, 0.0
        %v2755 = vmax.f32 %v2723, 0.0
        %v2756 = vmax.f32 %v2724, 0.0
        %v2757 = vpack.c.bf16 %v2726, %v2725
        %v2758 = vpack.c.bf16 %v2728, %v2727
        %v2759 = vpack.c.bf16 %v2730, %v2729
        %v2760 = vpack.c.bf16 %v2732, %v2731
        %v2761 = vpack.c.bf16 %v2734, %v2733
        %v2762 = vpack.c.bf16 %v2736, %v2735
        %v2763 = vpack.c.bf16 %v2738, %v2737
        %v2764 = vpack.c.bf16 %v2740, %v2739
        %v2765 = vpack.c.bf16 %v2742, %v2741
        %v2766 = vpack.c.bf16 %v2744, %v2743
        %v2767 = vpack.c.bf16 %v2746, %v2745
        %v2768 = vpack.c.bf16 %v2748, %v2747
        %v2769 = vpack.c.bf16 %v2750, %v2749
        %v2770 = vpack.c.bf16 %v2752, %v2751
        %v2771 = vpack.c.bf16 %v2754, %v2753
        %v2772 = vpack.c.bf16 %v2756, %v2755
        %2773 = vst.msk [vmem:[#allocation3] sm:$0xf] %vm298, 0
        %2774 = vst.msk [vmem:[#allocation3 + $0x4] sm:$0xf] %vm298, 0
        %s2775 = scalar_lea.vmem [#allocation3], 136
        %2776 = vst.msk [vmem:[%s2775] sm:$0xf] %vm298, 0
        %2777 = vst.msk [vmem:[%s2775 + $0x4] sm:$0xf] %vm298, 0
        %v2778 = vld [vmem:[#allocation3] sm:$0x1]
        %v2779 = vsel %vm306, 0, %v2778
        %2780 = vst [vmem:[#allocation3] sm:$0x1] %v2779
        %v2781 = vld [vmem:[#allocation3 + $0x8] sm:$0x1]
        %v2782 = vsel %vm306, 0, %v2781
        %2783 = vst [vmem:[#allocation3 + $0x8] sm:$0x1] %v2782
        %v2784 = vld [vmem:[#allocation3 + $0x10] sm:$0x1]
        %v2785 = vsel %vm306, 0, %v2784
        %2786 = vst [vmem:[#allocation3 + $0x10] sm:$0x1] %v2785
        %v2787 = vld [vmem:[#allocation3 + $0x18] sm:$0x1]
        %v2788 = vsel %vm306, 0, %v2787
        %2789 = vst [vmem:[#allocation3 + $0x18] sm:$0x1] %v2788
        %v2790 = vld [vmem:[#allocation3 + $0x20] sm:$0x1]
        %v2791 = vsel %vm306, 0, %v2790
        %2792 = vst [vmem:[#allocation3 + $0x20] sm:$0x1] %v2791
        %v2793 = vld [vmem:[#allocation3 + $0x28] sm:$0x1]
        %v2794 = vsel %vm306, 0, %v2793
        %2795 = vst [vmem:[#allocation3 + $0x28] sm:$0x1] %v2794
        %v2796 = vld [vmem:[#allocation3 + $0x30] sm:$0x1]
        %v2797 = vsel %vm306, 0, %v2796
        %2798 = vst [vmem:[#allocation3 + $0x30] sm:$0x1] %v2797
        %v2799 = vld [vmem:[#allocation3 + $0x38] sm:$0x1]
        %v2800 = vsel %vm306, 0, %v2799
        %2801 = vst [vmem:[#allocation3 + $0x38] sm:$0x1] %v2800
        %v2802 = vld [vmem:[#allocation3 + $0x40] sm:$0x1]
        %v2803 = vsel %vm306, 0, %v2802
        %2804 = vst [vmem:[#allocation3 + $0x40] sm:$0x1] %v2803
        %v2805 = vld [vmem:[#allocation3 + $0x48] sm:$0x1]
        %v2806 = vsel %vm306, 0, %v2805
        %2807 = vst [vmem:[#allocation3 + $0x48] sm:$0x1] %v2806
        %v2808 = vld [vmem:[#allocation3 + $0x50] sm:$0x1]
        %v2809 = vsel %vm306, 0, %v2808
        %2810 = vst [vmem:[#allocation3 + $0x50] sm:$0x1] %v2809
        %v2811 = vld [vmem:[#allocation3 + $0x58] sm:$0x1]
        %v2812 = vsel %vm306, 0, %v2811
        %2813 = vst [vmem:[#allocation3 + $0x58] sm:$0x1] %v2812
        %v2814 = vld [vmem:[#allocation3 + $0x60] sm:$0x1]
        %v2815 = vsel %vm306, 0, %v2814
        %2816 = vst [vmem:[#allocation3 + $0x60] sm:$0x1] %v2815
        %v2817 = vld [vmem:[#allocation3 + $0x68] sm:$0x1]
        %v2818 = vsel %vm306, 0, %v2817
        %2819 = vst [vmem:[#allocation3 + $0x68] sm:$0x1] %v2818
        %v2820 = vld [vmem:[#allocation3 + $0x70] sm:$0x1]
        %v2821 = vsel %vm306, 0, %v2820
        %2822 = vst [vmem:[#allocation3 + $0x70] sm:$0x1] %v2821
        %v2823 = vld [vmem:[#allocation3 + $0x78] sm:$0x1]
        %v2824 = vsel %vm306, 0, %v2823
        %2825 = vst [vmem:[#allocation3 + $0x78] sm:$0x1] %v2824
        %v2826 = vld [vmem:[#allocation3 + $0x80] sm:$0x1]
        %v2827 = vsel %vm306, 0, %v2826
        %2828 = vst [vmem:[#allocation3 + $0x80] sm:$0x1] %v2827
        %v2829 = vld [vmem:[#allocation3 + $0x88] sm:$0x1]
        %v2830 = vsel %vm306, 0, %v2829
        %2831 = vst [vmem:[#allocation3 + $0x88] sm:$0x1] %v2830
        %v2832 = vld [vmem:[#allocation3 + $0x4] sm:$0x8]
        %v2833 = vsel %vm363, 0, %v2832
        %2834 = vst [vmem:[#allocation3 + $0x4] sm:$0x8] %v2833
        %v2835 = vld [vmem:[#allocation3 + $0xc] sm:$0x8]
        %v2836 = vsel %vm363, 0, %v2835
        %2837 = vst [vmem:[#allocation3 + $0xc] sm:$0x8] %v2836
        %v2838 = vld [vmem:[#allocation3 + $0x14] sm:$0x8]
        %v2839 = vsel %vm363, 0, %v2838
        %2840 = vst [vmem:[#allocation3 + $0x14] sm:$0x8] %v2839
        %v2841 = vld [vmem:[#allocation3 + $0x1c] sm:$0x8]
        %v2842 = vsel %vm363, 0, %v2841
        %2843 = vst [vmem:[#allocation3 + $0x1c] sm:$0x8] %v2842
        %v2844 = vld [vmem:[#allocation3 + $0x24] sm:$0x8]
        %v2845 = vsel %vm363, 0, %v2844
        %2846 = vst [vmem:[#allocation3 + $0x24] sm:$0x8] %v2845
        %v2847 = vld [vmem:[#allocation3 + $0x2c] sm:$0x8]
        %v2848 = vsel %vm363, 0, %v2847
        %2849 = vst [vmem:[#allocation3 + $0x2c] sm:$0x8] %v2848
        %v2850 = vld [vmem:[#allocation3 + $0x34] sm:$0x8]
        %v2851 = vsel %vm363, 0, %v2850
        %2852 = vst [vmem:[#allocation3 + $0x34] sm:$0x8] %v2851
        %v2853 = vld [vmem:[#allocation3 + $0x3c] sm:$0x8]
        %v2854 = vsel %vm363, 0, %v2853
        %2855 = vst [vmem:[#allocation3 + $0x3c] sm:$0x8] %v2854
        %v2856 = vld [vmem:[#allocation3 + $0x44] sm:$0x8]
        %v2857 = vsel %vm363, 0, %v2856
        %2858 = vst [vmem:[#allocation3 + $0x44] sm:$0x8] %v2857
        %v2859 = vld [vmem:[#allocation3 + $0x4c] sm:$0x8]
        %v2860 = vsel %vm363, 0, %v2859
        %2861 = vst [vmem:[#allocation3 + $0x4c] sm:$0x8] %v2860
        %v2862 = vld [vmem:[#allocation3 + $0x54] sm:$0x8]
        %v2863 = vsel %vm363, 0, %v2862
        %2864 = vst [vmem:[#allocation3 + $0x54] sm:$0x8] %v2863
        %v2865 = vld [vmem:[#allocation3 + $0x5c] sm:$0x8]
        %v2866 = vsel %vm363, 0, %v2865
        %2867 = vst [vmem:[#allocation3 + $0x5c] sm:$0x8] %v2866
        %v2868 = vld [vmem:[#allocation3 + $0x64] sm:$0x8]
        %v2869 = vsel %vm363, 0, %v2868
        %2870 = vst [vmem:[#allocation3 + $0x64] sm:$0x8] %v2869
        %v2871 = vld [vmem:[#allocation3 + $0x6c] sm:$0x8]
        %v2872 = vsel %vm363, 0, %v2871
        %2873 = vst [vmem:[#allocation3 + $0x6c] sm:$0x8] %v2872
        %v2874 = vld [vmem:[#allocation3 + $0x74] sm:$0x8]
        %v2875 = vsel %vm363, 0, %v2874
        %2876 = vst [vmem:[#allocation3 + $0x74] sm:$0x8] %v2875
        %v2877 = vld [vmem:[#allocation3 + $0x7c] sm:$0x8]
        %v2878 = vsel %vm363, 0, %v2877
        %2879 = vst [vmem:[#allocation3 + $0x7c] sm:$0x8] %v2878
        %v2880 = vld [vmem:[#allocation3 + $0x84] sm:$0x8]
        %v2881 = vsel %vm363, 0, %v2880
        %2882 = vst [vmem:[#allocation3 + $0x84] sm:$0x8] %v2881
        %v2883 = vld [vmem:[#allocation3 + $0x8c] sm:$0x8]
        %v2884 = vsel %vm363, 0, %v2883
        %2885 = vst [vmem:[#allocation3 + $0x8c] sm:$0x8] %v2884
        %v2902 = vunpack.c.l.b16 %v2757
        %v2903 = vunpack.c.h.b16 %v2757
        %v2904 = vunpack.c.l.b16 %v2758
        %v2905 = vunpack.c.h.b16 %v2758
        %v2906 = vunpack.c.l.b16 %v2759
        %v2907 = vunpack.c.h.b16 %v2759
        %v2908 = vunpack.c.l.b16 %v2760
        %v2909 = vunpack.c.h.b16 %v2760
        %v2910 = vunpack.c.l.b16 %v2761
        %v2911 = vunpack.c.h.b16 %v2761
        %v2912 = vunpack.c.l.b16 %v2762
        %v2913 = vunpack.c.h.b16 %v2762
        %v2914 = vunpack.c.l.b16 %v2763
        %v2915 = vunpack.c.h.b16 %v2763
        %v2916 = vunpack.c.l.b16 %v2764
        %v2917 = vunpack.c.h.b16 %v2764
        %v2918 = vunpack.c.l.b16 %v2765
        %v2919 = vunpack.c.h.b16 %v2765
        %v2920 = vunpack.c.l.b16 %v2766
        %v2921 = vunpack.c.h.b16 %v2766
        %v2922 = vunpack.c.l.b16 %v2767
        %v2923 = vunpack.c.h.b16 %v2767
        %v2924 = vunpack.c.l.b16 %v2768
        %v2925 = vunpack.c.h.b16 %v2768
        %v2926 = vunpack.c.l.b16 %v2769
        %v2927 = vunpack.c.h.b16 %v2769
        %v2928 = vunpack.c.l.b16 %v2770
        %v2929 = vunpack.c.h.b16 %v2770
        %v2930 = vunpack.c.l.b16 %v2771
        %v2931 = vunpack.c.h.b16 %v2771
        %v2932 = vunpack.c.l.b16 %v2772
        %v2933 = vunpack.c.h.b16 %v2772
        %v2934 = vpack.c.b16 %v2902, %v2902
        %v2935 = vpack.c.b16 %v2903, %v2903
        %v2936 = vpack.c.b16 %v2904, %v2904
        %v2937 = vpack.c.b16 %v2905, %v2905
        %v2938 = vpack.c.b16 %v2906, %v2906
        %v2939 = vpack.c.b16 %v2907, %v2907
        %v2940 = vpack.c.b16 %v2908, %v2908
        %v2941 = vpack.c.b16 %v2909, %v2909
        %v2942 = vpack.c.b16 %v2910, %v2910
        %v2943 = vpack.c.b16 %v2911, %v2911
        %v2944 = vpack.c.b16 %v2912, %v2912
        %v2945 = vpack.c.b16 %v2913, %v2913
        %v2946 = vpack.c.b16 %v2914, %v2914
        %v2947 = vpack.c.b16 %v2915, %v2915
        %v2948 = vpack.c.b16 %v2916, %v2916
        %v2949 = vpack.c.b16 %v2917, %v2917
        %v2950 = vpack.c.b16 %v2918, %v2918
        %v2951 = vpack.c.b16 %v2919, %v2919
        %v2952 = vpack.c.b16 %v2920, %v2920
        %v2953 = vpack.c.b16 %v2921, %v2921
        %v2954 = vpack.c.b16 %v2922, %v2922
        %v2955 = vpack.c.b16 %v2923, %v2923
        %v2956 = vpack.c.b16 %v2924, %v2924
        %v2957 = vpack.c.b16 %v2925, %v2925
        %v2958 = vpack.c.b16 %v2926, %v2926
        %v2959 = vpack.c.b16 %v2927, %v2927
        %v2960 = vpack.c.b16 %v2928, %v2928
        %v2961 = vpack.c.b16 %v2929, %v2929
        %v2962 = vpack.c.b16 %v2930, %v2930
        %v2963 = vpack.c.b16 %v2931, %v2931
        %v2964 = vpack.c.b16 %v2932, %v2932
        %v2965 = vpack.c.b16 %v2933, %v2933
        %v2967 = vshrl.u32 %v2934, 16
        %v2969 = vrot.slane %v2967, 7
        %v2970 = vshll.u32 %v2934, 16
        %v2972 = vor.u32 %v2969, %v2970
        %v2973 = vrot.slane %v2969, 4
        %v2975 = vshrl.u32 %v2935, 16
        %v2977 = vrot.slane %v2975, 7
        %v2978 = vshll.u32 %v2935, 16
        %v2980 = vor.u32 %v2977, %v2978
        %v2981 = vsel %vm451, %v2973, %v2980
        %v2983 = vshrl.u32 %v2936, 16
        %v2985 = vrot.slane %v2983, 7
        %v2986 = vshll.u32 %v2936, 16
        %v2988 = vor.u32 %v2985, %v2986
        %v2989 = vrot.slane %v2985, 4
        %v2991 = vshrl.u32 %v2937, 16
        %v2993 = vrot.slane %v2991, 7
        %v2994 = vshll.u32 %v2937, 16
        %v2996 = vor.u32 %v2993, %v2994
        %v2997 = vsel %vm451, %v2989, %v2996
        %v2999 = vshrl.u32 %v2938, 16
        %v3001 = vrot.slane %v2999, 7
        %v3002 = vshll.u32 %v2938, 16
        %v3004 = vor.u32 %v3001, %v3002
        %v3005 = vrot.slane %v3001, 4
        %v3007 = vshrl.u32 %v2939, 16
        %v3009 = vrot.slane %v3007, 7
        %v3010 = vshll.u32 %v2939, 16
        %v3012 = vor.u32 %v3009, %v3010
        %v3013 = vsel %vm451, %v3005, %v3012
        %v3015 = vshrl.u32 %v2940, 16
        %v3017 = vrot.slane %v3015, 7
        %v3018 = vshll.u32 %v2940, 16
        %v3020 = vor.u32 %v3017, %v3018
        %v3021 = vrot.slane %v3017, 4
        %v3023 = vshrl.u32 %v2941, 16
        %v3025 = vrot.slane %v3023, 7
        %v3026 = vshll.u32 %v2941, 16
        %v3028 = vor.u32 %v3025, %v3026
        %v3029 = vsel %vm451, %v3021, %v3028
        %v3031 = vshrl.u32 %v2942, 16
        %v3033 = vrot.slane %v3031, 7
        %v3034 = vshll.u32 %v2942, 16
        %v3036 = vor.u32 %v3033, %v3034
        %v3037 = vrot.slane %v3033, 4
        %v3039 = vshrl.u32 %v2943, 16
        %v3041 = vrot.slane %v3039, 7
        %v3042 = vshll.u32 %v2943, 16
        %v3044 = vor.u32 %v3041, %v3042
        %v3045 = vsel %vm451, %v3037, %v3044
        %v3047 = vshrl.u32 %v2944, 16
        %v3049 = vrot.slane %v3047, 7
        %v3050 = vshll.u32 %v2944, 16
        %v3052 = vor.u32 %v3049, %v3050
        %v3053 = vrot.slane %v3049, 4
        %v3055 = vshrl.u32 %v2945, 16
        %v3057 = vrot.slane %v3055, 7
        %v3058 = vshll.u32 %v2945, 16
        %v3060 = vor.u32 %v3057, %v3058
        %v3061 = vsel %vm451, %v3053, %v3060
        %v3063 = vshrl.u32 %v2946, 16
        %v3065 = vrot.slane %v3063, 7
        %v3066 = vshll.u32 %v2946, 16
        %v3068 = vor.u32 %v3065, %v3066
        %v3069 = vrot.slane %v3065, 4
        %v3071 = vshrl.u32 %v2947, 16
        %v3073 = vrot.slane %v3071, 7
        %v3074 = vshll.u32 %v2947, 16
        %v3076 = vor.u32 %v3073, %v3074
        %v3077 = vsel %vm451, %v3069, %v3076
        %v3079 = vshrl.u32 %v2948, 16
        %v3081 = vrot.slane %v3079, 7
        %v3082 = vshll.u32 %v2948, 16
        %v3084 = vor.u32 %v3081, %v3082
        %v3085 = vrot.slane %v3081, 4
        %v3087 = vshrl.u32 %v2949, 16
        %v3089 = vrot.slane %v3087, 7
        %v3090 = vshll.u32 %v2949, 16
        %v3092 = vor.u32 %v3089, %v3090
        %v3093 = vsel %vm451, %v3085, %v3092
        %v3095 = vshrl.u32 %v2950, 16
        %v3097 = vrot.slane %v3095, 7
        %v3098 = vshll.u32 %v2950, 16
        %v3100 = vor.u32 %v3097, %v3098
        %v3101 = vrot.slane %v3097, 4
        %v3103 = vshrl.u32 %v2951, 16
        %v3105 = vrot.slane %v3103, 7
        %v3106 = vshll.u32 %v2951, 16
        %v3108 = vor.u32 %v3105, %v3106
        %v3109 = vsel %vm451, %v3101, %v3108
        %v3111 = vshrl.u32 %v2952, 16
        %v3113 = vrot.slane %v3111, 7
        %v3114 = vshll.u32 %v2952, 16
        %v3116 = vor.u32 %v3113, %v3114
        %v3117 = vrot.slane %v3113, 4
        %v3119 = vshrl.u32 %v2953, 16
        %v3121 = vrot.slane %v3119, 7
        %v3122 = vshll.u32 %v2953, 16
        %v3124 = vor.u32 %v3121, %v3122
        %v3125 = vsel %vm451, %v3117, %v3124
        %v3127 = vshrl.u32 %v2954, 16
        %v3129 = vrot.slane %v3127, 7
        %v3130 = vshll.u32 %v2954, 16
        %v3132 = vor.u32 %v3129, %v3130
        %v3133 = vrot.slane %v3129, 4
        %v3135 = vshrl.u32 %v2955, 16
        %v3137 = vrot.slane %v3135, 7
        %v3138 = vshll.u32 %v2955, 16
        %v3140 = vor.u32 %v3137, %v3138
        %v3141 = vsel %vm451, %v3133, %v3140
        %v3143 = vshrl.u32 %v2956, 16
        %v3145 = vrot.slane %v3143, 7
        %v3146 = vshll.u32 %v2956, 16
        %v3148 = vor.u32 %v3145, %v3146
        %v3149 = vrot.slane %v3145, 4
        %v3151 = vshrl.u32 %v2957, 16
        %v3153 = vrot.slane %v3151, 7
        %v3154 = vshll.u32 %v2957, 16
        %v3156 = vor.u32 %v3153, %v3154
        %v3157 = vsel %vm451, %v3149, %v3156
        %v3159 = vshrl.u32 %v2958, 16
        %v3161 = vrot.slane %v3159, 7
        %v3162 = vshll.u32 %v2958, 16
        %v3164 = vor.u32 %v3161, %v3162
        %v3165 = vrot.slane %v3161, 4
        %v3167 = vshrl.u32 %v2959, 16
        %v3169 = vrot.slane %v3167, 7
        %v3170 = vshll.u32 %v2959, 16
        %v3172 = vor.u32 %v3169, %v3170
        %v3173 = vsel %vm451, %v3165, %v3172
        %v3175 = vshrl.u32 %v2960, 16
        %v3177 = vrot.slane %v3175, 7
        %v3178 = vshll.u32 %v2960, 16
        %v3180 = vor.u32 %v3177, %v3178
        %v3181 = vrot.slane %v3177, 4
        %v3183 = vshrl.u32 %v2961, 16
        %v3185 = vrot.slane %v3183, 7
        %v3186 = vshll.u32 %v2961, 16
        %v3188 = vor.u32 %v3185, %v3186
        %v3189 = vsel %vm451, %v3181, %v3188
        %v3191 = vshrl.u32 %v2962, 16
        %v3193 = vrot.slane %v3191, 7
        %v3194 = vshll.u32 %v2962, 16
        %v3196 = vor.u32 %v3193, %v3194
        %v3197 = vrot.slane %v3193, 4
        %v3199 = vshrl.u32 %v2963, 16
        %v3201 = vrot.slane %v3199, 7
        %v3202 = vshll.u32 %v2963, 16
        %v3204 = vor.u32 %v3201, %v3202
        %v3205 = vsel %vm451, %v3197, %v3204
        %v3207 = vshrl.u32 %v2964, 16
        %v3209 = vrot.slane %v3207, 7
        %v3210 = vshll.u32 %v2964, 16
        %v3212 = vor.u32 %v3209, %v3210
        %v3213 = vrot.slane %v3209, 4
        %v3215 = vshrl.u32 %v2965, 16
        %v3217 = vrot.slane %v3215, 7
        %v3218 = vshll.u32 %v2965, 16
        %v3220 = vor.u32 %v3217, %v3218
        %v3221 = vsel %vm451, %v3213, %v3220
        %s3254 = scalar_lea.vmem [#allocation3], 8
        %v3255 = vld [vmem:[%s3254] sm:$0xf]
        %v3256 = vsel %vm743, %v2972, %v3255
        %3257 = vst [vmem:[%s3254] sm:$0xf] %v3256
        %3258 = vst.msk [vmem:[%s3254 + $0x4] sm:$0xf] %vm747, %v2981
        %v3259 = vld [vmem:[%s3254 + $0x8] sm:$0xf]
        %v3260 = vsel %vm743, %v2988, %v3259
        %3261 = vst [vmem:[%s3254 + $0x8] sm:$0xf] %v3260
        %3262 = vst.msk [vmem:[%s3254 + $0xc] sm:$0xf] %vm747, %v2997
        %v3263 = vld [vmem:[%s3254 + $0x10] sm:$0xf]
        %v3264 = vsel %vm743, %v3004, %v3263
        %3265 = vst [vmem:[%s3254 + $0x10] sm:$0xf] %v3264
        %3266 = vst.msk [vmem:[%s3254 + $0x14] sm:$0xf] %vm747, %v3013
        %v3267 = vld [vmem:[%s3254 + $0x18] sm:$0xf]
        %v3268 = vsel %vm743, %v3020, %v3267
        %3269 = vst [vmem:[%s3254 + $0x18] sm:$0xf] %v3268
        %3270 = vst.msk [vmem:[%s3254 + $0x1c] sm:$0xf] %vm747, %v3029
        %v3271 = vld [vmem:[%s3254 + $0x20] sm:$0xf]
        %v3272 = vsel %vm743, %v3036, %v3271
        %3273 = vst [vmem:[%s3254 + $0x20] sm:$0xf] %v3272
        %3274 = vst.msk [vmem:[%s3254 + $0x24] sm:$0xf] %vm747, %v3045
        %v3275 = vld [vmem:[%s3254 + $0x28] sm:$0xf]
        %v3276 = vsel %vm743, %v3052, %v3275
        %3277 = vst [vmem:[%s3254 + $0x28] sm:$0xf] %v3276
        %3278 = vst.msk [vmem:[%s3254 + $0x2c] sm:$0xf] %vm747, %v3061
        %v3279 = vld [vmem:[%s3254 + $0x30] sm:$0xf]
        %v3280 = vsel %vm743, %v3068, %v3279
        %3281 = vst [vmem:[%s3254 + $0x30] sm:$0xf] %v3280
        %3282 = vst.msk [vmem:[%s3254 + $0x34] sm:$0xf] %vm747, %v3077
        %v3283 = vld [vmem:[%s3254 + $0x38] sm:$0xf]
        %v3284 = vsel %vm743, %v3084, %v3283
        %3285 = vst [vmem:[%s3254 + $0x38] sm:$0xf] %v3284
        %3286 = vst.msk [vmem:[%s3254 + $0x3c] sm:$0xf] %vm747, %v3093
        %v3287 = vld [vmem:[%s3254 + $0x40] sm:$0xf]
        %v3288 = vsel %vm743, %v3100, %v3287
        %3289 = vst [vmem:[%s3254 + $0x40] sm:$0xf] %v3288
        %3290 = vst.msk [vmem:[%s3254 + $0x44] sm:$0xf] %vm747, %v3109
        %v3291 = vld [vmem:[%s3254 + $0x48] sm:$0xf]
        %v3292 = vsel %vm743, %v3116, %v3291
        %3293 = vst [vmem:[%s3254 + $0x48] sm:$0xf] %v3292
        %3294 = vst.msk [vmem:[%s3254 + $0x4c] sm:$0xf] %vm747, %v3125
        %v3295 = vld [vmem:[%s3254 + $0x50] sm:$0xf]
        %v3296 = vsel %vm743, %v3132, %v3295
        %3297 = vst [vmem:[%s3254 + $0x50] sm:$0xf] %v3296
        %3298 = vst.msk [vmem:[%s3254 + $0x54] sm:$0xf] %vm747, %v3141
        %v3299 = vld [vmem:[%s3254 + $0x58] sm:$0xf]
        %v3300 = vsel %vm743, %v3148, %v3299
        %3301 = vst [vmem:[%s3254 + $0x58] sm:$0xf] %v3300
        %3302 = vst.msk [vmem:[%s3254 + $0x5c] sm:$0xf] %vm747, %v3157
        %v3303 = vld [vmem:[%s3254 + $0x60] sm:$0xf]
        %v3304 = vsel %vm743, %v3164, %v3303
        %3305 = vst [vmem:[%s3254 + $0x60] sm:$0xf] %v3304
        %3306 = vst.msk [vmem:[%s3254 + $0x64] sm:$0xf] %vm747, %v3173
        %v3307 = vld [vmem:[%s3254 + $0x68] sm:$0xf]
        %v3308 = vsel %vm743, %v3180, %v3307
        %3309 = vst [vmem:[%s3254 + $0x68] sm:$0xf] %v3308
        %3310 = vst.msk [vmem:[%s3254 + $0x6c] sm:$0xf] %vm747, %v3189
        %v3311 = vld [vmem:[%s3254 + $0x70] sm:$0xf]
        %v3312 = vsel %vm743, %v3196, %v3311
        %3313 = vst [vmem:[%s3254 + $0x70] sm:$0xf] %v3312
        %3314 = vst.msk [vmem:[%s3254 + $0x74] sm:$0xf] %vm747, %v3205
        %v3315 = vld [vmem:[%s3254 + $0x78] sm:$0xf]
        %v3316 = vsel %vm743, %v3212, %v3315
        %3317 = vst [vmem:[%s3254 + $0x78] sm:$0xf] %v3316
        %3318 = vst.msk [vmem:[%s3254 + $0x7c] sm:$0xf] %vm747, %v3221
        %3319 = vrot.lane.b32.xlu0 %v2934, 32
        %v3320 = vpop.permute.xlu0 %3319
        %3321 = vrot.lane.b32.xlu0 %v2935, 32
        %v3322 = vpop.permute.xlu0 %3321
        %3323 = vrot.lane.b32.xlu0 %v2936, 32
        %v3324 = vpop.permute.xlu0 %3323
        %3325 = vrot.lane.b32.xlu0 %v2937, 32
        %v3326 = vpop.permute.xlu0 %3325
        %3327 = vrot.lane.b32.xlu0 %v2938, 32
        %v3328 = vpop.permute.xlu0 %3327
        %3329 = vrot.lane.b32.xlu0 %v2939, 32
        %v3330 = vpop.permute.xlu0 %3329
        %3331 = vrot.lane.b32.xlu0 %v2940, 32
        %v3332 = vpop.permute.xlu0 %3331
        %3333 = vrot.lane.b32.xlu0 %v2941, 32
        %v3334 = vpop.permute.xlu0 %3333
        %3335 = vrot.lane.b32.xlu0 %v2942, 32
        %v3336 = vpop.permute.xlu0 %3335
        %3337 = vrot.lane.b32.xlu0 %v2943, 32
        %v3338 = vpop.permute.xlu0 %3337
        %3339 = vrot.lane.b32.xlu0 %v2944, 32
        %v3340 = vpop.permute.xlu0 %3339
        %3341 = vrot.lane.b32.xlu0 %v2945, 32
        %v3342 = vpop.permute.xlu0 %3341
        %3343 = vrot.lane.b32.xlu0 %v2946, 32
        %v3344 = vpop.permute.xlu0 %3343
        %3345 = vrot.lane.b32.xlu0 %v2947, 32
        %v3346 = vpop.permute.xlu0 %3345
        %3347 = vrot.lane.b32.xlu0 %v2948, 32
        %v3348 = vpop.permute.xlu0 %3347
        %3349 = vrot.lane.b32.xlu0 %v2949, 32
        %v3350 = vpop.permute.xlu0 %3349
        %3351 = vrot.lane.b32.xlu0 %v2950, 32
        %v3352 = vpop.permute.xlu0 %3351
        %3353 = vrot.lane.b32.xlu0 %v2951, 32
        %v3354 = vpop.permute.xlu0 %3353
        %3355 = vrot.lane.b32.xlu0 %v2952, 32
        %v3356 = vpop.permute.xlu0 %3355
        %3357 = vrot.lane.b32.xlu0 %v2953, 32
        %v3358 = vpop.permute.xlu0 %3357
        %3359 = vrot.lane.b32.xlu0 %v2954, 32
        %v3360 = vpop.permute.xlu0 %3359
        %3361 = vrot.lane.b32.xlu0 %v2955, 32
        %v3362 = vpop.permute.xlu0 %3361
        %3363 = vrot.lane.b32.xlu0 %v2956, 32
        %v3364 = vpop.permute.xlu0 %3363
        %3365 = vrot.lane.b32.xlu0 %v2957, 32
        %v3366 = vpop.permute.xlu0 %3365
        %3367 = vrot.lane.b32.xlu0 %v2958, 32
        %v3368 = vpop.permute.xlu0 %3367
        %3369 = vrot.lane.b32.xlu0 %v2959, 32
        %v3370 = vpop.permute.xlu0 %3369
        %3371 = vrot.lane.b32.xlu0 %v2960, 32
        %v3372 = vpop.permute.xlu0 %3371
        %3373 = vrot.lane.b32.xlu0 %v2961, 32
        %v3374 = vpop.permute.xlu0 %3373
        %3375 = vrot.lane.b32.xlu0 %v2962, 32
        %v3376 = vpop.permute.xlu0 %3375
        %3377 = vrot.lane.b32.xlu0 %v2963, 32
        %v3378 = vpop.permute.xlu0 %3377
        %3379 = vrot.lane.b32.xlu0 %v2964, 32
        %v3380 = vpop.permute.xlu0 %3379
        %3381 = vrot.lane.b32.xlu0 %v2965, 32
        %v3382 = vpop.permute.xlu0 %3381
        %3415 = vst.msk [vmem:[%s3254] sm:$0xf] %vm969, %v3320
        %3416 = vst.msk [vmem:[%s3254 + $0x4] sm:$0xf] %vm969, %v3322
        %3417 = vst.msk [vmem:[%s3254 + $0x8] sm:$0xf] %vm969, %v3324
        %3418 = vst.msk [vmem:[%s3254 + $0xc] sm:$0xf] %vm969, %v3326
        %3419 = vst.msk [vmem:[%s3254 + $0x10] sm:$0xf] %vm969, %v3328
        %3420 = vst.msk [vmem:[%s3254 + $0x14] sm:$0xf] %vm969, %v3330
        %3421 = vst.msk [vmem:[%s3254 + $0x18] sm:$0xf] %vm969, %v3332
        %3422 = vst.msk [vmem:[%s3254 + $0x1c] sm:$0xf] %vm969, %v3334
        %3423 = vst.msk [vmem:[%s3254 + $0x20] sm:$0xf] %vm969, %v3336
        %3424 = vst.msk [vmem:[%s3254 + $0x24] sm:$0xf] %vm969, %v3338
        %3425 = vst.msk [vmem:[%s3254 + $0x28] sm:$0xf] %vm969, %v3340
        %3426 = vst.msk [vmem:[%s3254 + $0x2c] sm:$0xf] %vm969, %v3342
        %3427 = vst.msk [vmem:[%s3254 + $0x30] sm:$0xf] %vm969, %v3344
        %3428 = vst.msk [vmem:[%s3254 + $0x34] sm:$0xf] %vm969, %v3346
        %3429 = vst.msk [vmem:[%s3254 + $0x38] sm:$0xf] %vm969, %v3348
        %3430 = vst.msk [vmem:[%s3254 + $0x3c] sm:$0xf] %vm969, %v3350
        %3431 = vst.msk [vmem:[%s3254 + $0x40] sm:$0xf] %vm969, %v3352
        %3432 = vst.msk [vmem:[%s3254 + $0x44] sm:$0xf] %vm969, %v3354
        %3433 = vst.msk [vmem:[%s3254 + $0x48] sm:$0xf] %vm969, %v3356
        %3434 = vst.msk [vmem:[%s3254 + $0x4c] sm:$0xf] %vm969, %v3358
        %3435 = vst.msk [vmem:[%s3254 + $0x50] sm:$0xf] %vm969, %v3360
        %3436 = vst.msk [vmem:[%s3254 + $0x54] sm:$0xf] %vm969, %v3362
        %3437 = vst.msk [vmem:[%s3254 + $0x58] sm:$0xf] %vm969, %v3364
        %3438 = vst.msk [vmem:[%s3254 + $0x5c] sm:$0xf] %vm969, %v3366
        %3439 = vst.msk [vmem:[%s3254 + $0x60] sm:$0xf] %vm969, %v3368
        %3440 = vst.msk [vmem:[%s3254 + $0x64] sm:$0xf] %vm969, %v3370
        %3441 = vst.msk [vmem:[%s3254 + $0x68] sm:$0xf] %vm969, %v3372
        %3442 = vst.msk [vmem:[%s3254 + $0x6c] sm:$0xf] %vm969, %v3374
        %3443 = vst.msk [vmem:[%s3254 + $0x70] sm:$0xf] %vm969, %v3376
        %3444 = vst.msk [vmem:[%s3254 + $0x74] sm:$0xf] %vm969, %v3378
        %3445 = vst.msk [vmem:[%s3254 + $0x78] sm:$0xf] %vm969, %v3380
        %3446 = vst.msk [vmem:[%s3254 + $0x7c] sm:$0xf] %vm969, %v3382
        %v3447 = vrot.slane %v2967, 4
        %v3448 = vrot.slane %v2970, 5
        %v3449 = vor.u32 %v3447, %v3448
        %v3450 = vrot.slane %v3449, 4
        %v3451 = vrot.slane %v2978, 5
        %v3452 = vsel %vm1036, %v3450, %v3451
        %v3453 = vrot.slane %v2975, 4
        %v3454 = vor.u32 %v3453, %v3451
        %v3455 = vrot.slane %v3454, 4
        %v3456 = vrot.slane %v2983, 4
        %v3457 = vrot.slane %v2986, 5
        %v3458 = vor.u32 %v3456, %v3457
        %v3459 = vrot.slane %v3458, 4
        %v3460 = vrot.slane %v2994, 5
        %v3461 = vsel %vm1036, %v3459, %v3460
        %v3462 = vrot.slane %v2991, 4
        %v3463 = vor.u32 %v3462, %v3460
        %v3464 = vrot.slane %v3463, 4
        %v3465 = vrot.slane %v2999, 4
        %v3466 = vrot.slane %v3002, 5
        %v3467 = vor.u32 %v3465, %v3466
        %v3468 = vrot.slane %v3467, 4
        %v3469 = vrot.slane %v3010, 5
        %v3470 = vsel %vm1036, %v3468, %v3469
        %v3471 = vrot.slane %v3007, 4
        %v3472 = vor.u32 %v3471, %v3469
        %v3473 = vrot.slane %v3472, 4
        %v3474 = vrot.slane %v3015, 4
        %v3475 = vrot.slane %v3018, 5
        %v3476 = vor.u32 %v3474, %v3475
        %v3477 = vrot.slane %v3476, 4
        %v3478 = vrot.slane %v3026, 5
        %v3479 = vsel %vm1036, %v3477, %v3478
        %v3480 = vrot.slane %v3023, 4
        %v3481 = vor.u32 %v3480, %v3478
        %v3482 = vrot.slane %v3481, 4
        %v3483 = vrot.slane %v3031, 4
        %v3484 = vrot.slane %v3034, 5
        %v3485 = vor.u32 %v3483, %v3484
        %v3486 = vrot.slane %v3485, 4
        %v3487 = vrot.slane %v3042, 5
        %v3488 = vsel %vm1036, %v3486, %v3487
        %v3489 = vrot.slane %v3039, 4
        %v3490 = vor.u32 %v3489, %v3487
        %v3491 = vrot.slane %v3490, 4
        %v3492 = vrot.slane %v3047, 4
        %v3493 = vrot.slane %v3050, 5
        %v3494 = vor.u32 %v3492, %v3493
        %v3495 = vrot.slane %v3494, 4
        %v3496 = vrot.slane %v3058, 5
        %v3497 = vsel %vm1036, %v3495, %v3496
        %v3498 = vrot.slane %v3055, 4
        %v3499 = vor.u32 %v3498, %v3496
        %v3500 = vrot.slane %v3499, 4
        %v3501 = vrot.slane %v3063, 4
        %v3502 = vrot.slane %v3066, 5
        %v3503 = vor.u32 %v3501, %v3502
        %v3504 = vrot.slane %v3503, 4
        %v3505 = vrot.slane %v3074, 5
        %v3506 = vsel %vm1036, %v3504, %v3505
        %v3507 = vrot.slane %v3071, 4
        %v3508 = vor.u32 %v3507, %v3505
        %v3509 = vrot.slane %v3508, 4
        %v3510 = vrot.slane %v3079, 4
        %v3511 = vrot.slane %v3082, 5
        %v3512 = vor.u32 %v3510, %v3511
        %v3513 = vrot.slane %v3512, 4
        %v3514 = vrot.slane %v3090, 5
        %v3515 = vsel %vm1036, %v3513, %v3514
        %v3516 = vrot.slane %v3087, 4
        %v3517 = vor.u32 %v3516, %v3514
        %v3518 = vrot.slane %v3517, 4
        %v3519 = vrot.slane %v3095, 4
        %v3520 = vrot.slane %v3098, 5
        %v3521 = vor.u32 %v3519, %v3520
        %v3522 = vrot.slane %v3521, 4
        %v3523 = vrot.slane %v3106, 5
        %v3524 = vsel %vm1036, %v3522, %v3523
        %v3525 = vrot.slane %v3103, 4
        %v3526 = vor.u32 %v3525, %v3523
        %v3527 = vrot.slane %v3526, 4
        %v3528 = vrot.slane %v3111, 4
        %v3529 = vrot.slane %v3114, 5
        %v3530 = vor.u32 %v3528, %v3529
        %v3531 = vrot.slane %v3530, 4
        %v3532 = vrot.slane %v3122, 5
        %v3533 = vsel %vm1036, %v3531, %v3532
        %v3534 = vrot.slane %v3119, 4
        %v3535 = vor.u32 %v3534, %v3532
        %v3536 = vrot.slane %v3535, 4
        %v3537 = vrot.slane %v3127, 4
        %v3538 = vrot.slane %v3130, 5
        %v3539 = vor.u32 %v3537, %v3538
        %v3540 = vrot.slane %v3539, 4
        %v3541 = vrot.slane %v3138, 5
        %v3542 = vsel %vm1036, %v3540, %v3541
        %v3543 = vrot.slane %v3135, 4
        %v3544 = vor.u32 %v3543, %v3541
        %v3545 = vrot.slane %v3544, 4
        %v3546 = vrot.slane %v3143, 4
        %v3547 = vrot.slane %v3146, 5
        %v3548 = vor.u32 %v3546, %v3547
        %v3549 = vrot.slane %v3548, 4
        %v3550 = vrot.slane %v3154, 5
        %v3551 = vsel %vm1036, %v3549, %v3550
        %v3552 = vrot.slane %v3151, 4
        %v3553 = vor.u32 %v3552, %v3550
        %v3554 = vrot.slane %v3553, 4
        %v3555 = vrot.slane %v3159, 4
        %v3556 = vrot.slane %v3162, 5
        %v3557 = vor.u32 %v3555, %v3556
        %v3558 = vrot.slane %v3557, 4
        %v3559 = vrot.slane %v3170, 5
        %v3560 = vsel %vm1036, %v3558, %v3559
        %v3561 = vrot.slane %v3167, 4
        %v3562 = vor.u32 %v3561, %v3559
        %v3563 = vrot.slane %v3562, 4
        %v3564 = vrot.slane %v3175, 4
        %v3565 = vrot.slane %v3178, 5
        %v3566 = vor.u32 %v3564, %v3565
        %v3567 = vrot.slane %v3566, 4
        %v3568 = vrot.slane %v3186, 5
        %v3569 = vsel %vm1036, %v3567, %v3568
        %v3570 = vrot.slane %v3183, 4
        %v3571 = vor.u32 %v3570, %v3568
        %v3572 = vrot.slane %v3571, 4
        %v3573 = vrot.slane %v3191, 4
        %v3574 = vrot.slane %v3194, 5
        %v3575 = vor.u32 %v3573, %v3574
        %v3576 = vrot.slane %v3575, 4
        %v3577 = vrot.slane %v3202, 5
        %v3578 = vsel %vm1036, %v3576, %v3577
        %v3579 = vrot.slane %v3199, 4
        %v3580 = vor.u32 %v3579, %v3577
        %v3581 = vrot.slane %v3580, 4
        %v3582 = vrot.slane %v3207, 4
        %v3583 = vrot.slane %v3210, 5
        %v3584 = vor.u32 %v3582, %v3583
        %v3585 = vrot.slane %v3584, 4
        %v3586 = vrot.slane %v3218, 5
        %v3587 = vsel %vm1036, %v3585, %v3586
        %v3588 = vrot.slane %v3215, 4
        %v3589 = vor.u32 %v3588, %v3586
        %v3590 = vrot.slane %v3589, 4
        %3591 = vrot.lane.b32.xlu0 %v3452, 64
        %v3592 = vpop.permute.xlu0 %3591
        %3593 = vrot.lane.b32.xlu0 %v3455, 64
        %v3594 = vpop.permute.xlu0 %3593
        %3595 = vrot.lane.b32.xlu0 %v3461, 64
        %v3596 = vpop.permute.xlu0 %3595
        %3597 = vrot.lane.b32.xlu0 %v3464, 64
        %v3598 = vpop.permute.xlu0 %3597
        %3599 = vrot.lane.b32.xlu0 %v3470, 64
        %v3600 = vpop.permute.xlu0 %3599
        %3601 = vrot.lane.b32.xlu0 %v3473, 64
        %v3602 = vpop.permute.xlu0 %3601
        %3603 = vrot.lane.b32.xlu0 %v3479, 64
        %v3604 = vpop.permute.xlu0 %3603
        %3605 = vrot.lane.b32.xlu0 %v3482, 64
        %v3606 = vpop.permute.xlu0 %3605
        %3607 = vrot.lane.b32.xlu0 %v3488, 64
        %v3608 = vpop.permute.xlu0 %3607
        %3609 = vrot.lane.b32.xlu0 %v3491, 64
        %v3610 = vpop.permute.xlu0 %3609
        %3611 = vrot.lane.b32.xlu0 %v3497, 64
        %v3612 = vpop.permute.xlu0 %3611
        %3613 = vrot.lane.b32.xlu0 %v3500, 64
        %v3614 = vpop.permute.xlu0 %3613
        %3615 = vrot.lane.b32.xlu0 %v3506, 64
        %v3616 = vpop.permute.xlu0 %3615
        %3617 = vrot.lane.b32.xlu0 %v3509, 64
        %v3618 = vpop.permute.xlu0 %3617
        %3619 = vrot.lane.b32.xlu0 %v3515, 64
        %v3620 = vpop.permute.xlu0 %3619
        %3621 = vrot.lane.b32.xlu0 %v3518, 64
        %v3622 = vpop.permute.xlu0 %3621
        %3623 = vrot.lane.b32.xlu0 %v3524, 64
        %v3624 = vpop.permute.xlu0 %3623
        %3625 = vrot.lane.b32.xlu0 %v3527, 64
        %v3626 = vpop.permute.xlu0 %3625
        %3627 = vrot.lane.b32.xlu0 %v3533, 64
        %v3628 = vpop.permute.xlu0 %3627
        %3629 = vrot.lane.b32.xlu0 %v3536, 64
        %v3630 = vpop.permute.xlu0 %3629
        %3631 = vrot.lane.b32.xlu0 %v3542, 64
        %v3632 = vpop.permute.xlu0 %3631
        %3633 = vrot.lane.b32.xlu0 %v3545, 64
        %v3634 = vpop.permute.xlu0 %3633
        %3635 = vrot.lane.b32.xlu0 %v3551, 64
        %v3636 = vpop.permute.xlu0 %3635
        %3637 = vrot.lane.b32.xlu0 %v3554, 64
        %v3638 = vpop.permute.xlu0 %3637
        %3639 = vrot.lane.b32.xlu0 %v3560, 64
        %v3640 = vpop.permute.xlu0 %3639
        %3641 = vrot.lane.b32.xlu0 %v3563, 64
        %v3642 = vpop.permute.xlu0 %3641
        %3643 = vrot.lane.b32.xlu0 %v3569, 64
        %v3644 = vpop.permute.xlu0 %3643
        %3645 = vrot.lane.b32.xlu0 %v3572, 64
        %v3646 = vpop.permute.xlu0 %3645
        %3647 = vrot.lane.b32.xlu0 %v3578, 64
        %v3648 = vpop.permute.xlu0 %3647
        %3649 = vrot.lane.b32.xlu0 %v3581, 64
        %v3650 = vpop.permute.xlu0 %3649
        %3651 = vrot.lane.b32.xlu0 %v3587, 64
        %v3652 = vpop.permute.xlu0 %3651
        %3653 = vrot.lane.b32.xlu0 %v3590, 64
        %v3654 = vpop.permute.xlu0 %3653
        %3687 = vst.msk [vmem:[%s3254] sm:$0xf] %vm1437, %v3592
        %v3688 = vld [vmem:[%s3254 + $0x4] sm:$0xf]
        %v3689 = vsel %vm1440, %v3594, %v3688
        %3690 = vst [vmem:[%s3254 + $0x4] sm:$0xf] %v3689
        %3691 = vst.msk [vmem:[%s3254 + $0x8] sm:$0xf] %vm1437, %v3596
        %v3692 = vld [vmem:[%s3254 + $0xc] sm:$0xf]
        %v3693 = vsel %vm1440, %v3598, %v3692
        %3694 = vst [vmem:[%s3254 + $0xc] sm:$0xf] %v3693
        %3695 = vst.msk [vmem:[%s3254 + $0x10] sm:$0xf] %vm1437, %v3600
        %v3696 = vld [vmem:[%s3254 + $0x14] sm:$0xf]
        %v3697 = vsel %vm1440, %v3602, %v3696
        %3698 = vst [vmem:[%s3254 + $0x14] sm:$0xf] %v3697
        %3699 = vst.msk [vmem:[%s3254 + $0x18] sm:$0xf] %vm1437, %v3604
        %v3700 = vld [vmem:[%s3254 + $0x1c] sm:$0xf]
        %v3701 = vsel %vm1440, %v3606, %v3700
        %3702 = vst [vmem:[%s3254 + $0x1c] sm:$0xf] %v3701
        %3703 = vst.msk [vmem:[%s3254 + $0x20] sm:$0xf] %vm1437, %v3608
        %v3704 = vld [vmem:[%s3254 + $0x24] sm:$0xf]
        %v3705 = vsel %vm1440, %v3610, %v3704
        %3706 = vst [vmem:[%s3254 + $0x24] sm:$0xf] %v3705
        %3707 = vst.msk [vmem:[%s3254 + $0x28] sm:$0xf] %vm1437, %v3612
        %v3708 = vld [vmem:[%s3254 + $0x2c] sm:$0xf]
        %v3709 = vsel %vm1440, %v3614, %v3708
        %3710 = vst [vmem:[%s3254 + $0x2c] sm:$0xf] %v3709
        %3711 = vst.msk [vmem:[%s3254 + $0x30] sm:$0xf] %vm1437, %v3616
        %v3712 = vld [vmem:[%s3254 + $0x34] sm:$0xf]
        %v3713 = vsel %vm1440, %v3618, %v3712
        %3714 = vst [vmem:[%s3254 + $0x34] sm:$0xf] %v3713
        %3715 = vst.msk [vmem:[%s3254 + $0x38] sm:$0xf] %vm1437, %v3620
        %v3716 = vld [vmem:[%s3254 + $0x3c] sm:$0xf]
        %v3717 = vsel %vm1440, %v3622, %v3716
        %3718 = vst [vmem:[%s3254 + $0x3c] sm:$0xf] %v3717
        %3719 = vst.msk [vmem:[%s3254 + $0x40] sm:$0xf] %vm1437, %v3624
        %v3720 = vld [vmem:[%s3254 + $0x44] sm:$0xf]
        %v3721 = vsel %vm1440, %v3626, %v3720
        %3722 = vst [vmem:[%s3254 + $0x44] sm:$0xf] %v3721
        %3723 = vst.msk [vmem:[%s3254 + $0x48] sm:$0xf] %vm1437, %v3628
        %v3724 = vld [vmem:[%s3254 + $0x4c] sm:$0xf]
        %v3725 = vsel %vm1440, %v3630, %v3724
        %3726 = vst [vmem:[%s3254 + $0x4c] sm:$0xf] %v3725
        %3727 = vst.msk [vmem:[%s3254 + $0x50] sm:$0xf] %vm1437, %v3632
        %v3728 = vld [vmem:[%s3254 + $0x54] sm:$0xf]
        %v3729 = vsel %vm1440, %v3634, %v3728
        %3730 = vst [vmem:[%s3254 + $0x54] sm:$0xf] %v3729
        %3731 = vst.msk [vmem:[%s3254 + $0x58] sm:$0xf] %vm1437, %v3636
        %v3732 = vld [vmem:[%s3254 + $0x5c] sm:$0xf]
        %v3733 = vsel %vm1440, %v3638, %v3732
        %3734 = vst [vmem:[%s3254 + $0x5c] sm:$0xf] %v3733
        %3735 = vst.msk [vmem:[%s3254 + $0x60] sm:$0xf] %vm1437, %v3640
        %v3736 = vld [vmem:[%s3254 + $0x64] sm:$0xf]
        %v3737 = vsel %vm1440, %v3642, %v3736
        %3738 = vst [vmem:[%s3254 + $0x64] sm:$0xf] %v3737
        %3739 = vst.msk [vmem:[%s3254 + $0x68] sm:$0xf] %vm1437, %v3644
        %v3740 = vld [vmem:[%s3254 + $0x6c] sm:$0xf]
        %v3741 = vsel %vm1440, %v3646, %v3740
        %3742 = vst [vmem:[%s3254 + $0x6c] sm:$0xf] %v3741
        %3743 = vst.msk [vmem:[%s3254 + $0x70] sm:$0xf] %vm1437, %v3648
        %v3744 = vld [vmem:[%s3254 + $0x74] sm:$0xf]
        %v3745 = vsel %vm1440, %v3650, %v3744
        %3746 = vst [vmem:[%s3254 + $0x74] sm:$0xf] %v3745
        %3747 = vst.msk [vmem:[%s3254 + $0x78] sm:$0xf] %vm1437, %v3652
        %v3748 = vld [vmem:[%s3254 + $0x7c] sm:$0xf]
        %v3749 = vsel %vm1440, %v3654, %v3748
        %3750 = vst [vmem:[%s3254 + $0x7c] sm:$0xf] %v3749
        %v3751 = vld [vmem:[#allocation3] sm:$0xf]
        %v3752 = vld [vmem:[#allocation3 + $0x4] sm:$0xf]
        %v3753 = vld [vmem:[#allocation3 + $0x8] sm:$0xf]
        %v3754 = vld [vmem:[#allocation3 + $0xc] sm:$0xf]
        %v3755 = vld [vmem:[#allocation3 + $0x10] sm:$0xf]
        %v3756 = vld [vmem:[#allocation3 + $0x14] sm:$0xf]
        %v3757 = vld [vmem:[#allocation3 + $0x18] sm:$0xf]
        %v3758 = vld [vmem:[#allocation3 + $0x1c] sm:$0xf]
        %v3759 = vld [vmem:[#allocation3 + $0x20] sm:$0xf]
        %v3760 = vld [vmem:[#allocation3 + $0x24] sm:$0xf]
        %v3761 = vld [vmem:[#allocation3 + $0x28] sm:$0xf]
        %v3762 = vld [vmem:[#allocation3 + $0x2c] sm:$0xf]
        %v3763 = vld [vmem:[#allocation3 + $0x30] sm:$0xf]
        %v3764 = vld [vmem:[#allocation3 + $0x34] sm:$0xf]
        %v3765 = vld [vmem:[#allocation3 + $0x38] sm:$0xf]
        %v3766 = vld [vmem:[#allocation3 + $0x3c] sm:$0xf]
        %v3767 = vld [vmem:[#allocation3 + $0x40] sm:$0xf]
        %v3768 = vld [vmem:[#allocation3 + $0x44] sm:$0xf]
        %v3769 = vld [vmem:[#allocation3 + $0x48] sm:$0xf]
        %v3770 = vld [vmem:[#allocation3 + $0x4c] sm:$0xf]
        %v3771 = vld [vmem:[#allocation3 + $0x50] sm:$0xf]
        %v3772 = vld [vmem:[#allocation3 + $0x54] sm:$0xf]
        %v3773 = vld [vmem:[#allocation3 + $0x58] sm:$0xf]
        %v3774 = vld [vmem:[#allocation3 + $0x5c] sm:$0xf]
        %v3775 = vld [vmem:[#allocation3 + $0x60] sm:$0xf]
        %v3776 = vld [vmem:[#allocation3 + $0x64] sm:$0xf]
        %v3777 = vld [vmem:[#allocation3 + $0x68] sm:$0xf]
        %v3778 = vld [vmem:[#allocation3 + $0x6c] sm:$0xf]
        %v3779 = vld [vmem:[#allocation3 + $0x70] sm:$0xf]
        %v3780 = vld [vmem:[#allocation3 + $0x74] sm:$0xf]
        %v3781 = vld [vmem:[#allocation3 + $0x78] sm:$0xf]
        %v3782 = vld [vmem:[#allocation3 + $0x7c] sm:$0xf]
        %v3783 = vld [vmem:[%s4] sm:$0xf]
        %v3784 = vld [vmem:[%s4 + $0x4] sm:$0xf]
        %v3785 = vld [vmem:[%s4 + $0x8] sm:$0xf]
        %v3786 = vld [vmem:[%s4 + $0xc] sm:$0xf]
        %v3787 = vld [vmem:[%s4 + $0x10] sm:$0xf]
        %v3788 = vld [vmem:[%s4 + $0x14] sm:$0xf]
        %v3789 = vld [vmem:[%s4 + $0x18] sm:$0xf]
        %v3790 = vld [vmem:[%s4 + $0x1c] sm:$0xf]
        %v3791 = vld [vmem:[%s4 + $0x20] sm:$0xf]
        %v3792 = vld [vmem:[%s4 + $0x24] sm:$0xf]
        %v3793 = vld [vmem:[%s4 + $0x28] sm:$0xf]
        %v3794 = vld [vmem:[%s4 + $0x2c] sm:$0xf]
        %v3795 = vld [vmem:[%s3254] sm:$0xf]
        %v3796 = vld [vmem:[%s3254 + $0x4] sm:$0xf]
        %v3797 = vld [vmem:[%s3254 + $0x8] sm:$0xf]
        %v3798 = vld [vmem:[%s3254 + $0xc] sm:$0xf]
        %v3799 = vld [vmem:[%s3254 + $0x10] sm:$0xf]
        %v3800 = vld [vmem:[%s3254 + $0x14] sm:$0xf]
        %v3801 = vld [vmem:[%s3254 + $0x18] sm:$0xf]
        %v3802 = vld [vmem:[%s3254 + $0x1c] sm:$0xf]
        %v3803 = vld [vmem:[%s3254 + $0x20] sm:$0xf]
        %v3804 = vld [vmem:[%s3254 + $0x24] sm:$0xf]
        %v3805 = vld [vmem:[%s3254 + $0x28] sm:$0xf]
        %v3806 = vld [vmem:[%s3254 + $0x2c] sm:$0xf]
        %v3807 = vld [vmem:[%s3254 + $0x30] sm:$0xf]
        %v3808 = vld [vmem:[%s3254 + $0x34] sm:$0xf]
        %v3809 = vld [vmem:[%s3254 + $0x38] sm:$0xf]
        %v3810 = vld [vmem:[%s3254 + $0x3c] sm:$0xf]
        %v3811 = vld [vmem:[%s3254 + $0x40] sm:$0xf]
        %v3812 = vld [vmem:[%s3254 + $0x44] sm:$0xf]
        %v3813 = vld [vmem:[%s3254 + $0x48] sm:$0xf]
        %v3814 = vld [vmem:[%s3254 + $0x4c] sm:$0xf]
        %v3815 = vld [vmem:[%s3254 + $0x50] sm:$0xf]
        %v3816 = vld [vmem:[%s3254 + $0x54] sm:$0xf]
        %v3817 = vld [vmem:[%s3254 + $0x58] sm:$0xf]
        %v3818 = vld [vmem:[%s3254 + $0x5c] sm:$0xf]
        %v3819 = vld [vmem:[%s3254 + $0x60] sm:$0xf]
        %v3820 = vld [vmem:[%s3254 + $0x64] sm:$0xf]
        %v3821 = vld [vmem:[%s3254 + $0x68] sm:$0xf]
        %v3822 = vld [vmem:[%s3254 + $0x6c] sm:$0xf]
        %v3823 = vld [vmem:[%s3254 + $0x70] sm:$0xf]
        %v3824 = vld [vmem:[%s3254 + $0x74] sm:$0xf]
        %v3825 = vld [vmem:[%s3254 + $0x78] sm:$0xf]
        %v3826 = vld [vmem:[%s3254 + $0x7c] sm:$0xf]
        %s3827 = scalar_lea.vmem %s4, 48
        %v3828 = vld [vmem:[%s3827] sm:$0xf]
        %v3829 = vld [vmem:[%s3827 + $0x4] sm:$0xf]
        %v3830 = vld [vmem:[%s3827 + $0x8] sm:$0xf]
        %v3831 = vld [vmem:[%s3827 + $0xc] sm:$0xf]
        %v3832 = vld [vmem:[%s3827 + $0x10] sm:$0xf]
        %v3833 = vld [vmem:[%s3827 + $0x14] sm:$0xf]
        %v3834 = vld [vmem:[%s3827 + $0x18] sm:$0xf]
        %v3835 = vld [vmem:[%s3827 + $0x1c] sm:$0xf]
        %v3836 = vld [vmem:[%s3827 + $0x20] sm:$0xf]
        %v3837 = vld [vmem:[%s3827 + $0x24] sm:$0xf]
        %v3838 = vld [vmem:[%s3827 + $0x28] sm:$0xf]
        %v3839 = vld [vmem:[%s3827 + $0x2c] sm:$0xf]
        %v3872 = vunpack.c.l.b16 %v3795
        %v3873 = vunpack.c.l.b16 %v3796
        %v3874 = vunpack.c.l.b16 %v3797
        %v3875 = vunpack.c.l.b16 %v3798
        %v3876 = vunpack.c.l.b16 %v3799
        %v3877 = vunpack.c.l.b16 %v3800
        %v3878 = vunpack.c.l.b16 %v3801
        %v3879 = vunpack.c.l.b16 %v3802
        %v3880 = vunpack.c.l.b16 %v3803
        %v3881 = vunpack.c.l.b16 %v3804
        %v3882 = vunpack.c.l.b16 %v3805
        %v3883 = vunpack.c.l.b16 %v3806
        %v3884 = vunpack.c.l.b16 %v3807
        %v3885 = vunpack.c.l.b16 %v3808
        %v3886 = vunpack.c.l.b16 %v3809
        %v3887 = vunpack.c.l.b16 %v3810
        %v3888 = vunpack.c.l.b16 %v3811
        %v3889 = vunpack.c.l.b16 %v3812
        %v3890 = vunpack.c.l.b16 %v3813
        %v3891 = vunpack.c.l.b16 %v3814
        %v3892 = vunpack.c.l.b16 %v3815
        %v3893 = vunpack.c.l.b16 %v3816
        %v3894 = vunpack.c.l.b16 %v3817
        %v3895 = vunpack.c.l.b16 %v3818
        %v3896 = vunpack.c.l.b16 %v3819
        %v3897 = vunpack.c.l.b16 %v3820
        %v3898 = vunpack.c.l.b16 %v3821
        %v3899 = vunpack.c.l.b16 %v3822
        %v3900 = vunpack.c.l.b16 %v3823
        %v3901 = vunpack.c.l.b16 %v3824
        %v3902 = vunpack.c.l.b16 %v3825
        %v3903 = vunpack.c.l.b16 %v3826
        %v3904 = vpack.c.b16 %v3873, %v3872
        %v3905 = vpack.c.b16 %v3875, %v3874
        %v3906 = vpack.c.b16 %v3877, %v3876
        %v3907 = vpack.c.b16 %v3879, %v3878
        %v3908 = vpack.c.b16 %v3881, %v3880
        %v3909 = vpack.c.b16 %v3883, %v3882
        %v3910 = vpack.c.b16 %v3885, %v3884
        %v3911 = vpack.c.b16 %v3887, %v3886
        %v3912 = vpack.c.b16 %v3889, %v3888
        %v3913 = vpack.c.b16 %v3891, %v3890
        %v3914 = vpack.c.b16 %v3893, %v3892
        %v3915 = vpack.c.b16 %v3895, %v3894
        %v3916 = vpack.c.b16 %v3897, %v3896
        %v3917 = vpack.c.b16 %v3899, %v3898
        %v3918 = vpack.c.b16 %v3901, %v3900
        %v3919 = vpack.c.b16 %v3903, %v3902
        %v3932 = vunpack.c.l.b16 %v3828
        %v3933 = vunpack.c.l.b16 %v3829
        %v3934 = vunpack.c.l.b16 %v3830
        %v3935 = vunpack.c.l.b16 %v3831
        %v3936 = vunpack.c.l.b16 %v3832
        %v3937 = vunpack.c.l.b16 %v3833
        %v3938 = vunpack.c.l.b16 %v3834
        %v3939 = vunpack.c.l.b16 %v3835
        %v3940 = vunpack.c.l.b16 %v3836
        %v3941 = vunpack.c.l.b16 %v3837
        %v3942 = vunpack.c.l.b16 %v3838
        %v3943 = vunpack.c.l.b16 %v3839
        %v3944 = vpack.c.b16 %v3933, %v3932
        %v3945 = vpack.c.b16 %v3935, %v3934
        %v3946 = vpack.c.b16 %v3937, %v3936
        %v3947 = vpack.c.b16 %v3939, %v3938
        %v3948 = vpack.c.b16 %v3941, %v3940
        %v3949 = vpack.c.b16 %v3943, %v3942
        %v3957 = vsel %vm1709, %v3904, 0
        %v3960 = vsel %vm1709, %v3905, 0
        %v3963 = vsel %vm1709, %v3906, 0
        %v3966 = vsel %vm1709, %v3907, 0
        %v3969 = vsel %vm1709, %v3908, 0
        %v3972 = vsel %vm1709, %v3909, 0
        %v3975 = vsel %vm1709, %v3910, 0
        %v3978 = vsel %vm1709, %v3911, 0
        %v3981 = vsel %vm1709, %v3912, 0
        %v3984 = vsel %vm1709, %v3913, 0
        %v3987 = vsel %vm1709, %v3914, 0
        %v3990 = vsel %vm1709, %v3915, 0
        %v3993 = vsel %vm1709, %v3916, 0
        %v3996 = vsel %vm1709, %v3917, 0
        %v3999 = vsel %vm1709, %v3918, 0
        %v4002 = vsel %vm1709, %v3919, 0
        %4004 = vmatprep.subr.bf16.mxu0 0
        %4005 = vmatpush1.bf16.msra.mxu0 0
        %4006 = vmatprep.subr.bf16.mxu0 0
        %4007 = vmatpush1.bf16.msra.mxu0 0
        %4008 = vmatprep.subr.bf16.mxu0 0
        %4009 = vmatpush1.bf16.msra.mxu0 %v3949
        %4010 = vmatprep.subr.bf16.mxu0 0
        %4011 = vmatpush1.bf16.msra.mxu0 %v3948
        %4012 = vmatprep.subr.bf16.mxu0 0
        %4013 = vmatpush1.bf16.msra.mxu0 %v3947
        %4014 = vmatprep.subr.bf16.mxu0 0
        %4015 = vmatpush1.bf16.msra.mxu0 %v3946
        %4016 = vmatprep.subr.bf16.mxu0 0
        %4017 = vmatpush1.bf16.msra.mxu0 %v3945
        %4018 = vmatprep.subr.bf16.mxu0 0
        %4019 = vmatpush1.bf16.msra.mxu0 %v3944
        %4020 = vmatprep.subr.bf16.mxu0 0
        %4021 = vmatpush2.bf16.msra.mxu0 0
        %4022 = vmatprep.subr.bf16.mxu0 0
        %4023 = vmatpush2.bf16.msra.mxu0 0
        %4024 = vmatprep.subr.bf16.mxu0 0
        %4025 = vmatpush2.bf16.msra.mxu0 0
        %4026 = vmatprep.subr.bf16.mxu0 0
        %4027 = vmatpush2.bf16.msra.mxu0 0
        %4028 = vmatprep.subr.bf16.mxu0 0
        %4029 = vmatpush2.bf16.msra.mxu0 0
        %4030 = vmatprep.subr.bf16.mxu0 0
        %4031 = vmatpush2.bf16.msra.mxu0 0
        %4032 = vmatprep.subr.bf16.mxu0 0
        %4033 = vmatpush2.bf16.msra.mxu0 0
        %4034 = vmatprep.subr.bf16.mxu0 0
        %4035 = vmatpush2.bf16.msra.mxu0 0
        %4036 = vmatprep.mubr.bf16.mxu0 0
        %4037 = vmatmul.mubr.bf16.gmra.mxu0 %v3957
        %v4038 = vpop.f32.mrf.mxu0
        %v4039 = vadd.f32 0.0, %v4038
        %v4040 = vpop.f32.mrf.mxu0
        %v4041 = vpop.f32.mrf.mxu0
        %v4042 = vadd.f32 0.0, %v4041
        %v4043 = vpop.f32.mrf.mxu0
        %4044 = vmatprep.mubr.bf16.mxu0 0
        %4045 = vmatmul.mubr.bf16.gmra.mxu0 %v3960
        %v4046 = vpop.f32.mrf.mxu0
        %v4047 = vadd.f32 0.0, %v4046
        %v4048 = vpop.f32.mrf.mxu0
        %v4049 = vpop.f32.mrf.mxu0
        %v4050 = vadd.f32 0.0, %v4049
        %v4051 = vpop.f32.mrf.mxu0
        %4052 = vmatprep.mubr.bf16.mxu0 0
        %4053 = vmatmul.mubr.bf16.gmra.mxu0 %v3963
        %v4054 = vpop.f32.mrf.mxu0
        %v4055 = vadd.f32 0.0, %v4054
        %v4056 = vpop.f32.mrf.mxu0
        %v4057 = vpop.f32.mrf.mxu0
        %v4058 = vadd.f32 0.0, %v4057
        %v4059 = vpop.f32.mrf.mxu0
        %4060 = vmatprep.mubr.bf16.mxu0 0
        %4061 = vmatmul.mubr.bf16.gmra.mxu0 %v3966
        %v4062 = vpop.f32.mrf.mxu0
        %v4063 = vadd.f32 0.0, %v4062
        %v4064 = vpop.f32.mrf.mxu0
        %v4065 = vpop.f32.mrf.mxu0
        %v4066 = vadd.f32 0.0, %v4065
        %v4067 = vpop.f32.mrf.mxu0
        %4068 = vmatprep.mubr.bf16.mxu0 0
        %4069 = vmatmul.mubr.bf16.gmra.mxu0 %v3969
        %v4070 = vpop.f32.mrf.mxu0
        %v4071 = vadd.f32 0.0, %v4070
        %v4072 = vpop.f32.mrf.mxu0
        %v4073 = vpop.f32.mrf.mxu0
        %v4074 = vadd.f32 0.0, %v4073
        %v4075 = vpop.f32.mrf.mxu0
        %4076 = vmatprep.mubr.bf16.mxu0 0
        %4077 = vmatmul.mubr.bf16.gmra.mxu0 %v3972
        %v4078 = vpop.f32.mrf.mxu0
        %v4079 = vadd.f32 0.0, %v4078
        %v4080 = vpop.f32.mrf.mxu0
        %v4081 = vpop.f32.mrf.mxu0
        %v4082 = vadd.f32 0.0, %v4081
        %v4083 = vpop.f32.mrf.mxu0
        %4084 = vmatprep.mubr.bf16.mxu0 0
        %4085 = vmatmul.mubr.bf16.gmra.mxu0 %v3975
        %v4086 = vpop.f32.mrf.mxu0
        %v4087 = vadd.f32 0.0, %v4086
        %v4088 = vpop.f32.mrf.mxu0
        %v4089 = vpop.f32.mrf.mxu0
        %v4090 = vadd.f32 0.0, %v4089
        %v4091 = vpop.f32.mrf.mxu0
        %4092 = vmatprep.mubr.bf16.mxu0 0
        %4093 = vmatmul.mubr.bf16.gmra.mxu0 %v3978
        %v4094 = vpop.f32.mrf.mxu0
        %v4095 = vadd.f32 0.0, %v4094
        %v4096 = vpop.f32.mrf.mxu0
        %v4097 = vpop.f32.mrf.mxu0
        %v4098 = vadd.f32 0.0, %v4097
        %v4099 = vpop.f32.mrf.mxu0
        %4100 = vmatprep.mubr.bf16.mxu0 0
        %4101 = vmatmul.mubr.bf16.gmra.mxu0 %v3981
        %v4102 = vpop.f32.mrf.mxu0
        %v4103 = vadd.f32 0.0, %v4102
        %v4104 = vpop.f32.mrf.mxu0
        %v4105 = vpop.f32.mrf.mxu0
        %v4106 = vadd.f32 0.0, %v4105
        %v4107 = vpop.f32.mrf.mxu0
        %4108 = vmatprep.mubr.bf16.mxu0 0
        %4109 = vmatmul.mubr.bf16.gmra.mxu0 %v3984
        %v4110 = vpop.f32.mrf.mxu0
        %v4111 = vadd.f32 0.0, %v4110
        %v4112 = vpop.f32.mrf.mxu0
        %v4113 = vpop.f32.mrf.mxu0
        %v4114 = vadd.f32 0.0, %v4113
        %v4115 = vpop.f32.mrf.mxu0
        %4116 = vmatprep.mubr.bf16.mxu0 0
        %4117 = vmatmul.mubr.bf16.gmra.mxu0 %v3987
        %v4118 = vpop.f32.mrf.mxu0
        %v4119 = vadd.f32 0.0, %v4118
        %v4120 = vpop.f32.mrf.mxu0
        %v4121 = vpop.f32.mrf.mxu0
        %v4122 = vadd.f32 0.0, %v4121
        %v4123 = vpop.f32.mrf.mxu0
        %4124 = vmatprep.mubr.bf16.mxu0 0
        %4125 = vmatmul.mubr.bf16.gmra.mxu0 %v3990
        %v4126 = vpop.f32.mrf.mxu0
        %v4127 = vadd.f32 0.0, %v4126
        %v4128 = vpop.f32.mrf.mxu0
        %v4129 = vpop.f32.mrf.mxu0
        %v4130 = vadd.f32 0.0, %v4129
        %v4131 = vpop.f32.mrf.mxu0
        %4132 = vmatprep.mubr.bf16.mxu0 0
        %4133 = vmatmul.mubr.bf16.gmra.mxu0 %v3993
        %v4134 = vpop.f32.mrf.mxu0
        %v4135 = vadd.f32 0.0, %v4134
        %v4136 = vpop.f32.mrf.mxu0
        %v4137 = vpop.f32.mrf.mxu0
        %v4138 = vadd.f32 0.0, %v4137
        %v4139 = vpop.f32.mrf.mxu0
        %4140 = vmatprep.mubr.bf16.mxu0 0
        %4141 = vmatmul.mubr.bf16.gmra.mxu0 %v3996
        %v4142 = vpop.f32.mrf.mxu0
        %v4143 = vadd.f32 0.0, %v4142
        %v4144 = vpop.f32.mrf.mxu0
        %v4145 = vpop.f32.mrf.mxu0
        %v4146 = vadd.f32 0.0, %v4145
        %v4147 = vpop.f32.mrf.mxu0
        %4148 = vmatprep.mubr.bf16.mxu0 0
        %4149 = vmatmul.mubr.bf16.gmra.mxu0 %v3999
        %v4150 = vpop.f32.mrf.mxu0
        %v4151 = vadd.f32 0.0, %v4150
        %v4152 = vpop.f32.mrf.mxu0
        %v4153 = vpop.f32.mrf.mxu0
        %v4154 = vadd.f32 0.0, %v4153
        %v4155 = vpop.f32.mrf.mxu0
        %4156 = vmatprep.mubr.bf16.mxu0 0
        %4157 = vmatmul.mubr.bf16.gmra.mxu0 %v4002
        %v4158 = vpop.f32.mrf.mxu0
        %v4159 = vadd.f32 0.0, %v4158
        %v4160 = vpop.f32.mrf.mxu0
        %v4161 = vpop.f32.mrf.mxu0
        %v4162 = vadd.f32 0.0, %v4161
        %v4163 = vpop.f32.mrf.mxu0
        %4164 = vdwg.mxu0
        %v4197 = vunpack.c.l.b16 %v3751
        %v4198 = vunpack.c.l.b16 %v3752
        %v4199 = vunpack.c.l.b16 %v3753
        %v4200 = vunpack.c.l.b16 %v3754
        %v4201 = vunpack.c.l.b16 %v3755
        %v4202 = vunpack.c.l.b16 %v3756
        %v4203 = vunpack.c.l.b16 %v3757
        %v4204 = vunpack.c.l.b16 %v3758
        %v4205 = vunpack.c.l.b16 %v3759
        %v4206 = vunpack.c.l.b16 %v3760
        %v4207 = vunpack.c.l.b16 %v3761
        %v4208 = vunpack.c.l.b16 %v3762
        %v4209 = vunpack.c.l.b16 %v3763
        %v4210 = vunpack.c.l.b16 %v3764
        %v4211 = vunpack.c.l.b16 %v3765
        %v4212 = vunpack.c.l.b16 %v3766
        %v4213 = vunpack.c.l.b16 %v3767
        %v4214 = vunpack.c.l.b16 %v3768
        %v4215 = vunpack.c.l.b16 %v3769
        %v4216 = vunpack.c.l.b16 %v3770
        %v4217 = vunpack.c.l.b16 %v3771
        %v4218 = vunpack.c.l.b16 %v3772
        %v4219 = vunpack.c.l.b16 %v3773
        %v4220 = vunpack.c.l.b16 %v3774
        %v4221 = vunpack.c.l.b16 %v3775
        %v4222 = vunpack.c.l.b16 %v3776
        %v4223 = vunpack.c.l.b16 %v3777
        %v4224 = vunpack.c.l.b16 %v3778
        %v4225 = vunpack.c.l.b16 %v3779
        %v4226 = vunpack.c.l.b16 %v3780
        %v4227 = vunpack.c.l.b16 %v3781
        %v4228 = vunpack.c.l.b16 %v3782
        %v4229 = vpack.c.b16 %v4198, %v4197
        %v4230 = vpack.c.b16 %v4200, %v4199
        %v4231 = vpack.c.b16 %v4202, %v4201
        %v4232 = vpack.c.b16 %v4204, %v4203
        %v4233 = vpack.c.b16 %v4206, %v4205
        %v4234 = vpack.c.b16 %v4208, %v4207
        %v4235 = vpack.c.b16 %v4210, %v4209
        %v4236 = vpack.c.b16 %v4212, %v4211
        %v4237 = vpack.c.b16 %v4214, %v4213
        %v4238 = vpack.c.b16 %v4216, %v4215
        %v4239 = vpack.c.b16 %v4218, %v4217
        %v4240 = vpack.c.b16 %v4220, %v4219
        %v4241 = vpack.c.b16 %v4222, %v4221
        %v4242 = vpack.c.b16 %v4224, %v4223
        %v4243 = vpack.c.b16 %v4226, %v4225
        %v4244 = vpack.c.b16 %v4228, %v4227
        %v4257 = vunpack.c.l.b16 %v3783
        %v4258 = vunpack.c.l.b16 %v3784
        %v4259 = vunpack.c.l.b16 %v3785
        %v4260 = vunpack.c.l.b16 %v3786
        %v4261 = vunpack.c.l.b16 %v3787
        %v4262 = vunpack.c.l.b16 %v3788
        %v4263 = vunpack.c.l.b16 %v3789
        %v4264 = vunpack.c.l.b16 %v3790
        %v4265 = vunpack.c.l.b16 %v3791
        %v4266 = vunpack.c.l.b16 %v3792
        %v4267 = vunpack.c.l.b16 %v3793
        %v4268 = vunpack.c.l.b16 %v3794
        %v4269 = vpack.c.b16 %v4258, %v4257
        %v4270 = vpack.c.b16 %v4260, %v4259
        %v4271 = vpack.c.b16 %v4262, %v4261
        %v4272 = vpack.c.b16 %v4264, %v4263
        %v4273 = vpack.c.b16 %v4266, %v4265
        %v4274 = vpack.c.b16 %v4268, %v4267
        %v4282 = vsel %vm1709, %v4229, 0
        %v4285 = vsel %vm1709, %v4230, 0
        %v4288 = vsel %vm1709, %v4231, 0
        %v4291 = vsel %vm1709, %v4232, 0
        %v4294 = vsel %vm1709, %v4233, 0
        %v4297 = vsel %vm1709, %v4234, 0
        %v4300 = vsel %vm1709, %v4235, 0
        %v4303 = vsel %vm1709, %v4236, 0
        %v4306 = vsel %vm1709, %v4237, 0
        %v4309 = vsel %vm1709, %v4238, 0
        %v4312 = vsel %vm1709, %v4239, 0
        %v4315 = vsel %vm1709, %v4240, 0
        %v4318 = vsel %vm1709, %v4241, 0
        %v4321 = vsel %vm1709, %v4242, 0
        %v4324 = vsel %vm1709, %v4243, 0
        %v4327 = vsel %vm1709, %v4244, 0
        %4329 = vmatprep.subr.bf16.mxu0 0
        %4330 = vmatpush1.bf16.msra.mxu0 0
        %4331 = vmatprep.subr.bf16.mxu0 0
        %4332 = vmatpush1.bf16.msra.mxu0 0
        %4333 = vmatprep.subr.bf16.mxu0 0
        %4334 = vmatpush1.bf16.msra.mxu0 %v4274
        %4335 = vmatprep.subr.bf16.mxu0 0
        %4336 = vmatpush1.bf16.msra.mxu0 %v4273
        %4337 = vmatprep.subr.bf16.mxu0 0
        %4338 = vmatpush1.bf16.msra.mxu0 %v4272
        %4339 = vmatprep.subr.bf16.mxu0 0
        %4340 = vmatpush1.bf16.msra.mxu0 %v4271
        %4341 = vmatprep.subr.bf16.mxu0 0
        %4342 = vmatpush1.bf16.msra.mxu0 %v4270
        %4343 = vmatprep.subr.bf16.mxu0 0
        %4344 = vmatpush1.bf16.msra.mxu0 %v4269
        %4345 = vmatprep.subr.bf16.mxu0 0
        %4346 = vmatpush2.bf16.msra.mxu0 0
        %4347 = vmatprep.subr.bf16.mxu0 0
        %4348 = vmatpush2.bf16.msra.mxu0 0
        %4349 = vmatprep.subr.bf16.mxu0 0
        %4350 = vmatpush2.bf16.msra.mxu0 0
        %4351 = vmatprep.subr.bf16.mxu0 0
        %4352 = vmatpush2.bf16.msra.mxu0 0
        %4353 = vmatprep.subr.bf16.mxu0 0
        %4354 = vmatpush2.bf16.msra.mxu0 0
        %4355 = vmatprep.subr.bf16.mxu0 0
        %4356 = vmatpush2.bf16.msra.mxu0 0
        %4357 = vmatprep.subr.bf16.mxu0 0
        %4358 = vmatpush2.bf16.msra.mxu0 0
        %4359 = vmatprep.subr.bf16.mxu0 0
        %4360 = vmatpush2.bf16.msra.mxu0 0
        %4361 = vmatprep.mubr.bf16.mxu0 0
        %4362 = vmatmul.mubr.bf16.gmra.mxu0 %v4282
        %v4363 = vpop.f32.mrf.mxu0
        %v4364 = vadd.f32 %v4039, %v4363
        %v4365 = vpop.f32.mrf.mxu0
        %v4366 = vpop.f32.mrf.mxu0
        %v4367 = vadd.f32 %v4042, %v4366
        %v4368 = vpop.f32.mrf.mxu0
        %4369 = vmatprep.mubr.bf16.mxu0 0
        %4370 = vmatmul.mubr.bf16.gmra.mxu0 %v4285
        %v4371 = vpop.f32.mrf.mxu0
        %v4372 = vadd.f32 %v4047, %v4371
        %v4373 = vpop.f32.mrf.mxu0
        %v4374 = vpop.f32.mrf.mxu0
        %v4375 = vadd.f32 %v4050, %v4374
        %v4376 = vpop.f32.mrf.mxu0
        %4377 = vmatprep.mubr.bf16.mxu0 0
        %4378 = vmatmul.mubr.bf16.gmra.mxu0 %v4288
        %v4379 = vpop.f32.mrf.mxu0
        %v4380 = vadd.f32 %v4055, %v4379
        %v4381 = vpop.f32.mrf.mxu0
        %v4382 = vpop.f32.mrf.mxu0
        %v4383 = vadd.f32 %v4058, %v4382
        %v4384 = vpop.f32.mrf.mxu0
        %4385 = vmatprep.mubr.bf16.mxu0 0
        %4386 = vmatmul.mubr.bf16.gmra.mxu0 %v4291
        %v4387 = vpop.f32.mrf.mxu0
        %v4388 = vadd.f32 %v4063, %v4387
        %v4389 = vpop.f32.mrf.mxu0
        %v4390 = vpop.f32.mrf.mxu0
        %v4391 = vadd.f32 %v4066, %v4390
        %v4392 = vpop.f32.mrf.mxu0
        %4393 = vmatprep.mubr.bf16.mxu0 0
        %4394 = vmatmul.mubr.bf16.gmra.mxu0 %v4294
        %v4395 = vpop.f32.mrf.mxu0
        %v4396 = vadd.f32 %v4071, %v4395
        %v4397 = vpop.f32.mrf.mxu0
        %v4398 = vpop.f32.mrf.mxu0
        %v4399 = vadd.f32 %v4074, %v4398
        %v4400 = vpop.f32.mrf.mxu0
        %4401 = vmatprep.mubr.bf16.mxu0 0
        %4402 = vmatmul.mubr.bf16.gmra.mxu0 %v4297
        %v4403 = vpop.f32.mrf.mxu0
        %v4404 = vadd.f32 %v4079, %v4403
        %v4405 = vpop.f32.mrf.mxu0
        %v4406 = vpop.f32.mrf.mxu0
        %v4407 = vadd.f32 %v4082, %v4406
        %v4408 = vpop.f32.mrf.mxu0
        %4409 = vmatprep.mubr.bf16.mxu0 0
        %4410 = vmatmul.mubr.bf16.gmra.mxu0 %v4300
        %v4411 = vpop.f32.mrf.mxu0
        %v4412 = vadd.f32 %v4087, %v4411
        %v4413 = vpop.f32.mrf.mxu0
        %v4414 = vpop.f32.mrf.mxu0
        %v4415 = vadd.f32 %v4090, %v4414
        %v4416 = vpop.f32.mrf.mxu0
        %4417 = vmatprep.mubr.bf16.mxu0 0
        %4418 = vmatmul.mubr.bf16.gmra.mxu0 %v4303
        %v4419 = vpop.f32.mrf.mxu0
        %v4420 = vadd.f32 %v4095, %v4419
        %v4421 = vpop.f32.mrf.mxu0
        %v4422 = vpop.f32.mrf.mxu0
        %v4423 = vadd.f32 %v4098, %v4422
        %v4424 = vpop.f32.mrf.mxu0
        %4425 = vmatprep.mubr.bf16.mxu0 0
        %4426 = vmatmul.mubr.bf16.gmra.mxu0 %v4306
        %v4427 = vpop.f32.mrf.mxu0
        %v4428 = vadd.f32 %v4103, %v4427
        %v4429 = vpop.f32.mrf.mxu0
        %v4430 = vpop.f32.mrf.mxu0
        %v4431 = vadd.f32 %v4106, %v4430
        %v4432 = vpop.f32.mrf.mxu0
        %4433 = vmatprep.mubr.bf16.mxu0 0
        %4434 = vmatmul.mubr.bf16.gmra.mxu0 %v4309
        %v4435 = vpop.f32.mrf.mxu0
        %v4436 = vadd.f32 %v4111, %v4435
        %v4437 = vpop.f32.mrf.mxu0
        %v4438 = vpop.f32.mrf.mxu0
        %v4439 = vadd.f32 %v4114, %v4438
        %v4440 = vpop.f32.mrf.mxu0
        %4441 = vmatprep.mubr.bf16.mxu0 0
        %4442 = vmatmul.mubr.bf16.gmra.mxu0 %v4312
        %v4443 = vpop.f32.mrf.mxu0
        %v4444 = vadd.f32 %v4119, %v4443
        %v4445 = vpop.f32.mrf.mxu0
        %v4446 = vpop.f32.mrf.mxu0
        %v4447 = vadd.f32 %v4122, %v4446
        %v4448 = vpop.f32.mrf.mxu0
        %4449 = vmatprep.mubr.bf16.mxu0 0
        %4450 = vmatmul.mubr.bf16.gmra.mxu0 %v4315
        %v4451 = vpop.f32.mrf.mxu0
        %v4452 = vadd.f32 %v4127, %v4451
        %v4453 = vpop.f32.mrf.mxu0
        %v4454 = vpop.f32.mrf.mxu0
        %v4455 = vadd.f32 %v4130, %v4454
        %v4456 = vpop.f32.mrf.mxu0
        %4457 = vmatprep.mubr.bf16.mxu0 0
        %4458 = vmatmul.mubr.bf16.gmra.mxu0 %v4318
        %v4459 = vpop.f32.mrf.mxu0
        %v4460 = vadd.f32 %v4135, %v4459
        %v4461 = vpop.f32.mrf.mxu0
        %v4462 = vpop.f32.mrf.mxu0
        %v4463 = vadd.f32 %v4138, %v4462
        %v4464 = vpop.f32.mrf.mxu0
        %4465 = vmatprep.mubr.bf16.mxu0 0
        %4466 = vmatmul.mubr.bf16.gmra.mxu0 %v4321
        %v4467 = vpop.f32.mrf.mxu0
        %v4468 = vadd.f32 %v4143, %v4467
        %v4469 = vpop.f32.mrf.mxu0
        %v4470 = vpop.f32.mrf.mxu0
        %v4471 = vadd.f32 %v4146, %v4470
        %v4472 = vpop.f32.mrf.mxu0
        %4473 = vmatprep.mubr.bf16.mxu0 0
        %4474 = vmatmul.mubr.bf16.gmra.mxu0 %v4324
        %v4475 = vpop.f32.mrf.mxu0
        %v4476 = vadd.f32 %v4151, %v4475
        %v4477 = vpop.f32.mrf.mxu0
        %v4478 = vpop.f32.mrf.mxu0
        %v4479 = vadd.f32 %v4154, %v4478
        %v4480 = vpop.f32.mrf.mxu0
        %4481 = vmatprep.mubr.bf16.mxu0 0
        %4482 = vmatmul.mubr.bf16.gmra.mxu0 %v4327
        %v4483 = vpop.f32.mrf.mxu0
        %v4484 = vadd.f32 %v4159, %v4483
        %v4485 = vpop.f32.mrf.mxu0
        %v4486 = vpop.f32.mrf.mxu0
        %v4487 = vadd.f32 %v4162, %v4486
        %v4488 = vpop.f32.mrf.mxu0
        %4489 = vdwg.mxu0
        %s4490 = scalar_lea.vmem [#allocation3], 16
        %v4491 = vld [vmem:[%s4490] sm:$0xf]
        %v4492 = vld [vmem:[%s4490 + $0x4] sm:$0xf]
        %v4493 = vld [vmem:[%s4490 + $0x8] sm:$0xf]
        %v4494 = vld [vmem:[%s4490 + $0xc] sm:$0xf]
        %v4495 = vld [vmem:[%s4490 + $0x10] sm:$0xf]
        %v4496 = vld [vmem:[%s4490 + $0x14] sm:$0xf]
        %v4497 = vld [vmem:[%s4490 + $0x18] sm:$0xf]
        %v4498 = vld [vmem:[%s4490 + $0x1c] sm:$0xf]
        %v4499 = vld [vmem:[%s4490 + $0x20] sm:$0xf]
        %v4500 = vld [vmem:[%s4490 + $0x24] sm:$0xf]
        %v4501 = vld [vmem:[%s4490 + $0x28] sm:$0xf]
        %v4502 = vld [vmem:[%s4490 + $0x2c] sm:$0xf]
        %v4503 = vld [vmem:[%s4490 + $0x30] sm:$0xf]
        %v4504 = vld [vmem:[%s4490 + $0x34] sm:$0xf]
        %v4505 = vld [vmem:[%s4490 + $0x38] sm:$0xf]
        %v4506 = vld [vmem:[%s4490 + $0x3c] sm:$0xf]
        %v4507 = vld [vmem:[%s4490 + $0x40] sm:$0xf]
        %v4508 = vld [vmem:[%s4490 + $0x44] sm:$0xf]
        %v4509 = vld [vmem:[%s4490 + $0x48] sm:$0xf]
        %v4510 = vld [vmem:[%s4490 + $0x4c] sm:$0xf]
        %v4511 = vld [vmem:[%s4490 + $0x50] sm:$0xf]
        %v4512 = vld [vmem:[%s4490 + $0x54] sm:$0xf]
        %v4513 = vld [vmem:[%s4490 + $0x58] sm:$0xf]
        %v4514 = vld [vmem:[%s4490 + $0x5c] sm:$0xf]
        %v4515 = vld [vmem:[%s4490 + $0x60] sm:$0xf]
        %v4516 = vld [vmem:[%s4490 + $0x64] sm:$0xf]
        %v4517 = vld [vmem:[%s4490 + $0x68] sm:$0xf]
        %v4518 = vld [vmem:[%s4490 + $0x6c] sm:$0xf]
        %v4519 = vld [vmem:[%s4490 + $0x70] sm:$0xf]
        %v4520 = vld [vmem:[%s4490 + $0x74] sm:$0xf]
        %v4521 = vld [vmem:[%s4490 + $0x78] sm:$0xf]
        %v4522 = vld [vmem:[%s4490 + $0x7c] sm:$0xf]
        %s4523 = scalar_lea.vmem %s4, 96
        %v4524 = vld [vmem:[%s4523] sm:$0xf]
        %v4525 = vld [vmem:[%s4523 + $0x4] sm:$0xf]
        %v4526 = vld [vmem:[%s4523 + $0x8] sm:$0xf]
        %v4527 = vld [vmem:[%s4523 + $0xc] sm:$0xf]
        %v4528 = vld [vmem:[%s4523 + $0x10] sm:$0xf]
        %v4529 = vld [vmem:[%s4523 + $0x14] sm:$0xf]
        %v4530 = vld [vmem:[%s4523 + $0x18] sm:$0xf]
        %v4531 = vld [vmem:[%s4523 + $0x1c] sm:$0xf]
        %v4532 = vld [vmem:[%s4523 + $0x20] sm:$0xf]
        %v4533 = vld [vmem:[%s4523 + $0x24] sm:$0xf]
        %v4534 = vld [vmem:[%s4523 + $0x28] sm:$0xf]
        %v4535 = vld [vmem:[%s4523 + $0x2c] sm:$0xf]
        %v4568 = vunpack.c.l.b16 %v4491
        %v4569 = vunpack.c.l.b16 %v4492
        %v4570 = vunpack.c.l.b16 %v4493
        %v4571 = vunpack.c.l.b16 %v4494
        %v4572 = vunpack.c.l.b16 %v4495
        %v4573 = vunpack.c.l.b16 %v4496
        %v4574 = vunpack.c.l.b16 %v4497
        %v4575 = vunpack.c.l.b16 %v4498
        %v4576 = vunpack.c.l.b16 %v4499
        %v4577 = vunpack.c.l.b16 %v4500
        %v4578 = vunpack.c.l.b16 %v4501
        %v4579 = vunpack.c.l.b16 %v4502
        %v4580 = vunpack.c.l.b16 %v4503
        %v4581 = vunpack.c.l.b16 %v4504
        %v4582 = vunpack.c.l.b16 %v4505
        %v4583 = vunpack.c.l.b16 %v4506
        %v4584 = vunpack.c.l.b16 %v4507
        %v4585 = vunpack.c.l.b16 %v4508
        %v4586 = vunpack.c.l.b16 %v4509
        %v4587 = vunpack.c.l.b16 %v4510
        %v4588 = vunpack.c.l.b16 %v4511
        %v4589 = vunpack.c.l.b16 %v4512
        %v4590 = vunpack.c.l.b16 %v4513
        %v4591 = vunpack.c.l.b16 %v4514
        %v4592 = vunpack.c.l.b16 %v4515
        %v4593 = vunpack.c.l.b16 %v4516
        %v4594 = vunpack.c.l.b16 %v4517
        %v4595 = vunpack.c.l.b16 %v4518
        %v4596 = vunpack.c.l.b16 %v4519
        %v4597 = vunpack.c.l.b16 %v4520
        %v4598 = vunpack.c.l.b16 %v4521
        %v4599 = vunpack.c.l.b16 %v4522
        %v4600 = vpack.c.b16 %v4569, %v4568
        %v4601 = vpack.c.b16 %v4571, %v4570
        %v4602 = vpack.c.b16 %v4573, %v4572
        %v4603 = vpack.c.b16 %v4575, %v4574
        %v4604 = vpack.c.b16 %v4577, %v4576
        %v4605 = vpack.c.b16 %v4579, %v4578
        %v4606 = vpack.c.b16 %v4581, %v4580
        %v4607 = vpack.c.b16 %v4583, %v4582
        %v4608 = vpack.c.b16 %v4585, %v4584
        %v4609 = vpack.c.b16 %v4587, %v4586
        %v4610 = vpack.c.b16 %v4589, %v4588
        %v4611 = vpack.c.b16 %v4591, %v4590
        %v4612 = vpack.c.b16 %v4593, %v4592
        %v4613 = vpack.c.b16 %v4595, %v4594
        %v4614 = vpack.c.b16 %v4597, %v4596
        %v4615 = vpack.c.b16 %v4599, %v4598
        %v4628 = vunpack.c.l.b16 %v4524
        %v4629 = vunpack.c.l.b16 %v4525
        %v4630 = vunpack.c.l.b16 %v4526
        %v4631 = vunpack.c.l.b16 %v4527
        %v4632 = vunpack.c.l.b16 %v4528
        %v4633 = vunpack.c.l.b16 %v4529
        %v4634 = vunpack.c.l.b16 %v4530
        %v4635 = vunpack.c.l.b16 %v4531
        %v4636 = vunpack.c.l.b16 %v4532
        %v4637 = vunpack.c.l.b16 %v4533
        %v4638 = vunpack.c.l.b16 %v4534
        %v4639 = vunpack.c.l.b16 %v4535
        %v4640 = vpack.c.b16 %v4629, %v4628
        %v4641 = vpack.c.b16 %v4631, %v4630
        %v4642 = vpack.c.b16 %v4633, %v4632
        %v4643 = vpack.c.b16 %v4635, %v4634
        %v4644 = vpack.c.b16 %v4637, %v4636
        %v4645 = vpack.c.b16 %v4639, %v4638
        %v4653 = vsel %vm1709, %v4600, 0
        %v4656 = vsel %vm1709, %v4601, 0
        %v4659 = vsel %vm1709, %v4602, 0
        %v4662 = vsel %vm1709, %v4603, 0
        %v4665 = vsel %vm1709, %v4604, 0
        %v4668 = vsel %vm1709, %v4605, 0
        %v4671 = vsel %vm1709, %v4606, 0
        %v4674 = vsel %vm1709, %v4607, 0
        %v4677 = vsel %vm1709, %v4608, 0
        %v4680 = vsel %vm1709, %v4609, 0
        %v4683 = vsel %vm1709, %v4610, 0
        %v4686 = vsel %vm1709, %v4611, 0
        %v4689 = vsel %vm1709, %v4612, 0
        %v4692 = vsel %vm1709, %v4613, 0
        %v4695 = vsel %vm1709, %v4614, 0
        %v4698 = vsel %vm1709, %v4615, 0
        %4700 = vmatprep.subr.bf16.mxu0 0
        %4701 = vmatpush1.bf16.msra.mxu0 0
        %4702 = vmatprep.subr.bf16.mxu0 0
        %4703 = vmatpush1.bf16.msra.mxu0 0
        %4704 = vmatprep.subr.bf16.mxu0 0
        %4705 = vmatpush1.bf16.msra.mxu0 %v4645
        %4706 = vmatprep.subr.bf16.mxu0 0
        %4707 = vmatpush1.bf16.msra.mxu0 %v4644
        %4708 = vmatprep.subr.bf16.mxu0 0
        %4709 = vmatpush1.bf16.msra.mxu0 %v4643
        %4710 = vmatprep.subr.bf16.mxu0 0
        %4711 = vmatpush1.bf16.msra.mxu0 %v4642
        %4712 = vmatprep.subr.bf16.mxu0 0
        %4713 = vmatpush1.bf16.msra.mxu0 %v4641
        %4714 = vmatprep.subr.bf16.mxu0 0
        %4715 = vmatpush1.bf16.msra.mxu0 %v4640
        %4716 = vmatprep.subr.bf16.mxu0 0
        %4717 = vmatpush2.bf16.msra.mxu0 0
        %4718 = vmatprep.subr.bf16.mxu0 0
        %4719 = vmatpush2.bf16.msra.mxu0 0
        %4720 = vmatprep.subr.bf16.mxu0 0
        %4721 = vmatpush2.bf16.msra.mxu0 0
        %4722 = vmatprep.subr.bf16.mxu0 0
        %4723 = vmatpush2.bf16.msra.mxu0 0
        %4724 = vmatprep.subr.bf16.mxu0 0
        %4725 = vmatpush2.bf16.msra.mxu0 0
        %4726 = vmatprep.subr.bf16.mxu0 0
        %4727 = vmatpush2.bf16.msra.mxu0 0
        %4728 = vmatprep.subr.bf16.mxu0 0
        %4729 = vmatpush2.bf16.msra.mxu0 0
        %4730 = vmatprep.subr.bf16.mxu0 0
        %4731 = vmatpush2.bf16.msra.mxu0 0
        %4732 = vmatprep.mubr.bf16.mxu0 0
        %4733 = vmatmul.mubr.bf16.gmra.mxu0 %v4653
        %v4734 = vpop.f32.mrf.mxu0
        %v4735 = vadd.f32 0.0, %v4734
        %v4736 = vpop.f32.mrf.mxu0
        %v4737 = vpop.f32.mrf.mxu0
        %v4738 = vadd.f32 0.0, %v4737
        %v4739 = vpop.f32.mrf.mxu0
        %4740 = vmatprep.mubr.bf16.mxu0 0
        %4741 = vmatmul.mubr.bf16.gmra.mxu0 %v4656
        %v4742 = vpop.f32.mrf.mxu0
        %v4743 = vadd.f32 0.0, %v4742
        %v4744 = vpop.f32.mrf.mxu0
        %v4745 = vpop.f32.mrf.mxu0
        %v4746 = vadd.f32 0.0, %v4745
        %v4747 = vpop.f32.mrf.mxu0
        %4748 = vmatprep.mubr.bf16.mxu0 0
        %4749 = vmatmul.mubr.bf16.gmra.mxu0 %v4659
        %v4750 = vpop.f32.mrf.mxu0
        %v4751 = vadd.f32 0.0, %v4750
        %v4752 = vpop.f32.mrf.mxu0
        %v4753 = vpop.f32.mrf.mxu0
        %v4754 = vadd.f32 0.0, %v4753
        %v4755 = vpop.f32.mrf.mxu0
        %4756 = vmatprep.mubr.bf16.mxu0 0
        %4757 = vmatmul.mubr.bf16.gmra.mxu0 %v4662
        %v4758 = vpop.f32.mrf.mxu0
        %v4759 = vadd.f32 0.0, %v4758
        %v4760 = vpop.f32.mrf.mxu0
        %v4761 = vpop.f32.mrf.mxu0
        %v4762 = vadd.f32 0.0, %v4761
        %v4763 = vpop.f32.mrf.mxu0
        %4764 = vmatprep.mubr.bf16.mxu0 0
        %4765 = vmatmul.mubr.bf16.gmra.mxu0 %v4665
        %v4766 = vpop.f32.mrf.mxu0
        %v4767 = vadd.f32 0.0, %v4766
        %v4768 = vpop.f32.mrf.mxu0
        %v4769 = vpop.f32.mrf.mxu0
        %v4770 = vadd.f32 0.0, %v4769
        %v4771 = vpop.f32.mrf.mxu0
        %4772 = vmatprep.mubr.bf16.mxu0 0
        %4773 = vmatmul.mubr.bf16.gmra.mxu0 %v4668
        %v4774 = vpop.f32.mrf.mxu0
        %v4775 = vadd.f32 0.0, %v4774
        %v4776 = vpop.f32.mrf.mxu0
        %v4777 = vpop.f32.mrf.mxu0
        %v4778 = vadd.f32 0.0, %v4777
        %v4779 = vpop.f32.mrf.mxu0
        %4780 = vmatprep.mubr.bf16.mxu0 0
        %4781 = vmatmul.mubr.bf16.gmra.mxu0 %v4671
        %v4782 = vpop.f32.mrf.mxu0
        %v4783 = vadd.f32 0.0, %v4782
        %v4784 = vpop.f32.mrf.mxu0
        %v4785 = vpop.f32.mrf.mxu0
        %v4786 = vadd.f32 0.0, %v4785
        %v4787 = vpop.f32.mrf.mxu0
        %4788 = vmatprep.mubr.bf16.mxu0 0
        %4789 = vmatmul.mubr.bf16.gmra.mxu0 %v4674
        %v4790 = vpop.f32.mrf.mxu0
        %v4791 = vadd.f32 0.0, %v4790
        %v4792 = vpop.f32.mrf.mxu0
        %v4793 = vpop.f32.mrf.mxu0
        %v4794 = vadd.f32 0.0, %v4793
        %v4795 = vpop.f32.mrf.mxu0
        %4796 = vmatprep.mubr.bf16.mxu0 0
        %4797 = vmatmul.mubr.bf16.gmra.mxu0 %v4677
        %v4798 = vpop.f32.mrf.mxu0
        %v4799 = vadd.f32 0.0, %v4798
        %v4800 = vpop.f32.mrf.mxu0
        %v4801 = vpop.f32.mrf.mxu0
        %v4802 = vadd.f32 0.0, %v4801
        %v4803 = vpop.f32.mrf.mxu0
        %4804 = vmatprep.mubr.bf16.mxu0 0
        %4805 = vmatmul.mubr.bf16.gmra.mxu0 %v4680
        %v4806 = vpop.f32.mrf.mxu0
        %v4807 = vadd.f32 0.0, %v4806
        %v4808 = vpop.f32.mrf.mxu0
        %v4809 = vpop.f32.mrf.mxu0
        %v4810 = vadd.f32 0.0, %v4809
        %v4811 = vpop.f32.mrf.mxu0
        %4812 = vmatprep.mubr.bf16.mxu0 0
        %4813 = vmatmul.mubr.bf16.gmra.mxu0 %v4683
        %v4814 = vpop.f32.mrf.mxu0
        %v4815 = vadd.f32 0.0, %v4814
        %v4816 = vpop.f32.mrf.mxu0
        %v4817 = vpop.f32.mrf.mxu0
        %v4818 = vadd.f32 0.0, %v4817
        %v4819 = vpop.f32.mrf.mxu0
        %4820 = vmatprep.mubr.bf16.mxu0 0
        %4821 = vmatmul.mubr.bf16.gmra.mxu0 %v4686
        %v4822 = vpop.f32.mrf.mxu0
        %v4823 = vadd.f32 0.0, %v4822
        %v4824 = vpop.f32.mrf.mxu0
        %v4825 = vpop.f32.mrf.mxu0
        %v4826 = vadd.f32 0.0, %v4825
        %v4827 = vpop.f32.mrf.mxu0
        %4828 = vmatprep.mubr.bf16.mxu0 0
        %4829 = vmatmul.mubr.bf16.gmra.mxu0 %v4689
        %v4830 = vpop.f32.mrf.mxu0
        %v4831 = vadd.f32 0.0, %v4830
        %v4832 = vpop.f32.mrf.mxu0
        %v4833 = vpop.f32.mrf.mxu0
        %v4834 = vadd.f32 0.0, %v4833
        %v4835 = vpop.f32.mrf.mxu0
        %4836 = vmatprep.mubr.bf16.mxu0 0
        %4837 = vmatmul.mubr.bf16.gmra.mxu0 %v4692
        %v4838 = vpop.f32.mrf.mxu0
        %v4839 = vadd.f32 0.0, %v4838
        %v4840 = vpop.f32.mrf.mxu0
        %v4841 = vpop.f32.mrf.mxu0
        %v4842 = vadd.f32 0.0, %v4841
        %v4843 = vpop.f32.mrf.mxu0
        %4844 = vmatprep.mubr.bf16.mxu0 0
        %4845 = vmatmul.mubr.bf16.gmra.mxu0 %v4695
        %v4846 = vpop.f32.mrf.mxu0
        %v4847 = vadd.f32 0.0, %v4846
        %v4848 = vpop.f32.mrf.mxu0
        %v4849 = vpop.f32.mrf.mxu0
        %v4850 = vadd.f32 0.0, %v4849
        %v4851 = vpop.f32.mrf.mxu0
        %4852 = vmatprep.mubr.bf16.mxu0 0
        %4853 = vmatmul.mubr.bf16.gmra.mxu0 %v4698
        %v4854 = vpop.f32.mrf.mxu0
        %v4855 = vadd.f32 0.0, %v4854
        %v4856 = vpop.f32.mrf.mxu0
        %v4857 = vpop.f32.mrf.mxu0
        %v4858 = vadd.f32 0.0, %v4857
        %v4859 = vpop.f32.mrf.mxu0
        %4860 = vdwg.mxu0
        %v4861 = vadd.f32 %v4364, %v4735
        %v4862 = vadd.f32 %v4367, %v4738
        %v4863 = vadd.f32 %v4372, %v4743
        %v4864 = vadd.f32 %v4375, %v4746
        %v4865 = vadd.f32 %v4380, %v4751
        %v4866 = vadd.f32 %v4383, %v4754
        %v4867 = vadd.f32 %v4388, %v4759
        %v4868 = vadd.f32 %v4391, %v4762
        %v4869 = vadd.f32 %v4396, %v4767
        %v4870 = vadd.f32 %v4399, %v4770
        %v4871 = vadd.f32 %v4404, %v4775
        %v4872 = vadd.f32 %v4407, %v4778
        %v4873 = vadd.f32 %v4412, %v4783
        %v4874 = vadd.f32 %v4415, %v4786
        %v4875 = vadd.f32 %v4420, %v4791
        %v4876 = vadd.f32 %v4423, %v4794
        %v4877 = vadd.f32 %v4428, %v4799
        %v4878 = vadd.f32 %v4431, %v4802
        %v4879 = vadd.f32 %v4436, %v4807
        %v4880 = vadd.f32 %v4439, %v4810
        %v4881 = vadd.f32 %v4444, %v4815
        %v4882 = vadd.f32 %v4447, %v4818
        %v4883 = vadd.f32 %v4452, %v4823
        %v4884 = vadd.f32 %v4455, %v4826
        %v4885 = vadd.f32 %v4460, %v4831
        %v4886 = vadd.f32 %v4463, %v4834
        %v4887 = vadd.f32 %v4468, %v4839
        %v4888 = vadd.f32 %v4471, %v4842
        %v4889 = vadd.f32 %v4476, %v4847
        %v4890 = vadd.f32 %v4479, %v4850
        %v4891 = vadd.f32 %v4484, %v4855
        %v4892 = vadd.f32 %v4487, %v4858
        %v4893 = vld [vmem:[%s5] sm:$0x1]
        %v4895 = vlaneseq
        %v4896 = vshrl.u32 %v4895, 7
        %v4897 = vsub.s32 0, %v4896
        %v4898 = vrot.slane %v4893, %v4897
        %v4900 = vmul.f32 %v4861, %v4898
        %v4901 = vmul.f32 %v4862, %v4898
        %v4902 = vmul.f32 %v4863, %v4898
        %v4903 = vmul.f32 %v4864, %v4898
        %v4904 = vmul.f32 %v4865, %v4898
        %v4905 = vmul.f32 %v4866, %v4898
        %v4906 = vmul.f32 %v4867, %v4898
        %v4907 = vmul.f32 %v4868, %v4898
        %v4908 = vmul.f32 %v4869, %v4898
        %v4909 = vmul.f32 %v4870, %v4898
        %v4910 = vmul.f32 %v4871, %v4898
        %v4911 = vmul.f32 %v4872, %v4898
        %v4912 = vmul.f32 %v4873, %v4898
        %v4913 = vmul.f32 %v4874, %v4898
        %v4914 = vmul.f32 %v4875, %v4898
        %v4915 = vmul.f32 %v4876, %v4898
        %v4916 = vmul.f32 %v4877, %v4898
        %v4917 = vmul.f32 %v4878, %v4898
        %v4918 = vmul.f32 %v4879, %v4898
        %v4919 = vmul.f32 %v4880, %v4898
        %v4920 = vmul.f32 %v4881, %v4898
        %v4921 = vmul.f32 %v4882, %v4898
        %v4922 = vmul.f32 %v4883, %v4898
        %v4923 = vmul.f32 %v4884, %v4898
        %v4924 = vmul.f32 %v4885, %v4898
        %v4925 = vmul.f32 %v4886, %v4898
        %v4926 = vmul.f32 %v4887, %v4898
        %v4927 = vmul.f32 %v4888, %v4898
        %v4928 = vmul.f32 %v4889, %v4898
        %v4929 = vmul.f32 %v4890, %v4898
        %v4930 = vmul.f32 %v4891, %v4898
        %v4931 = vmul.f32 %v4892, %v4898
        %v4932 = vld [vmem:[%s6] sm:$0x1]
        %v4934 = vlaneseq
        %v4935 = vshrl.u32 %v4934, 7
        %v4936 = vsub.s32 0, %v4935
        %v4937 = vrot.slane %v4932, %v4936
        %v4939 = vadd.f32 %v4900, %v4937
        %v4940 = vadd.f32 %v4901, %v4937
        %v4941 = vadd.f32 %v4902, %v4937
        %v4942 = vadd.f32 %v4903, %v4937
        %v4943 = vadd.f32 %v4904, %v4937
        %v4944 = vadd.f32 %v4905, %v4937
        %v4945 = vadd.f32 %v4906, %v4937
        %v4946 = vadd.f32 %v4907, %v4937
        %v4947 = vadd.f32 %v4908, %v4937
        %v4948 = vadd.f32 %v4909, %v4937
        %v4949 = vadd.f32 %v4910, %v4937
        %v4950 = vadd.f32 %v4911, %v4937
        %v4951 = vadd.f32 %v4912, %v4937
        %v4952 = vadd.f32 %v4913, %v4937
        %v4953 = vadd.f32 %v4914, %v4937
        %v4954 = vadd.f32 %v4915, %v4937
        %v4955 = vadd.f32 %v4916, %v4937
        %v4956 = vadd.f32 %v4917, %v4937
        %v4957 = vadd.f32 %v4918, %v4937
        %v4958 = vadd.f32 %v4919, %v4937
        %v4959 = vadd.f32 %v4920, %v4937
        %v4960 = vadd.f32 %v4921, %v4937
        %v4961 = vadd.f32 %v4922, %v4937
        %v4962 = vadd.f32 %v4923, %v4937
        %v4963 = vadd.f32 %v4924, %v4937
        %v4964 = vadd.f32 %v4925, %v4937
        %v4965 = vadd.f32 %v4926, %v4937
        %v4966 = vadd.f32 %v4927, %v4937
        %v4967 = vadd.f32 %v4928, %v4937
        %v4968 = vadd.f32 %v4929, %v4937
        %v4969 = vadd.f32 %v4930, %v4937
        %v4970 = vadd.f32 %v4931, %v4937
        %v4971 = vld [vmem:[%s740] sm:$0xf]
        %v4972 = vld [vmem:[%s740 + $0x4] sm:$0xf]
        %v4973 = vld [vmem:[%s740 + $0x8] sm:$0xf]
        %v4974 = vld [vmem:[%s740 + $0xc] sm:$0xf]
        %v4975 = vld [vmem:[%s740 + $0x10] sm:$0xf]
        %v4976 = vld [vmem:[%s740 + $0x14] sm:$0xf]
        %v4977 = vld [vmem:[%s740 + $0x18] sm:$0xf]
        %v4978 = vld [vmem:[%s740 + $0x1c] sm:$0xf]
        %v4979 = vld [vmem:[%s740 + $0x20] sm:$0xf]
        %v4980 = vld [vmem:[%s740 + $0x24] sm:$0xf]
        %v4981 = vld [vmem:[%s740 + $0x28] sm:$0xf]
        %v4982 = vld [vmem:[%s740 + $0x2c] sm:$0xf]
        %v4983 = vld [vmem:[%s740 + $0x30] sm:$0xf]
        %v4984 = vld [vmem:[%s740 + $0x34] sm:$0xf]
        %v4985 = vld [vmem:[%s740 + $0x38] sm:$0xf]
        %v4986 = vld [vmem:[%s740 + $0x3c] sm:$0xf]
        %v4987 = vld [vmem:[%s740 + $0x40] sm:$0xf]
        %v4988 = vld [vmem:[%s740 + $0x44] sm:$0xf]
        %v4989 = vld [vmem:[%s740 + $0x48] sm:$0xf]
        %v4990 = vld [vmem:[%s740 + $0x4c] sm:$0xf]
        %v4991 = vld [vmem:[%s740 + $0x50] sm:$0xf]
        %v4992 = vld [vmem:[%s740 + $0x54] sm:$0xf]
        %v4993 = vld [vmem:[%s740 + $0x58] sm:$0xf]
        %v4994 = vld [vmem:[%s740 + $0x5c] sm:$0xf]
        %v4995 = vld [vmem:[%s740 + $0x60] sm:$0xf]
        %v4996 = vld [vmem:[%s740 + $0x64] sm:$0xf]
        %v4997 = vld [vmem:[%s740 + $0x68] sm:$0xf]
        %v4998 = vld [vmem:[%s740 + $0x6c] sm:$0xf]
        %v4999 = vld [vmem:[%s740 + $0x70] sm:$0xf]
        %v5000 = vld [vmem:[%s740 + $0x74] sm:$0xf]
        %v5001 = vld [vmem:[%s740 + $0x78] sm:$0xf]
        %v5002 = vld [vmem:[%s740 + $0x7c] sm:$0xf]
        %v5003 = vunpack.c.l.bf16 %v4971
        %v5004 = vunpack.c.l.bf16 %v4972
        %v5005 = vunpack.c.l.bf16 %v4973
        %v5006 = vunpack.c.l.bf16 %v4974
        %v5007 = vunpack.c.l.bf16 %v4975
        %v5008 = vunpack.c.l.bf16 %v4976
        %v5009 = vunpack.c.l.bf16 %v4977
        %v5010 = vunpack.c.l.bf16 %v4978
        %v5011 = vunpack.c.l.bf16 %v4979
        %v5012 = vunpack.c.l.bf16 %v4980
        %v5013 = vunpack.c.l.bf16 %v4981
        %v5014 = vunpack.c.l.bf16 %v4982
        %v5015 = vunpack.c.l.bf16 %v4983
        %v5016 = vunpack.c.l.bf16 %v4984
        %v5017 = vunpack.c.l.bf16 %v4985
        %v5018 = vunpack.c.l.bf16 %v4986
        %v5019 = vunpack.c.l.bf16 %v4987
        %v5020 = vunpack.c.l.bf16 %v4988
        %v5021 = vunpack.c.l.bf16 %v4989
        %v5022 = vunpack.c.l.bf16 %v4990
        %v5023 = vunpack.c.l.bf16 %v4991
        %v5024 = vunpack.c.l.bf16 %v4992
        %v5025 = vunpack.c.l.bf16 %v4993
        %v5026 = vunpack.c.l.bf16 %v4994
        %v5027 = vunpack.c.l.bf16 %v4995
        %v5028 = vunpack.c.l.bf16 %v4996
        %v5029 = vunpack.c.l.bf16 %v4997
        %v5030 = vunpack.c.l.bf16 %v4998
        %v5031 = vunpack.c.l.bf16 %v4999
        %v5032 = vunpack.c.l.bf16 %v5000
        %v5033 = vunpack.c.l.bf16 %v5001
        %v5034 = vunpack.c.l.bf16 %v5002
        %5067 = vrot.lane.b32.xlu0 %v5003, 96
        %v5068 = vpop.permute.xlu0 %5067
        %5069 = vrot.lane.b32.xlu0 %v5004, 96
        %v5070 = vpop.permute.xlu0 %5069
        %5071 = vrot.lane.b32.xlu0 %v5005, 96
        %v5072 = vpop.permute.xlu0 %5071
        %5073 = vrot.lane.b32.xlu0 %v5006, 96
        %v5074 = vpop.permute.xlu0 %5073
        %5075 = vrot.lane.b32.xlu0 %v5007, 96
        %v5076 = vpop.permute.xlu0 %5075
        %5077 = vrot.lane.b32.xlu0 %v5008, 96
        %v5078 = vpop.permute.xlu0 %5077
        %5079 = vrot.lane.b32.xlu0 %v5009, 96
        %v5080 = vpop.permute.xlu0 %5079
        %5081 = vrot.lane.b32.xlu0 %v5010, 96
        %v5082 = vpop.permute.xlu0 %5081
        %5083 = vrot.lane.b32.xlu0 %v5011, 96
        %v5084 = vpop.permute.xlu0 %5083
        %5085 = vrot.lane.b32.xlu0 %v5012, 96
        %v5086 = vpop.permute.xlu0 %5085
        %5087 = vrot.lane.b32.xlu0 %v5013, 96
        %v5088 = vpop.permute.xlu0 %5087
        %5089 = vrot.lane.b32.xlu0 %v5014, 96
        %v5090 = vpop.permute.xlu0 %5089
        %5091 = vrot.lane.b32.xlu0 %v5015, 96
        %v5092 = vpop.permute.xlu0 %5091
        %5093 = vrot.lane.b32.xlu0 %v5016, 96
        %v5094 = vpop.permute.xlu0 %5093
        %5095 = vrot.lane.b32.xlu0 %v5017, 96
        %v5096 = vpop.permute.xlu0 %5095
        %5097 = vrot.lane.b32.xlu0 %v5018, 96
        %v5098 = vpop.permute.xlu0 %5097
        %5099 = vrot.lane.b32.xlu0 %v5019, 96
        %v5100 = vpop.permute.xlu0 %5099
        %5101 = vrot.lane.b32.xlu0 %v5020, 96
        %v5102 = vpop.permute.xlu0 %5101
        %5103 = vrot.lane.b32.xlu0 %v5021, 96
        %v5104 = vpop.permute.xlu0 %5103
        %5105 = vrot.lane.b32.xlu0 %v5022, 96
        %v5106 = vpop.permute.xlu0 %5105
        %5107 = vrot.lane.b32.xlu0 %v5023, 96
        %v5108 = vpop.permute.xlu0 %5107
        %5109 = vrot.lane.b32.xlu0 %v5024, 96
        %v5110 = vpop.permute.xlu0 %5109
        %5111 = vrot.lane.b32.xlu0 %v5025, 96
        %v5112 = vpop.permute.xlu0 %5111
        %5113 = vrot.lane.b32.xlu0 %v5026, 96
        %v5114 = vpop.permute.xlu0 %5113
        %5115 = vrot.lane.b32.xlu0 %v5027, 96
        %v5116 = vpop.permute.xlu0 %5115
        %5117 = vrot.lane.b32.xlu0 %v5028, 96
        %v5118 = vpop.permute.xlu0 %5117
        %5119 = vrot.lane.b32.xlu0 %v5029, 96
        %v5120 = vpop.permute.xlu0 %5119
        %5121 = vrot.lane.b32.xlu0 %v5030, 96
        %v5122 = vpop.permute.xlu0 %5121
        %5123 = vrot.lane.b32.xlu0 %v5031, 96
        %v5124 = vpop.permute.xlu0 %5123
        %5125 = vrot.lane.b32.xlu0 %v5032, 96
        %v5126 = vpop.permute.xlu0 %5125
        %5127 = vrot.lane.b32.xlu0 %v5033, 96
        %v5128 = vpop.permute.xlu0 %5127
        %5129 = vrot.lane.b32.xlu0 %v5034, 96
        %v5130 = vpop.permute.xlu0 %5129
        %v5163 = vadd.f32 %v4939, %v5068
        %v5164 = vadd.f32 %v4940, %v5070
        %v5165 = vadd.f32 %v4941, %v5072
        %v5166 = vadd.f32 %v4942, %v5074
        %v5167 = vadd.f32 %v4943, %v5076
        %v5168 = vadd.f32 %v4944, %v5078
        %v5169 = vadd.f32 %v4945, %v5080
        %v5170 = vadd.f32 %v4946, %v5082
        %v5171 = vadd.f32 %v4947, %v5084
        %v5172 = vadd.f32 %v4948, %v5086
        %v5173 = vadd.f32 %v4949, %v5088
        %v5174 = vadd.f32 %v4950, %v5090
        %v5175 = vadd.f32 %v4951, %v5092
        %v5176 = vadd.f32 %v4952, %v5094
        %v5177 = vadd.f32 %v4953, %v5096
        %v5178 = vadd.f32 %v4954, %v5098
        %v5179 = vadd.f32 %v4955, %v5100
        %v5180 = vadd.f32 %v4956, %v5102
        %v5181 = vadd.f32 %v4957, %v5104
        %v5182 = vadd.f32 %v4958, %v5106
        %v5183 = vadd.f32 %v4959, %v5108
        %v5184 = vadd.f32 %v4960, %v5110
        %v5185 = vadd.f32 %v4961, %v5112
        %v5186 = vadd.f32 %v4962, %v5114
        %v5187 = vadd.f32 %v4963, %v5116
        %v5188 = vadd.f32 %v4964, %v5118
        %v5189 = vadd.f32 %v4965, %v5120
        %v5190 = vadd.f32 %v4966, %v5122
        %v5191 = vadd.f32 %v4967, %v5124
        %v5192 = vadd.f32 %v4968, %v5126
        %v5193 = vadd.f32 %v4969, %v5128
        %v5194 = vadd.f32 %v4970, %v5130
        %v5195 = vmax.f32 %v5163, 0.0
        %v5196 = vmax.f32 %v5164, 0.0
        %v5197 = vmax.f32 %v5165, 0.0
        %v5198 = vmax.f32 %v5166, 0.0
        %v5199 = vmax.f32 %v5167, 0.0
        %v5200 = vmax.f32 %v5168, 0.0
        %v5201 = vmax.f32 %v5169, 0.0
        %v5202 = vmax.f32 %v5170, 0.0
        %v5203 = vmax.f32 %v5171, 0.0
        %v5204 = vmax.f32 %v5172, 0.0
        %v5205 = vmax.f32 %v5173, 0.0
        %v5206 = vmax.f32 %v5174, 0.0
        %v5207 = vmax.f32 %v5175, 0.0
        %v5208 = vmax.f32 %v5176, 0.0
        %v5209 = vmax.f32 %v5177, 0.0
        %v5210 = vmax.f32 %v5178, 0.0
        %v5211 = vmax.f32 %v5179, 0.0
        %v5212 = vmax.f32 %v5180, 0.0
        %v5213 = vmax.f32 %v5181, 0.0
        %v5214 = vmax.f32 %v5182, 0.0
        %v5215 = vmax.f32 %v5183, 0.0
        %v5216 = vmax.f32 %v5184, 0.0
        %v5217 = vmax.f32 %v5185, 0.0
        %v5218 = vmax.f32 %v5186, 0.0
        %v5219 = vmax.f32 %v5187, 0.0
        %v5220 = vmax.f32 %v5188, 0.0
        %v5221 = vmax.f32 %v5189, 0.0
        %v5222 = vmax.f32 %v5190, 0.0
        %v5223 = vmax.f32 %v5191, 0.0
        %v5224 = vmax.f32 %v5192, 0.0
        %v5225 = vmax.f32 %v5193, 0.0
        %v5226 = vmax.f32 %v5194, 0.0
        %v5227 = vpack.c.bf16 %v5196, %v5195
        %v5228 = vpack.c.bf16 %v5198, %v5197
        %v5229 = vpack.c.bf16 %v5200, %v5199
        %v5230 = vpack.c.bf16 %v5202, %v5201
        %v5231 = vpack.c.bf16 %v5204, %v5203
        %v5232 = vpack.c.bf16 %v5206, %v5205
        %v5233 = vpack.c.bf16 %v5208, %v5207
        %v5234 = vpack.c.bf16 %v5210, %v5209
        %v5235 = vpack.c.bf16 %v5212, %v5211
        %v5236 = vpack.c.bf16 %v5214, %v5213
        %v5237 = vpack.c.bf16 %v5216, %v5215
        %v5238 = vpack.c.bf16 %v5218, %v5217
        %v5239 = vpack.c.bf16 %v5220, %v5219
        %v5240 = vpack.c.bf16 %v5222, %v5221
        %v5241 = vpack.c.bf16 %v5224, %v5223
        %v5242 = vpack.c.bf16 %v5226, %v5225
        %v5259 = vunpack.c.l.b16 %v5227
        %v5260 = vunpack.c.h.b16 %v5227
        %v5261 = vunpack.c.l.b16 %v5228
        %v5262 = vunpack.c.h.b16 %v5228
        %v5263 = vunpack.c.l.b16 %v5229
        %v5264 = vunpack.c.h.b16 %v5229
        %v5265 = vunpack.c.l.b16 %v5230
        %v5266 = vunpack.c.h.b16 %v5230
        %v5267 = vunpack.c.l.b16 %v5231
        %v5268 = vunpack.c.h.b16 %v5231
        %v5269 = vunpack.c.l.b16 %v5232
        %v5270 = vunpack.c.h.b16 %v5232
        %v5271 = vunpack.c.l.b16 %v5233
        %v5272 = vunpack.c.h.b16 %v5233
        %v5273 = vunpack.c.l.b16 %v5234
        %v5274 = vunpack.c.h.b16 %v5234
        %v5275 = vunpack.c.l.b16 %v5235
        %v5276 = vunpack.c.h.b16 %v5235
        %v5277 = vunpack.c.l.b16 %v5236
        %v5278 = vunpack.c.h.b16 %v5236
        %v5279 = vunpack.c.l.b16 %v5237
        %v5280 = vunpack.c.h.b16 %v5237
        %v5281 = vunpack.c.l.b16 %v5238
        %v5282 = vunpack.c.h.b16 %v5238
        %v5283 = vunpack.c.l.b16 %v5239
        %v5284 = vunpack.c.h.b16 %v5239
        %v5285 = vunpack.c.l.b16 %v5240
        %v5286 = vunpack.c.h.b16 %v5240
        %v5287 = vunpack.c.l.b16 %v5241
        %v5288 = vunpack.c.h.b16 %v5241
        %v5289 = vunpack.c.l.b16 %v5242
        %v5290 = vunpack.c.h.b16 %v5242
        %v5291 = vpack.c.b16 %v5259, %v5259
        %v5292 = vpack.c.b16 %v5260, %v5260
        %v5293 = vpack.c.b16 %v5261, %v5261
        %v5294 = vpack.c.b16 %v5262, %v5262
        %v5295 = vpack.c.b16 %v5263, %v5263
        %v5296 = vpack.c.b16 %v5264, %v5264
        %v5297 = vpack.c.b16 %v5265, %v5265
        %v5298 = vpack.c.b16 %v5266, %v5266
        %v5299 = vpack.c.b16 %v5267, %v5267
        %v5300 = vpack.c.b16 %v5268, %v5268
        %v5301 = vpack.c.b16 %v5269, %v5269
        %v5302 = vpack.c.b16 %v5270, %v5270
        %v5303 = vpack.c.b16 %v5271, %v5271
        %v5304 = vpack.c.b16 %v5272, %v5272
        %v5305 = vpack.c.b16 %v5273, %v5273
        %v5306 = vpack.c.b16 %v5274, %v5274
        %v5307 = vpack.c.b16 %v5275, %v5275
        %v5308 = vpack.c.b16 %v5276, %v5276
        %v5309 = vpack.c.b16 %v5277, %v5277
        %v5310 = vpack.c.b16 %v5278, %v5278
        %v5311 = vpack.c.b16 %v5279, %v5279
        %v5312 = vpack.c.b16 %v5280, %v5280
        %v5313 = vpack.c.b16 %v5281, %v5281
        %v5314 = vpack.c.b16 %v5282, %v5282
        %v5315 = vpack.c.b16 %v5283, %v5283
        %v5316 = vpack.c.b16 %v5284, %v5284
        %v5317 = vpack.c.b16 %v5285, %v5285
        %v5318 = vpack.c.b16 %v5286, %v5286
        %v5319 = vpack.c.b16 %v5287, %v5287
        %v5320 = vpack.c.b16 %v5288, %v5288
        %v5321 = vpack.c.b16 %v5289, %v5289
        %v5322 = vpack.c.b16 %v5290, %v5290
        %5355 = vst.msk [vmem:[%s296] sm:$0xf] %vm747, %v5291
        %5356 = vst.msk [vmem:[%s296 + $0x4] sm:$0xf] %vm747, %v5292
        %5357 = vst.msk [vmem:[%s296 + $0x8] sm:$0xf] %vm747, %v5293
        %5358 = vst.msk [vmem:[%s296 + $0xc] sm:$0xf] %vm747, %v5294
        %5359 = vst.msk [vmem:[%s296 + $0x10] sm:$0xf] %vm747, %v5295
        %5360 = vst.msk [vmem:[%s296 + $0x14] sm:$0xf] %vm747, %v5296
        %5361 = vst.msk [vmem:[%s296 + $0x18] sm:$0xf] %vm747, %v5297
        %5362 = vst.msk [vmem:[%s296 + $0x1c] sm:$0xf] %vm747, %v5298
        %5363 = vst.msk [vmem:[%s296 + $0x20] sm:$0xf] %vm747, %v5299
        %5364 = vst.msk [vmem:[%s296 + $0x24] sm:$0xf] %vm747, %v5300
        %5365 = vst.msk [vmem:[%s296 + $0x28] sm:$0xf] %vm747, %v5301
        %5366 = vst.msk [vmem:[%s296 + $0x2c] sm:$0xf] %vm747, %v5302
        %5367 = vst.msk [vmem:[%s296 + $0x30] sm:$0xf] %vm747, %v5303
        %5368 = vst.msk [vmem:[%s296 + $0x34] sm:$0xf] %vm747, %v5304
        %5369 = vst.msk [vmem:[%s296 + $0x38] sm:$0xf] %vm747, %v5305
        %5370 = vst.msk [vmem:[%s296 + $0x3c] sm:$0xf] %vm747, %v5306
        %5371 = vst.msk [vmem:[%s296 + $0x40] sm:$0xf] %vm747, %v5307
        %5372 = vst.msk [vmem:[%s296 + $0x44] sm:$0xf] %vm747, %v5308
        %5373 = vst.msk [vmem:[%s296 + $0x48] sm:$0xf] %vm747, %v5309
        %5374 = vst.msk [vmem:[%s296 + $0x4c] sm:$0xf] %vm747, %v5310
        %5375 = vst.msk [vmem:[%s296 + $0x50] sm:$0xf] %vm747, %v5311
        %5376 = vst.msk [vmem:[%s296 + $0x54] sm:$0xf] %vm747, %v5312
        %5377 = vst.msk [vmem:[%s296 + $0x58] sm:$0xf] %vm747, %v5313
        %5378 = vst.msk [vmem:[%s296 + $0x5c] sm:$0xf] %vm747, %v5314
        %5379 = vst.msk [vmem:[%s296 + $0x60] sm:$0xf] %vm747, %v5315
        %5380 = vst.msk [vmem:[%s296 + $0x64] sm:$0xf] %vm747, %v5316
        %5381 = vst.msk [vmem:[%s296 + $0x68] sm:$0xf] %vm747, %v5317
        %5382 = vst.msk [vmem:[%s296 + $0x6c] sm:$0xf] %vm747, %v5318
        %5383 = vst.msk [vmem:[%s296 + $0x70] sm:$0xf] %vm747, %v5319
        %5384 = vst.msk [vmem:[%s296 + $0x74] sm:$0xf] %vm747, %v5320
        %5385 = vst.msk [vmem:[%s296 + $0x78] sm:$0xf] %vm747, %v5321
        %5386 = vst.msk [vmem:[%s296 + $0x7c] sm:$0xf] %vm747, %v5322
        %s5387 = sand.u32 %s184, 1
        %s5388 = scalar_lea.sflag [#allocation6], %s5387
        %s5389 = sand.u32 %s184, 1
        %s5390 = smul.addr %s5389, 128
        %s5391 = scalar_lea.vmem [#allocation7], %s5390
        // Predicated region
        $region53: #{tpu_custom_call.1} parent=47 // pred_check
          %p5392 = pneg %p194
        $region54: #{tpu_custom_call.1} parent=47 // pred_check_branch
          %5394 = sbr.rel (%p5392) target = $region56
        $region55: #{tpu_custom_call.1} parent=47 // pred_region
          %s5396 = ssub.s32 2048, 2048
          %5397 = vsyncadd %s5388, %s5396
          %s5398 = smul.addr %s24, 32
          %s5399 = smul.addr %s5398, 64
          %s5400 = scalar_lea.hbm %s7, %s5399
          %s5401 = sshll.u32 %s5391, 4
          %s5402 = int_to_ptr.vmem [resolvable:$true] %s5401
          %5407 = dma.vmem_to_hbm [thread:$0]  %s5402, 2048, %s5400, %s5388, 64, 64, 4
        $region56: #{tpu_custom_call.1} parent=47 // pred_fallthru
          _
      $region48: #{tpu_custom_call.1} parent=5 // pred_fallthru
        _
      %p5408 = scmp.le.s32.totalorder 2, %s19
      // Predicated region
      $region57: #{tpu_custom_call.1} parent=5 // pred_check
        %p5409 = pneg %p5408
      $region58: #{tpu_custom_call.1} parent=5 // pred_check_branch
        %5411 = sbr.rel (%p5409) target = $region60
      $region59: #{tpu_custom_call.1} parent=5 // pred_region
        %s5412 = ssub.s32 %s19, 2
        // Predicated region
        $region61: #{tpu_custom_call.1} parent=59 // pred_check
          %p5413 = pneg %p200
        $region62: #{tpu_custom_call.1} parent=59 // pred_check_branch
          %5415 = sbr.rel (%p5413) target = $region64
        $region63: #{tpu_custom_call.1} parent=59 // pred_region
          %s5416 = sand.u32 %s185, 1
          %s5417 = scalar_lea.sflag [#allocation6], %s5416
          %s5418 = sand.u32 %s185, 1
          %s5419 = smul.addr %s5418, 128
          %s5420 = scalar_lea.vmem [#allocation7], %s5419
          %5421 = dma.done %s5417, 2048
        $region64: #{tpu_custom_call.1} parent=59 // pred_fallthru
          _
      $region60: #{tpu_custom_call.1} parent=5 // pred_fallthru
        _
    $region6: #{tpu_custom_call.1} parent=1 // loop_footer
      %s23 = sadd.s32 1, %s19
    $region7: #{tpu_custom_call.1} parent=1 // loop_footer_branch
      %18 = sbr.rel target = $region3
    $region8: #{tpu_custom_call.1} parent=1 // loop_exit
      _
    %5422 = vsyncpa [#allocation5], 1
    %s5423 = scalar_lea.sflag [#allocation5], 1
    %5424 = vsyncpa %s5423, 1
    %5425 = vsyncpa [#allocation6], 1
    %s5426 = scalar_lea.sflag [#allocation6], 1
    %5427 = vsyncpa %s5426, 1

</llo_original>
